<compile_context>
chip_gen: v7x
topology: tpu7x:2x2x1
jax: 0.10.0
libtpu: 0.0.40
codegen_flags: <defaults>
</compile_context>

<pallas_src>
import functools
import math

import jax
import jax.numpy as jnp
from jax import lax
from jax.experimental import pallas as pl
from jax.experimental.pallas import tpu as pltpu

KS = 3          # 3x3x3 kernel, stride 1, padding 1 ("SAME")
BN_EPS = 1e-5
VMEM_LIMIT = 48 * 1024 * 1024      # explicit scoped-VMEM budget (fits v7x 64MiB)


# ---------------------------------------------------------------------------
# VMEM-budget tile picker (largest divisor of D whose conv working set fits).
# ---------------------------------------------------------------------------
def _pick_td(D, H, W, Cin, Cout, budget_bytes=20 * 1024 * 1024):
    def tile_pad(r, c, b):   # (8,128)-tiled footprint of the minor two dims
        return (-(-r // 8) * 8) * (-(-c // 128) * 128) * b

    for td in range(D, 0, -1):
        if D % td:
            continue
        use = (2 * td * H * tile_pad(W, Cin, 4)                  # main input x2
               + 4 * H * tile_pad(W, Cin, 4)                     # D-halo rows
               + 2 * td * H * tile_pad(W, Cout, 4)               # output x2
               + 9 * tile_pad(3 * Cin, Cout, 2)                  # folded weights
               + (td + 2) * (H + 2) * tile_pad(W + 2, Cin, 4)    # f32 slab
               + (td + 2) * (H + 2) * tile_pad(W, 3 * Cin, 2)    # kw-folded copy
               + 2 * tile_pad(td * H * W, Cout, 4))              # acc / squares
        if use <= budget_bytes:
            return td
    return 1


# ---------------------------------------------------------------------------
# Fused kernel: [optional relu(x*scale+shift) prologue] -> in-kernel "SAME"
# padding -> kw-folded 3x3x3 conv (bf16 MXU, f32 acc) -> fused BN batch-stat
# partials + conv output tile.
# ---------------------------------------------------------------------------
def _conv_bn_kernel(xm_ref, xlo_ref, xhi_ref, w_ref, sc_ref, sh_ref,
                    y_ref, s_ref, q_ref, *, apply_prologue):
    _, TD, H, W, Cin = xm_ref.shape
    Cout = y_ref.shape[-1]
    t = pl.program_id(1)
    n_t = pl.num_programs(1)

    def act(v32):
        # Fused BN+ReLU of the *previous* layer (f32 elementwise; v5e-safe).
        if apply_prologue:
            v32 = jnp.maximum(v32 * sc_ref[0, :] + sh_ref[0, :], 0.0)
        return v32

    # ---- assemble the zero-padded (and, for layer 2, activated) input slab.
    # D-halo rows are masked to zero at the batch-D boundary; H/W borders are
    # zero-concatenated.  This replaces the jnp.pad HBM pass entirely.
    lo = act(xlo_ref[0].astype(jnp.float32)) * (t > 0).astype(jnp.float32)
    hi = act(xhi_ref[0].astype(jnp.float32)) * (t < n_t - 1).astype(jnp.float32)
    mid = act(xm_ref[0].astype(jnp.float32))
    slab_d = jnp.concatenate([lo, mid, hi], axis=0)            # (TD+2, H, W, C)
    z_h = jnp.zeros((TD + 2, 1, W, Cin), jnp.float32)
    slab_h = jnp.concatenate([z_h, slab_d, z_h], axis=1)       # (TD+2, H+2, W, C)
    z_w = jnp.zeros((TD + 2, H + 2, 1, Cin), jnp.float32)
    slab = jnp.concatenate([z_w, slab_h, z_w], axis=2)         # (TD+2, H+2, W+2, C)

    # ---- fold the 3 kw taps into the contraction dim (done once per tile).
    xcat = jnp.concatenate(
        [slab[:, :, 0:W, :], slab[:, :, 1:W + 1, :], slab[:, :, 2:W + 2, :]],
        axis=-1).astype(jnp.bfloat16)                          # (TD+2, H+2, W, 3C)

    # ---- 9 remaining taps: slices only along D/H (tile-aligned), K = 3*Cin.
    acc = jnp.zeros((TD * H * W, Cout), jnp.float32)
    for kd in range(KS):
        for kh in range(KS):
            xs = xcat[kd:kd + TD, kh:kh + H, :, :].reshape(TD * H * W, 3 * Cin)
            acc = acc + jnp.dot(xs, w_ref[kd, kh, :, :],
                                preferred_element_type=jnp.float32)

    # ---- fused BatchNorm batch-stat partials (hierarchical reduce:
    # vreg-wise adds over row groups of 8; the final 8-row sum is done in XLA).
    rows = TD * H * W
    pad = (-rows) % 8
    accp = acc if pad == 0 else jnp.concatenate(
        [acc, jnp.zeros((pad, Cout), jnp.float32)], axis=0)
    g = accp.reshape(-1, 8, Cout)
    s_ref[...] = jnp.sum(g, axis=0).reshape(1, 1, 8, Cout)
    q_ref[...] = jnp.sum(g * g, axis=0).reshape(1, 1, 8, Cout)

    y_ref[...] = acc.reshape(1, TD, H, W, Cout).astype(y_ref.dtype)


def conv3d_bn_fused(x, w_folded, scale_in, shift_in, *, apply_prologue, td,
                    out_dtype=jnp.bfloat16):
    """3x3x3 'SAME' conv over NDHWC x, with optional fused input BN+ReLU
    prologue and fused per-(n, d-tile) batch-stat partials."""
    N, D, H, W, Cin = x.shape
    Cout = w_folded.shape[-1]
    assert D % td == 0, (D, td)
    n_td = D // td

    kern = functools.partial(_conv_bn_kernel, apply_prologue=apply_prologue)
    return pl.pallas_call(
        kern,
        out_shape=(jax.ShapeDtypeStruct((N, D, H, W, Cout), out_dtype),
                   jax.ShapeDtypeStruct((N, n_td, 8, Cout), jnp.float32),
                   jax.ShapeDtypeStruct((N, n_td, 8, Cout), jnp.float32)),
        grid_spec=pltpu.PrefetchScalarGridSpec(
            num_scalar_prefetch=0,
            grid=(N, n_td),
            in_specs=[
                # main D tile
                pl.BlockSpec((1, td, H, W, Cin), lambda n, t: (n, t, 0, 0, 0)),
                # one-row D halos (element-indexed since block size is 1);
                # clamped at batch-D boundaries, masked to zero in-kernel.
                pl.BlockSpec((1, 1, H, W, Cin),
                             lambda n, t: (n, jnp.maximum(t * td - 1, 0), 0, 0, 0)),
                pl.BlockSpec((1, 1, H, W, Cin),
                             lambda n, t: (n, jnp.minimum((t + 1) * td, D - 1), 0, 0, 0)),
                # kw-folded bf16 weights, resident across the grid
                pl.BlockSpec((KS, KS, 3 * Cin, Cout), lambda n, t: (0, 0, 0, 0)),
                # prologue affine (previous layer's BN scale/shift)
                pl.BlockSpec((1, Cin), lambda n, t: (0, 0)),
                pl.BlockSpec((1, Cin), lambda n, t: (0, 0)),
            ],
            out_specs=(
                pl.BlockSpec((1, td, H, W, Cout), lambda n, t: (n, t, 0, 0, 0)),
                pl.BlockSpec((1, 1, 8, Cout), lambda n, t: (n, t, 0, 0)),
                pl.BlockSpec((1, 1, 8, Cout), lambda n, t: (n, t, 0, 0)),
            ),
        ),
        compiler_params=pltpu.CompilerParams(
            dimension_semantics=("parallel", "parallel"),
            vmem_limit_bytes=VMEM_LIMIT),
    )(x, x, x, w_folded, scale_in, shift_in)


# ---------------------------------------------------------------------------
# Final fused affine-BN + ReLU pass (needed because BN2 stats require all of
# conv2's output before normalization).
# ---------------------------------------------------------------------------
def _bn_relu_kernel(y_ref, sc_ref, sh_ref, o_ref):
    y = y_ref[...].astype(jnp.float32)
    o_ref[...] = jnp.maximum(y * sc_ref[0, :] + sh_ref[0, :], 0.0)


def bn_relu(y, scale, shift, *, td):
    N, D, H, W, C = y.shape
    n_td = D // td
    return pl.pallas_call(
        _bn_relu_kernel,
        out_shape=jax.ShapeDtypeStruct((N, D, H, W, C), jnp.float32),
        grid_spec=pltpu.PrefetchScalarGridSpec(
            num_scalar_prefetch=0,
            grid=(N, n_td),
            in_specs=[pl.BlockSpec((1, td, H, W, C), lambda n, t: (n, t, 0, 0, 0)),
                      pl.BlockSpec((1, C), lambda n, t: (0, 0)),
                      pl.BlockSpec((1, C), lambda n, t: (0, 0))],
            out_specs=pl.BlockSpec((1, td, H, W, C), lambda n, t: (n, t, 0, 0, 0)),
        ),
        compiler_params=pltpu.CompilerParams(
            dimension_semantics=("parallel", "parallel"),
            vmem_limit_bytes=VMEM_LIMIT),
    )(y, scale.reshape(1, C), shift.reshape(1, C))


# ---------------------------------------------------------------------------
# Batch-stat partials -> BN affine (tiny XLA math on (N, tiles, 8, C) sums).
# TODO(synk): for very large N*D*H*W, use centered/Welford accumulation to
# avoid E[x^2]-E[x]^2 cancellation in f32.
# ---------------------------------------------------------------------------
def _bn_affine(s_part, q_part, gamma, beta, count, eps=BN_EPS):
    s = jnp.sum(s_part, axis=(0, 1, 2))
    q = jnp.sum(q_part, axis=(0, 1, 2))
    mean = s / count
    var = jnp.maximum(q / count - mean * mean, 0.0)   # biased (PyTorch train mode)
    scale = gamma / jnp.sqrt(var + eps)
    shift = beta - mean * scale
    return scale, shift


def _fold_kw(w_dhwio):
    # (3,3,3,Cin,Cout) DHWIO -> (3,3,3*Cin,Cout), kw folded into K, bf16 for MXU.
    kd, kh, kw, ci, co = w_dhwio.shape
    return w_dhwio.reshape(kd, kh, kw * ci, co).astype(jnp.bfloat16)


# ---------------------------------------------------------------------------
# Parameter init (PyTorch-default-style) and full forward.
# TODO(synk): BatchNorm running_mean/running_var momentum bookkeeping is
# training-only state and does not affect the forward output; not implemented.
# ---------------------------------------------------------------------------
def init_params(key, inp_feat, out_feat):
    k = jax.random.split(key, 4)
    b1 = 1.0 / math.sqrt(inp_feat * KS ** 3)
    b2 = 1.0 / math.sqrt(out_feat * KS ** 3)
    # PyTorch conv weight layout (Cout, Cin, kd, kh, kw) -> DHWIO.
    w1 = jax.random.uniform(k[0], (out_feat, inp_feat, KS, KS, KS),
                            jnp.float32, -b1, b1)
    w2 = jax.random.uniform(k[2], (out_feat, out_feat, KS, KS, KS),
                            jnp.float32, -b2, b2)
    return {
        "w1": jnp.transpose(w1, (2, 3, 4, 1, 0)),
        "b1": jax.random.uniform(k[1], (out_feat,), jnp.float32, -b1, b1),
        "g1": jnp.ones((out_feat,), jnp.float32),
        "be1": jnp.zeros((out_feat,), jnp.float32),
        "w2": jnp.transpose(w2, (2, 3, 4, 1, 0)),
        "b2": jax.random.uniform(k[3], (out_feat,), jnp.float32, -b2, b2),
        "g2": jnp.ones((out_feat,), jnp.float32),
        "be2": jnp.zeros((out_feat,), jnp.float32),
    }


def conv3d_block_forward(params, x_ncdhw, td=None):
    # x_ncdhw: (N, C, D, H, W) like PyTorch; returns (N, Cout, D, H, W) f32.
    x = jnp.transpose(x_ncdhw, (0, 2, 3, 4, 1)).astype(jnp.float32)   # -> NDHWC
    N, D, H, W, Cin = x.shape
    Cmid = params["w1"].shape[-1]
    count = float(N * D * H * W)
    if td is None:
        td = _pick_td(D, H, W, max(Cin, Cmid), Cmid)

    w1f = _fold_kw(params["w1"])
    w2f = _fold_kw(params["w2"])

    # layer 1: conv (+ fused batch stats).  Conv biases are dropped: a
    # per-channel constant is exactly cancelled by train-mode BatchNorm.
    ones = jnp.ones((1, Cin), jnp.float32)
    zeros = jnp.zeros((1, Cin), jnp.float32)
    y1, s1, q1 = conv3d_bn_fused(x, w1f, ones, zeros,
                                 apply_prologue=False, td=td)
    sc1, sh1 = _bn_affine(s1, q1, params["g1"], params["be1"], count)

    # layer 2: conv with BN1+ReLU fused into its input prologue (+ fused stats).
    y2, s2, q2 = conv3d_bn_fused(y1, w2f, sc1.reshape(1, Cmid),
                                 sh1.reshape(1, Cmid),
                                 apply_prologue=True, td=td)
    sc2, sh2 = _bn_affine(s2, q2, params["g2"], params["be2"], count)

    out = bn_relu(y2, sc2, sh2, td=td)
    return jnp.transpose(out, (0, 4, 1, 2, 3))                        # -> NCDHW


def reference_forward(params, x_ncdhw):
    x = jnp.transpose(x_ncdhw, (0, 2, 3, 4, 1)).astype(jnp.float32)

    def conv(x, w, b):
        y = lax.conv_general_dilated(
            x, w, (1, 1, 1), "SAME",
            dimension_numbers=("NDHWC", "DHWIO", "NDHWC"))
        return y + b

    def bn_relu_ref(y, g, be):
        mean = jnp.mean(y, axis=(0, 1, 2, 3))
        var = jnp.mean((y - mean) ** 2, axis=(0, 1, 2, 3))
        return jnp.maximum((y - mean) / jnp.sqrt(var + BN_EPS) * g + be, 0.0)

    y = bn_relu_ref(conv(x, params["w1"], params["b1"]), params["g1"], params["be1"])
    y = bn_relu_ref(conv(y, params["w2"], params["b2"]), params["g2"], params["be2"])
    return jnp.transpose(y, (0, 4, 1, 2, 3))


if __name__ == "__main__":
    N, Cin, Cout, D, H, W = 2, 4, 8, 8, 8, 8
    key = jax.random.PRNGKey(0)
    k_x, k_p = jax.random.split(key)
    x = jax.random.normal(k_x, (N, Cin, D, H, W), jnp.float32)
    params = init_params(k_p, Cin, Cout)

    # td=4 so the D-tiling / halo path is actually exercised at this toy size.
    fwd = jax.jit(functools.partial(conv3d_block_forward, td=4))
    out = jax.block_until_ready(fwd(params, x))
    assert out.shape == (N, Cout, D, H, W), out.shape

    ref = reference_forward(params, x)
    max_err = float(jnp.max(jnp.abs(out - ref)))
    # bf16 MXU operands + bf16-stored intermediate vs. all-f32 reference.
    if not bool(jnp.allclose(out, ref, atol=5e-2, rtol=5e-2)):
        raise AssertionError(f"mismatch vs reference, max abs err = {max_err}")

    print("KERNEL_OK")
</pallas_src>

<mosaic_0001>
module attributes {stable_mosaic.version = 11 : i64} {
  func.func @_conv_bn_kernel(%arg0: i32, %arg1: i32, %arg2: memref<1x4x8x8x8xbf16, #tpu.memory_space<vmem>>, %arg3: memref<1x1x8x8x8xbf16, #tpu.memory_space<vmem>>, %arg4: memref<1x1x8x8x8xbf16, #tpu.memory_space<vmem>>, %arg5: memref<3x3x24x8xbf16, #tpu.memory_space<vmem>>, %arg6: memref<1x8xf32, #tpu.memory_space<vmem>>, %arg7: memref<1x8xf32, #tpu.memory_space<vmem>>, %arg8: memref<1x4x8x8x8xbf16, #tpu.memory_space<vmem>>, %arg9: memref<1x1x8x8xf32, #tpu.memory_space<vmem>>, %arg10: memref<1x1x8x8xf32, #tpu.memory_space<vmem>>) attributes {dimension_semantics = [#tpu.dimension_semantics<parallel>, #tpu.dimension_semantics<parallel>], iteration_bounds = array<i64: 2, 2>, scalar_prefetch = 0 : i64, scratch_operands = 0 : i64, tpu.core_type = #tpu.core_type<tc>, window_params = [{transform_indices = @transform_0, window_bounds = array<i64: 1, 4, 8, 8, 8>}, {transform_indices = @transform_1, window_bounds = array<i64: 1, 1, 8, 8, 8>}, {transform_indices = @transform_2, window_bounds = array<i64: 1, 1, 8, 8, 8>}, {pipeline_mode = #tpu.pipeline_mode<synchronous>, transform_indices = @transform_3, window_bounds = array<i64: 3, 3, 24, 8>}, {pipeline_mode = #tpu.pipeline_mode<synchronous>, transform_indices = @transform_4, window_bounds = array<i64: 1, 8>}, {pipeline_mode = #tpu.pipeline_mode<synchronous>, transform_indices = @transform_5, window_bounds = array<i64: 1, 8>}, {transform_indices = @transform_6, window_bounds = array<i64: 1, 4, 8, 8, 8>}, {transform_indices = @transform_7, window_bounds = array<i64: 1, 1, 8, 8>}, {transform_indices = @transform_8, window_bounds = array<i64: 1, 1, 8, 8>}]} {
    %c0 = arith.constant 0 : index
    %c0_0 = arith.constant 0 : index
    %c0_1 = arith.constant 0 : index
    %c0_2 = arith.constant 0 : index
    %c0_3 = arith.constant 0 : index
    %0 = vector.load %arg3[%c0, %c0_0, %c0_1, %c0_2, %c0_3] : memref<1x1x8x8x8xbf16, #tpu.memory_space<vmem>>, vector<1x1x8x8x8xbf16>
    %1 = vector.shape_cast %0 : vector<1x1x8x8x8xbf16> to vector<1x8x8x8xbf16>
    %2 = arith.extf %1 : vector<1x8x8x8xbf16> to vector<1x8x8x8xf32>
    %c0_4 = arith.constant 0 : index
    %c0_5 = arith.constant 0 : index
    %3 = vector.load %arg6[%c0_4, %c0_5] : memref<1x8xf32, #tpu.memory_space<vmem>>, vector<1x8xf32>
    %4 = vector.shape_cast %3 : vector<1x8xf32> to vector<8xf32>
    %5 = vector.shape_cast %4 : vector<8xf32> to vector<1x1x1x8xf32>
    %6 = vector.broadcast %5 : vector<1x1x1x8xf32> to vector<1x8x8x8xf32>
    %7 = arith.mulf %2, %6 : vector<1x8x8x8xf32>
    %c0_6 = arith.constant 0 : index
    %c0_7 = arith.constant 0 : index
    %8 = vector.load %arg7[%c0_6, %c0_7] : memref<1x8xf32, #tpu.memory_space<vmem>>, vector<1x8xf32>
    %9 = vector.shape_cast %8 : vector<1x8xf32> to vector<8xf32>
    %10 = vector.shape_cast %9 : vector<8xf32> to vector<1x1x1x8xf32>
    %11 = vector.broadcast %10 : vector<1x1x1x8xf32> to vector<1x8x8x8xf32>
    %12 = arith.addf %7, %11 : vector<1x8x8x8xf32>
    %cst = arith.constant 0.000000e+00 : f32
    %13 = vector.broadcast %cst : f32 to vector<1x8x8x8xf32>
    %14 = arith.maximumf %12, %13 : vector<1x8x8x8xf32>
    %c0_i32 = arith.constant 0 : i32
    %15 = arith.cmpi sgt, %arg1, %c0_i32 : i32
    %16 = arith.extui %15 : i1 to i32
    %17 = arith.sitofp %16 : i32 to f32
    %18 = vector.broadcast %17 : f32 to vector<1x8x8x8xf32>
    %19 = arith.mulf %14, %18 : vector<1x8x8x8xf32>
    %c0_8 = arith.constant 0 : index
    %c0_9 = arith.constant 0 : index
    %c0_10 = arith.constant 0 : index
    %c0_11 = arith.constant 0 : index
    %c0_12 = arith.constant 0 : index
    %20 = vector.load %arg4[%c0_8, %c0_9, %c0_10, %c0_11, %c0_12] : memref<1x1x8x8x8xbf16, #tpu.memory_space<vmem>>, vector<1x1x8x8x8xbf16>
    %21 = vector.shape_cast %20 : vector<1x1x8x8x8xbf16> to vector<1x8x8x8xbf16>
    %22 = arith.extf %21 : vector<1x8x8x8xbf16> to vector<1x8x8x8xf32>
    %c0_13 = arith.constant 0 : index
    %c0_14 = arith.constant 0 : index
    %23 = vector.load %arg6[%c0_13, %c0_14] : memref<1x8xf32, #tpu.memory_space<vmem>>, vector<1x8xf32>
    %24 = vector.shape_cast %23 : vector<1x8xf32> to vector<8xf32>
    %25 = vector.shape_cast %24 : vector<8xf32> to vector<1x1x1x8xf32>
    %26 = vector.broadcast %25 : vector<1x1x1x8xf32> to vector<1x8x8x8xf32>
    %27 = arith.mulf %22, %26 : vector<1x8x8x8xf32>
    %c0_15 = arith.constant 0 : index
    %c0_16 = arith.constant 0 : index
    %28 = vector.load %arg7[%c0_15, %c0_16] : memref<1x8xf32, #tpu.memory_space<vmem>>, vector<1x8xf32>
    %29 = vector.shape_cast %28 : vector<1x8xf32> to vector<8xf32>
    %30 = vector.shape_cast %29 : vector<8xf32> to vector<1x1x1x8xf32>
    %31 = vector.broadcast %30 : vector<1x1x1x8xf32> to vector<1x8x8x8xf32>
    %32 = arith.addf %27, %31 : vector<1x8x8x8xf32>
    %cst_17 = arith.constant 0.000000e+00 : f32
    %33 = vector.broadcast %cst_17 : f32 to vector<1x8x8x8xf32>
    %34 = arith.maximumf %32, %33 : vector<1x8x8x8xf32>
    %c1_i32 = arith.constant 1 : i32
    %35 = arith.cmpi slt, %arg1, %c1_i32 : i32
    %36 = arith.extui %35 : i1 to i32
    %37 = arith.sitofp %36 : i32 to f32
    %38 = vector.broadcast %37 : f32 to vector<1x8x8x8xf32>
    %39 = arith.mulf %34, %38 : vector<1x8x8x8xf32>
    %c0_18 = arith.constant 0 : index
    %c0_19 = arith.constant 0 : index
    %c0_20 = arith.constant 0 : index
    %c0_21 = arith.constant 0 : index
    %c0_22 = arith.constant 0 : index
    %40 = vector.load %arg2[%c0_18, %c0_19, %c0_20, %c0_21, %c0_22] : memref<1x4x8x8x8xbf16, #tpu.memory_space<vmem>>, vector<1x4x8x8x8xbf16>
    %41 = vector.shape_cast %40 : vector<1x4x8x8x8xbf16> to vector<4x8x8x8xbf16>
    %42 = arith.extf %41 : vector<4x8x8x8xbf16> to vector<4x8x8x8xf32>
    %c0_23 = arith.constant 0 : index
    %c0_24 = arith.constant 0 : index
    %43 = vector.load %arg6[%c0_23, %c0_24] : memref<1x8xf32, #tpu.memory_space<vmem>>, vector<1x8xf32>
    %44 = vector.shape_cast %43 : vector<1x8xf32> to vector<8xf32>
    %45 = vector.shape_cast %44 : vector<8xf32> to vector<1x1x1x8xf32>
    %46 = vector.broadcast %45 : vector<1x1x1x8xf32> to vector<4x8x8x8xf32>
    %47 = arith.mulf %42, %46 : vector<4x8x8x8xf32>
    %c0_25 = arith.constant 0 : index
    %c0_26 = arith.constant 0 : index
    %48 = vector.load %arg7[%c0_25, %c0_26] : memref<1x8xf32, #tpu.memory_space<vmem>>, vector<1x8xf32>
    %49 = vector.shape_cast %48 : vector<1x8xf32> to vector<8xf32>
    %50 = vector.shape_cast %49 : vector<8xf32> to vector<1x1x1x8xf32>
    %51 = vector.broadcast %50 : vector<1x1x1x8xf32> to vector<4x8x8x8xf32>
    %52 = arith.addf %47, %51 : vector<4x8x8x8xf32>
    %cst_27 = arith.constant 0.000000e+00 : f32
    %53 = vector.broadcast %cst_27 : f32 to vector<4x8x8x8xf32>
    %54 = arith.maximumf %52, %53 : vector<4x8x8x8xf32>
    %55 = tpu.concatenate %19, %54, %39 in 0 : vector<1x8x8x8xf32>, vector<4x8x8x8xf32>, vector<1x8x8x8xf32> -> vector<6x8x8x8xf32>
    %cst_28 = arith.constant 0.000000e+00 : f32
    %56 = vector.broadcast %cst_28 : f32 to vector<6x1x8x8xf32>
    %57 = tpu.concatenate %56, %55, %56 in 1 : vector<6x1x8x8xf32>, vector<6x8x8x8xf32>, vector<6x1x8x8xf32> -> vector<6x10x8x8xf32>
    %cst_29 = arith.constant 0.000000e+00 : f32
    %58 = vector.broadcast %cst_29 : f32 to vector<6x10x1x8xf32>
    %59 = tpu.concatenate %58, %57, %58 in 2 : vector<6x10x1x8xf32>, vector<6x10x8x8xf32>, vector<6x10x1x8xf32> -> vector<6x10x10x8xf32>
    %60 = vector.extract_strided_slice %59 {offsets = [0, 0, 0, 0], sizes = [6, 10, 8, 8], strides = [1, 1, 1, 1]} : vector<6x10x10x8xf32> to vector<6x10x8x8xf32>
    %61 = vector.extract_strided_slice %59 {offsets = [0, 0, 1, 0], sizes = [6, 10, 8, 8], strides = [1, 1, 1, 1]} : vector<6x10x10x8xf32> to vector<6x10x8x8xf32>
    %62 = vector.extract_strided_slice %59 {offsets = [0, 0, 2, 0], sizes = [6, 10, 8, 8], strides = [1, 1, 1, 1]} : vector<6x10x10x8xf32> to vector<6x10x8x8xf32>
    %63 = tpu.concatenate %60, %61, %62 in 3 : vector<6x10x8x8xf32>, vector<6x10x8x8xf32>, vector<6x10x8x8xf32> -> vector<6x10x8x24xf32>
    %64 = arith.truncf %63 : vector<6x10x8x24xf32> to vector<6x10x8x24xbf16>
    %cst_30 = arith.constant 0.000000e+00 : f32
    %65 = vector.broadcast %cst_30 : f32 to vector<256x8xf32>
    %66 = vector.extract_strided_slice %64 {offsets = [0, 0, 0, 0], sizes = [4, 8, 8, 24], strides = [1, 1, 1, 1]} : vector<6x10x8x24xbf16> to vector<4x8x8x24xbf16>
    %67 = vector.shape_cast %66 : vector<4x8x8x24xbf16> to vector<256x24xbf16>
    %c0_31 = arith.constant 0 : index
    %c0_32 = arith.constant 0 : index
    %c0_33 = arith.constant 0 : index
    %c0_34 = arith.constant 0 : index
    %68 = vector.load %arg5[%c0_31, %c0_32, %c0_33, %c0_34] : memref<3x3x24x8xbf16, #tpu.memory_space<vmem>>, vector<1x1x24x8xbf16>
    %69 = vector.shape_cast %68 : vector<1x1x24x8xbf16> to vector<24x8xbf16>
    %cst_35 = arith.constant dense<0.000000e+00> : vector<256x8xf32>
    %70 = tpu.matmul %67, %69, %cst_35 {dimension_numbers = #tpu.dot_dimension_numbers<[1], [0], [0], [1], [0, 0, 1, 1], [], []>} : vector<256x24xbf16>, vector<24x8xbf16>, vector<256x8xf32> -> vector<256x8xf32>
    %71 = arith.addf %65, %70 : vector<256x8xf32>
    %72 = vector.extract_strided_slice %64 {offsets = [0, 1, 0, 0], sizes = [4, 8, 8, 24], strides = [1, 1, 1, 1]} : vector<6x10x8x24xbf16> to vector<4x8x8x24xbf16>
    %73 = vector.shape_cast %72 : vector<4x8x8x24xbf16> to vector<256x24xbf16>
    %c0_36 = arith.constant 0 : index
    %c1 = arith.constant 1 : index
    %c0_37 = arith.constant 0 : index
    %c0_38 = arith.constant 0 : index
    %74 = vector.load %arg5[%c0_36, %c1, %c0_37, %c0_38] : memref<3x3x24x8xbf16, #tpu.memory_space<vmem>>, vector<1x1x24x8xbf16>
    %75 = vector.shape_cast %74 : vector<1x1x24x8xbf16> to vector<24x8xbf16>
    %cst_39 = arith.constant dense<0.000000e+00> : vector<256x8xf32>
    %76 = tpu.matmul %73, %75, %cst_39 {dimension_numbers = #tpu.dot_dimension_numbers<[1], [0], [0], [1], [0, 0, 1, 1], [], []>} : vector<256x24xbf16>, vector<24x8xbf16>, vector<256x8xf32> -> vector<256x8xf32>
    %77 = arith.addf %71, %76 : vector<256x8xf32>
    %78 = vector.extract_strided_slice %64 {offsets = [0, 2, 0, 0], sizes = [4, 8, 8, 24], strides = [1, 1, 1, 1]} : vector<6x10x8x24xbf16> to vector<4x8x8x24xbf16>
    %79 = vector.shape_cast %78 : vector<4x8x8x24xbf16> to vector<256x24xbf16>
    %c0_40 = arith.constant 0 : index
    %c2 = arith.constant 2 : index
    %c0_41 = arith.constant 0 : index
    %c0_42 = arith.constant 0 : index
    %80 = vector.load %arg5[%c0_40, %c2, %c0_41, %c0_42] : memref<3x3x24x8xbf16, #tpu.memory_space<vmem>>, vector<1x1x24x8xbf16>
    %81 = vector.shape_cast %80 : vector<1x1x24x8xbf16> to vector<24x8xbf16>
    %cst_43 = arith.constant dense<0.000000e+00> : vector<256x8xf32>
    %82 = tpu.matmul %79, %81, %cst_43 {dimension_numbers = #tpu.dot_dimension_numbers<[1], [0], [0], [1], [0, 0, 1, 1], [], []>} : vector<256x24xbf16>, vector<24x8xbf16>, vector<256x8xf32> -> vector<256x8xf32>
    %83 = arith.addf %77, %82 : vector<256x8xf32>
    %84 = vector.extract_strided_slice %64 {offsets = [1, 0, 0, 0], sizes = [4, 8, 8, 24], strides = [1, 1, 1, 1]} : vector<6x10x8x24xbf16> to vector<4x8x8x24xbf16>
    %85 = vector.shape_cast %84 : vector<4x8x8x24xbf16> to vector<256x24xbf16>
    %c1_44 = arith.constant 1 : index
    %c0_45 = arith.constant 0 : index
    %c0_46 = arith.constant 0 : index
    %c0_47 = arith.constant 0 : index
    %86 = vector.load %arg5[%c1_44, %c0_45, %c0_46, %c0_47] : memref<3x3x24x8xbf16, #tpu.memory_space<vmem>>, vector<1x1x24x8xbf16>
    %87 = vector.shape_cast %86 : vector<1x1x24x8xbf16> to vector<24x8xbf16>
    %cst_48 = arith.constant dense<0.000000e+00> : vector<256x8xf32>
    %88 = tpu.matmul %85, %87, %cst_48 {dimension_numbers = #tpu.dot_dimension_numbers<[1], [0], [0], [1], [0, 0, 1, 1], [], []>} : vector<256x24xbf16>, vector<24x8xbf16>, vector<256x8xf32> -> vector<256x8xf32>
    %89 = arith.addf %83, %88 : vector<256x8xf32>
    %90 = vector.extract_strided_slice %64 {offsets = [1, 1, 0, 0], sizes = [4, 8, 8, 24], strides = [1, 1, 1, 1]} : vector<6x10x8x24xbf16> to vector<4x8x8x24xbf16>
    %91 = vector.shape_cast %90 : vector<4x8x8x24xbf16> to vector<256x24xbf16>
    %c1_49 = arith.constant 1 : index
    %c1_50 = arith.constant 1 : index
    %c0_51 = arith.constant 0 : index
    %c0_52 = arith.constant 0 : index
    %92 = vector.load %arg5[%c1_49, %c1_50, %c0_51, %c0_52] : memref<3x3x24x8xbf16, #tpu.memory_space<vmem>>, vector<1x1x24x8xbf16>
    %93 = vector.shape_cast %92 : vector<1x1x24x8xbf16> to vector<24x8xbf16>
    %cst_53 = arith.constant dense<0.000000e+00> : vector<256x8xf32>
    %94 = tpu.matmul %91, %93, %cst_53 {dimension_numbers = #tpu.dot_dimension_numbers<[1], [0], [0], [1], [0, 0, 1, 1], [], []>} : vector<256x24xbf16>, vector<24x8xbf16>, vector<256x8xf32> -> vector<256x8xf32>
    %95 = arith.addf %89, %94 : vector<256x8xf32>
    %96 = vector.extract_strided_slice %64 {offsets = [1, 2, 0, 0], sizes = [4, 8, 8, 24], strides = [1, 1, 1, 1]} : vector<6x10x8x24xbf16> to vector<4x8x8x24xbf16>
    %97 = vector.shape_cast %96 : vector<4x8x8x24xbf16> to vector<256x24xbf16>
    %c1_54 = arith.constant 1 : index
    %c2_55 = arith.constant 2 : index
    %c0_56 = arith.constant 0 : index
    %c0_57 = arith.constant 0 : index
    %98 = vector.load %arg5[%c1_54, %c2_55, %c0_56, %c0_57] : memref<3x3x24x8xbf16, #tpu.memory_space<vmem>>, vector<1x1x24x8xbf16>
    %99 = vector.shape_cast %98 : vector<1x1x24x8xbf16> to vector<24x8xbf16>
    %cst_58 = arith.constant dense<0.000000e+00> : vector<256x8xf32>
    %100 = tpu.matmul %97, %99, %cst_58 {dimension_numbers = #tpu.dot_dimension_numbers<[1], [0], [0], [1], [0, 0, 1, 1], [], []>} : vector<256x24xbf16>, vector<24x8xbf16>, vector<256x8xf32> -> vector<256x8xf32>
    %101 = arith.addf %95, %100 : vector<256x8xf32>
    %102 = vector.extract_strided_slice %64 {offsets = [2, 0, 0, 0], sizes = [4, 8, 8, 24], strides = [1, 1, 1, 1]} : vector<6x10x8x24xbf16> to vector<4x8x8x24xbf16>
    %103 = vector.shape_cast %102 : vector<4x8x8x24xbf16> to vector<256x24xbf16>
    %c2_59 = arith.constant 2 : index
    %c0_60 = arith.constant 0 : index
    %c0_61 = arith.constant 0 : index
    %c0_62 = arith.constant 0 : index
    %104 = vector.load %arg5[%c2_59, %c0_60, %c0_61, %c0_62] : memref<3x3x24x8xbf16, #tpu.memory_space<vmem>>, vector<1x1x24x8xbf16>
    %105 = vector.shape_cast %104 : vector<1x1x24x8xbf16> to vector<24x8xbf16>
    %cst_63 = arith.constant dense<0.000000e+00> : vector<256x8xf32>
    %106 = tpu.matmul %103, %105, %cst_63 {dimension_numbers = #tpu.dot_dimension_numbers<[1], [0], [0], [1], [0, 0, 1, 1], [], []>} : vector<256x24xbf16>, vector<24x8xbf16>, vector<256x8xf32> -> vector<256x8xf32>
    %107 = arith.addf %101, %106 : vector<256x8xf32>
    %108 = vector.extract_strided_slice %64 {offsets = [2, 1, 0, 0], sizes = [4, 8, 8, 24], strides = [1, 1, 1, 1]} : vector<6x10x8x24xbf16> to vector<4x8x8x24xbf16>
    %109 = vector.shape_cast %108 : vector<4x8x8x24xbf16> to vector<256x24xbf16>
    %c2_64 = arith.constant 2 : index
    %c1_65 = arith.constant 1 : index
    %c0_66 = arith.constant 0 : index
    %c0_67 = arith.constant 0 : index
    %110 = vector.load %arg5[%c2_64, %c1_65, %c0_66, %c0_67] : memref<3x3x24x8xbf16, #tpu.memory_space<vmem>>, vector<1x1x24x8xbf16>
    %111 = vector.shape_cast %110 : vector<1x1x24x8xbf16> to vector<24x8xbf16>
    %cst_68 = arith.constant dense<0.000000e+00> : vector<256x8xf32>
    %112 = tpu.matmul %109, %111, %cst_68 {dimension_numbers = #tpu.dot_dimension_numbers<[1], [0], [0], [1], [0, 0, 1, 1], [], []>} : vector<256x24xbf16>, vector<24x8xbf16>, vector<256x8xf32> -> vector<256x8xf32>
    %113 = arith.addf %107, %112 : vector<256x8xf32>
    %114 = vector.extract_strided_slice %64 {offsets = [2, 2, 0, 0], sizes = [4, 8, 8, 24], strides = [1, 1, 1, 1]} : vector<6x10x8x24xbf16> to vector<4x8x8x24xbf16>
    %115 = vector.shape_cast %114 : vector<4x8x8x24xbf16> to vector<256x24xbf16>
    %c2_69 = arith.constant 2 : index
    %c2_70 = arith.constant 2 : index
    %c0_71 = arith.constant 0 : index
    %c0_72 = arith.constant 0 : index
    %116 = vector.load %arg5[%c2_69, %c2_70, %c0_71, %c0_72] : memref<3x3x24x8xbf16, #tpu.memory_space<vmem>>, vector<1x1x24x8xbf16>
    %117 = vector.shape_cast %116 : vector<1x1x24x8xbf16> to vector<24x8xbf16>
    %cst_73 = arith.constant dense<0.000000e+00> : vector<256x8xf32>
    %118 = tpu.matmul %115, %117, %cst_73 {dimension_numbers = #tpu.dot_dimension_numbers<[1], [0], [0], [1], [0, 0, 1, 1], [], []>} : vector<256x24xbf16>, vector<24x8xbf16>, vector<256x8xf32> -> vector<256x8xf32>
    %119 = arith.addf %113, %118 : vector<256x8xf32>
    %120 = vector.shape_cast %119 : vector<256x8xf32> to vector<32x8x8xf32>
    %cst_74 = arith.constant dense<0.000000e+00> : vector<8x8xf32>
    %121 = vector.multi_reduction <add>, %120, %cst_74 [0] : vector<32x8x8xf32> to vector<8x8xf32>
    %122 = vector.shape_cast %121 : vector<8x8xf32> to vector<1x1x8x8xf32>
    %c0_75 = arith.constant 0 : index
    %c0_76 = arith.constant 0 : index
    %c0_77 = arith.constant 0 : index
    %c0_78 = arith.constant 0 : index
    %123 = vector.load %arg9[%c0_75, %c0_76, %c0_77, %c0_78] : memref<1x1x8x8xf32, #tpu.memory_space<vmem>>, vector<1x1x8x8xf32>
    tpu.vector_store %arg9[%c0_75, %c0_76, %c0_77, %c0_78], %122 {strides = array<i32>} : memref<1x1x8x8xf32, #tpu.memory_space<vmem>>, vector<1x1x8x8xf32>,
    %124 = arith.mulf %120, %120 : vector<32x8x8xf32>
    %cst_79 = arith.constant dense<0.000000e+00> : vector<8x8xf32>
    %125 = vector.multi_reduction <add>, %124, %cst_79 [0] : vector<32x8x8xf32> to vector<8x8xf32>
    %126 = vector.shape_cast %125 : vector<8x8xf32> to vector<1x1x8x8xf32>
    %c0_80 = arith.constant 0 : index
    %c0_81 = arith.constant 0 : index
    %c0_82 = arith.constant 0 : index
    %c0_83 = arith.constant 0 : index
    %127 = vector.load %arg10[%c0_80, %c0_81, %c0_82, %c0_83] : memref<1x1x8x8xf32, #tpu.memory_space<vmem>>, vector<1x1x8x8xf32>
    tpu.vector_store %arg10[%c0_80, %c0_81, %c0_82, %c0_83], %126 {strides = array<i32>} : memref<1x1x8x8xf32, #tpu.memory_space<vmem>>, vector<1x1x8x8xf32>,
    %128 = vector.shape_cast %119 : vector<256x8xf32> to vector<1x4x8x8x8xf32>
    %129 = arith.truncf %128 : vector<1x4x8x8x8xf32> to vector<1x4x8x8x8xbf16>
    %c0_84 = arith.constant 0 : index
    %c0_85 = arith.constant 0 : index
    %c0_86 = arith.constant 0 : index
    %c0_87 = arith.constant 0 : index
    %c0_88 = arith.constant 0 : index
    %130 = vector.load %arg8[%c0_84, %c0_85, %c0_86, %c0_87, %c0_88] : memref<1x4x8x8x8xbf16, #tpu.memory_space<vmem>>, vector<1x4x8x8x8xbf16>
    tpu.vector_store %arg8[%c0_84, %c0_85, %c0_86, %c0_87, %c0_88], %129 {strides = array<i32>} : memref<1x4x8x8x8xbf16, #tpu.memory_space<vmem>>, vector<1x4x8x8x8xbf16>,
    return
  }
  func.func @transform_0(%arg0: i32, %arg1: i32) -> (i32, i32, i32, i32, i32) {
    %c0_i32 = arith.constant 0 : i32
    %c0_i32_0 = arith.constant 0 : i32
    %c0_i32_1 = arith.constant 0 : i32
    %c0_i32_2 = arith.constant 0 : i32
    return %arg0, %arg1, %c0_i32, %c0_i32_0, %c0_i32_1 : i32, i32, i32, i32, i32
  }
  func.func @transform_1(%arg0: i32, %arg1: i32) -> (i32, i32, i32, i32, i32) {
    %c4_i32 = arith.constant 4 : i32
    %0 = arith.muli %arg1, %c4_i32 : i32
    %c1_i32 = arith.constant 1 : i32
    %1 = arith.subi %0, %c1_i32 : i32
    %c0_i32 = arith.constant 0 : i32
    %2 = arith.maxsi %1, %c0_i32 : i32
    %c0_i32_0 = arith.constant 0 : i32
    %c0_i32_1 = arith.constant 0 : i32
    %c0_i32_2 = arith.constant 0 : i32
    %c0_i32_3 = arith.constant 0 : i32
    return %arg0, %2, %c0_i32_0, %c0_i32_1, %c0_i32_2 : i32, i32, i32, i32, i32
  }
  func.func @transform_2(%arg0: i32, %arg1: i32) -> (i32, i32, i32, i32, i32) {
    %c1_i32 = arith.constant 1 : i32
    %0 = arith.addi %arg1, %c1_i32 : i32
    %c4_i32 = arith.constant 4 : i32
    %1 = arith.muli %0, %c4_i32 : i32
    %c7_i32 = arith.constant 7 : i32
    %2 = arith.minsi %1, %c7_i32 : i32
    %c0_i32 = arith.constant 0 : i32
    %c0_i32_0 = arith.constant 0 : i32
    %c0_i32_1 = arith.constant 0 : i32
    %c0_i32_2 = arith.constant 0 : i32
    return %arg0, %2, %c0_i32, %c0_i32_0, %c0_i32_1 : i32, i32, i32, i32, i32
  }
  func.func @transform_3(%arg0: i32, %arg1: i32) -> (i32, i32, i32, i32) {
    %c0_i32 = arith.constant 0 : i32
    %c0_i32_0 = arith.constant 0 : i32
    %c0_i32_1 = arith.constant 0 : i32
    %c0_i32_2 = arith.constant 0 : i32
    %c0_i32_3 = arith.constant 0 : i32
    return %c0_i32, %c0_i32_0, %c0_i32_1, %c0_i32_2 : i32, i32, i32, i32
  }
  func.func @transform_4(%arg0: i32, %arg1: i32) -> (i32, i32) {
    %c0_i32 = arith.constant 0 : i32
    %c0_i32_0 = arith.constant 0 : i32
    %c0_i32_1 = arith.constant 0 : i32
    return %c0_i32, %c0_i32_0 : i32, i32
  }
  func.func @transform_5(%arg0: i32, %arg1: i32) -> (i32, i32) {
    %c0_i32 = arith.constant 0 : i32
    %c0_i32_0 = arith.constant 0 : i32
    %c0_i32_1 = arith.constant 0 : i32
    return %c0_i32, %c0_i32_0 : i32, i32
  }
  func.func @transform_6(%arg0: i32, %arg1: i32) -> (i32, i32, i32, i32, i32) {
    %c0_i32 = arith.constant 0 : i32
    %c0_i32_0 = arith.constant 0 : i32
    %c0_i32_1 = arith.constant 0 : i32
    %c0_i32_2 = arith.constant 0 : i32
    return %arg0, %arg1, %c0_i32, %c0_i32_0, %c0_i32_1 : i32, i32, i32, i32, i32
  }
  func.func @transform_7(%arg0: i32, %arg1: i32) -> (i32, i32, i32, i32) {
    %c0_i32 = arith.constant 0 : i32
    %c0_i32_0 = arith.constant 0 : i32
    %c0_i32_1 = arith.constant 0 : i32
    return %arg0, %arg1, %c0_i32, %c0_i32_0 : i32, i32, i32, i32
  }
  func.func @transform_8(%arg0: i32, %arg1: i32) -> (i32, i32, i32, i32) {
    %c0_i32 = arith.constant 0 : i32
    %c0_i32_0 = arith.constant 0 : i32
    %c0_i32_1 = arith.constant 0 : i32
    return %arg0, %arg1, %c0_i32, %c0_i32_0 : i32, i32, i32, i32
  }
}

module attributes {stable_mosaic.version = 11 : i64} {
  func.func @_conv_bn_kernel(%arg0: i32, %arg1: i32, %arg2: memref<1x4x8x8x4xf32, #tpu.memory_space<vmem>>, %arg3: memref<1x1x8x8x4xf32, #tpu.memory_space<vmem>>, %arg4: memref<1x1x8x8x4xf32, #tpu.memory_space<vmem>>, %arg5: memref<3x3x12x8xbf16, #tpu.memory_space<vmem>>, %arg6: memref<1x4xf32, #tpu.memory_space<vmem>>, %arg7: memref<1x4xf32, #tpu.memory_space<vmem>>, %arg8: memref<1x4x8x8x8xbf16, #tpu.memory_space<vmem>>, %arg9: memref<1x1x8x8xf32, #tpu.memory_space<vmem>>, %arg10: memref<1x1x8x8xf32, #tpu.memory_space<vmem>>) attributes {dimension_semantics = [#tpu.dimension_semantics<parallel>, #tpu.dimension_semantics<parallel>], iteration_bounds = array<i64: 2, 2>, scalar_prefetch = 0 : i64, scratch_operands = 0 : i64, tpu.core_type = #tpu.core_type<tc>, window_params = [{transform_indices = @transform_0, window_bounds = array<i64: 1, 4, 8, 8, 4>}, {transform_indices = @transform_1, window_bounds = array<i64: 1, 1, 8, 8, 4>}, {transform_indices = @transform_2, window_bounds = array<i64: 1, 1, 8, 8, 4>}, {pipeline_mode = #tpu.pipeline_mode<synchronous>, transform_indices = @transform_3, window_bounds = array<i64: 3, 3, 12, 8>}, {pipeline_mode = #tpu.pipeline_mode<synchronous>, transform_indices = @transform_4, window_bounds = array<i64: 1, 4>}, {pipeline_mode = #tpu.pipeline_mode<synchronous>, transform_indices = @transform_5, window_bounds = array<i64: 1, 4>}, {transform_indices = @transform_6, window_bounds = array<i64: 1, 4, 8, 8, 8>}, {transform_indices = @transform_7, window_bounds = array<i64: 1, 1, 8, 8>}, {transform_indices = @transform_8, window_bounds = array<i64: 1, 1, 8, 8>}]} {
    %c0 = arith.constant 0 : index
    %c0_0 = arith.constant 0 : index
    %c0_1 = arith.constant 0 : index
    %c0_2 = arith.constant 0 : index
    %c0_3 = arith.constant 0 : index
    %0 = vector.load %arg3[%c0, %c0_0, %c0_1, %c0_2, %c0_3] : memref<1x1x8x8x4xf32, #tpu.memory_space<vmem>>, vector<1x1x8x8x4xf32>
    %1 = vector.shape_cast %0 : vector<1x1x8x8x4xf32> to vector<1x8x8x4xf32>
    %c0_i32 = arith.constant 0 : i32
    %2 = arith.cmpi sgt, %arg1, %c0_i32 : i32
    %3 = arith.extui %2 : i1 to i32
    %4 = arith.sitofp %3 : i32 to f32
    %5 = vector.broadcast %4 : f32 to vector<1x8x8x4xf32>
    %6 = arith.mulf %1, %5 : vector<1x8x8x4xf32>
    %c0_4 = arith.constant 0 : index
    %c0_5 = arith.constant 0 : index
    %c0_6 = arith.constant 0 : index
    %c0_7 = arith.constant 0 : index
    %c0_8 = arith.constant 0 : index
    %7 = vector.load %arg4[%c0_4, %c0_5, %c0_6, %c0_7, %c0_8] : memref<1x1x8x8x4xf32, #tpu.memory_space<vmem>>, vector<1x1x8x8x4xf32>
    %8 = vector.shape_cast %7 : vector<1x1x8x8x4xf32> to vector<1x8x8x4xf32>
    %c1_i32 = arith.constant 1 : i32
    %9 = arith.cmpi slt, %arg1, %c1_i32 : i32
    %10 = arith.extui %9 : i1 to i32
    %11 = arith.sitofp %10 : i32 to f32
    %12 = vector.broadcast %11 : f32 to vector<1x8x8x4xf32>
    %13 = arith.mulf %8, %12 : vector<1x8x8x4xf32>
    %c0_9 = arith.constant 0 : index
    %c0_10 = arith.constant 0 : index
    %c0_11 = arith.constant 0 : index
    %c0_12 = arith.constant 0 : index
    %c0_13 = arith.constant 0 : index
    %14 = vector.load %arg2[%c0_9, %c0_10, %c0_11, %c0_12, %c0_13] : memref<1x4x8x8x4xf32, #tpu.memory_space<vmem>>, vector<1x4x8x8x4xf32>
    %15 = vector.shape_cast %14 : vector<1x4x8x8x4xf32> to vector<4x8x8x4xf32>
    %16 = tpu.concatenate %6, %15, %13 in 0 : vector<1x8x8x4xf32>, vector<4x8x8x4xf32>, vector<1x8x8x4xf32> -> vector<6x8x8x4xf32>
    %cst = arith.constant 0.000000e+00 : f32
    %17 = vector.broadcast %cst : f32 to vector<6x1x8x4xf32>
    %18 = tpu.concatenate %17, %16, %17 in 1 : vector<6x1x8x4xf32>, vector<6x8x8x4xf32>, vector<6x1x8x4xf32> -> vector<6x10x8x4xf32>
    %cst_14 = arith.constant 0.000000e+00 : f32
    %19 = vector.broadcast %cst_14 : f32 to vector<6x10x1x4xf32>
    %20 = tpu.concatenate %19, %18, %19 in 2 : vector<6x10x1x4xf32>, vector<6x10x8x4xf32>, vector<6x10x1x4xf32> -> vector<6x10x10x4xf32>
    %21 = vector.extract_strided_slice %20 {offsets = [0, 0, 0, 0], sizes = [6, 10, 8, 4], strides = [1, 1, 1, 1]} : vector<6x10x10x4xf32> to vector<6x10x8x4xf32>
    %22 = vector.extract_strided_slice %20 {offsets = [0, 0, 1, 0], sizes = [6, 10, 8, 4], strides = [1, 1, 1, 1]} : vector<6x10x10x4xf32> to vector<6x10x8x4xf32>
    %23 = vector.extract_strided_slice %20 {offsets = [0, 0, 2, 0], sizes = [6, 10, 8, 4], strides = [1, 1, 1, 1]} : vector<6x10x10x4xf32> to vector<6x10x8x4xf32>
    %24 = tpu.concatenate %21, %22, %23 in 3 : vector<6x10x8x4xf32>, vector<6x10x8x4xf32>, vector<6x10x8x4xf32> -> vector<6x10x8x12xf32>
    %25 = arith.truncf %24 : vector<6x10x8x12xf32> to vector<6x10x8x12xbf16>
    %cst_15 = arith.constant 0.000000e+00 : f32
    %26 = vector.broadcast %cst_15 : f32 to vector<256x8xf32>
    %27 = vector.extract_strided_slice %25 {offsets = [0, 0, 0, 0], sizes = [4, 8, 8, 12], strides = [1, 1, 1, 1]} : vector<6x10x8x12xbf16> to vector<4x8x8x12xbf16>
    %28 = vector.shape_cast %27 : vector<4x8x8x12xbf16> to vector<256x12xbf16>
    %c0_16 = arith.constant 0 : index
    %c0_17 = arith.constant 0 : index
    %c0_18 = arith.constant 0 : index
    %c0_19 = arith.constant 0 : index
    %29 = vector.load %arg5[%c0_16, %c0_17, %c0_18, %c0_19] : memref<3x3x12x8xbf16, #tpu.memory_space<vmem>>, vector<1x1x12x8xbf16>
    %30 = vector.shape_cast %29 : vector<1x1x12x8xbf16> to vector<12x8xbf16>
    %cst_20 = arith.constant dense<0.000000e+00> : vector<256x8xf32>
    %31 = tpu.matmul %28, %30, %cst_20 {dimension_numbers = #tpu.dot_dimension_numbers<[1], [0], [0], [1], [0, 0, 1, 1], [], []>} : vector<256x12xbf16>, vector<12x8xbf16>, vector<256x8xf32> -> vector<256x8xf32>
    %32 = arith.addf %26, %31 : vector<256x8xf32>
    %33 = vector.extract_strided_slice %25 {offsets = [0, 1, 0, 0], sizes = [4, 8, 8, 12], strides = [1, 1, 1, 1]} : vector<6x10x8x12xbf16> to vector<4x8x8x12xbf16>
    %34 = vector.shape_cast %33 : vector<4x8x8x12xbf16> to vector<256x12xbf16>
    %c0_21 = arith.constant 0 : index
    %c1 = arith.constant 1 : index
    %c0_22 = arith.constant 0 : index
    %c0_23 = arith.constant 0 : index
    %35 = vector.load %arg5[%c0_21, %c1, %c0_22, %c0_23] : memref<3x3x12x8xbf16, #tpu.memory_space<vmem>>, vector<1x1x12x8xbf16>
    %36 = vector.shape_cast %35 : vector<1x1x12x8xbf16> to vector<12x8xbf16>
    %cst_24 = arith.constant dense<0.000000e+00> : vector<256x8xf32>
    %37 = tpu.matmul %34, %36, %cst_24 {dimension_numbers = #tpu.dot_dimension_numbers<[1], [0], [0], [1], [0, 0, 1, 1], [], []>} : vector<256x12xbf16>, vector<12x8xbf16>, vector<256x8xf32> -> vector<256x8xf32>
    %38 = arith.addf %32, %37 : vector<256x8xf32>
    %39 = vector.extract_strided_slice %25 {offsets = [0, 2, 0, 0], sizes = [4, 8, 8, 12], strides = [1, 1, 1, 1]} : vector<6x10x8x12xbf16> to vector<4x8x8x12xbf16>
    %40 = vector.shape_cast %39 : vector<4x8x8x12xbf16> to vector<256x12xbf16>
    %c0_25 = arith.constant 0 : index
    %c2 = arith.constant 2 : index
    %c0_26 = arith.constant 0 : index
    %c0_27 = arith.constant 0 : index
    %41 = vector.load %arg5[%c0_25, %c2, %c0_26, %c0_27] : memref<3x3x12x8xbf16, #tpu.memory_space<vmem>>, vector<1x1x12x8xbf16>
    %42 = vector.shape_cast %41 : vector<1x1x12x8xbf16> to vector<12x8xbf16>
    %cst_28 = arith.constant dense<0.000000e+00> : vector<256x8xf32>
    %43 = tpu.matmul %40, %42, %cst_28 {dimension_numbers = #tpu.dot_dimension_numbers<[1], [0], [0], [1], [0, 0, 1, 1], [], []>} : vector<256x12xbf16>, vector<12x8xbf16>, vector<256x8xf32> -> vector<256x8xf32>
    %44 = arith.addf %38, %43 : vector<256x8xf32>
    %45 = vector.extract_strided_slice %25 {offsets = [1, 0, 0, 0], sizes = [4, 8, 8, 12], strides = [1, 1, 1, 1]} : vector<6x10x8x12xbf16> to vector<4x8x8x12xbf16>
    %46 = vector.shape_cast %45 : vector<4x8x8x12xbf16> to vector<256x12xbf16>
    %c1_29 = arith.constant 1 : index
    %c0_30 = arith.constant 0 : index
    %c0_31 = arith.constant 0 : index
    %c0_32 = arith.constant 0 : index
    %47 = vector.load %arg5[%c1_29, %c0_30, %c0_31, %c0_32] : memref<3x3x12x8xbf16, #tpu.memory_space<vmem>>, vector<1x1x12x8xbf16>
    %48 = vector.shape_cast %47 : vector<1x1x12x8xbf16> to vector<12x8xbf16>
    %cst_33 = arith.constant dense<0.000000e+00> : vector<256x8xf32>
    %49 = tpu.matmul %46, %48, %cst_33 {dimension_numbers = #tpu.dot_dimension_numbers<[1], [0], [0], [1], [0, 0, 1, 1], [], []>} : vector<256x12xbf16>, vector<12x8xbf16>, vector<256x8xf32> -> vector<256x8xf32>
    %50 = arith.addf %44, %49 : vector<256x8xf32>
    %51 = vector.extract_strided_slice %25 {offsets = [1, 1, 0, 0], sizes = [4, 8, 8, 12], strides = [1, 1, 1, 1]} : vector<6x10x8x12xbf16> to vector<4x8x8x12xbf16>
    %52 = vector.shape_cast %51 : vector<4x8x8x12xbf16> to vector<256x12xbf16>
    %c1_34 = arith.constant 1 : index
    %c1_35 = arith.constant 1 : index
    %c0_36 = arith.constant 0 : index
    %c0_37 = arith.constant 0 : index
    %53 = vector.load %arg5[%c1_34, %c1_35, %c0_36, %c0_37] : memref<3x3x12x8xbf16, #tpu.memory_space<vmem>>, vector<1x1x12x8xbf16>
    %54 = vector.shape_cast %53 : vector<1x1x12x8xbf16> to vector<12x8xbf16>
    %cst_38 = arith.constant dense<0.000000e+00> : vector<256x8xf32>
    %55 = tpu.matmul %52, %54, %cst_38 {dimension_numbers = #tpu.dot_dimension_numbers<[1], [0], [0], [1], [0, 0, 1, 1], [], []>} : vector<256x12xbf16>, vector<12x8xbf16>, vector<256x8xf32> -> vector<256x8xf32>
    %56 = arith.addf %50, %55 : vector<256x8xf32>
    %57 = vector.extract_strided_slice %25 {offsets = [1, 2, 0, 0], sizes = [4, 8, 8, 12], strides = [1, 1, 1, 1]} : vector<6x10x8x12xbf16> to vector<4x8x8x12xbf16>
    %58 = vector.shape_cast %57 : vector<4x8x8x12xbf16> to vector<256x12xbf16>
    %c1_39 = arith.constant 1 : index
    %c2_40 = arith.constant 2 : index
    %c0_41 = arith.constant 0 : index
    %c0_42 = arith.constant 0 : index
    %59 = vector.load %arg5[%c1_39, %c2_40, %c0_41, %c0_42] : memref<3x3x12x8xbf16, #tpu.memory_space<vmem>>, vector<1x1x12x8xbf16>
    %60 = vector.shape_cast %59 : vector<1x1x12x8xbf16> to vector<12x8xbf16>
    %cst_43 = arith.constant dense<0.000000e+00> : vector<256x8xf32>
    %61 = tpu.matmul %58, %60, %cst_43 {dimension_numbers = #tpu.dot_dimension_numbers<[1], [0], [0], [1], [0, 0, 1, 1], [], []>} : vector<256x12xbf16>, vector<12x8xbf16>, vector<256x8xf32> -> vector<256x8xf32>
    %62 = arith.addf %56, %61 : vector<256x8xf32>
    %63 = vector.extract_strided_slice %25 {offsets = [2, 0, 0, 0], sizes = [4, 8, 8, 12], strides = [1, 1, 1, 1]} : vector<6x10x8x12xbf16> to vector<4x8x8x12xbf16>
    %64 = vector.shape_cast %63 : vector<4x8x8x12xbf16> to vector<256x12xbf16>
    %c2_44 = arith.constant 2 : index
    %c0_45 = arith.constant 0 : index
    %c0_46 = arith.constant 0 : index
    %c0_47 = arith.constant 0 : index
    %65 = vector.load %arg5[%c2_44, %c0_45, %c0_46, %c0_47] : memref<3x3x12x8xbf16, #tpu.memory_space<vmem>>, vector<1x1x12x8xbf16>
    %66 = vector.shape_cast %65 : vector<1x1x12x8xbf16> to vector<12x8xbf16>
    %cst_48 = arith.constant dense<0.000000e+00> : vector<256x8xf32>
    %67 = tpu.matmul %64, %66, %cst_48 {dimension_numbers = #tpu.dot_dimension_numbers<[1], [0], [0], [1], [0, 0, 1, 1], [], []>} : vector<256x12xbf16>, vector<12x8xbf16>, vector<256x8xf32> -> vector<256x8xf32>
    %68 = arith.addf %62, %67 : vector<256x8xf32>
    %69 = vector.extract_strided_slice %25 {offsets = [2, 1, 0, 0], sizes = [4, 8, 8, 12], strides = [1, 1, 1, 1]} : vector<6x10x8x12xbf16> to vector<4x8x8x12xbf16>
    %70 = vector.shape_cast %69 : vector<4x8x8x12xbf16> to vector<256x12xbf16>
    %c2_49 = arith.constant 2 : index
    %c1_50 = arith.constant 1 : index
    %c0_51 = arith.constant 0 : index
    %c0_52 = arith.constant 0 : index
    %71 = vector.load %arg5[%c2_49, %c1_50, %c0_51, %c0_52] : memref<3x3x12x8xbf16, #tpu.memory_space<vmem>>, vector<1x1x12x8xbf16>
    %72 = vector.shape_cast %71 : vector<1x1x12x8xbf16> to vector<12x8xbf16>
    %cst_53 = arith.constant dense<0.000000e+00> : vector<256x8xf32>
    %73 = tpu.matmul %70, %72, %cst_53 {dimension_numbers = #tpu.dot_dimension_numbers<[1], [0], [0], [1], [0, 0, 1, 1], [], []>} : vector<256x12xbf16>, vector<12x8xbf16>, vector<256x8xf32> -> vector<256x8xf32>
    %74 = arith.addf %68, %73 : vector<256x8xf32>
    %75 = vector.extract_strided_slice %25 {offsets = [2, 2, 0, 0], sizes = [4, 8, 8, 12], strides = [1, 1, 1, 1]} : vector<6x10x8x12xbf16> to vector<4x8x8x12xbf16>
    %76 = vector.shape_cast %75 : vector<4x8x8x12xbf16> to vector<256x12xbf16>
    %c2_54 = arith.constant 2 : index
    %c2_55 = arith.constant 2 : index
    %c0_56 = arith.constant 0 : index
    %c0_57 = arith.constant 0 : index
    %77 = vector.load %arg5[%c2_54, %c2_55, %c0_56, %c0_57] : memref<3x3x12x8xbf16, #tpu.memory_space<vmem>>, vector<1x1x12x8xbf16>
    %78 = vector.shape_cast %77 : vector<1x1x12x8xbf16> to vector<12x8xbf16>
    %cst_58 = arith.constant dense<0.000000e+00> : vector<256x8xf32>
    %79 = tpu.matmul %76, %78, %cst_58 {dimension_numbers = #tpu.dot_dimension_numbers<[1], [0], [0], [1], [0, 0, 1, 1], [], []>} : vector<256x12xbf16>, vector<12x8xbf16>, vector<256x8xf32> -> vector<256x8xf32>
    %80 = arith.addf %74, %79 : vector<256x8xf32>
    %81 = vector.shape_cast %80 : vector<256x8xf32> to vector<32x8x8xf32>
    %cst_59 = arith.constant dense<0.000000e+00> : vector<8x8xf32>
    %82 = vector.multi_reduction <add>, %81, %cst_59 [0] : vector<32x8x8xf32> to vector<8x8xf32>
    %83 = vector.shape_cast %82 : vector<8x8xf32> to vector<1x1x8x8xf32>
    %c0_60 = arith.constant 0 : index
    %c0_61 = arith.constant 0 : index
    %c0_62 = arith.constant 0 : index
    %c0_63 = arith.constant 0 : index
    %84 = vector.load %arg9[%c0_60, %c0_61, %c0_62, %c0_63] : memref<1x1x8x8xf32, #tpu.memory_space<vmem>>, vector<1x1x8x8xf32>
    tpu.vector_store %arg9[%c0_60, %c0_61, %c0_62, %c0_63], %83 {strides = array<i32>} : memref<1x1x8x8xf32, #tpu.memory_space<vmem>>, vector<1x1x8x8xf32>,
    %85 = arith.mulf %81, %81 : vector<32x8x8xf32>
    %cst_64 = arith.constant dense<0.000000e+00> : vector<8x8xf32>
    %86 = vector.multi_reduction <add>, %85, %cst_64 [0] : vector<32x8x8xf32> to vector<8x8xf32>
    %87 = vector.shape_cast %86 : vector<8x8xf32> to vector<1x1x8x8xf32>
    %c0_65 = arith.constant 0 : index
    %c0_66 = arith.constant 0 : index
    %c0_67 = arith.constant 0 : index
    %c0_68 = arith.constant 0 : index
    %88 = vector.load %arg10[%c0_65, %c0_66, %c0_67, %c0_68] : memref<1x1x8x8xf32, #tpu.memory_space<vmem>>, vector<1x1x8x8xf32>
    tpu.vector_store %arg10[%c0_65, %c0_66, %c0_67, %c0_68], %87 {strides = array<i32>} : memref<1x1x8x8xf32, #tpu.memory_space<vmem>>, vector<1x1x8x8xf32>,
    %89 = vector.shape_cast %80 : vector<256x8xf32> to vector<1x4x8x8x8xf32>
    %90 = arith.truncf %89 : vector<1x4x8x8x8xf32> to vector<1x4x8x8x8xbf16>
    %c0_69 = arith.constant 0 : index
    %c0_70 = arith.constant 0 : index
    %c0_71 = arith.constant 0 : index
    %c0_72 = arith.constant 0 : index
    %c0_73 = arith.constant 0 : index
    %91 = vector.load %arg8[%c0_69, %c0_70, %c0_71, %c0_72, %c0_73] : memref<1x4x8x8x8xbf16, #tpu.memory_space<vmem>>, vector<1x4x8x8x8xbf16>
    tpu.vector_store %arg8[%c0_69, %c0_70, %c0_71, %c0_72, %c0_73], %90 {strides = array<i32>} : memref<1x4x8x8x8xbf16, #tpu.memory_space<vmem>>, vector<1x4x8x8x8xbf16>,
    return
  }
  func.func @transform_0(%arg0: i32, %arg1: i32) -> (i32, i32, i32, i32, i32) {
    %c0_i32 = arith.constant 0 : i32
    %c0_i32_0 = arith.constant 0 : i32
    %c0_i32_1 = arith.constant 0 : i32
    %c0_i32_2 = arith.constant 0 : i32
    return %arg0, %arg1, %c0_i32, %c0_i32_0, %c0_i32_1 : i32, i32, i32, i32, i32
  }
  func.func @transform_1(%arg0: i32, %arg1: i32) -> (i32, i32, i32, i32, i32) {
    %c4_i32 = arith.constant 4 : i32
    %0 = arith.muli %arg1, %c4_i32 : i32
    %c1_i32 = arith.constant 1 : i32
    %1 = arith.subi %0, %c1_i32 : i32
    %c0_i32 = arith.constant 0 : i32
    %2 = arith.maxsi %1, %c0_i32 : i32
    %c0_i32_0 = arith.constant 0 : i32
    %c0_i32_1 = arith.constant 0 : i32
    %c0_i32_2 = arith.constant 0 : i32
    %c0_i32_3 = arith.constant 0 : i32
    return %arg0, %2, %c0_i32_0, %c0_i32_1, %c0_i32_2 : i32, i32, i32, i32, i32
  }
  func.func @transform_2(%arg0: i32, %arg1: i32) -> (i32, i32, i32, i32, i32) {
    %c1_i32 = arith.constant 1 : i32
    %0 = arith.addi %arg1, %c1_i32 : i32
    %c4_i32 = arith.constant 4 : i32
    %1 = arith.muli %0, %c4_i32 : i32
    %c7_i32 = arith.constant 7 : i32
    %2 = arith.minsi %1, %c7_i32 : i32
    %c0_i32 = arith.constant 0 : i32
    %c0_i32_0 = arith.constant 0 : i32
    %c0_i32_1 = arith.constant 0 : i32
    %c0_i32_2 = arith.constant 0 : i32
    return %arg0, %2, %c0_i32, %c0_i32_0, %c0_i32_1 : i32, i32, i32, i32, i32
  }
  func.func @transform_3(%arg0: i32, %arg1: i32) -> (i32, i32, i32, i32) {
    %c0_i32 = arith.constant 0 : i32
    %c0_i32_0 = arith.constant 0 : i32
    %c0_i32_1 = arith.constant 0 : i32
    %c0_i32_2 = arith.constant 0 : i32
    %c0_i32_3 = arith.constant 0 : i32
    return %c0_i32, %c0_i32_0, %c0_i32_1, %c0_i32_2 : i32, i32, i32, i32
  }
  func.func @transform_4(%arg0: i32, %arg1: i32) -> (i32, i32) {
    %c0_i32 = arith.constant 0 : i32
    %c0_i32_0 = arith.constant 0 : i32
    %c0_i32_1 = arith.constant 0 : i32
    return %c0_i32, %c0_i32_0 : i32, i32
  }
  func.func @transform_5(%arg0: i32, %arg1: i32) -> (i32, i32) {
    %c0_i32 = arith.constant 0 : i32
    %c0_i32_0 = arith.constant 0 : i32
    %c0_i32_1 = arith.constant 0 : i32
    return %c0_i32, %c0_i32_0 : i32, i32
  }
  func.func @transform_6(%arg0: i32, %arg1: i32) -> (i32, i32, i32, i32, i32) {
    %c0_i32 = arith.constant 0 : i32
    %c0_i32_0 = arith.constant 0 : i32
    %c0_i32_1 = arith.constant 0 : i32
    %c0_i32_2 = arith.constant 0 : i32
    return %arg0, %arg1, %c0_i32, %c0_i32_0, %c0_i32_1 : i32, i32, i32, i32, i32
  }
  func.func @transform_7(%arg0: i32, %arg1: i32) -> (i32, i32, i32, i32) {
    %c0_i32 = arith.constant 0 : i32
    %c0_i32_0 = arith.constant 0 : i32
    %c0_i32_1 = arith.constant 0 : i32
    return %arg0, %arg1, %c0_i32, %c0_i32_0 : i32, i32, i32, i32
  }
  func.func @transform_8(%arg0: i32, %arg1: i32) -> (i32, i32, i32, i32) {
    %c0_i32 = arith.constant 0 : i32
    %c0_i32_0 = arith.constant 0 : i32
    %c0_i32_1 = arith.constant 0 : i32
    return %arg0, %arg1, %c0_i32, %c0_i32_0 : i32, i32, i32, i32
  }
}

module attributes {stable_mosaic.version = 11 : i64} {
  func.func @_bn_relu_kernel(%arg0: i32, %arg1: i32, %arg2: memref<1x4x8x8x8xbf16, #tpu.memory_space<vmem>>, %arg3: memref<1x8xf32, #tpu.memory_space<vmem>>, %arg4: memref<1x8xf32, #tpu.memory_space<vmem>>, %arg5: memref<1x4x8x8x8xf32, #tpu.memory_space<vmem>>) attributes {dimension_semantics = [#tpu.dimension_semantics<parallel>, #tpu.dimension_semantics<parallel>], iteration_bounds = array<i64: 2, 2>, scalar_prefetch = 0 : i64, scratch_operands = 0 : i64, tpu.core_type = #tpu.core_type<tc>, window_params = [{transform_indices = @transform_0, window_bounds = array<i64: 1, 4, 8, 8, 8>}, {pipeline_mode = #tpu.pipeline_mode<synchronous>, transform_indices = @transform_1, window_bounds = array<i64: 1, 8>}, {pipeline_mode = #tpu.pipeline_mode<synchronous>, transform_indices = @transform_2, window_bounds = array<i64: 1, 8>}, {transform_indices = @transform_3, window_bounds = array<i64: 1, 4, 8, 8, 8>}]} {
    %c0 = arith.constant 0 : index
    %c0_0 = arith.constant 0 : index
    %c0_1 = arith.constant 0 : index
    %c0_2 = arith.constant 0 : index
    %c0_3 = arith.constant 0 : index
    %0 = vector.load %arg2[%c0, %c0_0, %c0_1, %c0_2, %c0_3] : memref<1x4x8x8x8xbf16, #tpu.memory_space<vmem>>, vector<1x4x8x8x8xbf16>
    %1 = arith.extf %0 : vector<1x4x8x8x8xbf16> to vector<1x4x8x8x8xf32>
    %c0_4 = arith.constant 0 : index
    %c0_5 = arith.constant 0 : index
    %2 = vector.load %arg3[%c0_4, %c0_5] : memref<1x8xf32, #tpu.memory_space<vmem>>, vector<1x8xf32>
    %3 = vector.shape_cast %2 : vector<1x8xf32> to vector<8xf32>
    %4 = vector.shape_cast %3 : vector<8xf32> to vector<1x1x1x1x8xf32>
    %5 = vector.broadcast %4 : vector<1x1x1x1x8xf32> to vector<1x4x8x8x8xf32>
    %6 = arith.mulf %1, %5 : vector<1x4x8x8x8xf32>
    %c0_6 = arith.constant 0 : index
    %c0_7 = arith.constant 0 : index
    %7 = vector.load %arg4[%c0_6, %c0_7] : memref<1x8xf32, #tpu.memory_space<vmem>>, vector<1x8xf32>
    %8 = vector.shape_cast %7 : vector<1x8xf32> to vector<8xf32>
    %9 = vector.shape_cast %8 : vector<8xf32> to vector<1x1x1x1x8xf32>
    %10 = vector.broadcast %9 : vector<1x1x1x1x8xf32> to vector<1x4x8x8x8xf32>
    %11 = arith.addf %6, %10 : vector<1x4x8x8x8xf32>
    %cst = arith.constant 0.000000e+00 : f32
    %12 = vector.broadcast %cst : f32 to vector<1x4x8x8x8xf32>
    %13 = arith.maximumf %11, %12 : vector<1x4x8x8x8xf32>
    %c0_8 = arith.constant 0 : index
    %c0_9 = arith.constant 0 : index
    %c0_10 = arith.constant 0 : index
    %c0_11 = arith.constant 0 : index
    %c0_12 = arith.constant 0 : index
    %14 = vector.load %arg5[%c0_8, %c0_9, %c0_10, %c0_11, %c0_12] : memref<1x4x8x8x8xf32, #tpu.memory_space<vmem>>, vector<1x4x8x8x8xf32>
    tpu.vector_store %arg5[%c0_8, %c0_9, %c0_10, %c0_11, %c0_12], %13 {strides = array<i32>} : memref<1x4x8x8x8xf32, #tpu.memory_space<vmem>>, vector<1x4x8x8x8xf32>,
    return
  }
  func.func @transform_0(%arg0: i32, %arg1: i32) -> (i32, i32, i32, i32, i32) {
    %c0_i32 = arith.constant 0 : i32
    %c0_i32_0 = arith.constant 0 : i32
    %c0_i32_1 = arith.constant 0 : i32
    %c0_i32_2 = arith.constant 0 : i32
    return %arg0, %arg1, %c0_i32, %c0_i32_0, %c0_i32_1 : i32, i32, i32, i32, i32
  }
  func.func @transform_1(%arg0: i32, %arg1: i32) -> (i32, i32) {
    %c0_i32 = arith.constant 0 : i32
    %c0_i32_0 = arith.constant 0 : i32
    %c0_i32_1 = arith.constant 0 : i32
    return %c0_i32, %c0_i32_0 : i32, i32
  }
  func.func @transform_2(%arg0: i32, %arg1: i32) -> (i32, i32) {
    %c0_i32 = arith.constant 0 : i32
    %c0_i32_0 = arith.constant 0 : i32
    %c0_i32_1 = arith.constant 0 : i32
    return %c0_i32, %c0_i32_0 : i32, i32
  }
  func.func @transform_3(%arg0: i32, %arg1: i32) -> (i32, i32, i32, i32, i32) {
    %c0_i32 = arith.constant 0 : i32
    %c0_i32_0 = arith.constant 0 : i32
    %c0_i32_1 = arith.constant 0 : i32
    %c0_i32_2 = arith.constant 0 : i32
    return %arg0, %arg1, %c0_i32, %c0_i32_0, %c0_i32_1 : i32, i32, i32, i32, i32
  }
}

</mosaic_0001>

<llo_original>
// kernel: conv3d_block_forward.5
$region0: #{conv3d_block_forward.5}
  #allocation0 [shape = 'u32[]', space=smem, size = 0x4, offset = 0x4, fixed_abs, tag = 'smem constant byte address 0x4 - core index']
  #allocation1 [shape = 'u32[144,128]{1,0:T(1,128)}', space=vmem, size = 0x12000, scoped, tag = 'internal scratch']
  %s0 = inlined_call_operand.vmem [shape: bf16[2,8,8,8,8], index: 0, kind: input, shape index: {}]
  %s1 = inlined_call_operand.vmem [shape: f32[1,8], index: 1, kind: input, shape index: {}]
  %s2 = inlined_call_operand.vmem [shape: f32[1,8], index: 2, kind: input, shape index: {}]
  %s3 = inlined_call_operand.vmem [shape: f32[2,8,8,8,8], index: 3, kind: output, shape index: {}]
  %s4 = sld [smem:[#allocation0]]
  $region45: #{conv3d_block_forward.5} parent=0
    _
  %s6 = ssub.s32 1, %s4
  %s7 = scalar_select 0, %s6, %s4
  loop: start=0, step=1, limit=6
  $region2: #{conv3d_block_forward.5} parent=0 // loop_pre_header
    _
  $region3: #{conv3d_block_forward.5} parent=0 // loop_header
    %s9 = sphi 0, %s13
    %p10 = scmp.ge.s32.totalorder %s9, 6
    %s16 = sphi 0, %s28
    %s17 = sphi 0, %s24
    %s18 = sphi 0, %s16
    %s19 = sphi 0, %s17
    %s20 = sphi 0, %s18
    %s21 = sphi 0, %s19
    %s33 = sphi 0, %s35
    %s36 = sphi 0, %s33
    %s37 = sphi 0, %s36
    %s53 = sphi 0, %s37
    %s57 = sphi 0, %s57
    %s59 = sphi 0, %s57
    %s60 = sphi 0, %s59
    %s74 = sphi 0, %s60
    %s78 = sphi 0, %s78
    %s80 = sphi 0, %s78
    %s81 = sphi 0, %s80
    %s95 = sphi 0, %s81
    %s103 = sphi 0, %s105
    %s106 = sphi 0, %s103
    %s107 = sphi 0, %s106
    %s123 = sphi 0, %s107
  $region4: #{conv3d_block_forward.5} parent=0 // loop_header_branch
    %12 = sbr.rel (%p10) target = $region8
  $region5: #{conv3d_block_forward.5} parent=0 // loop_body
    %s14 = ssub.s32 %s9, 1
    %s15 = ssub.s32 %s9, 2
    %s22 = sadd.s32 1, %s17
    %p23 = scmp.ge.s32.totalorder %s22, 2
    %s24 = scalar_select %p23, 0, %s22
    %s25 = sadd.s32 1, %s16
    %s26 = scalar_select %p23, %s25, %s16
    %p27 = scmp.ge.s32.totalorder %s26, 2
    %s28 = scalar_select %p27, 0, %s26
    %s29 = ssub.s32 %s16, %s28
    %s30 = ssub.s32 %s17, %s24
    %s31 = sor.u32 %s29, %s30
    %p32 = scmp.eq.s32.totalorder %s31, 0
    %s34 = sadd.s32 %s33, 1
    %s35 = scalar_select %p32, %s33, %s34
    %p38 = pneg %p32
    %p39 = scmp.eq.s32.totalorder %s9, 3
    %p40 = por %p38, %p39
    %p41 = scmp.ne.s32.totalorder %s33, %s36
    %p42 = scmp.eq.s32.totalorder %s9, 0
    %p43 = por %p41, %p42
    %p44 = scmp.ne.s32.totalorder %s33, %s36
    %p45 = scmp.eq.s32.totalorder %s14, 3
    %p46 = por %p44, %p45
    %p47 = scmp.ne.s32.totalorder %s36, %s37
    %p48 = scmp.eq.s32.totalorder %s14, 0
    %p49 = por %p47, %p48
    %p50 = scmp.ne.s32.totalorder %s36, %s37
    %p51 = scmp.eq.s32.totalorder %s15, 3
    %p52 = por %p50, %p51
    %p54 = scmp.ne.s32.totalorder %s37, %s53
    %p55 = scmp.eq.s32.totalorder %s15, 0
    %p56 = por %p54, %p55
    %s58 = sadd.s32 %s57, 1
    %p61 = scmp.eq.s32.totalorder %s9, 3
    %p62 = scmp.ne.s32.totalorder %s57, %s59
    %p63 = scmp.eq.s32.totalorder %s9, 0
    %p64 = por %p62, %p63
    %p65 = scmp.ne.s32.totalorder %s57, %s59
    %p66 = scmp.eq.s32.totalorder %s14, 3
    %p67 = por %p65, %p66
    %p68 = scmp.ne.s32.totalorder %s59, %s60
    %p69 = scmp.eq.s32.totalorder %s14, 0
    %p70 = por %p68, %p69
    %p71 = scmp.ne.s32.totalorder %s59, %s60
    %p72 = scmp.eq.s32.totalorder %s15, 3
    %p73 = por %p71, %p72
    %p75 = scmp.ne.s32.totalorder %s60, %s74
    %p76 = scmp.eq.s32.totalorder %s15, 0
    %p77 = por %p75, %p76
    %s79 = sadd.s32 %s78, 1
    %p82 = scmp.eq.s32.totalorder %s9, 3
    %p83 = scmp.ne.s32.totalorder %s78, %s80
    %p84 = scmp.eq.s32.totalorder %s9, 0
    %p85 = por %p83, %p84
    %p86 = scmp.ne.s32.totalorder %s78, %s80
    %p87 = scmp.eq.s32.totalorder %s14, 3
    %p88 = por %p86, %p87
    %p89 = scmp.ne.s32.totalorder %s80, %s81
    %p90 = scmp.eq.s32.totalorder %s14, 0
    %p91 = por %p89, %p90
    %p92 = scmp.ne.s32.totalorder %s80, %s81
    %p93 = scmp.eq.s32.totalorder %s15, 3
    %p94 = por %p92, %p93
    %p96 = scmp.ne.s32.totalorder %s81, %s95
    %p97 = scmp.eq.s32.totalorder %s15, 0
    %p98 = por %p96, %p97
    %s99 = ssub.s32 %s16, %s28
    %s100 = ssub.s32 %s17, %s24
    %s101 = sor.u32 %s99, %s100
    %p102 = scmp.eq.s32.totalorder %s101, 0
    %s104 = sadd.s32 %s103, 1
    %s105 = scalar_select %p102, %s103, %s104
    %p108 = pneg %p102
    %p109 = scmp.eq.s32.totalorder %s9, 3
    %p110 = por %p108, %p109
    %p111 = scmp.ne.s32.totalorder %s103, %s106
    %p112 = scmp.eq.s32.totalorder %s9, 0
    %p113 = por %p111, %p112
    %p114 = scmp.ne.s32.totalorder %s103, %s106
    %p115 = scmp.eq.s32.totalorder %s14, 3
    %p116 = por %p114, %p115
    %p117 = scmp.ne.s32.totalorder %s106, %s107
    %p118 = scmp.eq.s32.totalorder %s14, 0
    %p119 = por %p117, %p118
    %p120 = scmp.ne.s32.totalorder %s106, %s107
    %p121 = scmp.eq.s32.totalorder %s15, 3
    %p122 = por %p120, %p121
    %p124 = scmp.ne.s32.totalorder %s107, %s123
    %p125 = scmp.eq.s32.totalorder %s15, 0
    %p126 = por %p124, %p125
    %p127 = scmp.le.s32.totalorder 1, %s9
    %p128 = scmp.lt.s32.totalorder %s9, 5
    %p129 = pnand %p127, %p128
    %p130 = pneg %p129
    // Predicated region
    $region9: #{conv3d_block_forward.5} parent=5 // pred_check
      _
    $region10: #{conv3d_block_forward.5} parent=5 // pred_check_branch
      %132 = sbr.rel (%p129) target = $region12
    $region11: #{conv3d_block_forward.5} parent=5 // pred_region
      %s133 = ssub.s32 %s9, 1
      // Predicated region
      $region13: #{conv3d_block_forward.5} parent=11 // pred_check
        %p134 = pneg %p70
      $region14: #{conv3d_block_forward.5} parent=11 // pred_check_branch
        %136 = sbr.rel (%p134) target = $region16
      $region15: #{conv3d_block_forward.5} parent=11 // pred_region
        _
      $region16: #{conv3d_block_forward.5} parent=11 // pred_fallthru
        _
      // Predicated region
      $region17: #{conv3d_block_forward.5} parent=11 // pred_check
        %p137 = pneg %p91
      $region18: #{conv3d_block_forward.5} parent=11 // pred_check_branch
        %139 = sbr.rel (%p137) target = $region20
      $region19: #{conv3d_block_forward.5} parent=11 // pred_region
        _
      $region20: #{conv3d_block_forward.5} parent=11 // pred_fallthru
        _
    $region12: #{conv3d_block_forward.5} parent=5 // pred_fallthru
      _
    %p140 = scmp.lt.s32.totalorder %s9, 4
    // Predicated region
    $region21: #{conv3d_block_forward.5} parent=5 // pred_check
      %p141 = pneg %p140
    $region22: #{conv3d_block_forward.5} parent=5 // pred_check_branch
      %143 = sbr.rel (%p141) target = $region24
    $region23: #{conv3d_block_forward.5} parent=5 // pred_region
      // Predicated region
      $region25: #{conv3d_block_forward.5} parent=23 // pred_check
        %p144 = pneg %p43
      $region26: #{conv3d_block_forward.5} parent=23 // pred_check_branch
        %146 = sbr.rel (%p144) target = $region28
      $region27: #{conv3d_block_forward.5} parent=23 // pred_region
        %s147 = smul.u32 4, %s17
        %p148 = scmp.lt.s32.totalorder %s16, 1
        %s149 = scalar_select %p148, %s16, 1
        %p150 = scmp.lt.s32.totalorder %s147, 7
        %s151 = scalar_select %p150, %s147, 7
        %s152 = smul.addr %s151, 8
        %s153 = smul.addr %s149, 64
        %s154 = sadd.s32 %s152, %s153
        %s155 = smul.addr %s154, 4
        %s156 = scalar_lea.vmem %s0, %s155
        %s157 = smul.u32 4, %s17
      $region28: #{conv3d_block_forward.5} parent=23 // pred_fallthru
        _
    $region24: #{conv3d_block_forward.5} parent=5 // pred_fallthru
      _
    %p158 = scmp.le.s32.totalorder 1, %s9
    %p159 = scmp.lt.s32.totalorder %s9, 5
    %p160 = pnand %p158, %p159
    %p161 = pneg %p160
    // Predicated region
    $region29: #{conv3d_block_forward.5} parent=5 // pred_check
      _
    $region30: #{conv3d_block_forward.5} parent=5 // pred_check_branch
      %163 = sbr.rel (%p160) target = $region32
    $region31: #{conv3d_block_forward.5} parent=5 // pred_region
      %s164 = ssub.s32 %s9, 1
      %s165 = smul.u32 4, %s19
      %p166 = scmp.lt.s32.totalorder %s18, 1
      %s167 = scalar_select %p166, %s18, 1
      %p168 = scmp.lt.s32.totalorder %s165, 7
      %s169 = scalar_select %p168, %s165, 7
      %s170 = smul.addr %s169, 8
      %s171 = smul.addr %s167, 64
      %s172 = sadd.s32 %s170, %s171
      %s173 = smul.addr %s172, 4
      %s174 = scalar_lea.vmem %s0, %s173
      %p175 = pneg %p49
      %p176 = pneg %p46
      %p177 = pneg %p70
      %p178 = pneg %p67
      %p179 = pneg %p91
      %p180 = pneg %p88
      %p181 = pneg %p119
      %p182 = pneg %p116
      %s183 = smul.u32 4, %s19
      %p184 = scmp.lt.s32.totalorder %s18, 1
      %s185 = scalar_select %p184, %s18, 1
      %p186 = scmp.lt.s32.totalorder %s183, 7
      %s187 = scalar_select %p186, %s183, 7
      %s188 = smul.addr %s187, 8
      %s189 = smul.addr %s185, 64
      %s190 = sadd.s32 %s188, %s189
      %s191 = smul.addr %s190, 8
      %s192 = scalar_lea.vmem %s3, %s191
      %s193 = smul.u32 4, %s19
      %p194 = scmp.lt.s32.totalorder %s18, 1
      %s195 = scalar_select %p194, %s18, 1
      %p196 = scmp.lt.s32.totalorder %s193, 7
      %s197 = scalar_select %p196, %s193, 7
      %s198 = smul.addr %s197, 8
      %s199 = smul.addr %s195, 64
      %s200 = sadd.s32 %s198, %s199
      %s201 = smul.addr %s200, 4
      %s202 = scalar_lea.vmem %s0, %s201
      %s203 = smul.u32 4, %s19
      %s204 = smul.u32 4, %s19
      %p205 = scmp.lt.s32.totalorder %s18, 1
      %s206 = scalar_select %p205, %s18, 1
      %p207 = scmp.lt.s32.totalorder %s204, 7
      %s208 = scalar_select %p207, %s204, 7
      %s209 = smul.addr %s208, 8
      %s210 = smul.addr %s206, 64
      %s211 = sadd.s32 %s209, %s210
      %s212 = smul.addr %s211, 8
      %s213 = scalar_lea.vmem %s3, %s212
      %s214 = smul.u32 4, %s19
      %v215 = vld [vmem:[%s202] sm:$0xf]
      %v216 = vld [vmem:[%s202 + $0x4] sm:$0xf]
      %v217 = vld [vmem:[%s202 + $0x8] sm:$0xf]
      %v218 = vld [vmem:[%s202 + $0xc] sm:$0xf]
      %v219 = vld [vmem:[%s202 + $0x10] sm:$0xf]
      %v220 = vld [vmem:[%s202 + $0x14] sm:$0xf]
      %v221 = vld [vmem:[%s202 + $0x18] sm:$0xf]
      %v222 = vld [vmem:[%s202 + $0x1c] sm:$0xf]
      %v223 = vld [vmem:[%s202 + $0x20] sm:$0xf]
      %v224 = vld [vmem:[%s202 + $0x24] sm:$0xf]
      %v225 = vld [vmem:[%s202 + $0x28] sm:$0xf]
      %v226 = vld [vmem:[%s202 + $0x2c] sm:$0xf]
      %v227 = vld [vmem:[%s202 + $0x30] sm:$0xf]
      %v228 = vld [vmem:[%s202 + $0x34] sm:$0xf]
      %v229 = vld [vmem:[%s202 + $0x38] sm:$0xf]
      %v230 = vld [vmem:[%s202 + $0x3c] sm:$0xf]
      %v231 = vld [vmem:[%s202 + $0x40] sm:$0xf]
      %v232 = vld [vmem:[%s202 + $0x44] sm:$0xf]
      %v233 = vld [vmem:[%s202 + $0x48] sm:$0xf]
      %v234 = vld [vmem:[%s202 + $0x4c] sm:$0xf]
      %v235 = vld [vmem:[%s202 + $0x50] sm:$0xf]
      %v236 = vld [vmem:[%s202 + $0x54] sm:$0xf]
      %v237 = vld [vmem:[%s202 + $0x58] sm:$0xf]
      %v238 = vld [vmem:[%s202 + $0x5c] sm:$0xf]
      %v239 = vld [vmem:[%s202 + $0x60] sm:$0xf]
      %v240 = vld [vmem:[%s202 + $0x64] sm:$0xf]
      %v241 = vld [vmem:[%s202 + $0x68] sm:$0xf]
      %v242 = vld [vmem:[%s202 + $0x6c] sm:$0xf]
      %v243 = vld [vmem:[%s202 + $0x70] sm:$0xf]
      %v244 = vld [vmem:[%s202 + $0x74] sm:$0xf]
      %v245 = vld [vmem:[%s202 + $0x78] sm:$0xf]
      %v246 = vld [vmem:[%s202 + $0x7c] sm:$0xf]
      %v247 = vunpack.c.l.bf16 %v215
      %v248 = vunpack.c.l.bf16 %v216
      %v249 = vunpack.c.l.bf16 %v217
      %v250 = vunpack.c.l.bf16 %v218
      %v251 = vunpack.c.l.bf16 %v219
      %v252 = vunpack.c.l.bf16 %v220
      %v253 = vunpack.c.l.bf16 %v221
      %v254 = vunpack.c.l.bf16 %v222
      %v255 = vunpack.c.l.bf16 %v223
      %v256 = vunpack.c.l.bf16 %v224
      %v257 = vunpack.c.l.bf16 %v225
      %v258 = vunpack.c.l.bf16 %v226
      %v259 = vunpack.c.l.bf16 %v227
      %v260 = vunpack.c.l.bf16 %v228
      %v261 = vunpack.c.l.bf16 %v229
      %v262 = vunpack.c.l.bf16 %v230
      %v263 = vunpack.c.l.bf16 %v231
      %v264 = vunpack.c.l.bf16 %v232
      %v265 = vunpack.c.l.bf16 %v233
      %v266 = vunpack.c.l.bf16 %v234
      %v267 = vunpack.c.l.bf16 %v235
      %v268 = vunpack.c.l.bf16 %v236
      %v269 = vunpack.c.l.bf16 %v237
      %v270 = vunpack.c.l.bf16 %v238
      %v271 = vunpack.c.l.bf16 %v239
      %v272 = vunpack.c.l.bf16 %v240
      %v273 = vunpack.c.l.bf16 %v241
      %v274 = vunpack.c.l.bf16 %v242
      %v275 = vunpack.c.l.bf16 %v243
      %v276 = vunpack.c.l.bf16 %v244
      %v277 = vunpack.c.l.bf16 %v245
      %v278 = vunpack.c.l.bf16 %v246
      %v279 = vld [vmem:[%s1] sm:$0x1]
      %v281 = vlaneseq
      %v282 = vshrl.u32 %v281, 7
      %v283 = vsub.s32 0, %v282
      %v284 = vrot.slane %v279, %v283
      %v286 = vmul.f32 %v247, %v284
      %v287 = vmul.f32 %v248, %v284
      %v288 = vmul.f32 %v249, %v284
      %v289 = vmul.f32 %v250, %v284
      %v290 = vmul.f32 %v251, %v284
      %v291 = vmul.f32 %v252, %v284
      %v292 = vmul.f32 %v253, %v284
      %v293 = vmul.f32 %v254, %v284
      %v294 = vmul.f32 %v255, %v284
      %v295 = vmul.f32 %v256, %v284
      %v296 = vmul.f32 %v257, %v284
      %v297 = vmul.f32 %v258, %v284
      %v298 = vmul.f32 %v259, %v284
      %v299 = vmul.f32 %v260, %v284
      %v300 = vmul.f32 %v261, %v284
      %v301 = vmul.f32 %v262, %v284
      %v302 = vmul.f32 %v263, %v284
      %v303 = vmul.f32 %v264, %v284
      %v304 = vmul.f32 %v265, %v284
      %v305 = vmul.f32 %v266, %v284
      %v306 = vmul.f32 %v267, %v284
      %v307 = vmul.f32 %v268, %v284
      %v308 = vmul.f32 %v269, %v284
      %v309 = vmul.f32 %v270, %v284
      %v310 = vmul.f32 %v271, %v284
      %v311 = vmul.f32 %v272, %v284
      %v312 = vmul.f32 %v273, %v284
      %v313 = vmul.f32 %v274, %v284
      %v314 = vmul.f32 %v275, %v284
      %v315 = vmul.f32 %v276, %v284
      %v316 = vmul.f32 %v277, %v284
      %v317 = vmul.f32 %v278, %v284
      %v318 = vld [vmem:[%s2] sm:$0x1]
      %v320 = vlaneseq
      %v321 = vshrl.u32 %v320, 7
      %v322 = vsub.s32 0, %v321
      %v323 = vrot.slane %v318, %v322
      %v325 = vadd.f32 %v286, %v323
      %v326 = vadd.f32 %v287, %v323
      %v327 = vadd.f32 %v288, %v323
      %v328 = vadd.f32 %v289, %v323
      %v329 = vadd.f32 %v290, %v323
      %v330 = vadd.f32 %v291, %v323
      %v331 = vadd.f32 %v292, %v323
      %v332 = vadd.f32 %v293, %v323
      %v333 = vadd.f32 %v294, %v323
      %v334 = vadd.f32 %v295, %v323
      %v335 = vadd.f32 %v296, %v323
      %v336 = vadd.f32 %v297, %v323
      %v337 = vadd.f32 %v298, %v323
      %v338 = vadd.f32 %v299, %v323
      %v339 = vadd.f32 %v300, %v323
      %v340 = vadd.f32 %v301, %v323
      %v341 = vadd.f32 %v302, %v323
      %v342 = vadd.f32 %v303, %v323
      %v343 = vadd.f32 %v304, %v323
      %v344 = vadd.f32 %v305, %v323
      %v345 = vadd.f32 %v306, %v323
      %v346 = vadd.f32 %v307, %v323
      %v347 = vadd.f32 %v308, %v323
      %v348 = vadd.f32 %v309, %v323
      %v349 = vadd.f32 %v310, %v323
      %v350 = vadd.f32 %v311, %v323
      %v351 = vadd.f32 %v312, %v323
      %v352 = vadd.f32 %v313, %v323
      %v353 = vadd.f32 %v314, %v323
      %v354 = vadd.f32 %v315, %v323
      %v355 = vadd.f32 %v316, %v323
      %v356 = vadd.f32 %v317, %v323
      %v357 = vmax.f32 %v325, 0.0
      %v358 = vmax.f32 %v326, 0.0
      %v359 = vmax.f32 %v327, 0.0
      %v360 = vmax.f32 %v328, 0.0
      %v361 = vmax.f32 %v329, 0.0
      %v362 = vmax.f32 %v330, 0.0
      %v363 = vmax.f32 %v331, 0.0
      %v364 = vmax.f32 %v332, 0.0
      %v365 = vmax.f32 %v333, 0.0
      %v366 = vmax.f32 %v334, 0.0
      %v367 = vmax.f32 %v335, 0.0
      %v368 = vmax.f32 %v336, 0.0
      %v369 = vmax.f32 %v337, 0.0
      %v370 = vmax.f32 %v338, 0.0
      %v371 = vmax.f32 %v339, 0.0
      %v372 = vmax.f32 %v340, 0.0
      %v373 = vmax.f32 %v341, 0.0
      %v374 = vmax.f32 %v342, 0.0
      %v375 = vmax.f32 %v343, 0.0
      %v376 = vmax.f32 %v344, 0.0
      %v377 = vmax.f32 %v345, 0.0
      %v378 = vmax.f32 %v346, 0.0
      %v379 = vmax.f32 %v347, 0.0
      %v380 = vmax.f32 %v348, 0.0
      %v381 = vmax.f32 %v349, 0.0
      %v382 = vmax.f32 %v350, 0.0
      %v383 = vmax.f32 %v351, 0.0
      %v384 = vmax.f32 %v352, 0.0
      %v385 = vmax.f32 %v353, 0.0
      %v386 = vmax.f32 %v354, 0.0
      %v387 = vmax.f32 %v355, 0.0
      %v388 = vmax.f32 %v356, 0.0
      %vm389 = vcmask 64512
      %390 = vst.msk [vmem:[%s213] sm:$0xff] %vm389, %v357
      %391 = vst.msk [vmem:[%s213 + $0x8] sm:$0xff] %vm389, %v358
      %392 = vst.msk [vmem:[%s213 + $0x10] sm:$0xff] %vm389, %v359
      %393 = vst.msk [vmem:[%s213 + $0x18] sm:$0xff] %vm389, %v360
      %394 = vst.msk [vmem:[%s213 + $0x20] sm:$0xff] %vm389, %v361
      %395 = vst.msk [vmem:[%s213 + $0x28] sm:$0xff] %vm389, %v362
      %396 = vst.msk [vmem:[%s213 + $0x30] sm:$0xff] %vm389, %v363
      %397 = vst.msk [vmem:[%s213 + $0x38] sm:$0xff] %vm389, %v364
      %398 = vst.msk [vmem:[%s213 + $0x40] sm:$0xff] %vm389, %v365
      %399 = vst.msk [vmem:[%s213 + $0x48] sm:$0xff] %vm389, %v366
      %400 = vst.msk [vmem:[%s213 + $0x50] sm:$0xff] %vm389, %v367
      %401 = vst.msk [vmem:[%s213 + $0x58] sm:$0xff] %vm389, %v368
      %402 = vst.msk [vmem:[%s213 + $0x60] sm:$0xff] %vm389, %v369
      %403 = vst.msk [vmem:[%s213 + $0x68] sm:$0xff] %vm389, %v370
      %404 = vst.msk [vmem:[%s213 + $0x70] sm:$0xff] %vm389, %v371
      %405 = vst.msk [vmem:[%s213 + $0x78] sm:$0xff] %vm389, %v372
      %406 = vst.msk [vmem:[%s213 + $0x80] sm:$0xff] %vm389, %v373
      %407 = vst.msk [vmem:[%s213 + $0x88] sm:$0xff] %vm389, %v374
      %408 = vst.msk [vmem:[%s213 + $0x90] sm:$0xff] %vm389, %v375
      %409 = vst.msk [vmem:[%s213 + $0x98] sm:$0xff] %vm389, %v376
      %410 = vst.msk [vmem:[%s213 + $0xa0] sm:$0xff] %vm389, %v377
      %411 = vst.msk [vmem:[%s213 + $0xa8] sm:$0xff] %vm389, %v378
      %412 = vst.msk [vmem:[%s213 + $0xb0] sm:$0xff] %vm389, %v379
      %413 = vst.msk [vmem:[%s213 + $0xb8] sm:$0xff] %vm389, %v380
      %414 = vst.msk [vmem:[%s213 + $0xc0] sm:$0xff] %vm389, %v381
      %415 = vst.msk [vmem:[%s213 + $0xc8] sm:$0xff] %vm389, %v382
      %416 = vst.msk [vmem:[%s213 + $0xd0] sm:$0xff] %vm389, %v383
      %417 = vst.msk [vmem:[%s213 + $0xd8] sm:$0xff] %vm389, %v384
      %418 = vst.msk [vmem:[%s213 + $0xe0] sm:$0xff] %vm389, %v385
      %419 = vst.msk [vmem:[%s213 + $0xe8] sm:$0xff] %vm389, %v386
      %420 = vst.msk [vmem:[%s213 + $0xf0] sm:$0xff] %vm389, %v387
      %421 = vst.msk [vmem:[%s213 + $0xf8] sm:$0xff] %vm389, %v388
      %s422 = smul.u32 4, %s19
      %p423 = scmp.lt.s32.totalorder %s18, 1
      %s424 = scalar_select %p423, %s18, 1
      %p425 = scmp.lt.s32.totalorder %s422, 7
      %s426 = scalar_select %p425, %s422, 7
      %s427 = smul.addr %s426, 8
      %s428 = smul.addr %s424, 64
      %s429 = sadd.s32 %s427, %s428
      %s430 = smul.addr %s429, 8
      %s431 = scalar_lea.vmem %s3, %s430
      // Predicated region
      $region33: #{conv3d_block_forward.5} parent=31 // pred_check
        %p432 = pneg %p116
      $region34: #{conv3d_block_forward.5} parent=31 // pred_check_branch
        %434 = sbr.rel (%p432) target = $region36
      $region35: #{conv3d_block_forward.5} parent=31 // pred_region
        %s435 = smul.u32 4, %s19
      $region36: #{conv3d_block_forward.5} parent=31 // pred_fallthru
        _
    $region32: #{conv3d_block_forward.5} parent=5 // pred_fallthru
      _
    %p436 = scmp.le.s32.totalorder 2, %s9
    // Predicated region
    $region37: #{conv3d_block_forward.5} parent=5 // pred_check
      %p437 = pneg %p436
    $region38: #{conv3d_block_forward.5} parent=5 // pred_check_branch
      %439 = sbr.rel (%p437) target = $region40
    $region39: #{conv3d_block_forward.5} parent=5 // pred_region
      %s440 = ssub.s32 %s9, 2
      // Predicated region
      $region41: #{conv3d_block_forward.5} parent=39 // pred_check
        %p441 = pneg %p122
      $region42: #{conv3d_block_forward.5} parent=39 // pred_check_branch
        %443 = sbr.rel (%p441) target = $region44
      $region43: #{conv3d_block_forward.5} parent=39 // pred_region
        %s444 = smul.u32 4, %s21
        %p445 = scmp.lt.s32.totalorder %s20, 1
        %s446 = scalar_select %p445, %s20, 1
        %p447 = scmp.lt.s32.totalorder %s444, 7
        %s448 = scalar_select %p447, %s444, 7
        %s449 = smul.addr %s448, 8
        %s450 = smul.addr %s446, 64
        %s451 = sadd.s32 %s449, %s450
        %s452 = smul.addr %s451, 8
        %s453 = scalar_lea.vmem %s3, %s452
      $region44: #{conv3d_block_forward.5} parent=39 // pred_fallthru
        _
    $region40: #{conv3d_block_forward.5} parent=5 // pred_fallthru
      _
  $region6: #{conv3d_block_forward.5} parent=0 // loop_footer
    %s13 = sadd.s32 1, %s9
  $region7: #{conv3d_block_forward.5} parent=0 // loop_footer_branch
    %8 = sbr.rel target = $region3
  $region8: #{conv3d_block_forward.5} parent=0 // loop_exit
    _

// kernel: conv3d_block_forward.4
$region0: #{conv3d_block_forward.4}
  #allocation0 [shape = 'u32[]', space=smem, size = 0x4, offset = 0x4, fixed_abs, tag = 'smem constant byte address 0x4 - core index']
  #allocation1 [shape = 'u32[144,128]{1,0:T(1,128)}', space=vmem, size = 0x12000, scoped, tag = 'internal scratch']
  %s0 = inlined_call_operand.vmem [shape: bf16[2,8,8,8,8], index: 0, kind: input, shape index: {}, may-alias: {0,1,2}]
  %s1 = inlined_call_operand.vmem [shape: bf16[2,8,8,8,8], index: 1, kind: input, shape index: {}, may-alias: {0,1,2}]
  %s2 = inlined_call_operand.vmem [shape: bf16[2,8,8,8,8], index: 2, kind: input, shape index: {}, may-alias: {0,1,2}]
  %s3 = inlined_call_operand.vmem [shape: bf16[3,3,24,8], index: 3, kind: input, shape index: {}]
  %s4 = inlined_call_operand.vmem [shape: f32[1,8], index: 4, kind: input, shape index: {}]
  %s5 = inlined_call_operand.vmem [shape: f32[1,8], index: 5, kind: input, shape index: {}]
  %s6 = inlined_call_operand.vmem [shape: bf16[2,8,8,8,8], index: 6, kind: output, shape index: {0}]
  %s7 = inlined_call_operand.vmem [shape: f32[2,2,8,8], index: 7, kind: output, shape index: {1}]
  %s8 = inlined_call_operand.vmem [shape: f32[2,2,8,8], index: 8, kind: output, shape index: {2}]
  %9 = xla_tuple %s6, %s7, %s8
  %s10 = sld [smem:[#allocation0]]
  $region73: #{conv3d_block_forward.4} parent=0
    _
  %s12 = ssub.s32 1, %s10
  %s13 = scalar_select 0, %s12, %s10
  loop: start=0, step=1, limit=6
  $region2: #{conv3d_block_forward.4} parent=0 // loop_pre_header
    _
  $region3: #{conv3d_block_forward.4} parent=0 // loop_header
    %s15 = sphi 0, %s19
    %p16 = scmp.ge.s32.totalorder %s15, 6
    %s22 = sphi 0, %s34
    %s23 = sphi 0, %s30
    %s24 = sphi 0, %s22
    %s25 = sphi 0, %s23
    %s26 = sphi 0, %s24
    %s27 = sphi 0, %s25
    %s39 = sphi 0, %s41
    %s42 = sphi 0, %s39
    %s43 = sphi 0, %s42
    %s59 = sphi 0, %s43
    %s75 = sphi 0, %s77
    %s78 = sphi 0, %s75
    %s79 = sphi 0, %s78
    %s95 = sphi 0, %s79
    %s111 = sphi 0, %s113
    %s114 = sphi 0, %s111
    %s115 = sphi 0, %s114
    %s131 = sphi 0, %s115
    %s135 = sphi 0, %s135
    %s137 = sphi 0, %s135
    %s138 = sphi 0, %s137
    %s152 = sphi 0, %s138
    %s156 = sphi 0, %s156
    %s158 = sphi 0, %s156
    %s159 = sphi 0, %s158
    %s173 = sphi 0, %s159
    %s177 = sphi 0, %s177
    %s179 = sphi 0, %s177
    %s180 = sphi 0, %s179
    %s194 = sphi 0, %s180
    %s202 = sphi 0, %s204
    %s205 = sphi 0, %s202
    %s206 = sphi 0, %s205
    %s222 = sphi 0, %s206
    %s230 = sphi 0, %s232
    %s233 = sphi 0, %s230
    %s234 = sphi 0, %s233
    %s250 = sphi 0, %s234
    %s258 = sphi 0, %s260
    %s261 = sphi 0, %s258
    %s262 = sphi 0, %s261
    %s278 = sphi 0, %s262
  $region4: #{conv3d_block_forward.4} parent=0 // loop_header_branch
    %18 = sbr.rel (%p16) target = $region8
  $region5: #{conv3d_block_forward.4} parent=0 // loop_body
    %s20 = ssub.s32 %s15, 1
    %s21 = ssub.s32 %s15, 2
    %s28 = sadd.s32 1, %s23
    %p29 = scmp.ge.s32.totalorder %s28, 2
    %s30 = scalar_select %p29, 0, %s28
    %s31 = sadd.s32 1, %s22
    %s32 = scalar_select %p29, %s31, %s22
    %p33 = scmp.ge.s32.totalorder %s32, 2
    %s34 = scalar_select %p33, 0, %s32
    %s35 = ssub.s32 %s22, %s34
    %s36 = ssub.s32 %s23, %s30
    %s37 = sor.u32 %s35, %s36
    %p38 = scmp.eq.s32.totalorder %s37, 0
    %s40 = sadd.s32 %s39, 1
    %s41 = scalar_select %p38, %s39, %s40
    %p44 = pneg %p38
    %p45 = scmp.eq.s32.totalorder %s15, 3
    %p46 = por %p44, %p45
    %p47 = scmp.ne.s32.totalorder %s39, %s42
    %p48 = scmp.eq.s32.totalorder %s15, 0
    %p49 = por %p47, %p48
    %p50 = scmp.ne.s32.totalorder %s39, %s42
    %p51 = scmp.eq.s32.totalorder %s20, 3
    %p52 = por %p50, %p51
    %p53 = scmp.ne.s32.totalorder %s42, %s43
    %p54 = scmp.eq.s32.totalorder %s20, 0
    %p55 = por %p53, %p54
    %p56 = scmp.ne.s32.totalorder %s42, %s43
    %p57 = scmp.eq.s32.totalorder %s21, 3
    %p58 = por %p56, %p57
    %p60 = scmp.ne.s32.totalorder %s43, %s59
    %p61 = scmp.eq.s32.totalorder %s21, 0
    %p62 = por %p60, %p61
    %s63 = smul.u32 %s23, 4
    %s64 = ssub.s32 %s63, 1
    %p65 = scmp.gt.s32.totalorder %s64, 0
    %s66 = scalar_select %p65, %s64, 0
    %s67 = smul.u32 %s30, 4
    %s68 = ssub.s32 %s67, 1
    %p69 = scmp.gt.s32.totalorder %s68, 0
    %s70 = scalar_select %p69, %s68, 0
    %s71 = ssub.s32 %s22, %s34
    %s72 = ssub.s32 %s66, %s70
    %s73 = sor.u32 %s71, %s72
    %p74 = scmp.eq.s32.totalorder %s73, 0
    %s76 = sadd.s32 %s75, 1
    %s77 = scalar_select %p74, %s75, %s76
    %p80 = pneg %p74
    %p81 = scmp.eq.s32.totalorder %s15, 3
    %p82 = por %p80, %p81
    %p83 = scmp.ne.s32.totalorder %s75, %s78
    %p84 = scmp.eq.s32.totalorder %s15, 0
    %p85 = por %p83, %p84
    %p86 = scmp.ne.s32.totalorder %s75, %s78
    %p87 = scmp.eq.s32.totalorder %s20, 3
    %p88 = por %p86, %p87
    %p89 = scmp.ne.s32.totalorder %s78, %s79
    %p90 = scmp.eq.s32.totalorder %s20, 0
    %p91 = por %p89, %p90
    %p92 = scmp.ne.s32.totalorder %s78, %s79
    %p93 = scmp.eq.s32.totalorder %s21, 3
    %p94 = por %p92, %p93
    %p96 = scmp.ne.s32.totalorder %s79, %s95
    %p97 = scmp.eq.s32.totalorder %s21, 0
    %p98 = por %p96, %p97
    %s99 = sadd.s32 %s23, 1
    %s100 = smul.u32 %s99, 4
    %p101 = scmp.lt.s32.totalorder %s100, 7
    %s102 = scalar_select %p101, %s100, 7
    %s103 = sadd.s32 %s30, 1
    %s104 = smul.u32 %s103, 4
    %p105 = scmp.lt.s32.totalorder %s104, 7
    %s106 = scalar_select %p105, %s104, 7
    %s107 = ssub.s32 %s22, %s34
    %s108 = ssub.s32 %s102, %s106
    %s109 = sor.u32 %s107, %s108
    %p110 = scmp.eq.s32.totalorder %s109, 0
    %s112 = sadd.s32 %s111, 1
    %s113 = scalar_select %p110, %s111, %s112
    %p116 = pneg %p110
    %p117 = scmp.eq.s32.totalorder %s15, 3
    %p118 = por %p116, %p117
    %p119 = scmp.ne.s32.totalorder %s111, %s114
    %p120 = scmp.eq.s32.totalorder %s15, 0
    %p121 = por %p119, %p120
    %p122 = scmp.ne.s32.totalorder %s111, %s114
    %p123 = scmp.eq.s32.totalorder %s20, 3
    %p124 = por %p122, %p123
    %p125 = scmp.ne.s32.totalorder %s114, %s115
    %p126 = scmp.eq.s32.totalorder %s20, 0
    %p127 = por %p125, %p126
    %p128 = scmp.ne.s32.totalorder %s114, %s115
    %p129 = scmp.eq.s32.totalorder %s21, 3
    %p130 = por %p128, %p129
    %p132 = scmp.ne.s32.totalorder %s115, %s131
    %p133 = scmp.eq.s32.totalorder %s21, 0
    %p134 = por %p132, %p133
    %s136 = sadd.s32 %s135, 1
    %p139 = scmp.eq.s32.totalorder %s15, 3
    %p140 = scmp.ne.s32.totalorder %s135, %s137
    %p141 = scmp.eq.s32.totalorder %s15, 0
    %p142 = por %p140, %p141
    %p143 = scmp.ne.s32.totalorder %s135, %s137
    %p144 = scmp.eq.s32.totalorder %s20, 3
    %p145 = por %p143, %p144
    %p146 = scmp.ne.s32.totalorder %s137, %s138
    %p147 = scmp.eq.s32.totalorder %s20, 0
    %p148 = por %p146, %p147
    %p149 = scmp.ne.s32.totalorder %s137, %s138
    %p150 = scmp.eq.s32.totalorder %s21, 3
    %p151 = por %p149, %p150
    %p153 = scmp.ne.s32.totalorder %s138, %s152
    %p154 = scmp.eq.s32.totalorder %s21, 0
    %p155 = por %p153, %p154
    %s157 = sadd.s32 %s156, 1
    %p160 = scmp.eq.s32.totalorder %s15, 3
    %p161 = scmp.ne.s32.totalorder %s156, %s158
    %p162 = scmp.eq.s32.totalorder %s15, 0
    %p163 = por %p161, %p162
    %p164 = scmp.ne.s32.totalorder %s156, %s158
    %p165 = scmp.eq.s32.totalorder %s20, 3
    %p166 = por %p164, %p165
    %p167 = scmp.ne.s32.totalorder %s158, %s159
    %p168 = scmp.eq.s32.totalorder %s20, 0
    %p169 = por %p167, %p168
    %p170 = scmp.ne.s32.totalorder %s158, %s159
    %p171 = scmp.eq.s32.totalorder %s21, 3
    %p172 = por %p170, %p171
    %p174 = scmp.ne.s32.totalorder %s159, %s173
    %p175 = scmp.eq.s32.totalorder %s21, 0
    %p176 = por %p174, %p175
    %s178 = sadd.s32 %s177, 1
    %p181 = scmp.eq.s32.totalorder %s15, 3
    %p182 = scmp.ne.s32.totalorder %s177, %s179
    %p183 = scmp.eq.s32.totalorder %s15, 0
    %p184 = por %p182, %p183
    %p185 = scmp.ne.s32.totalorder %s177, %s179
    %p186 = scmp.eq.s32.totalorder %s20, 3
    %p187 = por %p185, %p186
    %p188 = scmp.ne.s32.totalorder %s179, %s180
    %p189 = scmp.eq.s32.totalorder %s20, 0
    %p190 = por %p188, %p189
    %p191 = scmp.ne.s32.totalorder %s179, %s180
    %p192 = scmp.eq.s32.totalorder %s21, 3
    %p193 = por %p191, %p192
    %p195 = scmp.ne.s32.totalorder %s180, %s194
    %p196 = scmp.eq.s32.totalorder %s21, 0
    %p197 = por %p195, %p196
    %s198 = ssub.s32 %s22, %s34
    %s199 = ssub.s32 %s23, %s30
    %s200 = sor.u32 %s198, %s199
    %p201 = scmp.eq.s32.totalorder %s200, 0
    %s203 = sadd.s32 %s202, 1
    %s204 = scalar_select %p201, %s202, %s203
    %p207 = pneg %p201
    %p208 = scmp.eq.s32.totalorder %s15, 3
    %p209 = por %p207, %p208
    %p210 = scmp.ne.s32.totalorder %s202, %s205
    %p211 = scmp.eq.s32.totalorder %s15, 0
    %p212 = por %p210, %p211
    %p213 = scmp.ne.s32.totalorder %s202, %s205
    %p214 = scmp.eq.s32.totalorder %s20, 3
    %p215 = por %p213, %p214
    %p216 = scmp.ne.s32.totalorder %s205, %s206
    %p217 = scmp.eq.s32.totalorder %s20, 0
    %p218 = por %p216, %p217
    %p219 = scmp.ne.s32.totalorder %s205, %s206
    %p220 = scmp.eq.s32.totalorder %s21, 3
    %p221 = por %p219, %p220
    %p223 = scmp.ne.s32.totalorder %s206, %s222
    %p224 = scmp.eq.s32.totalorder %s21, 0
    %p225 = por %p223, %p224
    %s226 = ssub.s32 %s22, %s34
    %s227 = ssub.s32 %s23, %s30
    %s228 = sor.u32 %s226, %s227
    %p229 = scmp.eq.s32.totalorder %s228, 0
    %s231 = sadd.s32 %s230, 1
    %s232 = scalar_select %p229, %s230, %s231
    %p235 = pneg %p229
    %p236 = scmp.eq.s32.totalorder %s15, 3
    %p237 = por %p235, %p236
    %p238 = scmp.ne.s32.totalorder %s230, %s233
    %p239 = scmp.eq.s32.totalorder %s15, 0
    %p240 = por %p238, %p239
    %p241 = scmp.ne.s32.totalorder %s230, %s233
    %p242 = scmp.eq.s32.totalorder %s20, 3
    %p243 = por %p241, %p242
    %p244 = scmp.ne.s32.totalorder %s233, %s234
    %p245 = scmp.eq.s32.totalorder %s20, 0
    %p246 = por %p244, %p245
    %p247 = scmp.ne.s32.totalorder %s233, %s234
    %p248 = scmp.eq.s32.totalorder %s21, 3
    %p249 = por %p247, %p248
    %p251 = scmp.ne.s32.totalorder %s234, %s250
    %p252 = scmp.eq.s32.totalorder %s21, 0
    %p253 = por %p251, %p252
    %s254 = ssub.s32 %s22, %s34
    %s255 = ssub.s32 %s23, %s30
    %s256 = sor.u32 %s254, %s255
    %p257 = scmp.eq.s32.totalorder %s256, 0
    %s259 = sadd.s32 %s258, 1
    %s260 = scalar_select %p257, %s258, %s259
    %p263 = pneg %p257
    %p264 = scmp.eq.s32.totalorder %s15, 3
    %p265 = por %p263, %p264
    %p266 = scmp.ne.s32.totalorder %s258, %s261
    %p267 = scmp.eq.s32.totalorder %s15, 0
    %p268 = por %p266, %p267
    %p269 = scmp.ne.s32.totalorder %s258, %s261
    %p270 = scmp.eq.s32.totalorder %s20, 3
    %p271 = por %p269, %p270
    %p272 = scmp.ne.s32.totalorder %s261, %s262
    %p273 = scmp.eq.s32.totalorder %s20, 0
    %p274 = por %p272, %p273
    %p275 = scmp.ne.s32.totalorder %s261, %s262
    %p276 = scmp.eq.s32.totalorder %s21, 3
    %p277 = por %p275, %p276
    %p279 = scmp.ne.s32.totalorder %s262, %s278
    %p280 = scmp.eq.s32.totalorder %s21, 0
    %p281 = por %p279, %p280
    %p282 = scmp.le.s32.totalorder 1, %s15
    %p283 = scmp.lt.s32.totalorder %s15, 5
    %p284 = pnand %p282, %p283
    %p285 = pneg %p284
    // Predicated region
    $region9: #{conv3d_block_forward.4} parent=5 // pred_check
      _
    $region10: #{conv3d_block_forward.4} parent=5 // pred_check_branch
      %287 = sbr.rel (%p284) target = $region12
    $region11: #{conv3d_block_forward.4} parent=5 // pred_region
      %s288 = ssub.s32 %s15, 1
      // Predicated region
      $region13: #{conv3d_block_forward.4} parent=11 // pred_check
        %p289 = pneg %p148
      $region14: #{conv3d_block_forward.4} parent=11 // pred_check_branch
        %291 = sbr.rel (%p289) target = $region16
      $region15: #{conv3d_block_forward.4} parent=11 // pred_region
        _
      $region16: #{conv3d_block_forward.4} parent=11 // pred_fallthru
        _
      // Predicated region
      $region17: #{conv3d_block_forward.4} parent=11 // pred_check
        %p292 = pneg %p169
      $region18: #{conv3d_block_forward.4} parent=11 // pred_check_branch
        %294 = sbr.rel (%p292) target = $region20
      $region19: #{conv3d_block_forward.4} parent=11 // pred_region
        _
      $region20: #{conv3d_block_forward.4} parent=11 // pred_fallthru
        _
      // Predicated region
      $region21: #{conv3d_block_forward.4} parent=11 // pred_check
        %p295 = pneg %p190
      $region22: #{conv3d_block_forward.4} parent=11 // pred_check_branch
        %297 = sbr.rel (%p295) target = $region24
      $region23: #{conv3d_block_forward.4} parent=11 // pred_region
        _
      $region24: #{conv3d_block_forward.4} parent=11 // pred_fallthru
        _
    $region12: #{conv3d_block_forward.4} parent=5 // pred_fallthru
      _
    %p298 = scmp.lt.s32.totalorder %s15, 4
    // Predicated region
    $region25: #{conv3d_block_forward.4} parent=5 // pred_check
      %p299 = pneg %p298
    $region26: #{conv3d_block_forward.4} parent=5 // pred_check_branch
      %301 = sbr.rel (%p299) target = $region28
    $region27: #{conv3d_block_forward.4} parent=5 // pred_region
      // Predicated region
      $region29: #{conv3d_block_forward.4} parent=27 // pred_check
        %p302 = pneg %p49
      $region30: #{conv3d_block_forward.4} parent=27 // pred_check_branch
        %304 = sbr.rel (%p302) target = $region32
      $region31: #{conv3d_block_forward.4} parent=27 // pred_region
        %s305 = smul.u32 4, %s23
        %p306 = scmp.lt.s32.totalorder %s22, 1
        %s307 = scalar_select %p306, %s22, 1
        %p308 = scmp.lt.s32.totalorder %s305, 7
        %s309 = scalar_select %p308, %s305, 7
        %s310 = smul.addr %s309, 8
        %s311 = smul.addr %s307, 64
        %s312 = sadd.s32 %s310, %s311
        %s313 = smul.addr %s312, 4
        %s314 = scalar_lea.vmem %s0, %s313
        %s315 = smul.u32 4, %s23
      $region32: #{conv3d_block_forward.4} parent=27 // pred_fallthru
        _
      // Predicated region
      $region33: #{conv3d_block_forward.4} parent=27 // pred_check
        %p316 = pneg %p85
      $region34: #{conv3d_block_forward.4} parent=27 // pred_check_branch
        %318 = sbr.rel (%p316) target = $region36
      $region35: #{conv3d_block_forward.4} parent=27 // pred_region
        %s319 = smul.u32 %s23, 4
        %s320 = ssub.s32 %s319, 1
        %p321 = scmp.gt.s32.totalorder %s320, 0
        %s322 = scalar_select %p321, %s320, 0
        %p323 = scmp.lt.s32.totalorder %s22, 1
        %s324 = scalar_select %p323, %s22, 1
        %p325 = scmp.lt.s32.totalorder %s322, 7
        %s326 = scalar_select %p325, %s322, 7
        %s327 = smul.addr %s326, 8
        %s328 = smul.addr %s324, 64
        %s329 = sadd.s32 %s327, %s328
        %s330 = smul.addr %s329, 4
        %s331 = scalar_lea.vmem %s1, %s330
        %s332 = smul.u32 %s23, 4
        %s333 = ssub.s32 %s332, 1
        %p334 = scmp.gt.s32.totalorder %s333, 0
        %s335 = scalar_select %p334, %s333, 0
      $region36: #{conv3d_block_forward.4} parent=27 // pred_fallthru
        _
      // Predicated region
      $region37: #{conv3d_block_forward.4} parent=27 // pred_check
        %p336 = pneg %p121
      $region38: #{conv3d_block_forward.4} parent=27 // pred_check_branch
        %338 = sbr.rel (%p336) target = $region40
      $region39: #{conv3d_block_forward.4} parent=27 // pred_region
        %s339 = sadd.s32 %s23, 1
        %s340 = smul.u32 %s339, 4
        %p341 = scmp.lt.s32.totalorder %s340, 7
        %s342 = scalar_select %p341, %s340, 7
        %p343 = scmp.lt.s32.totalorder %s22, 1
        %s344 = scalar_select %p343, %s22, 1
        %p345 = scmp.lt.s32.totalorder %s342, 7
        %s346 = scalar_select %p345, %s342, 7
        %s347 = smul.addr %s346, 8
        %s348 = smul.addr %s344, 64
        %s349 = sadd.s32 %s347, %s348
        %s350 = smul.addr %s349, 4
        %s351 = scalar_lea.vmem %s2, %s350
        %s352 = sadd.s32 %s23, 1
        %s353 = smul.u32 %s352, 4
        %p354 = scmp.lt.s32.totalorder %s353, 7
        %s355 = scalar_select %p354, %s353, 7
      $region40: #{conv3d_block_forward.4} parent=27 // pred_fallthru
        _
    $region28: #{conv3d_block_forward.4} parent=5 // pred_fallthru
      _
    %p356 = scmp.le.s32.totalorder 1, %s15
    %p357 = scmp.lt.s32.totalorder %s15, 5
    %p358 = pnand %p356, %p357
    %p359 = pneg %p358
    // Predicated region
    $region41: #{conv3d_block_forward.4} parent=5 // pred_check
      _
    $region42: #{conv3d_block_forward.4} parent=5 // pred_check_branch
      %361 = sbr.rel (%p358) target = $region44
    $region43: #{conv3d_block_forward.4} parent=5 // pred_region
      %s362 = ssub.s32 %s15, 1
      %s363 = smul.u32 4, %s25
      %p364 = scmp.lt.s32.totalorder %s24, 1
      %s365 = scalar_select %p364, %s24, 1
      %p366 = scmp.lt.s32.totalorder %s363, 7
      %s367 = scalar_select %p366, %s363, 7
      %s368 = smul.addr %s367, 8
      %s369 = smul.addr %s365, 64
      %s370 = sadd.s32 %s368, %s369
      %s371 = smul.addr %s370, 4
      %s372 = scalar_lea.vmem %s0, %s371
      %p373 = pneg %p55
      %p374 = pneg %p52
      %s375 = smul.u32 %s25, 4
      %s376 = ssub.s32 %s375, 1
      %p377 = scmp.gt.s32.totalorder %s376, 0
      %s378 = scalar_select %p377, %s376, 0
      %p379 = scmp.lt.s32.totalorder %s24, 1
      %s380 = scalar_select %p379, %s24, 1
      %p381 = scmp.lt.s32.totalorder %s378, 7
      %s382 = scalar_select %p381, %s378, 7
      %s383 = smul.addr %s382, 8
      %s384 = smul.addr %s380, 64
      %s385 = sadd.s32 %s383, %s384
      %s386 = smul.addr %s385, 4
      %s387 = scalar_lea.vmem %s1, %s386
      %p388 = pneg %p91
      %p389 = pneg %p88
      %s390 = sadd.s32 %s25, 1
      %s391 = smul.u32 %s390, 4
      %p392 = scmp.lt.s32.totalorder %s391, 7
      %s393 = scalar_select %p392, %s391, 7
      %p394 = scmp.lt.s32.totalorder %s24, 1
      %s395 = scalar_select %p394, %s24, 1
      %p396 = scmp.lt.s32.totalorder %s393, 7
      %s397 = scalar_select %p396, %s393, 7
      %s398 = smul.addr %s397, 8
      %s399 = smul.addr %s395, 64
      %s400 = sadd.s32 %s398, %s399
      %s401 = smul.addr %s400, 4
      %s402 = scalar_lea.vmem %s2, %s401
      %p403 = pneg %p127
      %p404 = pneg %p124
      %p405 = pneg %p148
      %p406 = pneg %p145
      %p407 = pneg %p169
      %p408 = pneg %p166
      %p409 = pneg %p190
      %p410 = pneg %p187
      %p411 = pneg %p218
      %p412 = pneg %p215
      %s413 = smul.u32 4, %s25
      %p414 = scmp.lt.s32.totalorder %s24, 1
      %s415 = scalar_select %p414, %s24, 1
      %p416 = scmp.lt.s32.totalorder %s413, 7
      %s417 = scalar_select %p416, %s413, 7
      %s418 = smul.addr %s417, 8
      %s419 = smul.addr %s415, 64
      %s420 = sadd.s32 %s418, %s419
      %s421 = smul.addr %s420, 4
      %s422 = scalar_lea.vmem %s6, %s421
      %p423 = pneg %p246
      %p424 = pneg %p243
      %p425 = scmp.lt.s32.totalorder %s24, 1
      %s426 = scalar_select %p425, %s24, 1
      %p427 = scmp.lt.s32.totalorder %s25, 1
      %s428 = scalar_select %p427, %s25, 1
      %s429 = smul.addr %s426, 2
      %s430 = sadd.s32 %s428, %s429
      %s431 = smul.addr %s430, 8
      %s432 = scalar_lea.vmem %s7, %s431
      %p433 = pneg %p274
      %p434 = pneg %p271
      %p435 = scmp.lt.s32.totalorder %s24, 1
      %s436 = scalar_select %p435, %s24, 1
      %p437 = scmp.lt.s32.totalorder %s25, 1
      %s438 = scalar_select %p437, %s25, 1
      %s439 = smul.addr %s436, 2
      %s440 = sadd.s32 %s438, %s439
      %s441 = smul.addr %s440, 8
      %s442 = scalar_lea.vmem %s8, %s441
      %s443 = smul.u32 4, %s25
      %p444 = scmp.lt.s32.totalorder %s24, 1
      %s445 = scalar_select %p444, %s24, 1
      %p446 = scmp.lt.s32.totalorder %s443, 7
      %s447 = scalar_select %p446, %s443, 7
      %s448 = smul.addr %s447, 8
      %s449 = smul.addr %s445, 64
      %s450 = sadd.s32 %s448, %s449
      %s451 = smul.addr %s450, 4
      %s452 = scalar_lea.vmem %s0, %s451
      %s453 = smul.u32 4, %s25
      %s454 = smul.u32 %s25, 4
      %s455 = ssub.s32 %s454, 1
      %p456 = scmp.gt.s32.totalorder %s455, 0
      %s457 = scalar_select %p456, %s455, 0
      %p458 = scmp.lt.s32.totalorder %s24, 1
      %s459 = scalar_select %p458, %s24, 1
      %p460 = scmp.lt.s32.totalorder %s457, 7
      %s461 = scalar_select %p460, %s457, 7
      %s462 = smul.addr %s461, 8
      %s463 = smul.addr %s459, 64
      %s464 = sadd.s32 %s462, %s463
      %s465 = smul.addr %s464, 4
      %s466 = scalar_lea.vmem %s1, %s465
      %s467 = smul.u32 %s25, 4
      %s468 = ssub.s32 %s467, 1
      %p469 = scmp.gt.s32.totalorder %s468, 0
      %s470 = scalar_select %p469, %s468, 0
      %s471 = sadd.s32 %s25, 1
      %s472 = smul.u32 %s471, 4
      %p473 = scmp.lt.s32.totalorder %s472, 7
      %s474 = scalar_select %p473, %s472, 7
      %p475 = scmp.lt.s32.totalorder %s24, 1
      %s476 = scalar_select %p475, %s24, 1
      %p477 = scmp.lt.s32.totalorder %s474, 7
      %s478 = scalar_select %p477, %s474, 7
      %s479 = smul.addr %s478, 8
      %s480 = smul.addr %s476, 64
      %s481 = sadd.s32 %s479, %s480
      %s482 = smul.addr %s481, 4
      %s483 = scalar_lea.vmem %s2, %s482
      %s484 = sadd.s32 %s25, 1
      %s485 = smul.u32 %s484, 4
      %p486 = scmp.lt.s32.totalorder %s485, 7
      %s487 = scalar_select %p486, %s485, 7
      %s488 = smul.u32 4, %s25
      %p489 = scmp.lt.s32.totalorder %s24, 1
      %s490 = scalar_select %p489, %s24, 1
      %p491 = scmp.lt.s32.totalorder %s488, 7
      %s492 = scalar_select %p491, %s488, 7
      %s493 = smul.addr %s492, 8
      %s494 = smul.addr %s490, 64
      %s495 = sadd.s32 %s493, %s494
      %s496 = smul.addr %s495, 4
      %s497 = scalar_lea.vmem %s6, %s496
      %s498 = smul.u32 4, %s25
      %p499 = scmp.lt.s32.totalorder %s24, 1
      %s500 = scalar_select %p499, %s24, 1
      %p501 = scmp.lt.s32.totalorder %s25, 1
      %s502 = scalar_select %p501, %s25, 1
      %s503 = smul.addr %s500, 2
      %s504 = sadd.s32 %s502, %s503
      %s505 = smul.addr %s504, 8
      %s506 = scalar_lea.vmem %s7, %s505
      %p507 = scmp.lt.s32.totalorder %s24, 1
      %s508 = scalar_select %p507, %s24, 1
      %p509 = scmp.lt.s32.totalorder %s25, 1
      %s510 = scalar_select %p509, %s25, 1
      %s511 = smul.addr %s508, 2
      %s512 = sadd.s32 %s510, %s511
      %s513 = smul.addr %s512, 8
      %s514 = scalar_lea.vmem %s8, %s513
      %v516 = vld [vmem:[%s466] sm:$0xf]
      %v517 = vld [vmem:[%s466 + $0x4] sm:$0xf]
      %v518 = vld [vmem:[%s466 + $0x8] sm:$0xf]
      %v519 = vld [vmem:[%s466 + $0xc] sm:$0xf]
      %v520 = vld [vmem:[%s466 + $0x10] sm:$0xf]
      %v521 = vld [vmem:[%s466 + $0x14] sm:$0xf]
      %v522 = vld [vmem:[%s466 + $0x18] sm:$0xf]
      %v523 = vld [vmem:[%s466 + $0x1c] sm:$0xf]
      %v524 = vunpack.c.l.bf16 %v516
      %v525 = vunpack.c.l.bf16 %v517
      %v526 = vunpack.c.l.bf16 %v518
      %v527 = vunpack.c.l.bf16 %v519
      %v528 = vunpack.c.l.bf16 %v520
      %v529 = vunpack.c.l.bf16 %v521
      %v530 = vunpack.c.l.bf16 %v522
      %v531 = vunpack.c.l.bf16 %v523
      %v532 = vld [vmem:[%s4] sm:$0x1]
      %v534 = vlaneseq
      %v535 = vshrl.u32 %v534, 7
      %v536 = vsub.s32 0, %v535
      %v537 = vrot.slane %v532, %v536
      %v539 = vmul.f32 %v524, %v537
      %v540 = vmul.f32 %v525, %v537
      %v541 = vmul.f32 %v526, %v537
      %v542 = vmul.f32 %v527, %v537
      %v543 = vmul.f32 %v528, %v537
      %v544 = vmul.f32 %v529, %v537
      %v545 = vmul.f32 %v530, %v537
      %v546 = vmul.f32 %v531, %v537
      %v547 = vld [vmem:[%s5] sm:$0x1]
      %v549 = vlaneseq
      %v550 = vshrl.u32 %v549, 7
      %v551 = vsub.s32 0, %v550
      %v552 = vrot.slane %v547, %v551
      %v554 = vadd.f32 %v539, %v552
      %v555 = vadd.f32 %v540, %v552
      %v556 = vadd.f32 %v541, %v552
      %v557 = vadd.f32 %v542, %v552
      %v558 = vadd.f32 %v543, %v552
      %v559 = vadd.f32 %v544, %v552
      %v560 = vadd.f32 %v545, %v552
      %v561 = vadd.f32 %v546, %v552
      %v562 = vmax.f32 %v554, 0.0
      %v563 = vmax.f32 %v555, 0.0
      %v564 = vmax.f32 %v556, 0.0
      %v565 = vmax.f32 %v557, 0.0
      %v566 = vmax.f32 %v558, 0.0
      %v567 = vmax.f32 %v559, 0.0
      %v568 = vmax.f32 %v560, 0.0
      %v569 = vmax.f32 %v561, 0.0
      %p570 = scmp.gt.s32.totalorder %s25, 0
      %s571 = scalar_select %p570, 1, 0
      %s572 = scvt.s32.f32 %s571
      %v573 = vstv %s572
      %v574 = vmul.f32 %v562, %v573
      %v575 = vmul.f32 %v563, %v573
      %v576 = vmul.f32 %v564, %v573
      %v577 = vmul.f32 %v565, %v573
      %v578 = vmul.f32 %v566, %v573
      %v579 = vmul.f32 %v567, %v573
      %v580 = vmul.f32 %v568, %v573
      %v581 = vmul.f32 %v569, %v573
      %v582 = vld [vmem:[%s483] sm:$0xf]
      %v583 = vld [vmem:[%s483 + $0x4] sm:$0xf]
      %v584 = vld [vmem:[%s483 + $0x8] sm:$0xf]
      %v585 = vld [vmem:[%s483 + $0xc] sm:$0xf]
      %v586 = vld [vmem:[%s483 + $0x10] sm:$0xf]
      %v587 = vld [vmem:[%s483 + $0x14] sm:$0xf]
      %v588 = vld [vmem:[%s483 + $0x18] sm:$0xf]
      %v589 = vld [vmem:[%s483 + $0x1c] sm:$0xf]
      %v590 = vunpack.c.l.bf16 %v582
      %v591 = vunpack.c.l.bf16 %v583
      %v592 = vunpack.c.l.bf16 %v584
      %v593 = vunpack.c.l.bf16 %v585
      %v594 = vunpack.c.l.bf16 %v586
      %v595 = vunpack.c.l.bf16 %v587
      %v596 = vunpack.c.l.bf16 %v588
      %v597 = vunpack.c.l.bf16 %v589
      %v598 = vmul.f32 %v590, %v537
      %v599 = vmul.f32 %v591, %v537
      %v600 = vmul.f32 %v592, %v537
      %v601 = vmul.f32 %v593, %v537
      %v602 = vmul.f32 %v594, %v537
      %v603 = vmul.f32 %v595, %v537
      %v604 = vmul.f32 %v596, %v537
      %v605 = vmul.f32 %v597, %v537
      %v606 = vadd.f32 %v598, %v552
      %v607 = vadd.f32 %v599, %v552
      %v608 = vadd.f32 %v600, %v552
      %v609 = vadd.f32 %v601, %v552
      %v610 = vadd.f32 %v602, %v552
      %v611 = vadd.f32 %v603, %v552
      %v612 = vadd.f32 %v604, %v552
      %v613 = vadd.f32 %v605, %v552
      %v614 = vmax.f32 %v606, 0.0
      %v615 = vmax.f32 %v607, 0.0
      %v616 = vmax.f32 %v608, 0.0
      %v617 = vmax.f32 %v609, 0.0
      %v618 = vmax.f32 %v610, 0.0
      %v619 = vmax.f32 %v611, 0.0
      %v620 = vmax.f32 %v612, 0.0
      %v621 = vmax.f32 %v613, 0.0
      %p622 = scmp.lt.s32.totalorder %s25, 1
      %s623 = scalar_select %p622, 1, 0
      %s624 = scvt.s32.f32 %s623
      %v625 = vstv %s624
      %v626 = vmul.f32 %v614, %v625
      %v627 = vmul.f32 %v615, %v625
      %v628 = vmul.f32 %v616, %v625
      %v629 = vmul.f32 %v617, %v625
      %v630 = vmul.f32 %v618, %v625
      %v631 = vmul.f32 %v619, %v625
      %v632 = vmul.f32 %v620, %v625
      %v633 = vmul.f32 %v621, %v625
      %v634 = vld [vmem:[%s452] sm:$0xf]
      %v635 = vld [vmem:[%s452 + $0x4] sm:$0xf]
      %v636 = vld [vmem:[%s452 + $0x8] sm:$0xf]
      %v637 = vld [vmem:[%s452 + $0xc] sm:$0xf]
      %v638 = vld [vmem:[%s452 + $0x10] sm:$0xf]
      %v639 = vld [vmem:[%s452 + $0x14] sm:$0xf]
      %v640 = vld [vmem:[%s452 + $0x18] sm:$0xf]
      %v641 = vld [vmem:[%s452 + $0x1c] sm:$0xf]
      %v642 = vld [vmem:[%s452 + $0x20] sm:$0xf]
      %v643 = vld [vmem:[%s452 + $0x24] sm:$0xf]
      %v644 = vld [vmem:[%s452 + $0x28] sm:$0xf]
      %v645 = vld [vmem:[%s452 + $0x2c] sm:$0xf]
      %v646 = vld [vmem:[%s452 + $0x30] sm:$0xf]
      %v647 = vld [vmem:[%s452 + $0x34] sm:$0xf]
      %v648 = vld [vmem:[%s452 + $0x38] sm:$0xf]
      %v649 = vld [vmem:[%s452 + $0x3c] sm:$0xf]
      %v650 = vld [vmem:[%s452 + $0x40] sm:$0xf]
      %v651 = vld [vmem:[%s452 + $0x44] sm:$0xf]
      %v652 = vld [vmem:[%s452 + $0x48] sm:$0xf]
      %v653 = vld [vmem:[%s452 + $0x4c] sm:$0xf]
      %v654 = vld [vmem:[%s452 + $0x50] sm:$0xf]
      %v655 = vld [vmem:[%s452 + $0x54] sm:$0xf]
      %v656 = vld [vmem:[%s452 + $0x58] sm:$0xf]
      %v657 = vld [vmem:[%s452 + $0x5c] sm:$0xf]
      %v658 = vld [vmem:[%s452 + $0x60] sm:$0xf]
      %v659 = vld [vmem:[%s452 + $0x64] sm:$0xf]
      %v660 = vld [vmem:[%s452 + $0x68] sm:$0xf]
      %v661 = vld [vmem:[%s452 + $0x6c] sm:$0xf]
      %v662 = vld [vmem:[%s452 + $0x70] sm:$0xf]
      %v663 = vld [vmem:[%s452 + $0x74] sm:$0xf]
      %v664 = vld [vmem:[%s452 + $0x78] sm:$0xf]
      %v665 = vld [vmem:[%s452 + $0x7c] sm:$0xf]
      %v666 = vunpack.c.l.bf16 %v634
      %v667 = vunpack.c.l.bf16 %v635
      %v668 = vunpack.c.l.bf16 %v636
      %v669 = vunpack.c.l.bf16 %v637
      %v670 = vunpack.c.l.bf16 %v638
      %v671 = vunpack.c.l.bf16 %v639
      %v672 = vunpack.c.l.bf16 %v640
      %v673 = vunpack.c.l.bf16 %v641
      %v674 = vunpack.c.l.bf16 %v642
      %v675 = vunpack.c.l.bf16 %v643
      %v676 = vunpack.c.l.bf16 %v644
      %v677 = vunpack.c.l.bf16 %v645
      %v678 = vunpack.c.l.bf16 %v646
      %v679 = vunpack.c.l.bf16 %v647
      %v680 = vunpack.c.l.bf16 %v648
      %v681 = vunpack.c.l.bf16 %v649
      %v682 = vunpack.c.l.bf16 %v650
      %v683 = vunpack.c.l.bf16 %v651
      %v684 = vunpack.c.l.bf16 %v652
      %v685 = vunpack.c.l.bf16 %v653
      %v686 = vunpack.c.l.bf16 %v654
      %v687 = vunpack.c.l.bf16 %v655
      %v688 = vunpack.c.l.bf16 %v656
      %v689 = vunpack.c.l.bf16 %v657
      %v690 = vunpack.c.l.bf16 %v658
      %v691 = vunpack.c.l.bf16 %v659
      %v692 = vunpack.c.l.bf16 %v660
      %v693 = vunpack.c.l.bf16 %v661
      %v694 = vunpack.c.l.bf16 %v662
      %v695 = vunpack.c.l.bf16 %v663
      %v696 = vunpack.c.l.bf16 %v664
      %v697 = vunpack.c.l.bf16 %v665
      %v698 = vmul.f32 %v666, %v537
      %v699 = vmul.f32 %v667, %v537
      %v700 = vmul.f32 %v668, %v537
      %v701 = vmul.f32 %v669, %v537
      %v702 = vmul.f32 %v670, %v537
      %v703 = vmul.f32 %v671, %v537
      %v704 = vmul.f32 %v672, %v537
      %v705 = vmul.f32 %v673, %v537
      %v706 = vmul.f32 %v674, %v537
      %v707 = vmul.f32 %v675, %v537
      %v708 = vmul.f32 %v676, %v537
      %v709 = vmul.f32 %v677, %v537
      %v710 = vmul.f32 %v678, %v537
      %v711 = vmul.f32 %v679, %v537
      %v712 = vmul.f32 %v680, %v537
      %v713 = vmul.f32 %v681, %v537
      %v714 = vmul.f32 %v682, %v537
      %v715 = vmul.f32 %v683, %v537
      %v716 = vmul.f32 %v684, %v537
      %v717 = vmul.f32 %v685, %v537
      %v718 = vmul.f32 %v686, %v537
      %v719 = vmul.f32 %v687, %v537
      %v720 = vmul.f32 %v688, %v537
      %v721 = vmul.f32 %v689, %v537
      %v722 = vmul.f32 %v690, %v537
      %v723 = vmul.f32 %v691, %v537
      %v724 = vmul.f32 %v692, %v537
      %v725 = vmul.f32 %v693, %v537
      %v726 = vmul.f32 %v694, %v537
      %v727 = vmul.f32 %v695, %v537
      %v728 = vmul.f32 %v696, %v537
      %v729 = vmul.f32 %v697, %v537
      %v730 = vadd.f32 %v698, %v552
      %v731 = vadd.f32 %v699, %v552
      %v732 = vadd.f32 %v700, %v552
      %v733 = vadd.f32 %v701, %v552
      %v734 = vadd.f32 %v702, %v552
      %v735 = vadd.f32 %v703, %v552
      %v736 = vadd.f32 %v704, %v552
      %v737 = vadd.f32 %v705, %v552
      %v738 = vadd.f32 %v706, %v552
      %v739 = vadd.f32 %v707, %v552
      %v740 = vadd.f32 %v708, %v552
      %v741 = vadd.f32 %v709, %v552
      %v742 = vadd.f32 %v710, %v552
      %v743 = vadd.f32 %v711, %v552
      %v744 = vadd.f32 %v712, %v552
      %v745 = vadd.f32 %v713, %v552
      %v746 = vadd.f32 %v714, %v552
      %v747 = vadd.f32 %v715, %v552
      %v748 = vadd.f32 %v716, %v552
      %v749 = vadd.f32 %v717, %v552
      %v750 = vadd.f32 %v718, %v552
      %v751 = vadd.f32 %v719, %v552
      %v752 = vadd.f32 %v720, %v552
      %v753 = vadd.f32 %v721, %v552
      %v754 = vadd.f32 %v722, %v552
      %v755 = vadd.f32 %v723, %v552
      %v756 = vadd.f32 %v724, %v552
      %v757 = vadd.f32 %v725, %v552
      %v758 = vadd.f32 %v726, %v552
      %v759 = vadd.f32 %v727, %v552
      %v760 = vadd.f32 %v728, %v552
      %v761 = vadd.f32 %v729, %v552
      %v762 = vmax.f32 %v730, 0.0
      %v763 = vmax.f32 %v731, 0.0
      %v764 = vmax.f32 %v732, 0.0
      %v765 = vmax.f32 %v733, 0.0
      %v766 = vmax.f32 %v734, 0.0
      %v767 = vmax.f32 %v735, 0.0
      %v768 = vmax.f32 %v736, 0.0
      %v769 = vmax.f32 %v737, 0.0
      %v770 = vmax.f32 %v738, 0.0
      %v771 = vmax.f32 %v739, 0.0
      %v772 = vmax.f32 %v740, 0.0
      %v773 = vmax.f32 %v741, 0.0
      %v774 = vmax.f32 %v742, 0.0
      %v775 = vmax.f32 %v743, 0.0
      %v776 = vmax.f32 %v744, 0.0
      %v777 = vmax.f32 %v745, 0.0
      %v778 = vmax.f32 %v746, 0.0
      %v779 = vmax.f32 %v747, 0.0
      %v780 = vmax.f32 %v748, 0.0
      %v781 = vmax.f32 %v749, 0.0
      %v782 = vmax.f32 %v750, 0.0
      %v783 = vmax.f32 %v751, 0.0
      %v784 = vmax.f32 %v752, 0.0
      %v785 = vmax.f32 %v753, 0.0
      %v786 = vmax.f32 %v754, 0.0
      %v787 = vmax.f32 %v755, 0.0
      %v788 = vmax.f32 %v756, 0.0
      %v789 = vmax.f32 %v757, 0.0
      %v790 = vmax.f32 %v758, 0.0
      %v791 = vmax.f32 %v759, 0.0
      %v792 = vmax.f32 %v760, 0.0
      %v793 = vmax.f32 %v761, 0.0
      %v843 = vrot.slane 0.0, 7
      %v844 = vrot.slane %v574, 7
      %v845 = vrot.slane %v575, 7
      %v846 = vrot.slane %v576, 7
      %v847 = vrot.slane %v577, 7
      %v848 = vrot.slane %v578, 7
      %v849 = vrot.slane %v579, 7
      %v850 = vrot.slane %v580, 7
      %v851 = vrot.slane %v581, 7
      %v852 = vrot.slane %v762, 7
      %v853 = vrot.slane %v763, 7
      %v854 = vrot.slane %v764, 7
      %v855 = vrot.slane %v765, 7
      %v856 = vrot.slane %v766, 7
      %v857 = vrot.slane %v767, 7
      %v858 = vrot.slane %v768, 7
      %v859 = vrot.slane %v769, 7
      %v860 = vrot.slane %v770, 7
      %v861 = vrot.slane %v771, 7
      %v862 = vrot.slane %v772, 7
      %v863 = vrot.slane %v773, 7
      %v864 = vrot.slane %v774, 7
      %v865 = vrot.slane %v775, 7
      %v866 = vrot.slane %v776, 7
      %v867 = vrot.slane %v777, 7
      %v868 = vrot.slane %v778, 7
      %v869 = vrot.slane %v779, 7
      %v870 = vrot.slane %v780, 7
      %v871 = vrot.slane %v781, 7
      %v872 = vrot.slane %v782, 7
      %v873 = vrot.slane %v783, 7
      %v874 = vrot.slane %v784, 7
      %v875 = vrot.slane %v785, 7
      %v876 = vrot.slane %v786, 7
      %v877 = vrot.slane %v787, 7
      %v878 = vrot.slane %v788, 7
      %v879 = vrot.slane %v789, 7
      %v880 = vrot.slane %v790, 7
      %v881 = vrot.slane %v791, 7
      %v882 = vrot.slane %v792, 7
      %v883 = vrot.slane %v793, 7
      %v884 = vrot.slane %v626, 7
      %v885 = vrot.slane %v627, 7
      %v886 = vrot.slane %v628, 7
      %v887 = vrot.slane %v629, 7
      %v888 = vrot.slane %v630, 7
      %v889 = vrot.slane %v631, 7
      %v890 = vrot.slane %v632, 7
      %v891 = vrot.slane %v633, 7
      %vm941 = vcmask 1040384
      %v942 = vsel %vm941, 0.0, %v843
      %v943 = vsel %vm941, 0.0, %v844
      %v944 = vsel %vm941, 0.0, %v845
      %v945 = vsel %vm941, 0.0, %v846
      %v946 = vsel %vm941, 0.0, %v847
      %v947 = vsel %vm941, 0.0, %v848
      %v948 = vsel %vm941, 0.0, %v849
      %v949 = vsel %vm941, 0.0, %v850
      %v950 = vsel %vm941, 0.0, %v851
      %v951 = vsel %vm941, 0.0, %v852
      %v952 = vsel %vm941, 0.0, %v853
      %v953 = vsel %vm941, 0.0, %v854
      %v954 = vsel %vm941, 0.0, %v855
      %v955 = vsel %vm941, 0.0, %v856
      %v956 = vsel %vm941, 0.0, %v857
      %v957 = vsel %vm941, 0.0, %v858
      %v958 = vsel %vm941, 0.0, %v859
      %v959 = vsel %vm941, 0.0, %v860
      %v960 = vsel %vm941, 0.0, %v861
      %v961 = vsel %vm941, 0.0, %v862
      %v962 = vsel %vm941, 0.0, %v863
      %v963 = vsel %vm941, 0.0, %v864
      %v964 = vsel %vm941, 0.0, %v865
      %v965 = vsel %vm941, 0.0, %v866
      %v966 = vsel %vm941, 0.0, %v867
      %v967 = vsel %vm941, 0.0, %v868
      %v968 = vsel %vm941, 0.0, %v869
      %v969 = vsel %vm941, 0.0, %v870
      %v970 = vsel %vm941, 0.0, %v871
      %v971 = vsel %vm941, 0.0, %v872
      %v972 = vsel %vm941, 0.0, %v873
      %v973 = vsel %vm941, 0.0, %v874
      %v974 = vsel %vm941, 0.0, %v875
      %v975 = vsel %vm941, 0.0, %v876
      %v976 = vsel %vm941, 0.0, %v877
      %v977 = vsel %vm941, 0.0, %v878
      %v978 = vsel %vm941, 0.0, %v879
      %v979 = vsel %vm941, 0.0, %v880
      %v980 = vsel %vm941, 0.0, %v881
      %v981 = vsel %vm941, 0.0, %v882
      %v982 = vsel %vm941, 0.0, %v883
      %v983 = vsel %vm941, 0.0, %v884
      %v984 = vsel %vm941, 0.0, %v885
      %v985 = vsel %vm941, 0.0, %v886
      %v986 = vsel %vm941, 0.0, %v887
      %v987 = vsel %vm941, 0.0, %v888
      %v988 = vsel %vm941, 0.0, %v889
      %v989 = vsel %vm941, 0.0, %v890
      %v990 = vsel %vm941, 0.0, %v891
      %v991 = vsel %vm941, %v843, 0.0
      %v992 = vsel %vm941, %v844, 0.0
      %v993 = vsel %vm941, %v845, 0.0
      %v994 = vsel %vm941, %v846, 0.0
      %v995 = vsel %vm941, %v847, 0.0
      %v996 = vsel %vm941, %v848, 0.0
      %v997 = vsel %vm941, %v849, 0.0
      %v998 = vsel %vm941, %v850, 0.0
      %v999 = vsel %vm941, %v851, 0.0
      %v1000 = vsel %vm941, %v852, 0.0
      %v1001 = vsel %vm941, %v853, 0.0
      %v1002 = vsel %vm941, %v854, 0.0
      %v1003 = vsel %vm941, %v855, 0.0
      %v1004 = vsel %vm941, %v856, 0.0
      %v1005 = vsel %vm941, %v857, 0.0
      %v1006 = vsel %vm941, %v858, 0.0
      %v1007 = vsel %vm941, %v859, 0.0
      %v1008 = vsel %vm941, %v860, 0.0
      %v1009 = vsel %vm941, %v861, 0.0
      %v1010 = vsel %vm941, %v862, 0.0
      %v1011 = vsel %vm941, %v863, 0.0
      %v1012 = vsel %vm941, %v864, 0.0
      %v1013 = vsel %vm941, %v865, 0.0
      %v1014 = vsel %vm941, %v866, 0.0
      %v1015 = vsel %vm941, %v867, 0.0
      %v1016 = vsel %vm941, %v868, 0.0
      %v1017 = vsel %vm941, %v869, 0.0
      %v1018 = vsel %vm941, %v870, 0.0
      %v1019 = vsel %vm941, %v871, 0.0
      %v1020 = vsel %vm941, %v872, 0.0
      %v1021 = vsel %vm941, %v873, 0.0
      %v1022 = vsel %vm941, %v874, 0.0
      %v1023 = vsel %vm941, %v875, 0.0
      %v1024 = vsel %vm941, %v876, 0.0
      %v1025 = vsel %vm941, %v877, 0.0
      %v1026 = vsel %vm941, %v878, 0.0
      %v1027 = vsel %vm941, %v879, 0.0
      %v1028 = vsel %vm941, %v880, 0.0
      %v1029 = vsel %vm941, %v881, 0.0
      %v1030 = vsel %vm941, %v882, 0.0
      %v1031 = vsel %vm941, %v883, 0.0
      %v1032 = vsel %vm941, %v884, 0.0
      %v1033 = vsel %vm941, %v885, 0.0
      %v1034 = vsel %vm941, %v886, 0.0
      %v1035 = vsel %vm941, %v887, 0.0
      %v1036 = vsel %vm941, %v888, 0.0
      %v1037 = vsel %vm941, %v889, 0.0
      %v1038 = vsel %vm941, %v890, 0.0
      %v1039 = vsel %vm941, %v891, 0.0
      %vm1138 = vcmask 1046528
      %v1139 = vrot.slane %v942, 1
      %v1140 = vrot.slane %v991, 1
      %v1141 = vsel %vm1138, %v1139, %v1140
      %v1142 = vrot.slane %v943, 1
      %v1143 = vrot.slane %v992, 1
      %v1144 = vsel %vm1138, %v1142, %v1143
      %v1145 = vrot.slane %v944, 1
      %v1146 = vrot.slane %v993, 1
      %v1147 = vsel %vm1138, %v1145, %v1146
      %v1148 = vrot.slane %v945, 1
      %v1149 = vrot.slane %v994, 1
      %v1150 = vsel %vm1138, %v1148, %v1149
      %v1151 = vrot.slane %v946, 1
      %v1152 = vrot.slane %v995, 1
      %v1153 = vsel %vm1138, %v1151, %v1152
      %v1154 = vrot.slane %v947, 1
      %v1155 = vrot.slane %v996, 1
      %v1156 = vsel %vm1138, %v1154, %v1155
      %v1157 = vrot.slane %v948, 1
      %v1158 = vrot.slane %v997, 1
      %v1159 = vsel %vm1138, %v1157, %v1158
      %v1160 = vrot.slane %v949, 1
      %v1161 = vrot.slane %v998, 1
      %v1162 = vsel %vm1138, %v1160, %v1161
      %v1163 = vrot.slane %v950, 1
      %v1164 = vrot.slane %v999, 1
      %v1165 = vsel %vm1138, %v1163, %v1164
      %v1166 = vrot.slane %v951, 1
      %v1167 = vrot.slane %v1000, 1
      %v1168 = vsel %vm1138, %v1166, %v1167
      %v1169 = vrot.slane %v952, 1
      %v1170 = vrot.slane %v1001, 1
      %v1171 = vsel %vm1138, %v1169, %v1170
      %v1172 = vrot.slane %v953, 1
      %v1173 = vrot.slane %v1002, 1
      %v1174 = vsel %vm1138, %v1172, %v1173
      %v1175 = vrot.slane %v954, 1
      %v1176 = vrot.slane %v1003, 1
      %v1177 = vsel %vm1138, %v1175, %v1176
      %v1178 = vrot.slane %v955, 1
      %v1179 = vrot.slane %v1004, 1
      %v1180 = vsel %vm1138, %v1178, %v1179
      %v1181 = vrot.slane %v956, 1
      %v1182 = vrot.slane %v1005, 1
      %v1183 = vsel %vm1138, %v1181, %v1182
      %v1184 = vrot.slane %v957, 1
      %v1185 = vrot.slane %v1006, 1
      %v1186 = vsel %vm1138, %v1184, %v1185
      %v1187 = vrot.slane %v958, 1
      %v1188 = vrot.slane %v1007, 1
      %v1189 = vsel %vm1138, %v1187, %v1188
      %v1190 = vrot.slane %v959, 1
      %v1191 = vrot.slane %v1008, 1
      %v1192 = vsel %vm1138, %v1190, %v1191
      %v1193 = vrot.slane %v960, 1
      %v1194 = vrot.slane %v1009, 1
      %v1195 = vsel %vm1138, %v1193, %v1194
      %v1196 = vrot.slane %v961, 1
      %v1197 = vrot.slane %v1010, 1
      %v1198 = vsel %vm1138, %v1196, %v1197
      %v1199 = vrot.slane %v962, 1
      %v1200 = vrot.slane %v1011, 1
      %v1201 = vsel %vm1138, %v1199, %v1200
      %v1202 = vrot.slane %v963, 1
      %v1203 = vrot.slane %v1012, 1
      %v1204 = vsel %vm1138, %v1202, %v1203
      %v1205 = vrot.slane %v964, 1
      %v1206 = vrot.slane %v1013, 1
      %v1207 = vsel %vm1138, %v1205, %v1206
      %v1208 = vrot.slane %v965, 1
      %v1209 = vrot.slane %v1014, 1
      %v1210 = vsel %vm1138, %v1208, %v1209
      %v1211 = vrot.slane %v966, 1
      %v1212 = vrot.slane %v1015, 1
      %v1213 = vsel %vm1138, %v1211, %v1212
      %v1214 = vrot.slane %v967, 1
      %v1215 = vrot.slane %v1016, 1
      %v1216 = vsel %vm1138, %v1214, %v1215
      %v1217 = vrot.slane %v968, 1
      %v1218 = vrot.slane %v1017, 1
      %v1219 = vsel %vm1138, %v1217, %v1218
      %v1220 = vrot.slane %v969, 1
      %v1221 = vrot.slane %v1018, 1
      %v1222 = vsel %vm1138, %v1220, %v1221
      %v1223 = vrot.slane %v970, 1
      %v1224 = vrot.slane %v1019, 1
      %v1225 = vsel %vm1138, %v1223, %v1224
      %v1226 = vrot.slane %v971, 1
      %v1227 = vrot.slane %v1020, 1
      %v1228 = vsel %vm1138, %v1226, %v1227
      %v1229 = vrot.slane %v972, 1
      %v1230 = vrot.slane %v1021, 1
      %v1231 = vsel %vm1138, %v1229, %v1230
      %v1232 = vrot.slane %v973, 1
      %v1233 = vrot.slane %v1022, 1
      %v1234 = vsel %vm1138, %v1232, %v1233
      %v1235 = vrot.slane %v974, 1
      %v1236 = vrot.slane %v1023, 1
      %v1237 = vsel %vm1138, %v1235, %v1236
      %v1238 = vrot.slane %v975, 1
      %v1239 = vrot.slane %v1024, 1
      %v1240 = vsel %vm1138, %v1238, %v1239
      %v1241 = vrot.slane %v976, 1
      %v1242 = vrot.slane %v1025, 1
      %v1243 = vsel %vm1138, %v1241, %v1242
      %v1244 = vrot.slane %v977, 1
      %v1245 = vrot.slane %v1026, 1
      %v1246 = vsel %vm1138, %v1244, %v1245
      %v1247 = vrot.slane %v978, 1
      %v1248 = vrot.slane %v1027, 1
      %v1249 = vsel %vm1138, %v1247, %v1248
      %v1250 = vrot.slane %v979, 1
      %v1251 = vrot.slane %v1028, 1
      %v1252 = vsel %vm1138, %v1250, %v1251
      %v1253 = vrot.slane %v980, 1
      %v1254 = vrot.slane %v1029, 1
      %v1255 = vsel %vm1138, %v1253, %v1254
      %v1256 = vrot.slane %v981, 1
      %v1257 = vrot.slane %v1030, 1
      %v1258 = vsel %vm1138, %v1256, %v1257
      %v1259 = vrot.slane %v982, 1
      %v1260 = vrot.slane %v1031, 1
      %v1261 = vsel %vm1138, %v1259, %v1260
      %v1262 = vrot.slane %v983, 1
      %v1263 = vrot.slane %v1032, 1
      %v1264 = vsel %vm1138, %v1262, %v1263
      %v1265 = vrot.slane %v984, 1
      %v1266 = vrot.slane %v1033, 1
      %v1267 = vsel %vm1138, %v1265, %v1266
      %v1268 = vrot.slane %v985, 1
      %v1269 = vrot.slane %v1034, 1
      %v1270 = vsel %vm1138, %v1268, %v1269
      %v1271 = vrot.slane %v986, 1
      %v1272 = vrot.slane %v1035, 1
      %v1273 = vsel %vm1138, %v1271, %v1272
      %v1274 = vrot.slane %v987, 1
      %v1275 = vrot.slane %v1036, 1
      %v1276 = vsel %vm1138, %v1274, %v1275
      %v1277 = vrot.slane %v988, 1
      %v1278 = vrot.slane %v1037, 1
      %v1279 = vsel %vm1138, %v1277, %v1278
      %v1280 = vrot.slane %v989, 1
      %v1281 = vrot.slane %v1038, 1
      %v1282 = vsel %vm1138, %v1280, %v1281
      %v1283 = vrot.slane %v990, 1
      %v1284 = vrot.slane %v1039, 1
      %v1285 = vsel %vm1138, %v1283, %v1284
      %1286 = vrot.lane.b32.xlu0 %v1141, 8
      %v1287 = vpop.permute.xlu0 %1286
      %1288 = vrot.lane.b32.xlu0 %v1144, 8
      %v1289 = vpop.permute.xlu0 %1288
      %1290 = vrot.lane.b32.xlu0 %v1147, 8
      %v1291 = vpop.permute.xlu0 %1290
      %1292 = vrot.lane.b32.xlu0 %v1150, 8
      %v1293 = vpop.permute.xlu0 %1292
      %1294 = vrot.lane.b32.xlu0 %v1153, 8
      %v1295 = vpop.permute.xlu0 %1294
      %1296 = vrot.lane.b32.xlu0 %v1156, 8
      %v1297 = vpop.permute.xlu0 %1296
      %1298 = vrot.lane.b32.xlu0 %v1159, 8
      %v1299 = vpop.permute.xlu0 %1298
      %1300 = vrot.lane.b32.xlu0 %v1162, 8
      %v1301 = vpop.permute.xlu0 %1300
      %1302 = vrot.lane.b32.xlu0 %v1165, 8
      %v1303 = vpop.permute.xlu0 %1302
      %1304 = vrot.lane.b32.xlu0 %v1168, 8
      %v1305 = vpop.permute.xlu0 %1304
      %1306 = vrot.lane.b32.xlu0 %v1171, 8
      %v1307 = vpop.permute.xlu0 %1306
      %1308 = vrot.lane.b32.xlu0 %v1174, 8
      %v1309 = vpop.permute.xlu0 %1308
      %1310 = vrot.lane.b32.xlu0 %v1177, 8
      %v1311 = vpop.permute.xlu0 %1310
      %1312 = vrot.lane.b32.xlu0 %v1180, 8
      %v1313 = vpop.permute.xlu0 %1312
      %1314 = vrot.lane.b32.xlu0 %v1183, 8
      %v1315 = vpop.permute.xlu0 %1314
      %1316 = vrot.lane.b32.xlu0 %v1186, 8
      %v1317 = vpop.permute.xlu0 %1316
      %1318 = vrot.lane.b32.xlu0 %v1189, 8
      %v1319 = vpop.permute.xlu0 %1318
      %1320 = vrot.lane.b32.xlu0 %v1192, 8
      %v1321 = vpop.permute.xlu0 %1320
      %1322 = vrot.lane.b32.xlu0 %v1195, 8
      %v1323 = vpop.permute.xlu0 %1322
      %1324 = vrot.lane.b32.xlu0 %v1198, 8
      %v1325 = vpop.permute.xlu0 %1324
      %1326 = vrot.lane.b32.xlu0 %v1201, 8
      %v1327 = vpop.permute.xlu0 %1326
      %1328 = vrot.lane.b32.xlu0 %v1204, 8
      %v1329 = vpop.permute.xlu0 %1328
      %1330 = vrot.lane.b32.xlu0 %v1207, 8
      %v1331 = vpop.permute.xlu0 %1330
      %1332 = vrot.lane.b32.xlu0 %v1210, 8
      %v1333 = vpop.permute.xlu0 %1332
      %1334 = vrot.lane.b32.xlu0 %v1213, 8
      %v1335 = vpop.permute.xlu0 %1334
      %1336 = vrot.lane.b32.xlu0 %v1216, 8
      %v1337 = vpop.permute.xlu0 %1336
      %1338 = vrot.lane.b32.xlu0 %v1219, 8
      %v1339 = vpop.permute.xlu0 %1338
      %1340 = vrot.lane.b32.xlu0 %v1222, 8
      %v1341 = vpop.permute.xlu0 %1340
      %1342 = vrot.lane.b32.xlu0 %v1225, 8
      %v1343 = vpop.permute.xlu0 %1342
      %1344 = vrot.lane.b32.xlu0 %v1228, 8
      %v1345 = vpop.permute.xlu0 %1344
      %1346 = vrot.lane.b32.xlu0 %v1231, 8
      %v1347 = vpop.permute.xlu0 %1346
      %1348 = vrot.lane.b32.xlu0 %v1234, 8
      %v1349 = vpop.permute.xlu0 %1348
      %1350 = vrot.lane.b32.xlu0 %v1237, 8
      %v1351 = vpop.permute.xlu0 %1350
      %1352 = vrot.lane.b32.xlu0 %v1240, 8
      %v1353 = vpop.permute.xlu0 %1352
      %1354 = vrot.lane.b32.xlu0 %v1243, 8
      %v1355 = vpop.permute.xlu0 %1354
      %1356 = vrot.lane.b32.xlu0 %v1246, 8
      %v1357 = vpop.permute.xlu0 %1356
      %1358 = vrot.lane.b32.xlu0 %v1249, 8
      %v1359 = vpop.permute.xlu0 %1358
      %1360 = vrot.lane.b32.xlu0 %v1252, 8
      %v1361 = vpop.permute.xlu0 %1360
      %1362 = vrot.lane.b32.xlu0 %v1255, 8
      %v1363 = vpop.permute.xlu0 %1362
      %1364 = vrot.lane.b32.xlu0 %v1258, 8
      %v1365 = vpop.permute.xlu0 %1364
      %1366 = vrot.lane.b32.xlu0 %v1261, 8
      %v1367 = vpop.permute.xlu0 %1366
      %1368 = vrot.lane.b32.xlu0 %v1264, 8
      %v1369 = vpop.permute.xlu0 %1368
      %1370 = vrot.lane.b32.xlu0 %v1267, 8
      %v1371 = vpop.permute.xlu0 %1370
      %1372 = vrot.lane.b32.xlu0 %v1270, 8
      %v1373 = vpop.permute.xlu0 %1372
      %1374 = vrot.lane.b32.xlu0 %v1273, 8
      %v1375 = vpop.permute.xlu0 %1374
      %1376 = vrot.lane.b32.xlu0 %v1276, 8
      %v1377 = vpop.permute.xlu0 %1376
      %1378 = vrot.lane.b32.xlu0 %v1279, 8
      %v1379 = vpop.permute.xlu0 %1378
      %1380 = vrot.lane.b32.xlu0 %v1282, 8
      %v1381 = vpop.permute.xlu0 %1380
      %1382 = vrot.lane.b32.xlu0 %v1285, 8
      %v1383 = vpop.permute.xlu0 %1382
      %vm1433 = vcmask 1045504
      %v1434 = vrot.slane %v942, 2
      %v1435 = vrot.slane %v991, 2
      %v1436 = vsel %vm1433, %v1434, %v1435
      %v1437 = vrot.slane %v943, 2
      %v1438 = vrot.slane %v992, 2
      %v1439 = vsel %vm1433, %v1437, %v1438
      %v1440 = vrot.slane %v944, 2
      %v1441 = vrot.slane %v993, 2
      %v1442 = vsel %vm1433, %v1440, %v1441
      %v1443 = vrot.slane %v945, 2
      %v1444 = vrot.slane %v994, 2
      %v1445 = vsel %vm1433, %v1443, %v1444
      %v1446 = vrot.slane %v946, 2
      %v1447 = vrot.slane %v995, 2
      %v1448 = vsel %vm1433, %v1446, %v1447
      %v1449 = vrot.slane %v947, 2
      %v1450 = vrot.slane %v996, 2
      %v1451 = vsel %vm1433, %v1449, %v1450
      %v1452 = vrot.slane %v948, 2
      %v1453 = vrot.slane %v997, 2
      %v1454 = vsel %vm1433, %v1452, %v1453
      %v1455 = vrot.slane %v949, 2
      %v1456 = vrot.slane %v998, 2
      %v1457 = vsel %vm1433, %v1455, %v1456
      %v1458 = vrot.slane %v950, 2
      %v1459 = vrot.slane %v999, 2
      %v1460 = vsel %vm1433, %v1458, %v1459
      %v1461 = vrot.slane %v951, 2
      %v1462 = vrot.slane %v1000, 2
      %v1463 = vsel %vm1433, %v1461, %v1462
      %v1464 = vrot.slane %v952, 2
      %v1465 = vrot.slane %v1001, 2
      %v1466 = vsel %vm1433, %v1464, %v1465
      %v1467 = vrot.slane %v953, 2
      %v1468 = vrot.slane %v1002, 2
      %v1469 = vsel %vm1433, %v1467, %v1468
      %v1470 = vrot.slane %v954, 2
      %v1471 = vrot.slane %v1003, 2
      %v1472 = vsel %vm1433, %v1470, %v1471
      %v1473 = vrot.slane %v955, 2
      %v1474 = vrot.slane %v1004, 2
      %v1475 = vsel %vm1433, %v1473, %v1474
      %v1476 = vrot.slane %v956, 2
      %v1477 = vrot.slane %v1005, 2
      %v1478 = vsel %vm1433, %v1476, %v1477
      %v1479 = vrot.slane %v957, 2
      %v1480 = vrot.slane %v1006, 2
      %v1481 = vsel %vm1433, %v1479, %v1480
      %v1482 = vrot.slane %v958, 2
      %v1483 = vrot.slane %v1007, 2
      %v1484 = vsel %vm1433, %v1482, %v1483
      %v1485 = vrot.slane %v959, 2
      %v1486 = vrot.slane %v1008, 2
      %v1487 = vsel %vm1433, %v1485, %v1486
      %v1488 = vrot.slane %v960, 2
      %v1489 = vrot.slane %v1009, 2
      %v1490 = vsel %vm1433, %v1488, %v1489
      %v1491 = vrot.slane %v961, 2
      %v1492 = vrot.slane %v1010, 2
      %v1493 = vsel %vm1433, %v1491, %v1492
      %v1494 = vrot.slane %v962, 2
      %v1495 = vrot.slane %v1011, 2
      %v1496 = vsel %vm1433, %v1494, %v1495
      %v1497 = vrot.slane %v963, 2
      %v1498 = vrot.slane %v1012, 2
      %v1499 = vsel %vm1433, %v1497, %v1498
      %v1500 = vrot.slane %v964, 2
      %v1501 = vrot.slane %v1013, 2
      %v1502 = vsel %vm1433, %v1500, %v1501
      %v1503 = vrot.slane %v965, 2
      %v1504 = vrot.slane %v1014, 2
      %v1505 = vsel %vm1433, %v1503, %v1504
      %v1506 = vrot.slane %v966, 2
      %v1507 = vrot.slane %v1015, 2
      %v1508 = vsel %vm1433, %v1506, %v1507
      %v1509 = vrot.slane %v967, 2
      %v1510 = vrot.slane %v1016, 2
      %v1511 = vsel %vm1433, %v1509, %v1510
      %v1512 = vrot.slane %v968, 2
      %v1513 = vrot.slane %v1017, 2
      %v1514 = vsel %vm1433, %v1512, %v1513
      %v1515 = vrot.slane %v969, 2
      %v1516 = vrot.slane %v1018, 2
      %v1517 = vsel %vm1433, %v1515, %v1516
      %v1518 = vrot.slane %v970, 2
      %v1519 = vrot.slane %v1019, 2
      %v1520 = vsel %vm1433, %v1518, %v1519
      %v1521 = vrot.slane %v971, 2
      %v1522 = vrot.slane %v1020, 2
      %v1523 = vsel %vm1433, %v1521, %v1522
      %v1524 = vrot.slane %v972, 2
      %v1525 = vrot.slane %v1021, 2
      %v1526 = vsel %vm1433, %v1524, %v1525
      %v1527 = vrot.slane %v973, 2
      %v1528 = vrot.slane %v1022, 2
      %v1529 = vsel %vm1433, %v1527, %v1528
      %v1530 = vrot.slane %v974, 2
      %v1531 = vrot.slane %v1023, 2
      %v1532 = vsel %vm1433, %v1530, %v1531
      %v1533 = vrot.slane %v975, 2
      %v1534 = vrot.slane %v1024, 2
      %v1535 = vsel %vm1433, %v1533, %v1534
      %v1536 = vrot.slane %v976, 2
      %v1537 = vrot.slane %v1025, 2
      %v1538 = vsel %vm1433, %v1536, %v1537
      %v1539 = vrot.slane %v977, 2
      %v1540 = vrot.slane %v1026, 2
      %v1541 = vsel %vm1433, %v1539, %v1540
      %v1542 = vrot.slane %v978, 2
      %v1543 = vrot.slane %v1027, 2
      %v1544 = vsel %vm1433, %v1542, %v1543
      %v1545 = vrot.slane %v979, 2
      %v1546 = vrot.slane %v1028, 2
      %v1547 = vsel %vm1433, %v1545, %v1546
      %v1548 = vrot.slane %v980, 2
      %v1549 = vrot.slane %v1029, 2
      %v1550 = vsel %vm1433, %v1548, %v1549
      %v1551 = vrot.slane %v981, 2
      %v1552 = vrot.slane %v1030, 2
      %v1553 = vsel %vm1433, %v1551, %v1552
      %v1554 = vrot.slane %v982, 2
      %v1555 = vrot.slane %v1031, 2
      %v1556 = vsel %vm1433, %v1554, %v1555
      %v1557 = vrot.slane %v983, 2
      %v1558 = vrot.slane %v1032, 2
      %v1559 = vsel %vm1433, %v1557, %v1558
      %v1560 = vrot.slane %v984, 2
      %v1561 = vrot.slane %v1033, 2
      %v1562 = vsel %vm1433, %v1560, %v1561
      %v1563 = vrot.slane %v985, 2
      %v1564 = vrot.slane %v1034, 2
      %v1565 = vsel %vm1433, %v1563, %v1564
      %v1566 = vrot.slane %v986, 2
      %v1567 = vrot.slane %v1035, 2
      %v1568 = vsel %vm1433, %v1566, %v1567
      %v1569 = vrot.slane %v987, 2
      %v1570 = vrot.slane %v1036, 2
      %v1571 = vsel %vm1433, %v1569, %v1570
      %v1572 = vrot.slane %v988, 2
      %v1573 = vrot.slane %v1037, 2
      %v1574 = vsel %vm1433, %v1572, %v1573
      %v1575 = vrot.slane %v989, 2
      %v1576 = vrot.slane %v1038, 2
      %v1577 = vsel %vm1433, %v1575, %v1576
      %v1578 = vrot.slane %v990, 2
      %v1579 = vrot.slane %v1039, 2
      %v1580 = vsel %vm1433, %v1578, %v1579
      %1581 = vrot.lane.b32.xlu0 %v1436, 16
      %v1582 = vpop.permute.xlu0 %1581
      %1583 = vrot.lane.b32.xlu0 %v1439, 16
      %v1584 = vpop.permute.xlu0 %1583
      %1585 = vrot.lane.b32.xlu0 %v1442, 16
      %v1586 = vpop.permute.xlu0 %1585
      %1587 = vrot.lane.b32.xlu0 %v1445, 16
      %v1588 = vpop.permute.xlu0 %1587
      %1589 = vrot.lane.b32.xlu0 %v1448, 16
      %v1590 = vpop.permute.xlu0 %1589
      %1591 = vrot.lane.b32.xlu0 %v1451, 16
      %v1592 = vpop.permute.xlu0 %1591
      %1593 = vrot.lane.b32.xlu0 %v1454, 16
      %v1594 = vpop.permute.xlu0 %1593
      %1595 = vrot.lane.b32.xlu0 %v1457, 16
      %v1596 = vpop.permute.xlu0 %1595
      %1597 = vrot.lane.b32.xlu0 %v1460, 16
      %v1598 = vpop.permute.xlu0 %1597
      %1599 = vrot.lane.b32.xlu0 %v1463, 16
      %v1600 = vpop.permute.xlu0 %1599
      %1601 = vrot.lane.b32.xlu0 %v1466, 16
      %v1602 = vpop.permute.xlu0 %1601
      %1603 = vrot.lane.b32.xlu0 %v1469, 16
      %v1604 = vpop.permute.xlu0 %1603
      %1605 = vrot.lane.b32.xlu0 %v1472, 16
      %v1606 = vpop.permute.xlu0 %1605
      %1607 = vrot.lane.b32.xlu0 %v1475, 16
      %v1608 = vpop.permute.xlu0 %1607
      %1609 = vrot.lane.b32.xlu0 %v1478, 16
      %v1610 = vpop.permute.xlu0 %1609
      %1611 = vrot.lane.b32.xlu0 %v1481, 16
      %v1612 = vpop.permute.xlu0 %1611
      %1613 = vrot.lane.b32.xlu0 %v1484, 16
      %v1614 = vpop.permute.xlu0 %1613
      %1615 = vrot.lane.b32.xlu0 %v1487, 16
      %v1616 = vpop.permute.xlu0 %1615
      %1617 = vrot.lane.b32.xlu0 %v1490, 16
      %v1618 = vpop.permute.xlu0 %1617
      %1619 = vrot.lane.b32.xlu0 %v1493, 16
      %v1620 = vpop.permute.xlu0 %1619
      %1621 = vrot.lane.b32.xlu0 %v1496, 16
      %v1622 = vpop.permute.xlu0 %1621
      %1623 = vrot.lane.b32.xlu0 %v1499, 16
      %v1624 = vpop.permute.xlu0 %1623
      %1625 = vrot.lane.b32.xlu0 %v1502, 16
      %v1626 = vpop.permute.xlu0 %1625
      %1627 = vrot.lane.b32.xlu0 %v1505, 16
      %v1628 = vpop.permute.xlu0 %1627
      %1629 = vrot.lane.b32.xlu0 %v1508, 16
      %v1630 = vpop.permute.xlu0 %1629
      %1631 = vrot.lane.b32.xlu0 %v1511, 16
      %v1632 = vpop.permute.xlu0 %1631
      %1633 = vrot.lane.b32.xlu0 %v1514, 16
      %v1634 = vpop.permute.xlu0 %1633
      %1635 = vrot.lane.b32.xlu0 %v1517, 16
      %v1636 = vpop.permute.xlu0 %1635
      %1637 = vrot.lane.b32.xlu0 %v1520, 16
      %v1638 = vpop.permute.xlu0 %1637
      %1639 = vrot.lane.b32.xlu0 %v1523, 16
      %v1640 = vpop.permute.xlu0 %1639
      %1641 = vrot.lane.b32.xlu0 %v1526, 16
      %v1642 = vpop.permute.xlu0 %1641
      %1643 = vrot.lane.b32.xlu0 %v1529, 16
      %v1644 = vpop.permute.xlu0 %1643
      %1645 = vrot.lane.b32.xlu0 %v1532, 16
      %v1646 = vpop.permute.xlu0 %1645
      %1647 = vrot.lane.b32.xlu0 %v1535, 16
      %v1648 = vpop.permute.xlu0 %1647
      %1649 = vrot.lane.b32.xlu0 %v1538, 16
      %v1650 = vpop.permute.xlu0 %1649
      %1651 = vrot.lane.b32.xlu0 %v1541, 16
      %v1652 = vpop.permute.xlu0 %1651
      %1653 = vrot.lane.b32.xlu0 %v1544, 16
      %v1654 = vpop.permute.xlu0 %1653
      %1655 = vrot.lane.b32.xlu0 %v1547, 16
      %v1656 = vpop.permute.xlu0 %1655
      %1657 = vrot.lane.b32.xlu0 %v1550, 16
      %v1658 = vpop.permute.xlu0 %1657
      %1659 = vrot.lane.b32.xlu0 %v1553, 16
      %v1660 = vpop.permute.xlu0 %1659
      %1661 = vrot.lane.b32.xlu0 %v1556, 16
      %v1662 = vpop.permute.xlu0 %1661
      %1663 = vrot.lane.b32.xlu0 %v1559, 16
      %v1664 = vpop.permute.xlu0 %1663
      %1665 = vrot.lane.b32.xlu0 %v1562, 16
      %v1666 = vpop.permute.xlu0 %1665
      %1667 = vrot.lane.b32.xlu0 %v1565, 16
      %v1668 = vpop.permute.xlu0 %1667
      %1669 = vrot.lane.b32.xlu0 %v1568, 16
      %v1670 = vpop.permute.xlu0 %1669
      %1671 = vrot.lane.b32.xlu0 %v1571, 16
      %v1672 = vpop.permute.xlu0 %1671
      %1673 = vrot.lane.b32.xlu0 %v1574, 16
      %v1674 = vpop.permute.xlu0 %1673
      %1675 = vrot.lane.b32.xlu0 %v1577, 16
      %v1676 = vpop.permute.xlu0 %1675
      %1677 = vrot.lane.b32.xlu0 %v1580, 16
      %v1678 = vpop.permute.xlu0 %1677
      %vm1728 = vcmask 64512
      %v1729 = vsel %vm1728, %v942, %v1287
      %v1730 = vsel %vm1728, %v943, %v1289
      %v1731 = vsel %vm1728, %v944, %v1291
      %v1732 = vsel %vm1728, %v945, %v1293
      %v1733 = vsel %vm1728, %v946, %v1295
      %v1734 = vsel %vm1728, %v947, %v1297
      %v1735 = vsel %vm1728, %v948, %v1299
      %v1736 = vsel %vm1728, %v949, %v1301
      %v1737 = vsel %vm1728, %v950, %v1303
      %v1738 = vsel %vm1728, %v951, %v1305
      %v1739 = vsel %vm1728, %v952, %v1307
      %v1740 = vsel %vm1728, %v953, %v1309
      %v1741 = vsel %vm1728, %v954, %v1311
      %v1742 = vsel %vm1728, %v955, %v1313
      %v1743 = vsel %vm1728, %v956, %v1315
      %v1744 = vsel %vm1728, %v957, %v1317
      %v1745 = vsel %vm1728, %v958, %v1319
      %v1746 = vsel %vm1728, %v959, %v1321
      %v1747 = vsel %vm1728, %v960, %v1323
      %v1748 = vsel %vm1728, %v961, %v1325
      %v1749 = vsel %vm1728, %v962, %v1327
      %v1750 = vsel %vm1728, %v963, %v1329
      %v1751 = vsel %vm1728, %v964, %v1331
      %v1752 = vsel %vm1728, %v965, %v1333
      %v1753 = vsel %vm1728, %v966, %v1335
      %v1754 = vsel %vm1728, %v967, %v1337
      %v1755 = vsel %vm1728, %v968, %v1339
      %v1756 = vsel %vm1728, %v969, %v1341
      %v1757 = vsel %vm1728, %v970, %v1343
      %v1758 = vsel %vm1728, %v971, %v1345
      %v1759 = vsel %vm1728, %v972, %v1347
      %v1760 = vsel %vm1728, %v973, %v1349
      %v1761 = vsel %vm1728, %v974, %v1351
      %v1762 = vsel %vm1728, %v975, %v1353
      %v1763 = vsel %vm1728, %v976, %v1355
      %v1764 = vsel %vm1728, %v977, %v1357
      %v1765 = vsel %vm1728, %v978, %v1359
      %v1766 = vsel %vm1728, %v979, %v1361
      %v1767 = vsel %vm1728, %v980, %v1363
      %v1768 = vsel %vm1728, %v981, %v1365
      %v1769 = vsel %vm1728, %v982, %v1367
      %v1770 = vsel %vm1728, %v983, %v1369
      %v1771 = vsel %vm1728, %v984, %v1371
      %v1772 = vsel %vm1728, %v985, %v1373
      %v1773 = vsel %vm1728, %v986, %v1375
      %v1774 = vsel %vm1728, %v987, %v1377
      %v1775 = vsel %vm1728, %v988, %v1379
      %v1776 = vsel %vm1728, %v989, %v1381
      %v1777 = vsel %vm1728, %v990, %v1383
      %vm1778 = vcmask 130048
      %v1779 = vsel %vm1778, %v1729, %v1582
      %v1780 = vsel %vm1778, %v1730, %v1584
      %v1781 = vsel %vm1778, %v1731, %v1586
      %v1782 = vsel %vm1778, %v1732, %v1588
      %v1783 = vsel %vm1778, %v1733, %v1590
      %v1784 = vsel %vm1778, %v1734, %v1592
      %v1785 = vsel %vm1778, %v1735, %v1594
      %v1786 = vsel %vm1778, %v1736, %v1596
      %v1787 = vsel %vm1778, %v1737, %v1598
      %v1788 = vsel %vm1778, %v1738, %v1600
      %v1789 = vsel %vm1778, %v1739, %v1602
      %v1790 = vsel %vm1778, %v1740, %v1604
      %v1791 = vsel %vm1778, %v1741, %v1606
      %v1792 = vsel %vm1778, %v1742, %v1608
      %v1793 = vsel %vm1778, %v1743, %v1610
      %v1794 = vsel %vm1778, %v1744, %v1612
      %v1795 = vsel %vm1778, %v1745, %v1614
      %v1796 = vsel %vm1778, %v1746, %v1616
      %v1797 = vsel %vm1778, %v1747, %v1618
      %v1798 = vsel %vm1778, %v1748, %v1620
      %v1799 = vsel %vm1778, %v1749, %v1622
      %v1800 = vsel %vm1778, %v1750, %v1624
      %v1801 = vsel %vm1778, %v1751, %v1626
      %v1802 = vsel %vm1778, %v1752, %v1628
      %v1803 = vsel %vm1778, %v1753, %v1630
      %v1804 = vsel %vm1778, %v1754, %v1632
      %v1805 = vsel %vm1778, %v1755, %v1634
      %v1806 = vsel %vm1778, %v1756, %v1636
      %v1807 = vsel %vm1778, %v1757, %v1638
      %v1808 = vsel %vm1778, %v1758, %v1640
      %v1809 = vsel %vm1778, %v1759, %v1642
      %v1810 = vsel %vm1778, %v1760, %v1644
      %v1811 = vsel %vm1778, %v1761, %v1646
      %v1812 = vsel %vm1778, %v1762, %v1648
      %v1813 = vsel %vm1778, %v1763, %v1650
      %v1814 = vsel %vm1778, %v1764, %v1652
      %v1815 = vsel %vm1778, %v1765, %v1654
      %v1816 = vsel %vm1778, %v1766, %v1656
      %v1817 = vsel %vm1778, %v1767, %v1658
      %v1818 = vsel %vm1778, %v1768, %v1660
      %v1819 = vsel %vm1778, %v1769, %v1662
      %v1820 = vsel %vm1778, %v1770, %v1664
      %v1821 = vsel %vm1778, %v1771, %v1666
      %v1822 = vsel %vm1778, %v1772, %v1668
      %v1823 = vsel %vm1778, %v1773, %v1670
      %v1824 = vsel %vm1778, %v1774, %v1672
      %v1825 = vsel %vm1778, %v1775, %v1674
      %v1826 = vsel %vm1778, %v1776, %v1676
      %v1827 = vsel %vm1778, %v1777, %v1678
      %v1828 = vpack.c.bf16 %v1779, %v1779
      %v1829 = vpack.c.bf16 %v1780, %v1780
      %v1830 = vpack.c.bf16 %v1781, %v1781
      %v1831 = vpack.c.bf16 %v1782, %v1782
      %v1832 = vpack.c.bf16 %v1783, %v1783
      %v1833 = vpack.c.bf16 %v1784, %v1784
      %v1834 = vpack.c.bf16 %v1785, %v1785
      %v1835 = vpack.c.bf16 %v1786, %v1786
      %v1836 = vpack.c.bf16 %v1787, %v1787
      %v1837 = vpack.c.bf16 %v1788, %v1788
      %v1838 = vpack.c.bf16 %v1789, %v1789
      %v1839 = vpack.c.bf16 %v1790, %v1790
      %v1840 = vpack.c.bf16 %v1791, %v1791
      %v1841 = vpack.c.bf16 %v1792, %v1792
      %v1842 = vpack.c.bf16 %v1793, %v1793
      %v1843 = vpack.c.bf16 %v1794, %v1794
      %v1844 = vpack.c.bf16 %v1795, %v1795
      %v1845 = vpack.c.bf16 %v1796, %v1796
      %v1846 = vpack.c.bf16 %v1797, %v1797
      %v1847 = vpack.c.bf16 %v1798, %v1798
      %v1848 = vpack.c.bf16 %v1799, %v1799
      %v1849 = vpack.c.bf16 %v1800, %v1800
      %v1850 = vpack.c.bf16 %v1801, %v1801
      %v1851 = vpack.c.bf16 %v1802, %v1802
      %v1852 = vpack.c.bf16 %v1803, %v1803
      %v1853 = vpack.c.bf16 %v1804, %v1804
      %v1854 = vpack.c.bf16 %v1805, %v1805
      %v1855 = vpack.c.bf16 %v1806, %v1806
      %v1856 = vpack.c.bf16 %v1807, %v1807
      %v1857 = vpack.c.bf16 %v1808, %v1808
      %v1858 = vpack.c.bf16 %v1809, %v1809
      %v1859 = vpack.c.bf16 %v1810, %v1810
      %v1860 = vpack.c.bf16 %v1811, %v1811
      %v1861 = vpack.c.bf16 %v1812, %v1812
      %v1862 = vpack.c.bf16 %v1813, %v1813
      %v1863 = vpack.c.bf16 %v1814, %v1814
      %v1864 = vpack.c.bf16 %v1815, %v1815
      %v1865 = vpack.c.bf16 %v1816, %v1816
      %v1866 = vpack.c.bf16 %v1817, %v1817
      %v1867 = vpack.c.bf16 %v1818, %v1818
      %v1868 = vpack.c.bf16 %v1819, %v1819
      %v1869 = vpack.c.bf16 %v1820, %v1820
      %v1870 = vpack.c.bf16 %v1821, %v1821
      %v1871 = vpack.c.bf16 %v1822, %v1822
      %v1872 = vpack.c.bf16 %v1823, %v1823
      %v1873 = vpack.c.bf16 %v1824, %v1824
      %v1874 = vpack.c.bf16 %v1825, %v1825
      %v1875 = vpack.c.bf16 %v1826, %v1826
      %v1876 = vpack.c.bf16 %v1827, %v1827
      %v1877 = vld [vmem:[%s3] sm:$0xf]
      %v1878 = vld [vmem:[%s3 + $0x4] sm:$0xf]
      %v1879 = vld [vmem:[%s3 + $0x8] sm:$0xf]
      %s1880 = scalar_lea.vmem %s3, 12
      %v1881 = vld [vmem:[%s1880] sm:$0xf]
      %v1882 = vld [vmem:[%s1880 + $0x4] sm:$0xf]
      %v1883 = vld [vmem:[%s1880 + $0x8] sm:$0xf]
      %v1916 = vunpack.c.l.b16 %v1829
      %v1917 = vunpack.c.l.b16 %v1830
      %v1918 = vunpack.c.l.b16 %v1831
      %v1919 = vunpack.c.l.b16 %v1832
      %v1920 = vunpack.c.l.b16 %v1833
      %v1921 = vunpack.c.l.b16 %v1834
      %v1922 = vunpack.c.l.b16 %v1835
      %v1923 = vunpack.c.l.b16 %v1836
      %v1924 = vunpack.c.l.b16 %v1837
      %v1925 = vunpack.c.l.b16 %v1838
      %v1926 = vunpack.c.l.b16 %v1839
      %v1927 = vunpack.c.l.b16 %v1840
      %v1928 = vunpack.c.l.b16 %v1841
      %v1929 = vunpack.c.l.b16 %v1842
      %v1930 = vunpack.c.l.b16 %v1843
      %v1931 = vunpack.c.l.b16 %v1844
      %v1932 = vunpack.c.l.b16 %v1845
      %v1933 = vunpack.c.l.b16 %v1846
      %v1934 = vunpack.c.l.b16 %v1847
      %v1935 = vunpack.c.l.b16 %v1848
      %v1936 = vunpack.c.l.b16 %v1849
      %v1937 = vunpack.c.l.b16 %v1850
      %v1938 = vunpack.c.l.b16 %v1851
      %v1939 = vunpack.c.l.b16 %v1852
      %v1940 = vunpack.c.l.b16 %v1853
      %v1941 = vunpack.c.l.b16 %v1854
      %v1942 = vunpack.c.l.b16 %v1855
      %v1943 = vunpack.c.l.b16 %v1856
      %v1944 = vunpack.c.l.b16 %v1857
      %v1945 = vunpack.c.l.b16 %v1858
      %v1946 = vunpack.c.l.b16 %v1859
      %v1947 = vunpack.c.l.b16 %v1860
      %v1948 = vpack.c.b16 %v1917, %v1916
      %v1949 = vpack.c.b16 %v1919, %v1918
      %v1950 = vpack.c.b16 %v1921, %v1920
      %v1951 = vpack.c.b16 %v1923, %v1922
      %v1952 = vpack.c.b16 %v1925, %v1924
      %v1953 = vpack.c.b16 %v1927, %v1926
      %v1954 = vpack.c.b16 %v1929, %v1928
      %v1955 = vpack.c.b16 %v1931, %v1930
      %v1956 = vpack.c.b16 %v1933, %v1932
      %v1957 = vpack.c.b16 %v1935, %v1934
      %v1958 = vpack.c.b16 %v1937, %v1936
      %v1959 = vpack.c.b16 %v1939, %v1938
      %v1960 = vpack.c.b16 %v1941, %v1940
      %v1961 = vpack.c.b16 %v1943, %v1942
      %v1962 = vpack.c.b16 %v1945, %v1944
      %v1963 = vpack.c.b16 %v1947, %v1946
      %v1967 = vunpack.c.l.b16 %v1881
      %v1968 = vunpack.c.l.b16 %v1882
      %v1969 = vunpack.c.l.b16 %v1883
      %v1970 = vpack.c.b16 %v1968, %v1967
      %v1971 = vpack.c.b16 %v1969, %v1969
      %vm1973 = vcmask 195584
      %v1975 = vsel %vm1973, %v1948, 0
      %v1978 = vsel %vm1973, %v1949, 0
      %v1981 = vsel %vm1973, %v1950, 0
      %v1984 = vsel %vm1973, %v1951, 0
      %v1987 = vsel %vm1973, %v1952, 0
      %v1990 = vsel %vm1973, %v1953, 0
      %v1993 = vsel %vm1973, %v1954, 0
      %v1996 = vsel %vm1973, %v1955, 0
      %v1999 = vsel %vm1973, %v1956, 0
      %v2002 = vsel %vm1973, %v1957, 0
      %v2005 = vsel %vm1973, %v1958, 0
      %v2008 = vsel %vm1973, %v1959, 0
      %v2011 = vsel %vm1973, %v1960, 0
      %v2014 = vsel %vm1973, %v1961, 0
      %v2017 = vsel %vm1973, %v1962, 0
      %v2020 = vsel %vm1973, %v1963, 0
      %vm2022 = vcmask 1043456
      %v2024 = vsel %vm2022, %v1971, 0
      %2026 = vmatprep.subr.bf16.mxu0 0
      %2027 = vmatpush1.bf16.msra.mxu0 %v1970
      %2028 = vmatprep.subr.bf16.mxu0 0
      %2029 = vmatpush1.bf16.msra.mxu0 %v2024
      %2030 = vmatprep.subr.bf16.mxu0 0
      %2031 = vmatpush1.bf16.msra.mxu0 0
      %2032 = vmatprep.subr.bf16.mxu0 0
      %2033 = vmatpush1.bf16.msra.mxu0 0
      %2034 = vmatprep.subr.bf16.mxu0 0
      %2035 = vmatpush1.bf16.msra.mxu0 0
      %2036 = vmatprep.subr.bf16.mxu0 0
      %2037 = vmatpush1.bf16.msra.mxu0 0
      %2038 = vmatprep.subr.bf16.mxu0 0
      %2039 = vmatpush1.bf16.msra.mxu0 0
      %2040 = vmatprep.subr.bf16.mxu0 0
      %2041 = vmatpush1.bf16.msra.mxu0 0
      %2042 = vmatprep.subr.bf16.mxu0 0
      %2043 = vmatpush1.bf16.msra.mxu0 0
      %2044 = vmatprep.subr.bf16.mxu0 0
      %2045 = vmatpush1.bf16.msra.mxu0 0
      %2046 = vmatprep.subr.bf16.mxu0 0
      %2047 = vmatpush1.bf16.msra.mxu0 0
      %2048 = vmatprep.subr.bf16.mxu0 0
      %2049 = vmatpush1.bf16.msra.mxu0 0
      %2050 = vmatprep.subr.bf16.mxu0 0
      %2051 = vmatpush1.bf16.msra.mxu0 0
      %2052 = vmatprep.subr.bf16.mxu0 0
      %2053 = vmatpush1.bf16.msra.mxu0 0
      %2054 = vmatprep.subr.bf16.mxu0 0
      %2055 = vmatpush1.bf16.msra.mxu0 0
      %2056 = vmatprep.subr.bf16.mxu0 0
      %2057 = vmatpush1.bf16.msra.mxu0 0
      %2058 = vmatprep.mubr.bf16.mxu0 0
      %2059 = vmatmul.mubr.bf16.gmra.mrb[0].mxu0 %v1975
      %v2060 = vpop.f32.mrb[0].mxu0
      %v2061 = vadd.f32 0.0, %v2060
      %v2062 = vpop.f32.mrb[0].mxu0
      %v2063 = vpop.f32.mrb[0].mxu0
      %v2064 = vadd.f32 0.0, %v2063
      %v2065 = vpop.f32.mrb[0].mxu0
      %2066 = vmatprep.mubr.bf16.mxu0 0
      %2067 = vmatmul.mubr.bf16.gmra.mrb[0].mxu0 %v1978
      %v2068 = vpop.f32.mrb[0].mxu0
      %v2069 = vadd.f32 0.0, %v2068
      %v2070 = vpop.f32.mrb[0].mxu0
      %v2071 = vpop.f32.mrb[0].mxu0
      %v2072 = vadd.f32 0.0, %v2071
      %v2073 = vpop.f32.mrb[0].mxu0
      %2074 = vmatprep.mubr.bf16.mxu0 0
      %2075 = vmatmul.mubr.bf16.gmra.mrb[0].mxu0 %v1981
      %v2076 = vpop.f32.mrb[0].mxu0
      %v2077 = vadd.f32 0.0, %v2076
      %v2078 = vpop.f32.mrb[0].mxu0
      %v2079 = vpop.f32.mrb[0].mxu0
      %v2080 = vadd.f32 0.0, %v2079
      %v2081 = vpop.f32.mrb[0].mxu0
      %2082 = vmatprep.mubr.bf16.mxu0 0
      %2083 = vmatmul.mubr.bf16.gmra.mrb[0].mxu0 %v1984
      %v2084 = vpop.f32.mrb[0].mxu0
      %v2085 = vadd.f32 0.0, %v2084
      %v2086 = vpop.f32.mrb[0].mxu0
      %v2087 = vpop.f32.mrb[0].mxu0
      %v2088 = vadd.f32 0.0, %v2087
      %v2089 = vpop.f32.mrb[0].mxu0
      %2090 = vmatprep.mubr.bf16.mxu0 0
      %2091 = vmatmul.mubr.bf16.gmra.mrb[0].mxu0 %v1987
      %v2092 = vpop.f32.mrb[0].mxu0
      %v2093 = vadd.f32 0.0, %v2092
      %v2094 = vpop.f32.mrb[0].mxu0
      %v2095 = vpop.f32.mrb[0].mxu0
      %v2096 = vadd.f32 0.0, %v2095
      %v2097 = vpop.f32.mrb[0].mxu0
      %2098 = vmatprep.mubr.bf16.mxu0 0
      %2099 = vmatmul.mubr.bf16.gmra.mrb[0].mxu0 %v1990
      %v2100 = vpop.f32.mrb[0].mxu0
      %v2101 = vadd.f32 0.0, %v2100
      %v2102 = vpop.f32.mrb[0].mxu0
      %v2103 = vpop.f32.mrb[0].mxu0
      %v2104 = vadd.f32 0.0, %v2103
      %v2105 = vpop.f32.mrb[0].mxu0
      %2106 = vmatprep.mubr.bf16.mxu0 0
      %2107 = vmatmul.mubr.bf16.gmra.mrb[0].mxu0 %v1993
      %v2108 = vpop.f32.mrb[0].mxu0
      %v2109 = vadd.f32 0.0, %v2108
      %v2110 = vpop.f32.mrb[0].mxu0
      %v2111 = vpop.f32.mrb[0].mxu0
      %v2112 = vadd.f32 0.0, %v2111
      %v2113 = vpop.f32.mrb[0].mxu0
      %2114 = vmatprep.mubr.bf16.mxu0 0
      %2115 = vmatmul.mubr.bf16.gmra.mrb[0].mxu0 %v1996
      %v2116 = vpop.f32.mrb[0].mxu0
      %v2117 = vadd.f32 0.0, %v2116
      %v2118 = vpop.f32.mrb[0].mxu0
      %v2119 = vpop.f32.mrb[0].mxu0
      %v2120 = vadd.f32 0.0, %v2119
      %v2121 = vpop.f32.mrb[0].mxu0
      %2122 = vmatprep.mubr.bf16.mxu0 0
      %2123 = vmatmul.mubr.bf16.gmra.mrb[0].mxu0 %v1999
      %v2124 = vpop.f32.mrb[0].mxu0
      %v2125 = vadd.f32 0.0, %v2124
      %v2126 = vpop.f32.mrb[0].mxu0
      %v2127 = vpop.f32.mrb[0].mxu0
      %v2128 = vadd.f32 0.0, %v2127
      %v2129 = vpop.f32.mrb[0].mxu0
      %2130 = vmatprep.mubr.bf16.mxu0 0
      %2131 = vmatmul.mubr.bf16.gmra.mrb[0].mxu0 %v2002
      %v2132 = vpop.f32.mrb[0].mxu0
      %v2133 = vadd.f32 0.0, %v2132
      %v2134 = vpop.f32.mrb[0].mxu0
      %v2135 = vpop.f32.mrb[0].mxu0
      %v2136 = vadd.f32 0.0, %v2135
      %v2137 = vpop.f32.mrb[0].mxu0
      %2138 = vmatprep.mubr.bf16.mxu0 0
      %2139 = vmatmul.mubr.bf16.gmra.mrb[0].mxu0 %v2005
      %v2140 = vpop.f32.mrb[0].mxu0
      %v2141 = vadd.f32 0.0, %v2140
      %v2142 = vpop.f32.mrb[0].mxu0
      %v2143 = vpop.f32.mrb[0].mxu0
      %v2144 = vadd.f32 0.0, %v2143
      %v2145 = vpop.f32.mrb[0].mxu0
      %2146 = vmatprep.mubr.bf16.mxu0 0
      %2147 = vmatmul.mubr.bf16.gmra.mrb[0].mxu0 %v2008
      %v2148 = vpop.f32.mrb[0].mxu0
      %v2149 = vadd.f32 0.0, %v2148
      %v2150 = vpop.f32.mrb[0].mxu0
      %v2151 = vpop.f32.mrb[0].mxu0
      %v2152 = vadd.f32 0.0, %v2151
      %v2153 = vpop.f32.mrb[0].mxu0
      %2154 = vmatprep.mubr.bf16.mxu0 0
      %2155 = vmatmul.mubr.bf16.gmra.mrb[0].mxu0 %v2011
      %v2156 = vpop.f32.mrb[0].mxu0
      %v2157 = vadd.f32 0.0, %v2156
      %v2158 = vpop.f32.mrb[0].mxu0
      %v2159 = vpop.f32.mrb[0].mxu0
      %v2160 = vadd.f32 0.0, %v2159
      %v2161 = vpop.f32.mrb[0].mxu0
      %2162 = vmatprep.mubr.bf16.mxu0 0
      %2163 = vmatmul.mubr.bf16.gmra.mrb[0].mxu0 %v2014
      %v2164 = vpop.f32.mrb[0].mxu0
      %v2165 = vadd.f32 0.0, %v2164
      %v2166 = vpop.f32.mrb[0].mxu0
      %v2167 = vpop.f32.mrb[0].mxu0
      %v2168 = vadd.f32 0.0, %v2167
      %v2169 = vpop.f32.mrb[0].mxu0
      %2170 = vmatprep.mubr.bf16.mxu0 0
      %2171 = vmatmul.mubr.bf16.gmra.mrb[0].mxu0 %v2017
      %v2172 = vpop.f32.mrb[0].mxu0
      %v2173 = vadd.f32 0.0, %v2172
      %v2174 = vpop.f32.mrb[0].mxu0
      %v2175 = vpop.f32.mrb[0].mxu0
      %v2176 = vadd.f32 0.0, %v2175
      %v2177 = vpop.f32.mrb[0].mxu0
      %2178 = vmatprep.mubr.bf16.mxu0 0
      %2179 = vmatmul.mubr.bf16.gmra.mrb[0].mxu0 %v2020
      %v2180 = vpop.f32.mrb[0].mxu0
      %v2181 = vadd.f32 0.0, %v2180
      %v2182 = vpop.f32.mrb[0].mxu0
      %v2183 = vpop.f32.mrb[0].mxu0
      %v2184 = vadd.f32 0.0, %v2183
      %v2185 = vpop.f32.mrb[0].mxu0
      %2186 = vdwg.mxu0
      %v2188 = vunpack.c.l.b16 %v1828
      %v2189 = vpack.c.b16 %v1916, %v2188
      %v2190 = vpack.c.b16 %v1918, %v1917
      %v2191 = vpack.c.b16 %v1920, %v1919
      %v2192 = vpack.c.b16 %v1922, %v1921
      %v2193 = vpack.c.b16 %v1924, %v2188
      %v2194 = vpack.c.b16 %v1926, %v1925
      %v2195 = vpack.c.b16 %v1928, %v1927
      %v2196 = vpack.c.b16 %v1930, %v1929
      %v2197 = vpack.c.b16 %v1932, %v2188
      %v2198 = vpack.c.b16 %v1934, %v1933
      %v2199 = vpack.c.b16 %v1936, %v1935
      %v2200 = vpack.c.b16 %v1938, %v1937
      %v2201 = vpack.c.b16 %v1940, %v2188
      %v2202 = vpack.c.b16 %v1942, %v1941
      %v2203 = vpack.c.b16 %v1944, %v1943
      %v2204 = vpack.c.b16 %v1946, %v1945
      %v2208 = vunpack.c.l.b16 %v1877
      %v2209 = vunpack.c.l.b16 %v1878
      %v2210 = vunpack.c.l.b16 %v1879
      %v2211 = vpack.c.b16 %v2209, %v2208
      %v2212 = vpack.c.b16 %v2210, %v2210
      %v2215 = vsel %vm1973, %v2189, 0
      %v2218 = vsel %vm1973, %v2190, 0
      %v2221 = vsel %vm1973, %v2191, 0
      %v2224 = vsel %vm1973, %v2192, 0
      %v2227 = vsel %vm1973, %v2193, 0
      %v2230 = vsel %vm1973, %v2194, 0
      %v2233 = vsel %vm1973, %v2195, 0
      %v2236 = vsel %vm1973, %v2196, 0
      %v2239 = vsel %vm1973, %v2197, 0
      %v2242 = vsel %vm1973, %v2198, 0
      %v2245 = vsel %vm1973, %v2199, 0
      %v2248 = vsel %vm1973, %v2200, 0
      %v2251 = vsel %vm1973, %v2201, 0
      %v2254 = vsel %vm1973, %v2202, 0
      %v2257 = vsel %vm1973, %v2203, 0
      %v2260 = vsel %vm1973, %v2204, 0
      %v2263 = vsel %vm2022, %v2212, 0
      %2265 = vmatprep.subr.bf16.mxu0 0
      %2266 = vmatpush1.bf16.msra.mxu0 %v2211
      %2267 = vmatprep.subr.bf16.mxu0 0
      %2268 = vmatpush1.bf16.msra.mxu0 %v2263
      %2269 = vmatprep.subr.bf16.mxu0 0
      %2270 = vmatpush1.bf16.msra.mxu0 0
      %2271 = vmatprep.subr.bf16.mxu0 0
      %2272 = vmatpush1.bf16.msra.mxu0 0
      %2273 = vmatprep.subr.bf16.mxu0 0
      %2274 = vmatpush1.bf16.msra.mxu0 0
      %2275 = vmatprep.subr.bf16.mxu0 0
      %2276 = vmatpush1.bf16.msra.mxu0 0
      %2277 = vmatprep.subr.bf16.mxu0 0
      %2278 = vmatpush1.bf16.msra.mxu0 0
      %2279 = vmatprep.subr.bf16.mxu0 0
      %2280 = vmatpush1.bf16.msra.mxu0 0
      %2281 = vmatprep.subr.bf16.mxu0 0
      %2282 = vmatpush1.bf16.msra.mxu0 0
      %2283 = vmatprep.subr.bf16.mxu0 0
      %2284 = vmatpush1.bf16.msra.mxu0 0
      %2285 = vmatprep.subr.bf16.mxu0 0
      %2286 = vmatpush1.bf16.msra.mxu0 0
      %2287 = vmatprep.subr.bf16.mxu0 0
      %2288 = vmatpush1.bf16.msra.mxu0 0
      %2289 = vmatprep.subr.bf16.mxu0 0
      %2290 = vmatpush1.bf16.msra.mxu0 0
      %2291 = vmatprep.subr.bf16.mxu0 0
      %2292 = vmatpush1.bf16.msra.mxu0 0
      %2293 = vmatprep.subr.bf16.mxu0 0
      %2294 = vmatpush1.bf16.msra.mxu0 0
      %2295 = vmatprep.subr.bf16.mxu0 0
      %2296 = vmatpush1.bf16.msra.mxu0 0
      %2297 = vmatprep.mubr.bf16.mxu0 0
      %2298 = vmatmul.mubr.bf16.gmra.mrb[0].mxu0 %v2215
      %v2299 = vpop.f32.mrb[0].mxu0
      %v2300 = vadd.f32 %v2061, %v2299
      %v2301 = vpop.f32.mrb[0].mxu0
      %v2302 = vpop.f32.mrb[0].mxu0
      %v2303 = vadd.f32 %v2064, %v2302
      %v2304 = vpop.f32.mrb[0].mxu0
      %2305 = vmatprep.mubr.bf16.mxu0 0
      %2306 = vmatmul.mubr.bf16.gmra.mrb[0].mxu0 %v2218
      %v2307 = vpop.f32.mrb[0].mxu0
      %v2308 = vadd.f32 %v2069, %v2307
      %v2309 = vpop.f32.mrb[0].mxu0
      %v2310 = vpop.f32.mrb[0].mxu0
      %v2311 = vadd.f32 %v2072, %v2310
      %v2312 = vpop.f32.mrb[0].mxu0
      %2313 = vmatprep.mubr.bf16.mxu0 0
      %2314 = vmatmul.mubr.bf16.gmra.mrb[0].mxu0 %v2221
      %v2315 = vpop.f32.mrb[0].mxu0
      %v2316 = vadd.f32 %v2077, %v2315
      %v2317 = vpop.f32.mrb[0].mxu0
      %v2318 = vpop.f32.mrb[0].mxu0
      %v2319 = vadd.f32 %v2080, %v2318
      %v2320 = vpop.f32.mrb[0].mxu0
      %2321 = vmatprep.mubr.bf16.mxu0 0
      %2322 = vmatmul.mubr.bf16.gmra.mrb[0].mxu0 %v2224
      %v2323 = vpop.f32.mrb[0].mxu0
      %v2324 = vadd.f32 %v2085, %v2323
      %v2325 = vpop.f32.mrb[0].mxu0
      %v2326 = vpop.f32.mrb[0].mxu0
      %v2327 = vadd.f32 %v2088, %v2326
      %v2328 = vpop.f32.mrb[0].mxu0
      %2329 = vmatprep.mubr.bf16.mxu0 0
      %2330 = vmatmul.mubr.bf16.gmra.mrb[0].mxu0 %v2227
      %v2331 = vpop.f32.mrb[0].mxu0
      %v2332 = vadd.f32 %v2093, %v2331
      %v2333 = vpop.f32.mrb[0].mxu0
      %v2334 = vpop.f32.mrb[0].mxu0
      %v2335 = vadd.f32 %v2096, %v2334
      %v2336 = vpop.f32.mrb[0].mxu0
      %2337 = vmatprep.mubr.bf16.mxu0 0
      %2338 = vmatmul.mubr.bf16.gmra.mrb[0].mxu0 %v2230
      %v2339 = vpop.f32.mrb[0].mxu0
      %v2340 = vadd.f32 %v2101, %v2339
      %v2341 = vpop.f32.mrb[0].mxu0
      %v2342 = vpop.f32.mrb[0].mxu0
      %v2343 = vadd.f32 %v2104, %v2342
      %v2344 = vpop.f32.mrb[0].mxu0
      %2345 = vmatprep.mubr.bf16.mxu0 0
      %2346 = vmatmul.mubr.bf16.gmra.mrb[0].mxu0 %v2233
      %v2347 = vpop.f32.mrb[0].mxu0
      %v2348 = vadd.f32 %v2109, %v2347
      %v2349 = vpop.f32.mrb[0].mxu0
      %v2350 = vpop.f32.mrb[0].mxu0
      %v2351 = vadd.f32 %v2112, %v2350
      %v2352 = vpop.f32.mrb[0].mxu0
      %2353 = vmatprep.mubr.bf16.mxu0 0
      %2354 = vmatmul.mubr.bf16.gmra.mrb[0].mxu0 %v2236
      %v2355 = vpop.f32.mrb[0].mxu0
      %v2356 = vadd.f32 %v2117, %v2355
      %v2357 = vpop.f32.mrb[0].mxu0
      %v2358 = vpop.f32.mrb[0].mxu0
      %v2359 = vadd.f32 %v2120, %v2358
      %v2360 = vpop.f32.mrb[0].mxu0
      %2361 = vmatprep.mubr.bf16.mxu0 0
      %2362 = vmatmul.mubr.bf16.gmra.mrb[0].mxu0 %v2239
      %v2363 = vpop.f32.mrb[0].mxu0
      %v2364 = vadd.f32 %v2125, %v2363
      %v2365 = vpop.f32.mrb[0].mxu0
      %v2366 = vpop.f32.mrb[0].mxu0
      %v2367 = vadd.f32 %v2128, %v2366
      %v2368 = vpop.f32.mrb[0].mxu0
      %2369 = vmatprep.mubr.bf16.mxu0 0
      %2370 = vmatmul.mubr.bf16.gmra.mrb[0].mxu0 %v2242
      %v2371 = vpop.f32.mrb[0].mxu0
      %v2372 = vadd.f32 %v2133, %v2371
      %v2373 = vpop.f32.mrb[0].mxu0
      %v2374 = vpop.f32.mrb[0].mxu0
      %v2375 = vadd.f32 %v2136, %v2374
      %v2376 = vpop.f32.mrb[0].mxu0
      %2377 = vmatprep.mubr.bf16.mxu0 0
      %2378 = vmatmul.mubr.bf16.gmra.mrb[0].mxu0 %v2245
      %v2379 = vpop.f32.mrb[0].mxu0
      %v2380 = vadd.f32 %v2141, %v2379
      %v2381 = vpop.f32.mrb[0].mxu0
      %v2382 = vpop.f32.mrb[0].mxu0
      %v2383 = vadd.f32 %v2144, %v2382
      %v2384 = vpop.f32.mrb[0].mxu0
      %2385 = vmatprep.mubr.bf16.mxu0 0
      %2386 = vmatmul.mubr.bf16.gmra.mrb[0].mxu0 %v2248
      %v2387 = vpop.f32.mrb[0].mxu0
      %v2388 = vadd.f32 %v2149, %v2387
      %v2389 = vpop.f32.mrb[0].mxu0
      %v2390 = vpop.f32.mrb[0].mxu0
      %v2391 = vadd.f32 %v2152, %v2390
      %v2392 = vpop.f32.mrb[0].mxu0
      %2393 = vmatprep.mubr.bf16.mxu0 0
      %2394 = vmatmul.mubr.bf16.gmra.mrb[0].mxu0 %v2251
      %v2395 = vpop.f32.mrb[0].mxu0
      %v2396 = vadd.f32 %v2157, %v2395
      %v2397 = vpop.f32.mrb[0].mxu0
      %v2398 = vpop.f32.mrb[0].mxu0
      %v2399 = vadd.f32 %v2160, %v2398
      %v2400 = vpop.f32.mrb[0].mxu0
      %2401 = vmatprep.mubr.bf16.mxu0 0
      %2402 = vmatmul.mubr.bf16.gmra.mrb[0].mxu0 %v2254
      %v2403 = vpop.f32.mrb[0].mxu0
      %v2404 = vadd.f32 %v2165, %v2403
      %v2405 = vpop.f32.mrb[0].mxu0
      %v2406 = vpop.f32.mrb[0].mxu0
      %v2407 = vadd.f32 %v2168, %v2406
      %v2408 = vpop.f32.mrb[0].mxu0
      %2409 = vmatprep.mubr.bf16.mxu0 0
      %2410 = vmatmul.mubr.bf16.gmra.mrb[0].mxu0 %v2257
      %v2411 = vpop.f32.mrb[0].mxu0
      %v2412 = vadd.f32 %v2173, %v2411
      %v2413 = vpop.f32.mrb[0].mxu0
      %v2414 = vpop.f32.mrb[0].mxu0
      %v2415 = vadd.f32 %v2176, %v2414
      %v2416 = vpop.f32.mrb[0].mxu0
      %2417 = vmatprep.mubr.bf16.mxu0 0
      %2418 = vmatmul.mubr.bf16.gmra.mrb[0].mxu0 %v2260
      %v2419 = vpop.f32.mrb[0].mxu0
      %v2420 = vadd.f32 %v2181, %v2419
      %v2421 = vpop.f32.mrb[0].mxu0
      %v2422 = vpop.f32.mrb[0].mxu0
      %v2423 = vadd.f32 %v2184, %v2422
      %v2424 = vpop.f32.mrb[0].mxu0
      %2425 = vdwg.mxu0
      %s2426 = scalar_lea.vmem %s3, 24
      %v2427 = vld [vmem:[%s2426] sm:$0xf]
      %v2428 = vld [vmem:[%s2426 + $0x4] sm:$0xf]
      %v2429 = vld [vmem:[%s2426 + $0x8] sm:$0xf]
      %v2430 = vpack.c.b16 %v2188, %v1923
      %v2431 = vpack.c.b16 %v2188, %v1931
      %v2432 = vpack.c.b16 %v2188, %v1939
      %v2433 = vpack.c.b16 %v2188, %v1947
      %v2437 = vunpack.c.l.b16 %v2427
      %v2438 = vunpack.c.l.b16 %v2428
      %v2439 = vunpack.c.l.b16 %v2429
      %v2440 = vpack.c.b16 %v2438, %v2437
      %v2441 = vpack.c.b16 %v2439, %v2439
      %v2444 = vsel %vm1973, %v2430, 0
      %v2447 = vsel %vm1973, %v2431, 0
      %v2450 = vsel %vm1973, %v2432, 0
      %v2453 = vsel %vm1973, %v2433, 0
      %v2456 = vsel %vm2022, %v2441, 0
      %2458 = vmatprep.subr.bf16.mxu0 0
      %2459 = vmatpush1.bf16.msra.mxu0 %v2440
      %2460 = vmatprep.subr.bf16.mxu0 0
      %2461 = vmatpush1.bf16.msra.mxu0 %v2456
      %2462 = vmatprep.subr.bf16.mxu0 0
      %2463 = vmatpush1.bf16.msra.mxu0 0
      %2464 = vmatprep.subr.bf16.mxu0 0
      %2465 = vmatpush1.bf16.msra.mxu0 0
      %2466 = vmatprep.subr.bf16.mxu0 0
      %2467 = vmatpush1.bf16.msra.mxu0 0
      %2468 = vmatprep.subr.bf16.mxu0 0
      %2469 = vmatpush1.bf16.msra.mxu0 0
      %2470 = vmatprep.subr.bf16.mxu0 0
      %2471 = vmatpush1.bf16.msra.mxu0 0
      %2472 = vmatprep.subr.bf16.mxu0 0
      %2473 = vmatpush1.bf16.msra.mxu0 0
      %2474 = vmatprep.subr.bf16.mxu0 0
      %2475 = vmatpush1.bf16.msra.mxu0 0
      %2476 = vmatprep.subr.bf16.mxu0 0
      %2477 = vmatpush1.bf16.msra.mxu0 0
      %2478 = vmatprep.subr.bf16.mxu0 0
      %2479 = vmatpush1.bf16.msra.mxu0 0
      %2480 = vmatprep.subr.bf16.mxu0 0
      %2481 = vmatpush1.bf16.msra.mxu0 0
      %2482 = vmatprep.subr.bf16.mxu0 0
      %2483 = vmatpush1.bf16.msra.mxu0 0
      %2484 = vmatprep.subr.bf16.mxu0 0
      %2485 = vmatpush1.bf16.msra.mxu0 0
      %2486 = vmatprep.subr.bf16.mxu0 0
      %2487 = vmatpush1.bf16.msra.mxu0 0
      %2488 = vmatprep.subr.bf16.mxu0 0
      %2489 = vmatpush1.bf16.msra.mxu0 0
      %2490 = vmatprep.mubr.bf16.mxu0 0
      %2491 = vmatmul.mubr.bf16.gmra.mrb[0].mxu0 %v2218
      %v2492 = vpop.f32.mrb[0].mxu0
      %v2493 = vadd.f32 0.0, %v2492
      %v2494 = vpop.f32.mrb[0].mxu0
      %v2495 = vpop.f32.mrb[0].mxu0
      %v2496 = vadd.f32 0.0, %v2495
      %v2497 = vpop.f32.mrb[0].mxu0
      %2498 = vmatprep.mubr.bf16.mxu0 0
      %2499 = vmatmul.mubr.bf16.gmra.mrb[0].mxu0 %v2221
      %v2500 = vpop.f32.mrb[0].mxu0
      %v2501 = vadd.f32 0.0, %v2500
      %v2502 = vpop.f32.mrb[0].mxu0
      %v2503 = vpop.f32.mrb[0].mxu0
      %v2504 = vadd.f32 0.0, %v2503
      %v2505 = vpop.f32.mrb[0].mxu0
      %2506 = vmatprep.mubr.bf16.mxu0 0
      %2507 = vmatmul.mubr.bf16.gmra.mrb[0].mxu0 %v2224
      %v2508 = vpop.f32.mrb[0].mxu0
      %v2509 = vadd.f32 0.0, %v2508
      %v2510 = vpop.f32.mrb[0].mxu0
      %v2511 = vpop.f32.mrb[0].mxu0
      %v2512 = vadd.f32 0.0, %v2511
      %v2513 = vpop.f32.mrb[0].mxu0
      %2514 = vmatprep.mubr.bf16.mxu0 0
      %2515 = vmatmul.mubr.bf16.gmra.mrb[0].mxu0 %v2444
      %v2516 = vpop.f32.mrb[0].mxu0
      %v2517 = vadd.f32 0.0, %v2516
      %v2518 = vpop.f32.mrb[0].mxu0
      %v2519 = vpop.f32.mrb[0].mxu0
      %v2520 = vadd.f32 0.0, %v2519
      %v2521 = vpop.f32.mrb[0].mxu0
      %2522 = vmatprep.mubr.bf16.mxu0 0
      %2523 = vmatmul.mubr.bf16.gmra.mrb[0].mxu0 %v2230
      %v2524 = vpop.f32.mrb[0].mxu0
      %v2525 = vadd.f32 0.0, %v2524
      %v2526 = vpop.f32.mrb[0].mxu0
      %v2527 = vpop.f32.mrb[0].mxu0
      %v2528 = vadd.f32 0.0, %v2527
      %v2529 = vpop.f32.mrb[0].mxu0
      %2530 = vmatprep.mubr.bf16.mxu0 0
      %2531 = vmatmul.mubr.bf16.gmra.mrb[0].mxu0 %v2233
      %v2532 = vpop.f32.mrb[0].mxu0
      %v2533 = vadd.f32 0.0, %v2532
      %v2534 = vpop.f32.mrb[0].mxu0
      %v2535 = vpop.f32.mrb[0].mxu0
      %v2536 = vadd.f32 0.0, %v2535
      %v2537 = vpop.f32.mrb[0].mxu0
      %2538 = vmatprep.mubr.bf16.mxu0 0
      %2539 = vmatmul.mubr.bf16.gmra.mrb[0].mxu0 %v2236
      %v2540 = vpop.f32.mrb[0].mxu0
      %v2541 = vadd.f32 0.0, %v2540
      %v2542 = vpop.f32.mrb[0].mxu0
      %v2543 = vpop.f32.mrb[0].mxu0
      %v2544 = vadd.f32 0.0, %v2543
      %v2545 = vpop.f32.mrb[0].mxu0
      %2546 = vmatprep.mubr.bf16.mxu0 0
      %2547 = vmatmul.mubr.bf16.gmra.mrb[0].mxu0 %v2447
      %v2548 = vpop.f32.mrb[0].mxu0
      %v2549 = vadd.f32 0.0, %v2548
      %v2550 = vpop.f32.mrb[0].mxu0
      %v2551 = vpop.f32.mrb[0].mxu0
      %v2552 = vadd.f32 0.0, %v2551
      %v2553 = vpop.f32.mrb[0].mxu0
      %2554 = vmatprep.mubr.bf16.mxu0 0
      %2555 = vmatmul.mubr.bf16.gmra.mrb[0].mxu0 %v2242
      %v2556 = vpop.f32.mrb[0].mxu0
      %v2557 = vadd.f32 0.0, %v2556
      %v2558 = vpop.f32.mrb[0].mxu0
      %v2559 = vpop.f32.mrb[0].mxu0
      %v2560 = vadd.f32 0.0, %v2559
      %v2561 = vpop.f32.mrb[0].mxu0
      %2562 = vmatprep.mubr.bf16.mxu0 0
      %2563 = vmatmul.mubr.bf16.gmra.mrb[0].mxu0 %v2245
      %v2564 = vpop.f32.mrb[0].mxu0
      %v2565 = vadd.f32 0.0, %v2564
      %v2566 = vpop.f32.mrb[0].mxu0
      %v2567 = vpop.f32.mrb[0].mxu0
      %v2568 = vadd.f32 0.0, %v2567
      %v2569 = vpop.f32.mrb[0].mxu0
      %2570 = vmatprep.mubr.bf16.mxu0 0
      %2571 = vmatmul.mubr.bf16.gmra.mrb[0].mxu0 %v2248
      %v2572 = vpop.f32.mrb[0].mxu0
      %v2573 = vadd.f32 0.0, %v2572
      %v2574 = vpop.f32.mrb[0].mxu0
      %v2575 = vpop.f32.mrb[0].mxu0
      %v2576 = vadd.f32 0.0, %v2575
      %v2577 = vpop.f32.mrb[0].mxu0
      %2578 = vmatprep.mubr.bf16.mxu0 0
      %2579 = vmatmul.mubr.bf16.gmra.mrb[0].mxu0 %v2450
      %v2580 = vpop.f32.mrb[0].mxu0
      %v2581 = vadd.f32 0.0, %v2580
      %v2582 = vpop.f32.mrb[0].mxu0
      %v2583 = vpop.f32.mrb[0].mxu0
      %v2584 = vadd.f32 0.0, %v2583
      %v2585 = vpop.f32.mrb[0].mxu0
      %2586 = vmatprep.mubr.bf16.mxu0 0
      %2587 = vmatmul.mubr.bf16.gmra.mrb[0].mxu0 %v2254
      %v2588 = vpop.f32.mrb[0].mxu0
      %v2589 = vadd.f32 0.0, %v2588
      %v2590 = vpop.f32.mrb[0].mxu0
      %v2591 = vpop.f32.mrb[0].mxu0
      %v2592 = vadd.f32 0.0, %v2591
      %v2593 = vpop.f32.mrb[0].mxu0
      %2594 = vmatprep.mubr.bf16.mxu0 0
      %2595 = vmatmul.mubr.bf16.gmra.mrb[0].mxu0 %v2257
      %v2596 = vpop.f32.mrb[0].mxu0
      %v2597 = vadd.f32 0.0, %v2596
      %v2598 = vpop.f32.mrb[0].mxu0
      %v2599 = vpop.f32.mrb[0].mxu0
      %v2600 = vadd.f32 0.0, %v2599
      %v2601 = vpop.f32.mrb[0].mxu0
      %2602 = vmatprep.mubr.bf16.mxu0 0
      %2603 = vmatmul.mubr.bf16.gmra.mrb[0].mxu0 %v2260
      %v2604 = vpop.f32.mrb[0].mxu0
      %v2605 = vadd.f32 0.0, %v2604
      %v2606 = vpop.f32.mrb[0].mxu0
      %v2607 = vpop.f32.mrb[0].mxu0
      %v2608 = vadd.f32 0.0, %v2607
      %v2609 = vpop.f32.mrb[0].mxu0
      %2610 = vmatprep.mubr.bf16.mxu0 0
      %2611 = vmatmul.mubr.bf16.gmra.mrb[0].mxu0 %v2453
      %v2612 = vpop.f32.mrb[0].mxu0
      %v2613 = vadd.f32 0.0, %v2612
      %v2614 = vpop.f32.mrb[0].mxu0
      %v2615 = vpop.f32.mrb[0].mxu0
      %v2616 = vadd.f32 0.0, %v2615
      %v2617 = vpop.f32.mrb[0].mxu0
      %2618 = vdwg.mxu0
      %v2619 = vadd.f32 %v2300, %v2493
      %v2620 = vadd.f32 %v2303, %v2496
      %v2621 = vadd.f32 %v2308, %v2501
      %v2622 = vadd.f32 %v2311, %v2504
      %v2623 = vadd.f32 %v2316, %v2509
      %v2624 = vadd.f32 %v2319, %v2512
      %v2625 = vadd.f32 %v2324, %v2517
      %v2626 = vadd.f32 %v2327, %v2520
      %v2627 = vadd.f32 %v2332, %v2525
      %v2628 = vadd.f32 %v2335, %v2528
      %v2629 = vadd.f32 %v2340, %v2533
      %v2630 = vadd.f32 %v2343, %v2536
      %v2631 = vadd.f32 %v2348, %v2541
      %v2632 = vadd.f32 %v2351, %v2544
      %v2633 = vadd.f32 %v2356, %v2549
      %v2634 = vadd.f32 %v2359, %v2552
      %v2635 = vadd.f32 %v2364, %v2557
      %v2636 = vadd.f32 %v2367, %v2560
      %v2637 = vadd.f32 %v2372, %v2565
      %v2638 = vadd.f32 %v2375, %v2568
      %v2639 = vadd.f32 %v2380, %v2573
      %v2640 = vadd.f32 %v2383, %v2576
      %v2641 = vadd.f32 %v2388, %v2581
      %v2642 = vadd.f32 %v2391, %v2584
      %v2643 = vadd.f32 %v2396, %v2589
      %v2644 = vadd.f32 %v2399, %v2592
      %v2645 = vadd.f32 %v2404, %v2597
      %v2646 = vadd.f32 %v2407, %v2600
      %v2647 = vadd.f32 %v2412, %v2605
      %v2648 = vadd.f32 %v2415, %v2608
      %v2649 = vadd.f32 %v2420, %v2613
      %v2650 = vadd.f32 %v2423, %v2616
      %s2651 = scalar_lea.vmem %s3, 36
      %v2652 = vld [vmem:[%s2651] sm:$0xf]
      %v2653 = vld [vmem:[%s2651 + $0x4] sm:$0xf]
      %v2654 = vld [vmem:[%s2651 + $0x8] sm:$0xf]
      %v2662 = vunpack.c.l.b16 %v1861
      %v2663 = vunpack.c.l.b16 %v1862
      %v2664 = vunpack.c.l.b16 %v1863
      %v2665 = vunpack.c.l.b16 %v1864
      %v2666 = vunpack.c.l.b16 %v1865
      %v2667 = vunpack.c.l.b16 %v1866
      %v2668 = vunpack.c.l.b16 %v1867
      %v2669 = vpack.c.b16 %v2662, %v2188
      %v2670 = vpack.c.b16 %v2664, %v2663
      %v2671 = vpack.c.b16 %v2666, %v2665
      %v2672 = vpack.c.b16 %v2668, %v2667
      %v2676 = vunpack.c.l.b16 %v2652
      %v2677 = vunpack.c.l.b16 %v2653
      %v2678 = vunpack.c.l.b16 %v2654
      %v2679 = vpack.c.b16 %v2677, %v2676
      %v2680 = vpack.c.b16 %v2678, %v2678
      %v2683 = vsel %vm1973, %v2669, 0
      %v2686 = vsel %vm1973, %v2670, 0
      %v2689 = vsel %vm1973, %v2671, 0
      %v2692 = vsel %vm1973, %v2672, 0
      %v2695 = vsel %vm2022, %v2680, 0
      %2697 = vmatprep.subr.bf16.mxu0 0
      %2698 = vmatpush1.bf16.msra.mxu0 %v2679
      %2699 = vmatprep.subr.bf16.mxu0 0
      %2700 = vmatpush1.bf16.msra.mxu0 %v2695
      %2701 = vmatprep.subr.bf16.mxu0 0
      %2702 = vmatpush1.bf16.msra.mxu0 0
      %2703 = vmatprep.subr.bf16.mxu0 0
      %2704 = vmatpush1.bf16.msra.mxu0 0
      %2705 = vmatprep.subr.bf16.mxu0 0
      %2706 = vmatpush1.bf16.msra.mxu0 0
      %2707 = vmatprep.subr.bf16.mxu0 0
      %2708 = vmatpush1.bf16.msra.mxu0 0
      %2709 = vmatprep.subr.bf16.mxu0 0
      %2710 = vmatpush1.bf16.msra.mxu0 0
      %2711 = vmatprep.subr.bf16.mxu0 0
      %2712 = vmatpush1.bf16.msra.mxu0 0
      %2713 = vmatprep.subr.bf16.mxu0 0
      %2714 = vmatpush1.bf16.msra.mxu0 0
      %2715 = vmatprep.subr.bf16.mxu0 0
      %2716 = vmatpush1.bf16.msra.mxu0 0
      %2717 = vmatprep.subr.bf16.mxu0 0
      %2718 = vmatpush1.bf16.msra.mxu0 0
      %2719 = vmatprep.subr.bf16.mxu0 0
      %2720 = vmatpush1.bf16.msra.mxu0 0
      %2721 = vmatprep.subr.bf16.mxu0 0
      %2722 = vmatpush1.bf16.msra.mxu0 0
      %2723 = vmatprep.subr.bf16.mxu0 0
      %2724 = vmatpush1.bf16.msra.mxu0 0
      %2725 = vmatprep.subr.bf16.mxu0 0
      %2726 = vmatpush1.bf16.msra.mxu0 0
      %2727 = vmatprep.subr.bf16.mxu0 0
      %2728 = vmatpush1.bf16.msra.mxu0 0
      %2729 = vmatprep.mubr.bf16.mxu0 0
      %2730 = vmatmul.mubr.bf16.gmra.mrb[0].mxu0 %v2227
      %v2731 = vpop.f32.mrb[0].mxu0
      %v2732 = vadd.f32 0.0, %v2731
      %v2733 = vpop.f32.mrb[0].mxu0
      %v2734 = vpop.f32.mrb[0].mxu0
      %v2735 = vadd.f32 0.0, %v2734
      %v2736 = vpop.f32.mrb[0].mxu0
      %2737 = vmatprep.mubr.bf16.mxu0 0
      %2738 = vmatmul.mubr.bf16.gmra.mrb[0].mxu0 %v2230
      %v2739 = vpop.f32.mrb[0].mxu0
      %v2740 = vadd.f32 0.0, %v2739
      %v2741 = vpop.f32.mrb[0].mxu0
      %v2742 = vpop.f32.mrb[0].mxu0
      %v2743 = vadd.f32 0.0, %v2742
      %v2744 = vpop.f32.mrb[0].mxu0
      %2745 = vmatprep.mubr.bf16.mxu0 0
      %2746 = vmatmul.mubr.bf16.gmra.mrb[0].mxu0 %v2233
      %v2747 = vpop.f32.mrb[0].mxu0
      %v2748 = vadd.f32 0.0, %v2747
      %v2749 = vpop.f32.mrb[0].mxu0
      %v2750 = vpop.f32.mrb[0].mxu0
      %v2751 = vadd.f32 0.0, %v2750
      %v2752 = vpop.f32.mrb[0].mxu0
      %2753 = vmatprep.mubr.bf16.mxu0 0
      %2754 = vmatmul.mubr.bf16.gmra.mrb[0].mxu0 %v2236
      %v2755 = vpop.f32.mrb[0].mxu0
      %v2756 = vadd.f32 0.0, %v2755
      %v2757 = vpop.f32.mrb[0].mxu0
      %v2758 = vpop.f32.mrb[0].mxu0
      %v2759 = vadd.f32 0.0, %v2758
      %v2760 = vpop.f32.mrb[0].mxu0
      %2761 = vmatprep.mubr.bf16.mxu0 0
      %2762 = vmatmul.mubr.bf16.gmra.mrb[0].mxu0 %v2239
      %v2763 = vpop.f32.mrb[0].mxu0
      %v2764 = vadd.f32 0.0, %v2763
      %v2765 = vpop.f32.mrb[0].mxu0
      %v2766 = vpop.f32.mrb[0].mxu0
      %v2767 = vadd.f32 0.0, %v2766
      %v2768 = vpop.f32.mrb[0].mxu0
      %2769 = vmatprep.mubr.bf16.mxu0 0
      %2770 = vmatmul.mubr.bf16.gmra.mrb[0].mxu0 %v2242
      %v2771 = vpop.f32.mrb[0].mxu0
      %v2772 = vadd.f32 0.0, %v2771
      %v2773 = vpop.f32.mrb[0].mxu0
      %v2774 = vpop.f32.mrb[0].mxu0
      %v2775 = vadd.f32 0.0, %v2774
      %v2776 = vpop.f32.mrb[0].mxu0
      %2777 = vmatprep.mubr.bf16.mxu0 0
      %2778 = vmatmul.mubr.bf16.gmra.mrb[0].mxu0 %v2245
      %v2779 = vpop.f32.mrb[0].mxu0
      %v2780 = vadd.f32 0.0, %v2779
      %v2781 = vpop.f32.mrb[0].mxu0
      %v2782 = vpop.f32.mrb[0].mxu0
      %v2783 = vadd.f32 0.0, %v2782
      %v2784 = vpop.f32.mrb[0].mxu0
      %2785 = vmatprep.mubr.bf16.mxu0 0
      %2786 = vmatmul.mubr.bf16.gmra.mrb[0].mxu0 %v2248
      %v2787 = vpop.f32.mrb[0].mxu0
      %v2788 = vadd.f32 0.0, %v2787
      %v2789 = vpop.f32.mrb[0].mxu0
      %v2790 = vpop.f32.mrb[0].mxu0
      %v2791 = vadd.f32 0.0, %v2790
      %v2792 = vpop.f32.mrb[0].mxu0
      %2793 = vmatprep.mubr.bf16.mxu0 0
      %2794 = vmatmul.mubr.bf16.gmra.mrb[0].mxu0 %v2251
      %v2795 = vpop.f32.mrb[0].mxu0
      %v2796 = vadd.f32 0.0, %v2795
      %v2797 = vpop.f32.mrb[0].mxu0
      %v2798 = vpop.f32.mrb[0].mxu0
      %v2799 = vadd.f32 0.0, %v2798
      %v2800 = vpop.f32.mrb[0].mxu0
      %2801 = vmatprep.mubr.bf16.mxu0 0
      %2802 = vmatmul.mubr.bf16.gmra.mrb[0].mxu0 %v2254
      %v2803 = vpop.f32.mrb[0].mxu0
      %v2804 = vadd.f32 0.0, %v2803
      %v2805 = vpop.f32.mrb[0].mxu0
      %v2806 = vpop.f32.mrb[0].mxu0
      %v2807 = vadd.f32 0.0, %v2806
      %v2808 = vpop.f32.mrb[0].mxu0
      %2809 = vmatprep.mubr.bf16.mxu0 0
      %2810 = vmatmul.mubr.bf16.gmra.mrb[0].mxu0 %v2257
      %v2811 = vpop.f32.mrb[0].mxu0
      %v2812 = vadd.f32 0.0, %v2811
      %v2813 = vpop.f32.mrb[0].mxu0
      %v2814 = vpop.f32.mrb[0].mxu0
      %v2815 = vadd.f32 0.0, %v2814
      %v2816 = vpop.f32.mrb[0].mxu0
      %2817 = vmatprep.mubr.bf16.mxu0 0
      %2818 = vmatmul.mubr.bf16.gmra.mrb[0].mxu0 %v2260
      %v2819 = vpop.f32.mrb[0].mxu0
      %v2820 = vadd.f32 0.0, %v2819
      %v2821 = vpop.f32.mrb[0].mxu0
      %v2822 = vpop.f32.mrb[0].mxu0
      %v2823 = vadd.f32 0.0, %v2822
      %v2824 = vpop.f32.mrb[0].mxu0
      %2825 = vmatprep.mubr.bf16.mxu0 0
      %2826 = vmatmul.mubr.bf16.gmra.mrb[0].mxu0 %v2683
      %v2827 = vpop.f32.mrb[0].mxu0
      %v2828 = vadd.f32 0.0, %v2827
      %v2829 = vpop.f32.mrb[0].mxu0
      %v2830 = vpop.f32.mrb[0].mxu0
      %v2831 = vadd.f32 0.0, %v2830
      %v2832 = vpop.f32.mrb[0].mxu0
      %2833 = vmatprep.mubr.bf16.mxu0 0
      %2834 = vmatmul.mubr.bf16.gmra.mrb[0].mxu0 %v2686
      %v2835 = vpop.f32.mrb[0].mxu0
      %v2836 = vadd.f32 0.0, %v2835
      %v2837 = vpop.f32.mrb[0].mxu0
      %v2838 = vpop.f32.mrb[0].mxu0
      %v2839 = vadd.f32 0.0, %v2838
      %v2840 = vpop.f32.mrb[0].mxu0
      %2841 = vmatprep.mubr.bf16.mxu0 0
      %2842 = vmatmul.mubr.bf16.gmra.mrb[0].mxu0 %v2689
      %v2843 = vpop.f32.mrb[0].mxu0
      %v2844 = vadd.f32 0.0, %v2843
      %v2845 = vpop.f32.mrb[0].mxu0
      %v2846 = vpop.f32.mrb[0].mxu0
      %v2847 = vadd.f32 0.0, %v2846
      %v2848 = vpop.f32.mrb[0].mxu0
      %2849 = vmatprep.mubr.bf16.mxu0 0
      %2850 = vmatmul.mubr.bf16.gmra.mrb[0].mxu0 %v2692
      %v2851 = vpop.f32.mrb[0].mxu0
      %v2852 = vadd.f32 0.0, %v2851
      %v2853 = vpop.f32.mrb[0].mxu0
      %v2854 = vpop.f32.mrb[0].mxu0
      %v2855 = vadd.f32 0.0, %v2854
      %v2856 = vpop.f32.mrb[0].mxu0
      %2857 = vdwg.mxu0
      %v2858 = vadd.f32 %v2619, %v2732
      %v2859 = vadd.f32 %v2620, %v2735
      %v2860 = vadd.f32 %v2621, %v2740
      %v2861 = vadd.f32 %v2622, %v2743
      %v2862 = vadd.f32 %v2623, %v2748
      %v2863 = vadd.f32 %v2624, %v2751
      %v2864 = vadd.f32 %v2625, %v2756
      %v2865 = vadd.f32 %v2626, %v2759
      %v2866 = vadd.f32 %v2627, %v2764
      %v2867 = vadd.f32 %v2628, %v2767
      %v2868 = vadd.f32 %v2629, %v2772
      %v2869 = vadd.f32 %v2630, %v2775
      %v2870 = vadd.f32 %v2631, %v2780
      %v2871 = vadd.f32 %v2632, %v2783
      %v2872 = vadd.f32 %v2633, %v2788
      %v2873 = vadd.f32 %v2634, %v2791
      %v2874 = vadd.f32 %v2635, %v2796
      %v2875 = vadd.f32 %v2636, %v2799
      %v2876 = vadd.f32 %v2637, %v2804
      %v2877 = vadd.f32 %v2638, %v2807
      %v2878 = vadd.f32 %v2639, %v2812
      %v2879 = vadd.f32 %v2640, %v2815
      %v2880 = vadd.f32 %v2641, %v2820
      %v2881 = vadd.f32 %v2642, %v2823
      %v2882 = vadd.f32 %v2643, %v2828
      %v2883 = vadd.f32 %v2644, %v2831
      %v2884 = vadd.f32 %v2645, %v2836
      %v2885 = vadd.f32 %v2646, %v2839
      %v2886 = vadd.f32 %v2647, %v2844
      %v2887 = vadd.f32 %v2648, %v2847
      %v2888 = vadd.f32 %v2649, %v2852
      %v2889 = vadd.f32 %v2650, %v2855
      %s2890 = scalar_lea.vmem %s3, 48
      %v2891 = vld [vmem:[%s2890] sm:$0xf]
      %v2892 = vld [vmem:[%s2890 + $0x4] sm:$0xf]
      %v2893 = vld [vmem:[%s2890 + $0x8] sm:$0xf]
      %v2895 = vunpack.c.l.b16 %v1868
      %v2896 = vpack.c.b16 %v2663, %v2662
      %v2897 = vpack.c.b16 %v2665, %v2664
      %v2898 = vpack.c.b16 %v2667, %v2666
      %v2899 = vpack.c.b16 %v2895, %v2668
      %v2903 = vunpack.c.l.b16 %v2891
      %v2904 = vunpack.c.l.b16 %v2892
      %v2905 = vunpack.c.l.b16 %v2893
      %v2906 = vpack.c.b16 %v2904, %v2903
      %v2907 = vpack.c.b16 %v2905, %v2905
      %v2910 = vsel %vm1973, %v2896, 0
      %v2913 = vsel %vm1973, %v2897, 0
      %v2916 = vsel %vm1973, %v2898, 0
      %v2919 = vsel %vm1973, %v2899, 0
      %v2922 = vsel %vm2022, %v2907, 0
      %2924 = vmatprep.subr.bf16.mxu0 0
      %2925 = vmatpush1.bf16.msra.mxu0 %v2906
      %2926 = vmatprep.subr.bf16.mxu0 0
      %2927 = vmatpush1.bf16.msra.mxu0 %v2922
      %2928 = vmatprep.subr.bf16.mxu0 0
      %2929 = vmatpush1.bf16.msra.mxu0 0
      %2930 = vmatprep.subr.bf16.mxu0 0
      %2931 = vmatpush1.bf16.msra.mxu0 0
      %2932 = vmatprep.subr.bf16.mxu0 0
      %2933 = vmatpush1.bf16.msra.mxu0 0
      %2934 = vmatprep.subr.bf16.mxu0 0
      %2935 = vmatpush1.bf16.msra.mxu0 0
      %2936 = vmatprep.subr.bf16.mxu0 0
      %2937 = vmatpush1.bf16.msra.mxu0 0
      %2938 = vmatprep.subr.bf16.mxu0 0
      %2939 = vmatpush1.bf16.msra.mxu0 0
      %2940 = vmatprep.subr.bf16.mxu0 0
      %2941 = vmatpush1.bf16.msra.mxu0 0
      %2942 = vmatprep.subr.bf16.mxu0 0
      %2943 = vmatpush1.bf16.msra.mxu0 0
      %2944 = vmatprep.subr.bf16.mxu0 0
      %2945 = vmatpush1.bf16.msra.mxu0 0
      %2946 = vmatprep.subr.bf16.mxu0 0
      %2947 = vmatpush1.bf16.msra.mxu0 0
      %2948 = vmatprep.subr.bf16.mxu0 0
      %2949 = vmatpush1.bf16.msra.mxu0 0
      %2950 = vmatprep.subr.bf16.mxu0 0
      %2951 = vmatpush1.bf16.msra.mxu0 0
      %2952 = vmatprep.subr.bf16.mxu0 0
      %2953 = vmatpush1.bf16.msra.mxu0 0
      %2954 = vmatprep.subr.bf16.mxu0 0
      %2955 = vmatpush1.bf16.msra.mxu0 0
      %2956 = vmatprep.mubr.bf16.mxu0 0
      %2957 = vmatmul.mubr.bf16.gmra.mrb[0].mxu0 %v1987
      %v2958 = vpop.f32.mrb[0].mxu0
      %v2959 = vadd.f32 0.0, %v2958
      %v2960 = vpop.f32.mrb[0].mxu0
      %v2961 = vpop.f32.mrb[0].mxu0
      %v2962 = vadd.f32 0.0, %v2961
      %v2963 = vpop.f32.mrb[0].mxu0
      %2964 = vmatprep.mubr.bf16.mxu0 0
      %2965 = vmatmul.mubr.bf16.gmra.mrb[0].mxu0 %v1990
      %v2966 = vpop.f32.mrb[0].mxu0
      %v2967 = vadd.f32 0.0, %v2966
      %v2968 = vpop.f32.mrb[0].mxu0
      %v2969 = vpop.f32.mrb[0].mxu0
      %v2970 = vadd.f32 0.0, %v2969
      %v2971 = vpop.f32.mrb[0].mxu0
      %2972 = vmatprep.mubr.bf16.mxu0 0
      %2973 = vmatmul.mubr.bf16.gmra.mrb[0].mxu0 %v1993
      %v2974 = vpop.f32.mrb[0].mxu0
      %v2975 = vadd.f32 0.0, %v2974
      %v2976 = vpop.f32.mrb[0].mxu0
      %v2977 = vpop.f32.mrb[0].mxu0
      %v2978 = vadd.f32 0.0, %v2977
      %v2979 = vpop.f32.mrb[0].mxu0
      %2980 = vmatprep.mubr.bf16.mxu0 0
      %2981 = vmatmul.mubr.bf16.gmra.mrb[0].mxu0 %v1996
      %v2982 = vpop.f32.mrb[0].mxu0
      %v2983 = vadd.f32 0.0, %v2982
      %v2984 = vpop.f32.mrb[0].mxu0
      %v2985 = vpop.f32.mrb[0].mxu0
      %v2986 = vadd.f32 0.0, %v2985
      %v2987 = vpop.f32.mrb[0].mxu0
      %2988 = vmatprep.mubr.bf16.mxu0 0
      %2989 = vmatmul.mubr.bf16.gmra.mrb[0].mxu0 %v1999
      %v2990 = vpop.f32.mrb[0].mxu0
      %v2991 = vadd.f32 0.0, %v2990
      %v2992 = vpop.f32.mrb[0].mxu0
      %v2993 = vpop.f32.mrb[0].mxu0
      %v2994 = vadd.f32 0.0, %v2993
      %v2995 = vpop.f32.mrb[0].mxu0
      %2996 = vmatprep.mubr.bf16.mxu0 0
      %2997 = vmatmul.mubr.bf16.gmra.mrb[0].mxu0 %v2002
      %v2998 = vpop.f32.mrb[0].mxu0
      %v2999 = vadd.f32 0.0, %v2998
      %v3000 = vpop.f32.mrb[0].mxu0
      %v3001 = vpop.f32.mrb[0].mxu0
      %v3002 = vadd.f32 0.0, %v3001
      %v3003 = vpop.f32.mrb[0].mxu0
      %3004 = vmatprep.mubr.bf16.mxu0 0
      %3005 = vmatmul.mubr.bf16.gmra.mrb[0].mxu0 %v2005
      %v3006 = vpop.f32.mrb[0].mxu0
      %v3007 = vadd.f32 0.0, %v3006
      %v3008 = vpop.f32.mrb[0].mxu0
      %v3009 = vpop.f32.mrb[0].mxu0
      %v3010 = vadd.f32 0.0, %v3009
      %v3011 = vpop.f32.mrb[0].mxu0
      %3012 = vmatprep.mubr.bf16.mxu0 0
      %3013 = vmatmul.mubr.bf16.gmra.mrb[0].mxu0 %v2008
      %v3014 = vpop.f32.mrb[0].mxu0
      %v3015 = vadd.f32 0.0, %v3014
      %v3016 = vpop.f32.mrb[0].mxu0
      %v3017 = vpop.f32.mrb[0].mxu0
      %v3018 = vadd.f32 0.0, %v3017
      %v3019 = vpop.f32.mrb[0].mxu0
      %3020 = vmatprep.mubr.bf16.mxu0 0
      %3021 = vmatmul.mubr.bf16.gmra.mrb[0].mxu0 %v2011
      %v3022 = vpop.f32.mrb[0].mxu0
      %v3023 = vadd.f32 0.0, %v3022
      %v3024 = vpop.f32.mrb[0].mxu0
      %v3025 = vpop.f32.mrb[0].mxu0
      %v3026 = vadd.f32 0.0, %v3025
      %v3027 = vpop.f32.mrb[0].mxu0
      %3028 = vmatprep.mubr.bf16.mxu0 0
      %3029 = vmatmul.mubr.bf16.gmra.mrb[0].mxu0 %v2014
      %v3030 = vpop.f32.mrb[0].mxu0
      %v3031 = vadd.f32 0.0, %v3030
      %v3032 = vpop.f32.mrb[0].mxu0
      %v3033 = vpop.f32.mrb[0].mxu0
      %v3034 = vadd.f32 0.0, %v3033
      %v3035 = vpop.f32.mrb[0].mxu0
      %3036 = vmatprep.mubr.bf16.mxu0 0
      %3037 = vmatmul.mubr.bf16.gmra.mrb[0].mxu0 %v2017
      %v3038 = vpop.f32.mrb[0].mxu0
      %v3039 = vadd.f32 0.0, %v3038
      %v3040 = vpop.f32.mrb[0].mxu0
      %v3041 = vpop.f32.mrb[0].mxu0
      %v3042 = vadd.f32 0.0, %v3041
      %v3043 = vpop.f32.mrb[0].mxu0
      %3044 = vmatprep.mubr.bf16.mxu0 0
      %3045 = vmatmul.mubr.bf16.gmra.mrb[0].mxu0 %v2020
      %v3046 = vpop.f32.mrb[0].mxu0
      %v3047 = vadd.f32 0.0, %v3046
      %v3048 = vpop.f32.mrb[0].mxu0
      %v3049 = vpop.f32.mrb[0].mxu0
      %v3050 = vadd.f32 0.0, %v3049
      %v3051 = vpop.f32.mrb[0].mxu0
      %3052 = vmatprep.mubr.bf16.mxu0 0
      %3053 = vmatmul.mubr.bf16.gmra.mrb[0].mxu0 %v2910
      %v3054 = vpop.f32.mrb[0].mxu0
      %v3055 = vadd.f32 0.0, %v3054
      %v3056 = vpop.f32.mrb[0].mxu0
      %v3057 = vpop.f32.mrb[0].mxu0
      %v3058 = vadd.f32 0.0, %v3057
      %v3059 = vpop.f32.mrb[0].mxu0
      %3060 = vmatprep.mubr.bf16.mxu0 0
      %3061 = vmatmul.mubr.bf16.gmra.mrb[0].mxu0 %v2913
      %v3062 = vpop.f32.mrb[0].mxu0
      %v3063 = vadd.f32 0.0, %v3062
      %v3064 = vpop.f32.mrb[0].mxu0
      %v3065 = vpop.f32.mrb[0].mxu0
      %v3066 = vadd.f32 0.0, %v3065
      %v3067 = vpop.f32.mrb[0].mxu0
      %3068 = vmatprep.mubr.bf16.mxu0 0
      %3069 = vmatmul.mubr.bf16.gmra.mrb[0].mxu0 %v2916
      %v3070 = vpop.f32.mrb[0].mxu0
      %v3071 = vadd.f32 0.0, %v3070
      %v3072 = vpop.f32.mrb[0].mxu0
      %v3073 = vpop.f32.mrb[0].mxu0
      %v3074 = vadd.f32 0.0, %v3073
      %v3075 = vpop.f32.mrb[0].mxu0
      %3076 = vmatprep.mubr.bf16.mxu0 0
      %3077 = vmatmul.mubr.bf16.gmra.mrb[0].mxu0 %v2919
      %v3078 = vpop.f32.mrb[0].mxu0
      %v3079 = vadd.f32 0.0, %v3078
      %v3080 = vpop.f32.mrb[0].mxu0
      %v3081 = vpop.f32.mrb[0].mxu0
      %v3082 = vadd.f32 0.0, %v3081
      %v3083 = vpop.f32.mrb[0].mxu0
      %3084 = vdwg.mxu0
      %v3085 = vadd.f32 %v2858, %v2959
      %v3086 = vadd.f32 %v2859, %v2962
      %v3087 = vadd.f32 %v2860, %v2967
      %v3088 = vadd.f32 %v2861, %v2970
      %v3089 = vadd.f32 %v2862, %v2975
      %v3090 = vadd.f32 %v2863, %v2978
      %v3091 = vadd.f32 %v2864, %v2983
      %v3092 = vadd.f32 %v2865, %v2986
      %v3093 = vadd.f32 %v2866, %v2991
      %v3094 = vadd.f32 %v2867, %v2994
      %v3095 = vadd.f32 %v2868, %v2999
      %v3096 = vadd.f32 %v2869, %v3002
      %v3097 = vadd.f32 %v2870, %v3007
      %v3098 = vadd.f32 %v2871, %v3010
      %v3099 = vadd.f32 %v2872, %v3015
      %v3100 = vadd.f32 %v2873, %v3018
      %v3101 = vadd.f32 %v2874, %v3023
      %v3102 = vadd.f32 %v2875, %v3026
      %v3103 = vadd.f32 %v2876, %v3031
      %v3104 = vadd.f32 %v2877, %v3034
      %v3105 = vadd.f32 %v2878, %v3039
      %v3106 = vadd.f32 %v2879, %v3042
      %v3107 = vadd.f32 %v2880, %v3047
      %v3108 = vadd.f32 %v2881, %v3050
      %v3109 = vadd.f32 %v2882, %v3055
      %v3110 = vadd.f32 %v2883, %v3058
      %v3111 = vadd.f32 %v2884, %v3063
      %v3112 = vadd.f32 %v2885, %v3066
      %v3113 = vadd.f32 %v2886, %v3071
      %v3114 = vadd.f32 %v2887, %v3074
      %v3115 = vadd.f32 %v2888, %v3079
      %v3116 = vadd.f32 %v2889, %v3082
      %s3117 = scalar_lea.vmem %s3, 60
      %v3118 = vld [vmem:[%s3117] sm:$0xf]
      %v3119 = vld [vmem:[%s3117 + $0x4] sm:$0xf]
      %v3120 = vld [vmem:[%s3117 + $0x8] sm:$0xf]
      %v3121 = vpack.c.b16 %v2188, %v2895
      %v3125 = vunpack.c.l.b16 %v3118
      %v3126 = vunpack.c.l.b16 %v3119
      %v3127 = vunpack.c.l.b16 %v3120
      %v3128 = vpack.c.b16 %v3126, %v3125
      %v3129 = vpack.c.b16 %v3127, %v3127
      %v3132 = vsel %vm1973, %v3121, 0
      %v3135 = vsel %vm2022, %v3129, 0
      %3137 = vmatprep.subr.bf16.mxu0 0
      %3138 = vmatpush1.bf16.msra.mxu0 %v3128
      %3139 = vmatprep.subr.bf16.mxu0 0
      %3140 = vmatpush1.bf16.msra.mxu0 %v3135
      %3141 = vmatprep.subr.bf16.mxu0 0
      %3142 = vmatpush1.bf16.msra.mxu0 0
      %3143 = vmatprep.subr.bf16.mxu0 0
      %3144 = vmatpush1.bf16.msra.mxu0 0
      %3145 = vmatprep.subr.bf16.mxu0 0
      %3146 = vmatpush1.bf16.msra.mxu0 0
      %3147 = vmatprep.subr.bf16.mxu0 0
      %3148 = vmatpush1.bf16.msra.mxu0 0
      %3149 = vmatprep.subr.bf16.mxu0 0
      %3150 = vmatpush1.bf16.msra.mxu0 0
      %3151 = vmatprep.subr.bf16.mxu0 0
      %3152 = vmatpush1.bf16.msra.mxu0 0
      %3153 = vmatprep.subr.bf16.mxu0 0
      %3154 = vmatpush1.bf16.msra.mxu0 0
      %3155 = vmatprep.subr.bf16.mxu0 0
      %3156 = vmatpush1.bf16.msra.mxu0 0
      %3157 = vmatprep.subr.bf16.mxu0 0
      %3158 = vmatpush1.bf16.msra.mxu0 0
      %3159 = vmatprep.subr.bf16.mxu0 0
      %3160 = vmatpush1.bf16.msra.mxu0 0
      %3161 = vmatprep.subr.bf16.mxu0 0
      %3162 = vmatpush1.bf16.msra.mxu0 0
      %3163 = vmatprep.subr.bf16.mxu0 0
      %3164 = vmatpush1.bf16.msra.mxu0 0
      %3165 = vmatprep.subr.bf16.mxu0 0
      %3166 = vmatpush1.bf16.msra.mxu0 0
      %3167 = vmatprep.subr.bf16.mxu0 0
      %3168 = vmatpush1.bf16.msra.mxu0 0
      %3169 = vmatprep.mubr.bf16.mxu0 0
      %3170 = vmatmul.mubr.bf16.gmra.mrb[0].mxu0 %v2230
      %v3171 = vpop.f32.mrb[0].mxu0
      %v3172 = vadd.f32 0.0, %v3171
      %v3173 = vpop.f32.mrb[0].mxu0
      %v3174 = vpop.f32.mrb[0].mxu0
      %v3175 = vadd.f32 0.0, %v3174
      %v3176 = vpop.f32.mrb[0].mxu0
      %3177 = vmatprep.mubr.bf16.mxu0 0
      %3178 = vmatmul.mubr.bf16.gmra.mrb[0].mxu0 %v2233
      %v3179 = vpop.f32.mrb[0].mxu0
      %v3180 = vadd.f32 0.0, %v3179
      %v3181 = vpop.f32.mrb[0].mxu0
      %v3182 = vpop.f32.mrb[0].mxu0
      %v3183 = vadd.f32 0.0, %v3182
      %v3184 = vpop.f32.mrb[0].mxu0
      %3185 = vmatprep.mubr.bf16.mxu0 0
      %3186 = vmatmul.mubr.bf16.gmra.mrb[0].mxu0 %v2236
      %v3187 = vpop.f32.mrb[0].mxu0
      %v3188 = vadd.f32 0.0, %v3187
      %v3189 = vpop.f32.mrb[0].mxu0
      %v3190 = vpop.f32.mrb[0].mxu0
      %v3191 = vadd.f32 0.0, %v3190
      %v3192 = vpop.f32.mrb[0].mxu0
      %3193 = vmatprep.mubr.bf16.mxu0 0
      %3194 = vmatmul.mubr.bf16.gmra.mrb[0].mxu0 %v2447
      %v3195 = vpop.f32.mrb[0].mxu0
      %v3196 = vadd.f32 0.0, %v3195
      %v3197 = vpop.f32.mrb[0].mxu0
      %v3198 = vpop.f32.mrb[0].mxu0
      %v3199 = vadd.f32 0.0, %v3198
      %v3200 = vpop.f32.mrb[0].mxu0
      %3201 = vmatprep.mubr.bf16.mxu0 0
      %3202 = vmatmul.mubr.bf16.gmra.mrb[0].mxu0 %v2242
      %v3203 = vpop.f32.mrb[0].mxu0
      %v3204 = vadd.f32 0.0, %v3203
      %v3205 = vpop.f32.mrb[0].mxu0
      %v3206 = vpop.f32.mrb[0].mxu0
      %v3207 = vadd.f32 0.0, %v3206
      %v3208 = vpop.f32.mrb[0].mxu0
      %3209 = vmatprep.mubr.bf16.mxu0 0
      %3210 = vmatmul.mubr.bf16.gmra.mrb[0].mxu0 %v2245
      %v3211 = vpop.f32.mrb[0].mxu0
      %v3212 = vadd.f32 0.0, %v3211
      %v3213 = vpop.f32.mrb[0].mxu0
      %v3214 = vpop.f32.mrb[0].mxu0
      %v3215 = vadd.f32 0.0, %v3214
      %v3216 = vpop.f32.mrb[0].mxu0
      %3217 = vmatprep.mubr.bf16.mxu0 0
      %3218 = vmatmul.mubr.bf16.gmra.mrb[0].mxu0 %v2248
      %v3219 = vpop.f32.mrb[0].mxu0
      %v3220 = vadd.f32 0.0, %v3219
      %v3221 = vpop.f32.mrb[0].mxu0
      %v3222 = vpop.f32.mrb[0].mxu0
      %v3223 = vadd.f32 0.0, %v3222
      %v3224 = vpop.f32.mrb[0].mxu0
      %3225 = vmatprep.mubr.bf16.mxu0 0
      %3226 = vmatmul.mubr.bf16.gmra.mrb[0].mxu0 %v2450
      %v3227 = vpop.f32.mrb[0].mxu0
      %v3228 = vadd.f32 0.0, %v3227
      %v3229 = vpop.f32.mrb[0].mxu0
      %v3230 = vpop.f32.mrb[0].mxu0
      %v3231 = vadd.f32 0.0, %v3230
      %v3232 = vpop.f32.mrb[0].mxu0
      %3233 = vmatprep.mubr.bf16.mxu0 0
      %3234 = vmatmul.mubr.bf16.gmra.mrb[0].mxu0 %v2254
      %v3235 = vpop.f32.mrb[0].mxu0
      %v3236 = vadd.f32 0.0, %v3235
      %v3237 = vpop.f32.mrb[0].mxu0
      %v3238 = vpop.f32.mrb[0].mxu0
      %v3239 = vadd.f32 0.0, %v3238
      %v3240 = vpop.f32.mrb[0].mxu0
      %3241 = vmatprep.mubr.bf16.mxu0 0
      %3242 = vmatmul.mubr.bf16.gmra.mrb[0].mxu0 %v2257
      %v3243 = vpop.f32.mrb[0].mxu0
      %v3244 = vadd.f32 0.0, %v3243
      %v3245 = vpop.f32.mrb[0].mxu0
      %v3246 = vpop.f32.mrb[0].mxu0
      %v3247 = vadd.f32 0.0, %v3246
      %v3248 = vpop.f32.mrb[0].mxu0
      %3249 = vmatprep.mubr.bf16.mxu0 0
      %3250 = vmatmul.mubr.bf16.gmra.mrb[0].mxu0 %v2260
      %v3251 = vpop.f32.mrb[0].mxu0
      %v3252 = vadd.f32 0.0, %v3251
      %v3253 = vpop.f32.mrb[0].mxu0
      %v3254 = vpop.f32.mrb[0].mxu0
      %v3255 = vadd.f32 0.0, %v3254
      %v3256 = vpop.f32.mrb[0].mxu0
      %3257 = vmatprep.mubr.bf16.mxu0 0
      %3258 = vmatmul.mubr.bf16.gmra.mrb[0].mxu0 %v2453
      %v3259 = vpop.f32.mrb[0].mxu0
      %v3260 = vadd.f32 0.0, %v3259
      %v3261 = vpop.f32.mrb[0].mxu0
      %v3262 = vpop.f32.mrb[0].mxu0
      %v3263 = vadd.f32 0.0, %v3262
      %v3264 = vpop.f32.mrb[0].mxu0
      %3265 = vmatprep.mubr.bf16.mxu0 0
      %3266 = vmatmul.mubr.bf16.gmra.mrb[0].mxu0 %v2686
      %v3267 = vpop.f32.mrb[0].mxu0
      %v3268 = vadd.f32 0.0, %v3267
      %v3269 = vpop.f32.mrb[0].mxu0
      %v3270 = vpop.f32.mrb[0].mxu0
      %v3271 = vadd.f32 0.0, %v3270
      %v3272 = vpop.f32.mrb[0].mxu0
      %3273 = vmatprep.mubr.bf16.mxu0 0
      %3274 = vmatmul.mubr.bf16.gmra.mrb[0].mxu0 %v2689
      %v3275 = vpop.f32.mrb[0].mxu0
      %v3276 = vadd.f32 0.0, %v3275
      %v3277 = vpop.f32.mrb[0].mxu0
      %v3278 = vpop.f32.mrb[0].mxu0
      %v3279 = vadd.f32 0.0, %v3278
      %v3280 = vpop.f32.mrb[0].mxu0
      %3281 = vmatprep.mubr.bf16.mxu0 0
      %3282 = vmatmul.mubr.bf16.gmra.mrb[0].mxu0 %v2692
      %v3283 = vpop.f32.mrb[0].mxu0
      %v3284 = vadd.f32 0.0, %v3283
      %v3285 = vpop.f32.mrb[0].mxu0
      %v3286 = vpop.f32.mrb[0].mxu0
      %v3287 = vadd.f32 0.0, %v3286
      %v3288 = vpop.f32.mrb[0].mxu0
      %3289 = vmatprep.mubr.bf16.mxu0 0
      %3290 = vmatmul.mubr.bf16.gmra.mrb[0].mxu0 %v3132
      %v3291 = vpop.f32.mrb[0].mxu0
      %v3292 = vadd.f32 0.0, %v3291
      %v3293 = vpop.f32.mrb[0].mxu0
      %v3294 = vpop.f32.mrb[0].mxu0
      %v3295 = vadd.f32 0.0, %v3294
      %v3296 = vpop.f32.mrb[0].mxu0
      %3297 = vdwg.mxu0
      %v3298 = vadd.f32 %v3085, %v3172
      %v3299 = vadd.f32 %v3086, %v3175
      %v3300 = vadd.f32 %v3087, %v3180
      %v3301 = vadd.f32 %v3088, %v3183
      %v3302 = vadd.f32 %v3089, %v3188
      %v3303 = vadd.f32 %v3090, %v3191
      %v3304 = vadd.f32 %v3091, %v3196
      %v3305 = vadd.f32 %v3092, %v3199
      %v3306 = vadd.f32 %v3093, %v3204
      %v3307 = vadd.f32 %v3094, %v3207
      %v3308 = vadd.f32 %v3095, %v3212
      %v3309 = vadd.f32 %v3096, %v3215
      %v3310 = vadd.f32 %v3097, %v3220
      %v3311 = vadd.f32 %v3098, %v3223
      %v3312 = vadd.f32 %v3099, %v3228
      %v3313 = vadd.f32 %v3100, %v3231
      %v3314 = vadd.f32 %v3101, %v3236
      %v3315 = vadd.f32 %v3102, %v3239
      %v3316 = vadd.f32 %v3103, %v3244
      %v3317 = vadd.f32 %v3104, %v3247
      %v3318 = vadd.f32 %v3105, %v3252
      %v3319 = vadd.f32 %v3106, %v3255
      %v3320 = vadd.f32 %v3107, %v3260
      %v3321 = vadd.f32 %v3108, %v3263
      %v3322 = vadd.f32 %v3109, %v3268
      %v3323 = vadd.f32 %v3110, %v3271
      %v3324 = vadd.f32 %v3111, %v3276
      %v3325 = vadd.f32 %v3112, %v3279
      %v3326 = vadd.f32 %v3113, %v3284
      %v3327 = vadd.f32 %v3114, %v3287
      %v3328 = vadd.f32 %v3115, %v3292
      %v3329 = vadd.f32 %v3116, %v3295
      %s3330 = scalar_lea.vmem %s3, 72
      %v3331 = vld [vmem:[%s3330] sm:$0xf]
      %v3332 = vld [vmem:[%s3330 + $0x4] sm:$0xf]
      %v3333 = vld [vmem:[%s3330 + $0x8] sm:$0xf]
      %v3341 = vunpack.c.l.b16 %v1869
      %v3342 = vunpack.c.l.b16 %v1870
      %v3343 = vunpack.c.l.b16 %v1871
      %v3344 = vunpack.c.l.b16 %v1872
      %v3345 = vunpack.c.l.b16 %v1873
      %v3346 = vunpack.c.l.b16 %v1874
      %v3347 = vunpack.c.l.b16 %v1875
      %v3348 = vpack.c.b16 %v3341, %v2188
      %v3349 = vpack.c.b16 %v3343, %v3342
      %v3350 = vpack.c.b16 %v3345, %v3344
      %v3351 = vpack.c.b16 %v3347, %v3346
      %v3355 = vunpack.c.l.b16 %v3331
      %v3356 = vunpack.c.l.b16 %v3332
      %v3357 = vunpack.c.l.b16 %v3333
      %v3358 = vpack.c.b16 %v3356, %v3355
      %v3359 = vpack.c.b16 %v3357, %v3357
      %v3362 = vsel %vm1973, %v3348, 0
      %v3365 = vsel %vm1973, %v3349, 0
      %v3368 = vsel %vm1973, %v3350, 0
      %v3371 = vsel %vm1973, %v3351, 0
      %v3374 = vsel %vm2022, %v3359, 0
      %3376 = vmatprep.subr.bf16.mxu0 0
      %3377 = vmatpush1.bf16.msra.mxu0 %v3358
      %3378 = vmatprep.subr.bf16.mxu0 0
      %3379 = vmatpush1.bf16.msra.mxu0 %v3374
      %3380 = vmatprep.subr.bf16.mxu0 0
      %3381 = vmatpush1.bf16.msra.mxu0 0
      %3382 = vmatprep.subr.bf16.mxu0 0
      %3383 = vmatpush1.bf16.msra.mxu0 0
      %3384 = vmatprep.subr.bf16.mxu0 0
      %3385 = vmatpush1.bf16.msra.mxu0 0
      %3386 = vmatprep.subr.bf16.mxu0 0
      %3387 = vmatpush1.bf16.msra.mxu0 0
      %3388 = vmatprep.subr.bf16.mxu0 0
      %3389 = vmatpush1.bf16.msra.mxu0 0
      %3390 = vmatprep.subr.bf16.mxu0 0
      %3391 = vmatpush1.bf16.msra.mxu0 0
      %3392 = vmatprep.subr.bf16.mxu0 0
      %3393 = vmatpush1.bf16.msra.mxu0 0
      %3394 = vmatprep.subr.bf16.mxu0 0
      %3395 = vmatpush1.bf16.msra.mxu0 0
      %3396 = vmatprep.subr.bf16.mxu0 0
      %3397 = vmatpush1.bf16.msra.mxu0 0
      %3398 = vmatprep.subr.bf16.mxu0 0
      %3399 = vmatpush1.bf16.msra.mxu0 0
      %3400 = vmatprep.subr.bf16.mxu0 0
      %3401 = vmatpush1.bf16.msra.mxu0 0
      %3402 = vmatprep.subr.bf16.mxu0 0
      %3403 = vmatpush1.bf16.msra.mxu0 0
      %3404 = vmatprep.subr.bf16.mxu0 0
      %3405 = vmatpush1.bf16.msra.mxu0 0
      %3406 = vmatprep.subr.bf16.mxu0 0
      %3407 = vmatpush1.bf16.msra.mxu0 0
      %3408 = vmatprep.mubr.bf16.mxu0 0
      %3409 = vmatmul.mubr.bf16.gmra.mrb[0].mxu0 %v2239
      %v3410 = vpop.f32.mrb[0].mxu0
      %v3411 = vadd.f32 0.0, %v3410
      %v3412 = vpop.f32.mrb[0].mxu0
      %v3413 = vpop.f32.mrb[0].mxu0
      %v3414 = vadd.f32 0.0, %v3413
      %v3415 = vpop.f32.mrb[0].mxu0
      %3416 = vmatprep.mubr.bf16.mxu0 0
      %3417 = vmatmul.mubr.bf16.gmra.mrb[0].mxu0 %v2242
      %v3418 = vpop.f32.mrb[0].mxu0
      %v3419 = vadd.f32 0.0, %v3418
      %v3420 = vpop.f32.mrb[0].mxu0
      %v3421 = vpop.f32.mrb[0].mxu0
      %v3422 = vadd.f32 0.0, %v3421
      %v3423 = vpop.f32.mrb[0].mxu0
      %3424 = vmatprep.mubr.bf16.mxu0 0
      %3425 = vmatmul.mubr.bf16.gmra.mrb[0].mxu0 %v2245
      %v3426 = vpop.f32.mrb[0].mxu0
      %v3427 = vadd.f32 0.0, %v3426
      %v3428 = vpop.f32.mrb[0].mxu0
      %v3429 = vpop.f32.mrb[0].mxu0
      %v3430 = vadd.f32 0.0, %v3429
      %v3431 = vpop.f32.mrb[0].mxu0
      %3432 = vmatprep.mubr.bf16.mxu0 0
      %3433 = vmatmul.mubr.bf16.gmra.mrb[0].mxu0 %v2248
      %v3434 = vpop.f32.mrb[0].mxu0
      %v3435 = vadd.f32 0.0, %v3434
      %v3436 = vpop.f32.mrb[0].mxu0
      %v3437 = vpop.f32.mrb[0].mxu0
      %v3438 = vadd.f32 0.0, %v3437
      %v3439 = vpop.f32.mrb[0].mxu0
      %3440 = vmatprep.mubr.bf16.mxu0 0
      %3441 = vmatmul.mubr.bf16.gmra.mrb[0].mxu0 %v2251
      %v3442 = vpop.f32.mrb[0].mxu0
      %v3443 = vadd.f32 0.0, %v3442
      %v3444 = vpop.f32.mrb[0].mxu0
      %v3445 = vpop.f32.mrb[0].mxu0
      %v3446 = vadd.f32 0.0, %v3445
      %v3447 = vpop.f32.mrb[0].mxu0
      %3448 = vmatprep.mubr.bf16.mxu0 0
      %3449 = vmatmul.mubr.bf16.gmra.mrb[0].mxu0 %v2254
      %v3450 = vpop.f32.mrb[0].mxu0
      %v3451 = vadd.f32 0.0, %v3450
      %v3452 = vpop.f32.mrb[0].mxu0
      %v3453 = vpop.f32.mrb[0].mxu0
      %v3454 = vadd.f32 0.0, %v3453
      %v3455 = vpop.f32.mrb[0].mxu0
      %3456 = vmatprep.mubr.bf16.mxu0 0
      %3457 = vmatmul.mubr.bf16.gmra.mrb[0].mxu0 %v2257
      %v3458 = vpop.f32.mrb[0].mxu0
      %v3459 = vadd.f32 0.0, %v3458
      %v3460 = vpop.f32.mrb[0].mxu0
      %v3461 = vpop.f32.mrb[0].mxu0
      %v3462 = vadd.f32 0.0, %v3461
      %v3463 = vpop.f32.mrb[0].mxu0
      %3464 = vmatprep.mubr.bf16.mxu0 0
      %3465 = vmatmul.mubr.bf16.gmra.mrb[0].mxu0 %v2260
      %v3466 = vpop.f32.mrb[0].mxu0
      %v3467 = vadd.f32 0.0, %v3466
      %v3468 = vpop.f32.mrb[0].mxu0
      %v3469 = vpop.f32.mrb[0].mxu0
      %v3470 = vadd.f32 0.0, %v3469
      %v3471 = vpop.f32.mrb[0].mxu0
      %3472 = vmatprep.mubr.bf16.mxu0 0
      %3473 = vmatmul.mubr.bf16.gmra.mrb[0].mxu0 %v2683
      %v3474 = vpop.f32.mrb[0].mxu0
      %v3475 = vadd.f32 0.0, %v3474
      %v3476 = vpop.f32.mrb[0].mxu0
      %v3477 = vpop.f32.mrb[0].mxu0
      %v3478 = vadd.f32 0.0, %v3477
      %v3479 = vpop.f32.mrb[0].mxu0
      %3480 = vmatprep.mubr.bf16.mxu0 0
      %3481 = vmatmul.mubr.bf16.gmra.mrb[0].mxu0 %v2686
      %v3482 = vpop.f32.mrb[0].mxu0
      %v3483 = vadd.f32 0.0, %v3482
      %v3484 = vpop.f32.mrb[0].mxu0
      %v3485 = vpop.f32.mrb[0].mxu0
      %v3486 = vadd.f32 0.0, %v3485
      %v3487 = vpop.f32.mrb[0].mxu0
      %3488 = vmatprep.mubr.bf16.mxu0 0
      %3489 = vmatmul.mubr.bf16.gmra.mrb[0].mxu0 %v2689
      %v3490 = vpop.f32.mrb[0].mxu0
      %v3491 = vadd.f32 0.0, %v3490
      %v3492 = vpop.f32.mrb[0].mxu0
      %v3493 = vpop.f32.mrb[0].mxu0
      %v3494 = vadd.f32 0.0, %v3493
      %v3495 = vpop.f32.mrb[0].mxu0
      %3496 = vmatprep.mubr.bf16.mxu0 0
      %3497 = vmatmul.mubr.bf16.gmra.mrb[0].mxu0 %v2692
      %v3498 = vpop.f32.mrb[0].mxu0
      %v3499 = vadd.f32 0.0, %v3498
      %v3500 = vpop.f32.mrb[0].mxu0
      %v3501 = vpop.f32.mrb[0].mxu0
      %v3502 = vadd.f32 0.0, %v3501
      %v3503 = vpop.f32.mrb[0].mxu0
      %3504 = vmatprep.mubr.bf16.mxu0 0
      %3505 = vmatmul.mubr.bf16.gmra.mrb[0].mxu0 %v3362
      %v3506 = vpop.f32.mrb[0].mxu0
      %v3507 = vadd.f32 0.0, %v3506
      %v3508 = vpop.f32.mrb[0].mxu0
      %v3509 = vpop.f32.mrb[0].mxu0
      %v3510 = vadd.f32 0.0, %v3509
      %v3511 = vpop.f32.mrb[0].mxu0
      %3512 = vmatprep.mubr.bf16.mxu0 0
      %3513 = vmatmul.mubr.bf16.gmra.mrb[0].mxu0 %v3365
      %v3514 = vpop.f32.mrb[0].mxu0
      %v3515 = vadd.f32 0.0, %v3514
      %v3516 = vpop.f32.mrb[0].mxu0
      %v3517 = vpop.f32.mrb[0].mxu0
      %v3518 = vadd.f32 0.0, %v3517
      %v3519 = vpop.f32.mrb[0].mxu0
      %3520 = vmatprep.mubr.bf16.mxu0 0
      %3521 = vmatmul.mubr.bf16.gmra.mrb[0].mxu0 %v3368
      %v3522 = vpop.f32.mrb[0].mxu0
      %v3523 = vadd.f32 0.0, %v3522
      %v3524 = vpop.f32.mrb[0].mxu0
      %v3525 = vpop.f32.mrb[0].mxu0
      %v3526 = vadd.f32 0.0, %v3525
      %v3527 = vpop.f32.mrb[0].mxu0
      %3528 = vmatprep.mubr.bf16.mxu0 0
      %3529 = vmatmul.mubr.bf16.gmra.mrb[0].mxu0 %v3371
      %v3530 = vpop.f32.mrb[0].mxu0
      %v3531 = vadd.f32 0.0, %v3530
      %v3532 = vpop.f32.mrb[0].mxu0
      %v3533 = vpop.f32.mrb[0].mxu0
      %v3534 = vadd.f32 0.0, %v3533
      %v3535 = vpop.f32.mrb[0].mxu0
      %3536 = vdwg.mxu0
      %v3537 = vadd.f32 %v3298, %v3411
      %v3538 = vadd.f32 %v3299, %v3414
      %v3539 = vadd.f32 %v3300, %v3419
      %v3540 = vadd.f32 %v3301, %v3422
      %v3541 = vadd.f32 %v3302, %v3427
      %v3542 = vadd.f32 %v3303, %v3430
      %v3543 = vadd.f32 %v3304, %v3435
      %v3544 = vadd.f32 %v3305, %v3438
      %v3545 = vadd.f32 %v3306, %v3443
      %v3546 = vadd.f32 %v3307, %v3446
      %v3547 = vadd.f32 %v3308, %v3451
      %v3548 = vadd.f32 %v3309, %v3454
      %v3549 = vadd.f32 %v3310, %v3459
      %v3550 = vadd.f32 %v3311, %v3462
      %v3551 = vadd.f32 %v3312, %v3467
      %v3552 = vadd.f32 %v3313, %v3470
      %v3553 = vadd.f32 %v3314, %v3475
      %v3554 = vadd.f32 %v3315, %v3478
      %v3555 = vadd.f32 %v3316, %v3483
      %v3556 = vadd.f32 %v3317, %v3486
      %v3557 = vadd.f32 %v3318, %v3491
      %v3558 = vadd.f32 %v3319, %v3494
      %v3559 = vadd.f32 %v3320, %v3499
      %v3560 = vadd.f32 %v3321, %v3502
      %v3561 = vadd.f32 %v3322, %v3507
      %v3562 = vadd.f32 %v3323, %v3510
      %v3563 = vadd.f32 %v3324, %v3515
      %v3564 = vadd.f32 %v3325, %v3518
      %v3565 = vadd.f32 %v3326, %v3523
      %v3566 = vadd.f32 %v3327, %v3526
      %v3567 = vadd.f32 %v3328, %v3531
      %v3568 = vadd.f32 %v3329, %v3534
      %s3569 = scalar_lea.vmem %s3, 84
      %v3570 = vld [vmem:[%s3569] sm:$0xf]
      %v3571 = vld [vmem:[%s3569 + $0x4] sm:$0xf]
      %v3572 = vld [vmem:[%s3569 + $0x8] sm:$0xf]
      %v3574 = vunpack.c.l.b16 %v1876
      %v3575 = vpack.c.b16 %v3342, %v3341
      %v3576 = vpack.c.b16 %v3344, %v3343
      %v3577 = vpack.c.b16 %v3346, %v3345
      %v3578 = vpack.c.b16 %v3574, %v3347
      %v3582 = vunpack.c.l.b16 %v3570
      %v3583 = vunpack.c.l.b16 %v3571
      %v3584 = vunpack.c.l.b16 %v3572
      %v3585 = vpack.c.b16 %v3583, %v3582
      %v3586 = vpack.c.b16 %v3584, %v3584
      %v3589 = vsel %vm1973, %v3575, 0
      %v3592 = vsel %vm1973, %v3576, 0
      %v3595 = vsel %vm1973, %v3577, 0
      %v3598 = vsel %vm1973, %v3578, 0
      %v3601 = vsel %vm2022, %v3586, 0
      %3603 = vmatprep.subr.bf16.mxu0 0
      %3604 = vmatpush1.bf16.msra.mxu0 %v3585
      %3605 = vmatprep.subr.bf16.mxu0 0
      %3606 = vmatpush1.bf16.msra.mxu0 %v3601
      %3607 = vmatprep.subr.bf16.mxu0 0
      %3608 = vmatpush1.bf16.msra.mxu0 0
      %3609 = vmatprep.subr.bf16.mxu0 0
      %3610 = vmatpush1.bf16.msra.mxu0 0
      %3611 = vmatprep.subr.bf16.mxu0 0
      %3612 = vmatpush1.bf16.msra.mxu0 0
      %3613 = vmatprep.subr.bf16.mxu0 0
      %3614 = vmatpush1.bf16.msra.mxu0 0
      %3615 = vmatprep.subr.bf16.mxu0 0
      %3616 = vmatpush1.bf16.msra.mxu0 0
      %3617 = vmatprep.subr.bf16.mxu0 0
      %3618 = vmatpush1.bf16.msra.mxu0 0
      %3619 = vmatprep.subr.bf16.mxu0 0
      %3620 = vmatpush1.bf16.msra.mxu0 0
      %3621 = vmatprep.subr.bf16.mxu0 0
      %3622 = vmatpush1.bf16.msra.mxu0 0
      %3623 = vmatprep.subr.bf16.mxu0 0
      %3624 = vmatpush1.bf16.msra.mxu0 0
      %3625 = vmatprep.subr.bf16.mxu0 0
      %3626 = vmatpush1.bf16.msra.mxu0 0
      %3627 = vmatprep.subr.bf16.mxu0 0
      %3628 = vmatpush1.bf16.msra.mxu0 0
      %3629 = vmatprep.subr.bf16.mxu0 0
      %3630 = vmatpush1.bf16.msra.mxu0 0
      %3631 = vmatprep.subr.bf16.mxu0 0
      %3632 = vmatpush1.bf16.msra.mxu0 0
      %3633 = vmatprep.subr.bf16.mxu0 0
      %3634 = vmatpush1.bf16.msra.mxu0 0
      %3635 = vmatprep.mubr.bf16.mxu0 0
      %3636 = vmatmul.mubr.bf16.gmra.mrb[0].mxu0 %v1999
      %v3637 = vpop.f32.mrb[0].mxu0
      %v3638 = vadd.f32 0.0, %v3637
      %v3639 = vpop.f32.mrb[0].mxu0
      %v3640 = vpop.f32.mrb[0].mxu0
      %v3641 = vadd.f32 0.0, %v3640
      %v3642 = vpop.f32.mrb[0].mxu0
      %3643 = vmatprep.mubr.bf16.mxu0 0
      %3644 = vmatmul.mubr.bf16.gmra.mrb[0].mxu0 %v2002
      %v3645 = vpop.f32.mrb[0].mxu0
      %v3646 = vadd.f32 0.0, %v3645
      %v3647 = vpop.f32.mrb[0].mxu0
      %v3648 = vpop.f32.mrb[0].mxu0
      %v3649 = vadd.f32 0.0, %v3648
      %v3650 = vpop.f32.mrb[0].mxu0
      %3651 = vmatprep.mubr.bf16.mxu0 0
      %3652 = vmatmul.mubr.bf16.gmra.mrb[0].mxu0 %v2005
      %v3653 = vpop.f32.mrb[0].mxu0
      %v3654 = vadd.f32 0.0, %v3653
      %v3655 = vpop.f32.mrb[0].mxu0
      %v3656 = vpop.f32.mrb[0].mxu0
      %v3657 = vadd.f32 0.0, %v3656
      %v3658 = vpop.f32.mrb[0].mxu0
      %3659 = vmatprep.mubr.bf16.mxu0 0
      %3660 = vmatmul.mubr.bf16.gmra.mrb[0].mxu0 %v2008
      %v3661 = vpop.f32.mrb[0].mxu0
      %v3662 = vadd.f32 0.0, %v3661
      %v3663 = vpop.f32.mrb[0].mxu0
      %v3664 = vpop.f32.mrb[0].mxu0
      %v3665 = vadd.f32 0.0, %v3664
      %v3666 = vpop.f32.mrb[0].mxu0
      %3667 = vmatprep.mubr.bf16.mxu0 0
      %3668 = vmatmul.mubr.bf16.gmra.mrb[0].mxu0 %v2011
      %v3669 = vpop.f32.mrb[0].mxu0
      %v3670 = vadd.f32 0.0, %v3669
      %v3671 = vpop.f32.mrb[0].mxu0
      %v3672 = vpop.f32.mrb[0].mxu0
      %v3673 = vadd.f32 0.0, %v3672
      %v3674 = vpop.f32.mrb[0].mxu0
      %3675 = vmatprep.mubr.bf16.mxu0 0
      %3676 = vmatmul.mubr.bf16.gmra.mrb[0].mxu0 %v2014
      %v3677 = vpop.f32.mrb[0].mxu0
      %v3678 = vadd.f32 0.0, %v3677
      %v3679 = vpop.f32.mrb[0].mxu0
      %v3680 = vpop.f32.mrb[0].mxu0
      %v3681 = vadd.f32 0.0, %v3680
      %v3682 = vpop.f32.mrb[0].mxu0
      %3683 = vmatprep.mubr.bf16.mxu0 0
      %3684 = vmatmul.mubr.bf16.gmra.mrb[0].mxu0 %v2017
      %v3685 = vpop.f32.mrb[0].mxu0
      %v3686 = vadd.f32 0.0, %v3685
      %v3687 = vpop.f32.mrb[0].mxu0
      %v3688 = vpop.f32.mrb[0].mxu0
      %v3689 = vadd.f32 0.0, %v3688
      %v3690 = vpop.f32.mrb[0].mxu0
      %3691 = vmatprep.mubr.bf16.mxu0 0
      %3692 = vmatmul.mubr.bf16.gmra.mrb[0].mxu0 %v2020
      %v3693 = vpop.f32.mrb[0].mxu0
      %v3694 = vadd.f32 0.0, %v3693
      %v3695 = vpop.f32.mrb[0].mxu0
      %v3696 = vpop.f32.mrb[0].mxu0
      %v3697 = vadd.f32 0.0, %v3696
      %v3698 = vpop.f32.mrb[0].mxu0
      %3699 = vmatprep.mubr.bf16.mxu0 0
      %3700 = vmatmul.mubr.bf16.gmra.mrb[0].mxu0 %v2910
      %v3701 = vpop.f32.mrb[0].mxu0
      %v3702 = vadd.f32 0.0, %v3701
      %v3703 = vpop.f32.mrb[0].mxu0
      %v3704 = vpop.f32.mrb[0].mxu0
      %v3705 = vadd.f32 0.0, %v3704
      %v3706 = vpop.f32.mrb[0].mxu0
      %3707 = vmatprep.mubr.bf16.mxu0 0
      %3708 = vmatmul.mubr.bf16.gmra.mrb[0].mxu0 %v2913
      %v3709 = vpop.f32.mrb[0].mxu0
      %v3710 = vadd.f32 0.0, %v3709
      %v3711 = vpop.f32.mrb[0].mxu0
      %v3712 = vpop.f32.mrb[0].mxu0
      %v3713 = vadd.f32 0.0, %v3712
      %v3714 = vpop.f32.mrb[0].mxu0
      %3715 = vmatprep.mubr.bf16.mxu0 0
      %3716 = vmatmul.mubr.bf16.gmra.mrb[0].mxu0 %v2916
      %v3717 = vpop.f32.mrb[0].mxu0
      %v3718 = vadd.f32 0.0, %v3717
      %v3719 = vpop.f32.mrb[0].mxu0
      %v3720 = vpop.f32.mrb[0].mxu0
      %v3721 = vadd.f32 0.0, %v3720
      %v3722 = vpop.f32.mrb[0].mxu0
      %3723 = vmatprep.mubr.bf16.mxu0 0
      %3724 = vmatmul.mubr.bf16.gmra.mrb[0].mxu0 %v2919
      %v3725 = vpop.f32.mrb[0].mxu0
      %v3726 = vadd.f32 0.0, %v3725
      %v3727 = vpop.f32.mrb[0].mxu0
      %v3728 = vpop.f32.mrb[0].mxu0
      %v3729 = vadd.f32 0.0, %v3728
      %v3730 = vpop.f32.mrb[0].mxu0
      %3731 = vmatprep.mubr.bf16.mxu0 0
      %3732 = vmatmul.mubr.bf16.gmra.mrb[0].mxu0 %v3589
      %v3733 = vpop.f32.mrb[0].mxu0
      %v3734 = vadd.f32 0.0, %v3733
      %v3735 = vpop.f32.mrb[0].mxu0
      %v3736 = vpop.f32.mrb[0].mxu0
      %v3737 = vadd.f32 0.0, %v3736
      %v3738 = vpop.f32.mrb[0].mxu0
      %3739 = vmatprep.mubr.bf16.mxu0 0
      %3740 = vmatmul.mubr.bf16.gmra.mrb[0].mxu0 %v3592
      %v3741 = vpop.f32.mrb[0].mxu0
      %v3742 = vadd.f32 0.0, %v3741
      %v3743 = vpop.f32.mrb[0].mxu0
      %v3744 = vpop.f32.mrb[0].mxu0
      %v3745 = vadd.f32 0.0, %v3744
      %v3746 = vpop.f32.mrb[0].mxu0
      %3747 = vmatprep.mubr.bf16.mxu0 0
      %3748 = vmatmul.mubr.bf16.gmra.mrb[0].mxu0 %v3595
      %v3749 = vpop.f32.mrb[0].mxu0
      %v3750 = vadd.f32 0.0, %v3749
      %v3751 = vpop.f32.mrb[0].mxu0
      %v3752 = vpop.f32.mrb[0].mxu0
      %v3753 = vadd.f32 0.0, %v3752
      %v3754 = vpop.f32.mrb[0].mxu0
      %3755 = vmatprep.mubr.bf16.mxu0 0
      %3756 = vmatmul.mubr.bf16.gmra.mrb[0].mxu0 %v3598
      %v3757 = vpop.f32.mrb[0].mxu0
      %v3758 = vadd.f32 0.0, %v3757
      %v3759 = vpop.f32.mrb[0].mxu0
      %v3760 = vpop.f32.mrb[0].mxu0
      %v3761 = vadd.f32 0.0, %v3760
      %v3762 = vpop.f32.mrb[0].mxu0
      %3763 = vdwg.mxu0
      %v3764 = vadd.f32 %v3537, %v3638
      %v3765 = vadd.f32 %v3538, %v3641
      %v3766 = vadd.f32 %v3539, %v3646
      %v3767 = vadd.f32 %v3540, %v3649
      %v3768 = vadd.f32 %v3541, %v3654
      %v3769 = vadd.f32 %v3542, %v3657
      %v3770 = vadd.f32 %v3543, %v3662
      %v3771 = vadd.f32 %v3544, %v3665
      %v3772 = vadd.f32 %v3545, %v3670
      %v3773 = vadd.f32 %v3546, %v3673
      %v3774 = vadd.f32 %v3547, %v3678
      %v3775 = vadd.f32 %v3548, %v3681
      %v3776 = vadd.f32 %v3549, %v3686
      %v3777 = vadd.f32 %v3550, %v3689
      %v3778 = vadd.f32 %v3551, %v3694
      %v3779 = vadd.f32 %v3552, %v3697
      %v3780 = vadd.f32 %v3553, %v3702
      %v3781 = vadd.f32 %v3554, %v3705
      %v3782 = vadd.f32 %v3555, %v3710
      %v3783 = vadd.f32 %v3556, %v3713
      %v3784 = vadd.f32 %v3557, %v3718
      %v3785 = vadd.f32 %v3558, %v3721
      %v3786 = vadd.f32 %v3559, %v3726
      %v3787 = vadd.f32 %v3560, %v3729
      %v3788 = vadd.f32 %v3561, %v3734
      %v3789 = vadd.f32 %v3562, %v3737
      %v3790 = vadd.f32 %v3563, %v3742
      %v3791 = vadd.f32 %v3564, %v3745
      %v3792 = vadd.f32 %v3565, %v3750
      %v3793 = vadd.f32 %v3566, %v3753
      %v3794 = vadd.f32 %v3567, %v3758
      %v3795 = vadd.f32 %v3568, %v3761
      %s3796 = scalar_lea.vmem %s3, 96
      %v3797 = vld [vmem:[%s3796] sm:$0xf]
      %v3798 = vld [vmem:[%s3796 + $0x4] sm:$0xf]
      %v3799 = vld [vmem:[%s3796 + $0x8] sm:$0xf]
      %v3800 = vpack.c.b16 %v2188, %v3574
      %v3804 = vunpack.c.l.b16 %v3797
      %v3805 = vunpack.c.l.b16 %v3798
      %v3806 = vunpack.c.l.b16 %v3799
      %v3807 = vpack.c.b16 %v3805, %v3804
      %v3808 = vpack.c.b16 %v3806, %v3806
      %v3811 = vsel %vm1973, %v3800, 0
      %v3814 = vsel %vm2022, %v3808, 0
      %3816 = vmatprep.subr.bf16.mxu0 0
      %3817 = vmatpush1.bf16.msra.mxu0 %v3807
      %3818 = vmatprep.subr.bf16.mxu0 0
      %3819 = vmatpush1.bf16.msra.mxu0 %v3814
      %3820 = vmatprep.subr.bf16.mxu0 0
      %3821 = vmatpush1.bf16.msra.mxu0 0
      %3822 = vmatprep.subr.bf16.mxu0 0
      %3823 = vmatpush1.bf16.msra.mxu0 0
      %3824 = vmatprep.subr.bf16.mxu0 0
      %3825 = vmatpush1.bf16.msra.mxu0 0
      %3826 = vmatprep.subr.bf16.mxu0 0
      %3827 = vmatpush1.bf16.msra.mxu0 0
      %3828 = vmatprep.subr.bf16.mxu0 0
      %3829 = vmatpush1.bf16.msra.mxu0 0
      %3830 = vmatprep.subr.bf16.mxu0 0
      %3831 = vmatpush1.bf16.msra.mxu0 0
      %3832 = vmatprep.subr.bf16.mxu0 0
      %3833 = vmatpush1.bf16.msra.mxu0 0
      %3834 = vmatprep.subr.bf16.mxu0 0
      %3835 = vmatpush1.bf16.msra.mxu0 0
      %3836 = vmatprep.subr.bf16.mxu0 0
      %3837 = vmatpush1.bf16.msra.mxu0 0
      %3838 = vmatprep.subr.bf16.mxu0 0
      %3839 = vmatpush1.bf16.msra.mxu0 0
      %3840 = vmatprep.subr.bf16.mxu0 0
      %3841 = vmatpush1.bf16.msra.mxu0 0
      %3842 = vmatprep.subr.bf16.mxu0 0
      %3843 = vmatpush1.bf16.msra.mxu0 0
      %3844 = vmatprep.subr.bf16.mxu0 0
      %3845 = vmatpush1.bf16.msra.mxu0 0
      %3846 = vmatprep.subr.bf16.mxu0 0
      %3847 = vmatpush1.bf16.msra.mxu0 0
      %3848 = vmatprep.mubr.bf16.mxu0 0
      %3849 = vmatmul.mubr.bf16.gmra.mrb[0].mxu0 %v2242
      %v3850 = vpop.f32.mrb[0].mxu0
      %v3851 = vadd.f32 0.0, %v3850
      %v3852 = vpop.f32.mrb[0].mxu0
      %v3853 = vpop.f32.mrb[0].mxu0
      %v3854 = vadd.f32 0.0, %v3853
      %v3855 = vpop.f32.mrb[0].mxu0
      %3856 = vmatprep.mubr.bf16.mxu0 0
      %3857 = vmatmul.mubr.bf16.gmra.mrb[0].mxu0 %v2245
      %v3858 = vpop.f32.mrb[0].mxu0
      %v3859 = vadd.f32 0.0, %v3858
      %v3860 = vpop.f32.mrb[0].mxu0
      %v3861 = vpop.f32.mrb[0].mxu0
      %v3862 = vadd.f32 0.0, %v3861
      %v3863 = vpop.f32.mrb[0].mxu0
      %3864 = vmatprep.mubr.bf16.mxu0 0
      %3865 = vmatmul.mubr.bf16.gmra.mrb[0].mxu0 %v2248
      %v3866 = vpop.f32.mrb[0].mxu0
      %v3867 = vadd.f32 0.0, %v3866
      %v3868 = vpop.f32.mrb[0].mxu0
      %v3869 = vpop.f32.mrb[0].mxu0
      %v3870 = vadd.f32 0.0, %v3869
      %v3871 = vpop.f32.mrb[0].mxu0
      %3872 = vmatprep.mubr.bf16.mxu0 0
      %3873 = vmatmul.mubr.bf16.gmra.mrb[0].mxu0 %v2450
      %v3874 = vpop.f32.mrb[0].mxu0
      %v3875 = vadd.f32 0.0, %v3874
      %v3876 = vpop.f32.mrb[0].mxu0
      %v3877 = vpop.f32.mrb[0].mxu0
      %v3878 = vadd.f32 0.0, %v3877
      %v3879 = vpop.f32.mrb[0].mxu0
      %3880 = vmatprep.mubr.bf16.mxu0 0
      %3881 = vmatmul.mubr.bf16.gmra.mrb[0].mxu0 %v2254
      %v3882 = vpop.f32.mrb[0].mxu0
      %v3883 = vadd.f32 0.0, %v3882
      %v3884 = vpop.f32.mrb[0].mxu0
      %v3885 = vpop.f32.mrb[0].mxu0
      %v3886 = vadd.f32 0.0, %v3885
      %v3887 = vpop.f32.mrb[0].mxu0
      %3888 = vmatprep.mubr.bf16.mxu0 0
      %3889 = vmatmul.mubr.bf16.gmra.mrb[0].mxu0 %v2257
      %v3890 = vpop.f32.mrb[0].mxu0
      %v3891 = vadd.f32 0.0, %v3890
      %v3892 = vpop.f32.mrb[0].mxu0
      %v3893 = vpop.f32.mrb[0].mxu0
      %v3894 = vadd.f32 0.0, %v3893
      %v3895 = vpop.f32.mrb[0].mxu0
      %3896 = vmatprep.mubr.bf16.mxu0 0
      %3897 = vmatmul.mubr.bf16.gmra.mrb[0].mxu0 %v2260
      %v3898 = vpop.f32.mrb[0].mxu0
      %v3899 = vadd.f32 0.0, %v3898
      %v3900 = vpop.f32.mrb[0].mxu0
      %v3901 = vpop.f32.mrb[0].mxu0
      %v3902 = vadd.f32 0.0, %v3901
      %v3903 = vpop.f32.mrb[0].mxu0
      %3904 = vmatprep.mubr.bf16.mxu0 0
      %3905 = vmatmul.mubr.bf16.gmra.mrb[0].mxu0 %v2453
      %v3906 = vpop.f32.mrb[0].mxu0
      %v3907 = vadd.f32 0.0, %v3906
      %v3908 = vpop.f32.mrb[0].mxu0
      %v3909 = vpop.f32.mrb[0].mxu0
      %v3910 = vadd.f32 0.0, %v3909
      %v3911 = vpop.f32.mrb[0].mxu0
      %3912 = vmatprep.mubr.bf16.mxu0 0
      %3913 = vmatmul.mubr.bf16.gmra.mrb[0].mxu0 %v2686
      %v3914 = vpop.f32.mrb[0].mxu0
      %v3915 = vadd.f32 0.0, %v3914
      %v3916 = vpop.f32.mrb[0].mxu0
      %v3917 = vpop.f32.mrb[0].mxu0
      %v3918 = vadd.f32 0.0, %v3917
      %v3919 = vpop.f32.mrb[0].mxu0
      %3920 = vmatprep.mubr.bf16.mxu0 0
      %3921 = vmatmul.mubr.bf16.gmra.mrb[0].mxu0 %v2689
      %v3922 = vpop.f32.mrb[0].mxu0
      %v3923 = vadd.f32 0.0, %v3922
      %v3924 = vpop.f32.mrb[0].mxu0
      %v3925 = vpop.f32.mrb[0].mxu0
      %v3926 = vadd.f32 0.0, %v3925
      %v3927 = vpop.f32.mrb[0].mxu0
      %3928 = vmatprep.mubr.bf16.mxu0 0
      %3929 = vmatmul.mubr.bf16.gmra.mrb[0].mxu0 %v2692
      %v3930 = vpop.f32.mrb[0].mxu0
      %v3931 = vadd.f32 0.0, %v3930
      %v3932 = vpop.f32.mrb[0].mxu0
      %v3933 = vpop.f32.mrb[0].mxu0
      %v3934 = vadd.f32 0.0, %v3933
      %v3935 = vpop.f32.mrb[0].mxu0
      %3936 = vmatprep.mubr.bf16.mxu0 0
      %3937 = vmatmul.mubr.bf16.gmra.mrb[0].mxu0 %v3132
      %v3938 = vpop.f32.mrb[0].mxu0
      %v3939 = vadd.f32 0.0, %v3938
      %v3940 = vpop.f32.mrb[0].mxu0
      %v3941 = vpop.f32.mrb[0].mxu0
      %v3942 = vadd.f32 0.0, %v3941
      %v3943 = vpop.f32.mrb[0].mxu0
      %3944 = vmatprep.mubr.bf16.mxu0 0
      %3945 = vmatmul.mubr.bf16.gmra.mrb[0].mxu0 %v3365
      %v3946 = vpop.f32.mrb[0].mxu0
      %v3947 = vadd.f32 0.0, %v3946
      %v3948 = vpop.f32.mrb[0].mxu0
      %v3949 = vpop.f32.mrb[0].mxu0
      %v3950 = vadd.f32 0.0, %v3949
      %v3951 = vpop.f32.mrb[0].mxu0
      %3952 = vmatprep.mubr.bf16.mxu0 0
      %3953 = vmatmul.mubr.bf16.gmra.mrb[0].mxu0 %v3368
      %v3954 = vpop.f32.mrb[0].mxu0
      %v3955 = vadd.f32 0.0, %v3954
      %v3956 = vpop.f32.mrb[0].mxu0
      %v3957 = vpop.f32.mrb[0].mxu0
      %v3958 = vadd.f32 0.0, %v3957
      %v3959 = vpop.f32.mrb[0].mxu0
      %3960 = vmatprep.mubr.bf16.mxu0 0
      %3961 = vmatmul.mubr.bf16.gmra.mrb[0].mxu0 %v3371
      %v3962 = vpop.f32.mrb[0].mxu0
      %v3963 = vadd.f32 0.0, %v3962
      %v3964 = vpop.f32.mrb[0].mxu0
      %v3965 = vpop.f32.mrb[0].mxu0
      %v3966 = vadd.f32 0.0, %v3965
      %v3967 = vpop.f32.mrb[0].mxu0
      %3968 = vmatprep.mubr.bf16.mxu0 0
      %3969 = vmatmul.mubr.bf16.gmra.mrb[0].mxu0 %v3811
      %v3970 = vpop.f32.mrb[0].mxu0
      %v3971 = vadd.f32 0.0, %v3970
      %v3972 = vpop.f32.mrb[0].mxu0
      %v3973 = vpop.f32.mrb[0].mxu0
      %v3974 = vadd.f32 0.0, %v3973
      %v3975 = vpop.f32.mrb[0].mxu0
      %3976 = vdwg.mxu0
      %v3977 = vadd.f32 %v3764, %v3851
      %v3978 = vadd.f32 %v3765, %v3854
      %v3979 = vadd.f32 %v3766, %v3859
      %v3980 = vadd.f32 %v3767, %v3862
      %v3981 = vadd.f32 %v3768, %v3867
      %v3982 = vadd.f32 %v3769, %v3870
      %v3983 = vadd.f32 %v3770, %v3875
      %v3984 = vadd.f32 %v3771, %v3878
      %v3985 = vadd.f32 %v3772, %v3883
      %v3986 = vadd.f32 %v3773, %v3886
      %v3987 = vadd.f32 %v3774, %v3891
      %v3988 = vadd.f32 %v3775, %v3894
      %v3989 = vadd.f32 %v3776, %v3899
      %v3990 = vadd.f32 %v3777, %v3902
      %v3991 = vadd.f32 %v3778, %v3907
      %v3992 = vadd.f32 %v3779, %v3910
      %v3993 = vadd.f32 %v3780, %v3915
      %v3994 = vadd.f32 %v3781, %v3918
      %v3995 = vadd.f32 %v3782, %v3923
      %v3996 = vadd.f32 %v3783, %v3926
      %v3997 = vadd.f32 %v3784, %v3931
      %v3998 = vadd.f32 %v3785, %v3934
      %v3999 = vadd.f32 %v3786, %v3939
      %v4000 = vadd.f32 %v3787, %v3942
      %v4001 = vadd.f32 %v3788, %v3947
      %v4002 = vadd.f32 %v3789, %v3950
      %v4003 = vadd.f32 %v3790, %v3955
      %v4004 = vadd.f32 %v3791, %v3958
      %v4005 = vadd.f32 %v3792, %v3963
      %v4006 = vadd.f32 %v3793, %v3966
      %v4007 = vadd.f32 %v3794, %v3971
      %v4008 = vadd.f32 %v3795, %v3974
      %v4009 = vsel %vm1728, %v3977, 0.0
      %v4010 = vsel %vm1728, %v3978, 0.0
      %v4011 = vadd.f32 %v4009, %v4010
      %v4012 = vsel %vm1728, %v3979, 0.0
      %v4013 = vadd.f32 %v4011, %v4012
      %v4014 = vsel %vm1728, %v3980, 0.0
      %v4015 = vadd.f32 %v4013, %v4014
      %v4016 = vsel %vm1728, %v3981, 0.0
      %v4017 = vadd.f32 %v4015, %v4016
      %v4018 = vsel %vm1728, %v3982, 0.0
      %v4019 = vadd.f32 %v4017, %v4018
      %v4020 = vsel %vm1728, %v3983, 0.0
      %v4021 = vadd.f32 %v4019, %v4020
      %v4022 = vsel %vm1728, %v3984, 0.0
      %v4023 = vadd.f32 %v4021, %v4022
      %v4024 = vsel %vm1728, %v3985, 0.0
      %v4025 = vadd.f32 %v4023, %v4024
      %v4026 = vsel %vm1728, %v3986, 0.0
      %v4027 = vadd.f32 %v4025, %v4026
      %v4028 = vsel %vm1728, %v3987, 0.0
      %v4029 = vadd.f32 %v4027, %v4028
      %v4030 = vsel %vm1728, %v3988, 0.0
      %v4031 = vadd.f32 %v4029, %v4030
      %v4032 = vsel %vm1728, %v3989, 0.0
      %v4033 = vadd.f32 %v4031, %v4032
      %v4034 = vsel %vm1728, %v3990, 0.0
      %v4035 = vadd.f32 %v4033, %v4034
      %v4036 = vsel %vm1728, %v3991, 0.0
      %v4037 = vadd.f32 %v4035, %v4036
      %v4038 = vsel %vm1728, %v3992, 0.0
      %v4039 = vadd.f32 %v4037, %v4038
      %v4040 = vsel %vm1728, %v3993, 0.0
      %v4041 = vadd.f32 %v4039, %v4040
      %v4042 = vsel %vm1728, %v3994, 0.0
      %v4043 = vadd.f32 %v4041, %v4042
      %v4044 = vsel %vm1728, %v3995, 0.0
      %v4045 = vadd.f32 %v4043, %v4044
      %v4046 = vsel %vm1728, %v3996, 0.0
      %v4047 = vadd.f32 %v4045, %v4046
      %v4048 = vsel %vm1728, %v3997, 0.0
      %v4049 = vadd.f32 %v4047, %v4048
      %v4050 = vsel %vm1728, %v3998, 0.0
      %v4051 = vadd.f32 %v4049, %v4050
      %v4052 = vsel %vm1728, %v3999, 0.0
      %v4053 = vadd.f32 %v4051, %v4052
      %v4054 = vsel %vm1728, %v4000, 0.0
      %v4055 = vadd.f32 %v4053, %v4054
      %v4056 = vsel %vm1728, %v4001, 0.0
      %v4057 = vadd.f32 %v4055, %v4056
      %v4058 = vsel %vm1728, %v4002, 0.0
      %v4059 = vadd.f32 %v4057, %v4058
      %v4060 = vsel %vm1728, %v4003, 0.0
      %v4061 = vadd.f32 %v4059, %v4060
      %v4062 = vsel %vm1728, %v4004, 0.0
      %v4063 = vadd.f32 %v4061, %v4062
      %v4064 = vsel %vm1728, %v4005, 0.0
      %v4065 = vadd.f32 %v4063, %v4064
      %v4066 = vsel %vm1728, %v4006, 0.0
      %v4067 = vadd.f32 %v4065, %v4066
      %v4068 = vsel %vm1728, %v4007, 0.0
      %v4069 = vadd.f32 %v4067, %v4068
      %v4070 = vsel %vm1728, %v4008, 0.0
      %v4071 = vadd.f32 %v4069, %v4070
      %4072 = vst.msk [vmem:[%s506] sm:$0xff] %vm1728, %v4071
      %v4073 = vmul.f32 %v3977, %v3977
      %v4074 = vmul.f32 %v3978, %v3978
      %v4075 = vmul.f32 %v3979, %v3979
      %v4076 = vmul.f32 %v3980, %v3980
      %v4077 = vmul.f32 %v3981, %v3981
      %v4078 = vmul.f32 %v3982, %v3982
      %v4079 = vmul.f32 %v3983, %v3983
      %v4080 = vmul.f32 %v3984, %v3984
      %v4081 = vmul.f32 %v3985, %v3985
      %v4082 = vmul.f32 %v3986, %v3986
      %v4083 = vmul.f32 %v3987, %v3987
      %v4084 = vmul.f32 %v3988, %v3988
      %v4085 = vmul.f32 %v3989, %v3989
      %v4086 = vmul.f32 %v3990, %v3990
      %v4087 = vmul.f32 %v3991, %v3991
      %v4088 = vmul.f32 %v3992, %v3992
      %v4089 = vmul.f32 %v3993, %v3993
      %v4090 = vmul.f32 %v3994, %v3994
      %v4091 = vmul.f32 %v3995, %v3995
      %v4092 = vmul.f32 %v3996, %v3996
      %v4093 = vmul.f32 %v3997, %v3997
      %v4094 = vmul.f32 %v3998, %v3998
      %v4095 = vmul.f32 %v3999, %v3999
      %v4096 = vmul.f32 %v4000, %v4000
      %v4097 = vmul.f32 %v4001, %v4001
      %v4098 = vmul.f32 %v4002, %v4002
      %v4099 = vmul.f32 %v4003, %v4003
      %v4100 = vmul.f32 %v4004, %v4004
      %v4101 = vmul.f32 %v4005, %v4005
      %v4102 = vmul.f32 %v4006, %v4006
      %v4103 = vmul.f32 %v4007, %v4007
      %v4104 = vmul.f32 %v4008, %v4008
      %v4105 = vsel %vm1728, %v4073, 0.0
      %v4106 = vsel %vm1728, %v4074, 0.0
      %v4107 = vadd.f32 %v4105, %v4106
      %v4108 = vsel %vm1728, %v4075, 0.0
      %v4109 = vadd.f32 %v4107, %v4108
      %v4110 = vsel %vm1728, %v4076, 0.0
      %v4111 = vadd.f32 %v4109, %v4110
      %v4112 = vsel %vm1728, %v4077, 0.0
      %v4113 = vadd.f32 %v4111, %v4112
      %v4114 = vsel %vm1728, %v4078, 0.0
      %v4115 = vadd.f32 %v4113, %v4114
      %v4116 = vsel %vm1728, %v4079, 0.0
      %v4117 = vadd.f32 %v4115, %v4116
      %v4118 = vsel %vm1728, %v4080, 0.0
      %v4119 = vadd.f32 %v4117, %v4118
      %v4120 = vsel %vm1728, %v4081, 0.0
      %v4121 = vadd.f32 %v4119, %v4120
      %v4122 = vsel %vm1728, %v4082, 0.0
      %v4123 = vadd.f32 %v4121, %v4122
      %v4124 = vsel %vm1728, %v4083, 0.0
      %v4125 = vadd.f32 %v4123, %v4124
      %v4126 = vsel %vm1728, %v4084, 0.0
      %v4127 = vadd.f32 %v4125, %v4126
      %v4128 = vsel %vm1728, %v4085, 0.0
      %v4129 = vadd.f32 %v4127, %v4128
      %v4130 = vsel %vm1728, %v4086, 0.0
      %v4131 = vadd.f32 %v4129, %v4130
      %v4132 = vsel %vm1728, %v4087, 0.0
      %v4133 = vadd.f32 %v4131, %v4132
      %v4134 = vsel %vm1728, %v4088, 0.0
      %v4135 = vadd.f32 %v4133, %v4134
      %v4136 = vsel %vm1728, %v4089, 0.0
      %v4137 = vadd.f32 %v4135, %v4136
      %v4138 = vsel %vm1728, %v4090, 0.0
      %v4139 = vadd.f32 %v4137, %v4138
      %v4140 = vsel %vm1728, %v4091, 0.0
      %v4141 = vadd.f32 %v4139, %v4140
      %v4142 = vsel %vm1728, %v4092, 0.0
      %v4143 = vadd.f32 %v4141, %v4142
      %v4144 = vsel %vm1728, %v4093, 0.0
      %v4145 = vadd.f32 %v4143, %v4144
      %v4146 = vsel %vm1728, %v4094, 0.0
      %v4147 = vadd.f32 %v4145, %v4146
      %v4148 = vsel %vm1728, %v4095, 0.0
      %v4149 = vadd.f32 %v4147, %v4148
      %v4150 = vsel %vm1728, %v4096, 0.0
      %v4151 = vadd.f32 %v4149, %v4150
      %v4152 = vsel %vm1728, %v4097, 0.0
      %v4153 = vadd.f32 %v4151, %v4152
      %v4154 = vsel %vm1728, %v4098, 0.0
      %v4155 = vadd.f32 %v4153, %v4154
      %v4156 = vsel %vm1728, %v4099, 0.0
      %v4157 = vadd.f32 %v4155, %v4156
      %v4158 = vsel %vm1728, %v4100, 0.0
      %v4159 = vadd.f32 %v4157, %v4158
      %v4160 = vsel %vm1728, %v4101, 0.0
      %v4161 = vadd.f32 %v4159, %v4160
      %v4162 = vsel %vm1728, %v4102, 0.0
      %v4163 = vadd.f32 %v4161, %v4162
      %v4164 = vsel %vm1728, %v4103, 0.0
      %v4165 = vadd.f32 %v4163, %v4164
      %v4166 = vsel %vm1728, %v4104, 0.0
      %v4167 = vadd.f32 %v4165, %v4166
      %4168 = vst.msk [vmem:[%s514] sm:$0xff] %vm1728, %v4167
      %v4169 = vpack.c.bf16 %v3977, %v3977
      %v4170 = vpack.c.bf16 %v3978, %v3978
      %v4171 = vpack.c.bf16 %v3979, %v3979
      %v4172 = vpack.c.bf16 %v3980, %v3980
      %v4173 = vpack.c.bf16 %v3981, %v3981
      %v4174 = vpack.c.bf16 %v3982, %v3982
      %v4175 = vpack.c.bf16 %v3983, %v3983
      %v4176 = vpack.c.bf16 %v3984, %v3984
      %v4177 = vpack.c.bf16 %v3985, %v3985
      %v4178 = vpack.c.bf16 %v3986, %v3986
      %v4179 = vpack.c.bf16 %v3987, %v3987
      %v4180 = vpack.c.bf16 %v3988, %v3988
      %v4181 = vpack.c.bf16 %v3989, %v3989
      %v4182 = vpack.c.bf16 %v3990, %v3990
      %v4183 = vpack.c.bf16 %v3991, %v3991
      %v4184 = vpack.c.bf16 %v3992, %v3992
      %v4185 = vpack.c.bf16 %v3993, %v3993
      %v4186 = vpack.c.bf16 %v3994, %v3994
      %v4187 = vpack.c.bf16 %v3995, %v3995
      %v4188 = vpack.c.bf16 %v3996, %v3996
      %v4189 = vpack.c.bf16 %v3997, %v3997
      %v4190 = vpack.c.bf16 %v3998, %v3998
      %v4191 = vpack.c.bf16 %v3999, %v3999
      %v4192 = vpack.c.bf16 %v4000, %v4000
      %v4193 = vpack.c.bf16 %v4001, %v4001
      %v4194 = vpack.c.bf16 %v4002, %v4002
      %v4195 = vpack.c.bf16 %v4003, %v4003
      %v4196 = vpack.c.bf16 %v4004, %v4004
      %v4197 = vpack.c.bf16 %v4005, %v4005
      %v4198 = vpack.c.bf16 %v4006, %v4006
      %v4199 = vpack.c.bf16 %v4007, %v4007
      %v4200 = vpack.c.bf16 %v4008, %v4008
      %vm4201 = vcmask 60416
      %4202 = vst.msk [vmem:[%s497] sm:$0xf] %vm4201, %v4169
      %4203 = vst.msk [vmem:[%s497 + $0x4] sm:$0xf] %vm4201, %v4170
      %4204 = vst.msk [vmem:[%s497 + $0x8] sm:$0xf] %vm4201, %v4171
      %4205 = vst.msk [vmem:[%s497 + $0xc] sm:$0xf] %vm4201, %v4172
      %4206 = vst.msk [vmem:[%s497 + $0x10] sm:$0xf] %vm4201, %v4173
      %4207 = vst.msk [vmem:[%s497 + $0x14] sm:$0xf] %vm4201, %v4174
      %4208 = vst.msk [vmem:[%s497 + $0x18] sm:$0xf] %vm4201, %v4175
      %4209 = vst.msk [vmem:[%s497 + $0x1c] sm:$0xf] %vm4201, %v4176
      %4210 = vst.msk [vmem:[%s497 + $0x20] sm:$0xf] %vm4201, %v4177
      %4211 = vst.msk [vmem:[%s497 + $0x24] sm:$0xf] %vm4201, %v4178
      %4212 = vst.msk [vmem:[%s497 + $0x28] sm:$0xf] %vm4201, %v4179
      %4213 = vst.msk [vmem:[%s497 + $0x2c] sm:$0xf] %vm4201, %v4180
      %4214 = vst.msk [vmem:[%s497 + $0x30] sm:$0xf] %vm4201, %v4181
      %4215 = vst.msk [vmem:[%s497 + $0x34] sm:$0xf] %vm4201, %v4182
      %4216 = vst.msk [vmem:[%s497 + $0x38] sm:$0xf] %vm4201, %v4183
      %4217 = vst.msk [vmem:[%s497 + $0x3c] sm:$0xf] %vm4201, %v4184
      %4218 = vst.msk [vmem:[%s497 + $0x40] sm:$0xf] %vm4201, %v4185
      %4219 = vst.msk [vmem:[%s497 + $0x44] sm:$0xf] %vm4201, %v4186
      %4220 = vst.msk [vmem:[%s497 + $0x48] sm:$0xf] %vm4201, %v4187
      %4221 = vst.msk [vmem:[%s497 + $0x4c] sm:$0xf] %vm4201, %v4188
      %4222 = vst.msk [vmem:[%s497 + $0x50] sm:$0xf] %vm4201, %v4189
      %4223 = vst.msk [vmem:[%s497 + $0x54] sm:$0xf] %vm4201, %v4190
      %4224 = vst.msk [vmem:[%s497 + $0x58] sm:$0xf] %vm4201, %v4191
      %4225 = vst.msk [vmem:[%s497 + $0x5c] sm:$0xf] %vm4201, %v4192
      %4226 = vst.msk [vmem:[%s497 + $0x60] sm:$0xf] %vm4201, %v4193
      %4227 = vst.msk [vmem:[%s497 + $0x64] sm:$0xf] %vm4201, %v4194
      %4228 = vst.msk [vmem:[%s497 + $0x68] sm:$0xf] %vm4201, %v4195
      %4229 = vst.msk [vmem:[%s497 + $0x6c] sm:$0xf] %vm4201, %v4196
      %4230 = vst.msk [vmem:[%s497 + $0x70] sm:$0xf] %vm4201, %v4197
      %4231 = vst.msk [vmem:[%s497 + $0x74] sm:$0xf] %vm4201, %v4198
      %4232 = vst.msk [vmem:[%s497 + $0x78] sm:$0xf] %vm4201, %v4199
      %4233 = vst.msk [vmem:[%s497 + $0x7c] sm:$0xf] %vm4201, %v4200
      %s4234 = smul.u32 4, %s25
      %p4235 = scmp.lt.s32.totalorder %s24, 1
      %s4236 = scalar_select %p4235, %s24, 1
      %p4237 = scmp.lt.s32.totalorder %s4234, 7
      %s4238 = scalar_select %p4237, %s4234, 7
      %s4239 = smul.addr %s4238, 8
      %s4240 = smul.addr %s4236, 64
      %s4241 = sadd.s32 %s4239, %s4240
      %s4242 = smul.addr %s4241, 4
      %s4243 = scalar_lea.vmem %s6, %s4242
      %p4244 = scmp.lt.s32.totalorder %s24, 1
      %s4245 = scalar_select %p4244, %s24, 1
      %p4246 = scmp.lt.s32.totalorder %s25, 1
      %s4247 = scalar_select %p4246, %s25, 1
      %s4248 = smul.addr %s4245, 2
      %s4249 = sadd.s32 %s4247, %s4248
      %s4250 = smul.addr %s4249, 8
      %s4251 = scalar_lea.vmem %s7, %s4250
      %p4252 = scmp.lt.s32.totalorder %s24, 1
      %s4253 = scalar_select %p4252, %s24, 1
      %p4254 = scmp.lt.s32.totalorder %s25, 1
      %s4255 = scalar_select %p4254, %s25, 1
      %s4256 = smul.addr %s4253, 2
      %s4257 = sadd.s32 %s4255, %s4256
      %s4258 = smul.addr %s4257, 8
      %s4259 = scalar_lea.vmem %s8, %s4258
      // Predicated region
      $region45: #{conv3d_block_forward.4} parent=43 // pred_check
        %p4260 = pneg %p215
      $region46: #{conv3d_block_forward.4} parent=43 // pred_check_branch
        %4262 = sbr.rel (%p4260) target = $region48
      $region47: #{conv3d_block_forward.4} parent=43 // pred_region
        %s4263 = smul.u32 4, %s25
      $region48: #{conv3d_block_forward.4} parent=43 // pred_fallthru
        _
      // Predicated region
      $region49: #{conv3d_block_forward.4} parent=43 // pred_check
        %p4264 = pneg %p243
      $region50: #{conv3d_block_forward.4} parent=43 // pred_check_branch
        %4266 = sbr.rel (%p4264) target = $region52
      $region51: #{conv3d_block_forward.4} parent=43 // pred_region
        _
      $region52: #{conv3d_block_forward.4} parent=43 // pred_fallthru
        _
      // Predicated region
      $region53: #{conv3d_block_forward.4} parent=43 // pred_check
        %p4267 = pneg %p271
      $region54: #{conv3d_block_forward.4} parent=43 // pred_check_branch
        %4269 = sbr.rel (%p4267) target = $region56
      $region55: #{conv3d_block_forward.4} parent=43 // pred_region
        _
      $region56: #{conv3d_block_forward.4} parent=43 // pred_fallthru
        _
    $region44: #{conv3d_block_forward.4} parent=5 // pred_fallthru
      _
    %p4270 = scmp.le.s32.totalorder 2, %s15
    // Predicated region
    $region57: #{conv3d_block_forward.4} parent=5 // pred_check
      %p4271 = pneg %p4270
    $region58: #{conv3d_block_forward.4} parent=5 // pred_check_branch
      %4273 = sbr.rel (%p4271) target = $region60
    $region59: #{conv3d_block_forward.4} parent=5 // pred_region
      %s4274 = ssub.s32 %s15, 2
      // Predicated region
      $region61: #{conv3d_block_forward.4} parent=59 // pred_check
        %p4275 = pneg %p221
      $region62: #{conv3d_block_forward.4} parent=59 // pred_check_branch
        %4277 = sbr.rel (%p4275) target = $region64
      $region63: #{conv3d_block_forward.4} parent=59 // pred_region
        %s4278 = smul.u32 4, %s27
        %p4279 = scmp.lt.s32.totalorder %s26, 1
        %s4280 = scalar_select %p4279, %s26, 1
        %p4281 = scmp.lt.s32.totalorder %s4278, 7
        %s4282 = scalar_select %p4281, %s4278, 7
        %s4283 = smul.addr %s4282, 8
        %s4284 = smul.addr %s4280, 64
        %s4285 = sadd.s32 %s4283, %s4284
        %s4286 = smul.addr %s4285, 4
        %s4287 = scalar_lea.vmem %s6, %s4286
      $region64: #{conv3d_block_forward.4} parent=59 // pred_fallthru
        _
      // Predicated region
      $region65: #{conv3d_block_forward.4} parent=59 // pred_check
        %p4288 = pneg %p249
      $region66: #{conv3d_block_forward.4} parent=59 // pred_check_branch
        %4290 = sbr.rel (%p4288) target = $region68
      $region67: #{conv3d_block_forward.4} parent=59 // pred_region
        %p4291 = scmp.lt.s32.totalorder %s26, 1
        %s4292 = scalar_select %p4291, %s26, 1
        %p4293 = scmp.lt.s32.totalorder %s27, 1
        %s4294 = scalar_select %p4293, %s27, 1
        %s4295 = smul.addr %s4292, 2
        %s4296 = sadd.s32 %s4294, %s4295
        %s4297 = smul.addr %s4296, 8
        %s4298 = scalar_lea.vmem %s7, %s4297
      $region68: #{conv3d_block_forward.4} parent=59 // pred_fallthru
        _
      // Predicated region
      $region69: #{conv3d_block_forward.4} parent=59 // pred_check
        %p4299 = pneg %p277
      $region70: #{conv3d_block_forward.4} parent=59 // pred_check_branch
        %4301 = sbr.rel (%p4299) target = $region72
      $region71: #{conv3d_block_forward.4} parent=59 // pred_region
        %p4302 = scmp.lt.s32.totalorder %s26, 1
        %s4303 = scalar_select %p4302, %s26, 1
        %p4304 = scmp.lt.s32.totalorder %s27, 1
        %s4305 = scalar_select %p4304, %s27, 1
        %s4306 = smul.addr %s4303, 2
        %s4307 = sadd.s32 %s4305, %s4306
        %s4308 = smul.addr %s4307, 8
        %s4309 = scalar_lea.vmem %s8, %s4308
      $region72: #{conv3d_block_forward.4} parent=59 // pred_fallthru
        _
    $region60: #{conv3d_block_forward.4} parent=5 // pred_fallthru
      _
  $region6: #{conv3d_block_forward.4} parent=0 // loop_footer
    %s19 = sadd.s32 1, %s15
  $region7: #{conv3d_block_forward.4} parent=0 // loop_footer_branch
    %14 = sbr.rel target = $region3
  $region8: #{conv3d_block_forward.4} parent=0 // loop_exit
    _

// kernel: conv3d_block_forward.3
$region0: #{conv3d_block_forward.3}
  #allocation0 [shape = 'u32[]', space=smem, size = 0x4, offset = 0x4, fixed_abs, tag = 'smem constant byte address 0x4 - core index']
  #allocation1 [shape = 'u32[144,128]{1,0:T(1,128)}', space=vmem, size = 0x12000, scoped, tag = 'internal scratch']
  %s0 = inlined_call_operand.vmem [shape: f32[2,8,8,8,4], index: 0, kind: input, shape index: {}, may-alias: {0,1,2}]
  %s1 = inlined_call_operand.vmem [shape: f32[2,8,8,8,4], index: 1, kind: input, shape index: {}, may-alias: {0,1,2}]
  %s2 = inlined_call_operand.vmem [shape: f32[2,8,8,8,4], index: 2, kind: input, shape index: {}, may-alias: {0,1,2}]
  %s3 = inlined_call_operand.vmem [shape: bf16[3,3,12,8], index: 3, kind: input, shape index: {}]
  %s4 = inlined_call_operand.vmem [shape: f32[1,4], index: 4, kind: input, shape index: {}]
  %s5 = inlined_call_operand.vmem [shape: f32[1,4], index: 5, kind: input, shape index: {}]
  %s6 = inlined_call_operand.vmem [shape: bf16[2,8,8,8,8], index: 6, kind: output, shape index: {0}]
  %s7 = inlined_call_operand.vmem [shape: f32[2,2,8,8], index: 7, kind: output, shape index: {1}]
  %s8 = inlined_call_operand.vmem [shape: f32[2,2,8,8], index: 8, kind: output, shape index: {2}]
  %9 = xla_tuple %s6, %s7, %s8
  %s10 = sld [smem:[#allocation0]]
  $region73: #{conv3d_block_forward.3} parent=0
    _
  %s12 = ssub.s32 1, %s10
  %s13 = scalar_select 0, %s12, %s10
  loop: start=0, step=1, limit=6
  $region2: #{conv3d_block_forward.3} parent=0 // loop_pre_header
    _
  $region3: #{conv3d_block_forward.3} parent=0 // loop_header
    %s15 = sphi 0, %s19
    %p16 = scmp.ge.s32.totalorder %s15, 6
    %s22 = sphi 0, %s34
    %s23 = sphi 0, %s30
    %s24 = sphi 0, %s22
    %s25 = sphi 0, %s23
    %s26 = sphi 0, %s24
    %s27 = sphi 0, %s25
    %s39 = sphi 0, %s41
    %s42 = sphi 0, %s39
    %s43 = sphi 0, %s42
    %s59 = sphi 0, %s43
    %s75 = sphi 0, %s77
    %s78 = sphi 0, %s75
    %s79 = sphi 0, %s78
    %s95 = sphi 0, %s79
    %s111 = sphi 0, %s113
    %s114 = sphi 0, %s111
    %s115 = sphi 0, %s114
    %s131 = sphi 0, %s115
    %s135 = sphi 0, %s135
    %s137 = sphi 0, %s135
    %s138 = sphi 0, %s137
    %s152 = sphi 0, %s138
    %s156 = sphi 0, %s156
    %s158 = sphi 0, %s156
    %s159 = sphi 0, %s158
    %s173 = sphi 0, %s159
    %s177 = sphi 0, %s177
    %s179 = sphi 0, %s177
    %s180 = sphi 0, %s179
    %s194 = sphi 0, %s180
    %s202 = sphi 0, %s204
    %s205 = sphi 0, %s202
    %s206 = sphi 0, %s205
    %s222 = sphi 0, %s206
    %s230 = sphi 0, %s232
    %s233 = sphi 0, %s230
    %s234 = sphi 0, %s233
    %s250 = sphi 0, %s234
    %s258 = sphi 0, %s260
    %s261 = sphi 0, %s258
    %s262 = sphi 0, %s261
    %s278 = sphi 0, %s262
  $region4: #{conv3d_block_forward.3} parent=0 // loop_header_branch
    %18 = sbr.rel (%p16) target = $region8
  $region5: #{conv3d_block_forward.3} parent=0 // loop_body
    %s20 = ssub.s32 %s15, 1
    %s21 = ssub.s32 %s15, 2
    %s28 = sadd.s32 1, %s23
    %p29 = scmp.ge.s32.totalorder %s28, 2
    %s30 = scalar_select %p29, 0, %s28
    %s31 = sadd.s32 1, %s22
    %s32 = scalar_select %p29, %s31, %s22
    %p33 = scmp.ge.s32.totalorder %s32, 2
    %s34 = scalar_select %p33, 0, %s32
    %s35 = ssub.s32 %s22, %s34
    %s36 = ssub.s32 %s23, %s30
    %s37 = sor.u32 %s35, %s36
    %p38 = scmp.eq.s32.totalorder %s37, 0
    %s40 = sadd.s32 %s39, 1
    %s41 = scalar_select %p38, %s39, %s40
    %p44 = pneg %p38
    %p45 = scmp.eq.s32.totalorder %s15, 3
    %p46 = por %p44, %p45
    %p47 = scmp.ne.s32.totalorder %s39, %s42
    %p48 = scmp.eq.s32.totalorder %s15, 0
    %p49 = por %p47, %p48
    %p50 = scmp.ne.s32.totalorder %s39, %s42
    %p51 = scmp.eq.s32.totalorder %s20, 3
    %p52 = por %p50, %p51
    %p53 = scmp.ne.s32.totalorder %s42, %s43
    %p54 = scmp.eq.s32.totalorder %s20, 0
    %p55 = por %p53, %p54
    %p56 = scmp.ne.s32.totalorder %s42, %s43
    %p57 = scmp.eq.s32.totalorder %s21, 3
    %p58 = por %p56, %p57
    %p60 = scmp.ne.s32.totalorder %s43, %s59
    %p61 = scmp.eq.s32.totalorder %s21, 0
    %p62 = por %p60, %p61
    %s63 = smul.u32 %s23, 4
    %s64 = ssub.s32 %s63, 1
    %p65 = scmp.gt.s32.totalorder %s64, 0
    %s66 = scalar_select %p65, %s64, 0
    %s67 = smul.u32 %s30, 4
    %s68 = ssub.s32 %s67, 1
    %p69 = scmp.gt.s32.totalorder %s68, 0
    %s70 = scalar_select %p69, %s68, 0
    %s71 = ssub.s32 %s22, %s34
    %s72 = ssub.s32 %s66, %s70
    %s73 = sor.u32 %s71, %s72
    %p74 = scmp.eq.s32.totalorder %s73, 0
    %s76 = sadd.s32 %s75, 1
    %s77 = scalar_select %p74, %s75, %s76
    %p80 = pneg %p74
    %p81 = scmp.eq.s32.totalorder %s15, 3
    %p82 = por %p80, %p81
    %p83 = scmp.ne.s32.totalorder %s75, %s78
    %p84 = scmp.eq.s32.totalorder %s15, 0
    %p85 = por %p83, %p84
    %p86 = scmp.ne.s32.totalorder %s75, %s78
    %p87 = scmp.eq.s32.totalorder %s20, 3
    %p88 = por %p86, %p87
    %p89 = scmp.ne.s32.totalorder %s78, %s79
    %p90 = scmp.eq.s32.totalorder %s20, 0
    %p91 = por %p89, %p90
    %p92 = scmp.ne.s32.totalorder %s78, %s79
    %p93 = scmp.eq.s32.totalorder %s21, 3
    %p94 = por %p92, %p93
    %p96 = scmp.ne.s32.totalorder %s79, %s95
    %p97 = scmp.eq.s32.totalorder %s21, 0
    %p98 = por %p96, %p97
    %s99 = sadd.s32 %s23, 1
    %s100 = smul.u32 %s99, 4
    %p101 = scmp.lt.s32.totalorder %s100, 7
    %s102 = scalar_select %p101, %s100, 7
    %s103 = sadd.s32 %s30, 1
    %s104 = smul.u32 %s103, 4
    %p105 = scmp.lt.s32.totalorder %s104, 7
    %s106 = scalar_select %p105, %s104, 7
    %s107 = ssub.s32 %s22, %s34
    %s108 = ssub.s32 %s102, %s106
    %s109 = sor.u32 %s107, %s108
    %p110 = scmp.eq.s32.totalorder %s109, 0
    %s112 = sadd.s32 %s111, 1
    %s113 = scalar_select %p110, %s111, %s112
    %p116 = pneg %p110
    %p117 = scmp.eq.s32.totalorder %s15, 3
    %p118 = por %p116, %p117
    %p119 = scmp.ne.s32.totalorder %s111, %s114
    %p120 = scmp.eq.s32.totalorder %s15, 0
    %p121 = por %p119, %p120
    %p122 = scmp.ne.s32.totalorder %s111, %s114
    %p123 = scmp.eq.s32.totalorder %s20, 3
    %p124 = por %p122, %p123
    %p125 = scmp.ne.s32.totalorder %s114, %s115
    %p126 = scmp.eq.s32.totalorder %s20, 0
    %p127 = por %p125, %p126
    %p128 = scmp.ne.s32.totalorder %s114, %s115
    %p129 = scmp.eq.s32.totalorder %s21, 3
    %p130 = por %p128, %p129
    %p132 = scmp.ne.s32.totalorder %s115, %s131
    %p133 = scmp.eq.s32.totalorder %s21, 0
    %p134 = por %p132, %p133
    %s136 = sadd.s32 %s135, 1
    %p139 = scmp.eq.s32.totalorder %s15, 3
    %p140 = scmp.ne.s32.totalorder %s135, %s137
    %p141 = scmp.eq.s32.totalorder %s15, 0
    %p142 = por %p140, %p141
    %p143 = scmp.ne.s32.totalorder %s135, %s137
    %p144 = scmp.eq.s32.totalorder %s20, 3
    %p145 = por %p143, %p144
    %p146 = scmp.ne.s32.totalorder %s137, %s138
    %p147 = scmp.eq.s32.totalorder %s20, 0
    %p148 = por %p146, %p147
    %p149 = scmp.ne.s32.totalorder %s137, %s138
    %p150 = scmp.eq.s32.totalorder %s21, 3
    %p151 = por %p149, %p150
    %p153 = scmp.ne.s32.totalorder %s138, %s152
    %p154 = scmp.eq.s32.totalorder %s21, 0
    %p155 = por %p153, %p154
    %s157 = sadd.s32 %s156, 1
    %p160 = scmp.eq.s32.totalorder %s15, 3
    %p161 = scmp.ne.s32.totalorder %s156, %s158
    %p162 = scmp.eq.s32.totalorder %s15, 0
    %p163 = por %p161, %p162
    %p164 = scmp.ne.s32.totalorder %s156, %s158
    %p165 = scmp.eq.s32.totalorder %s20, 3
    %p166 = por %p164, %p165
    %p167 = scmp.ne.s32.totalorder %s158, %s159
    %p168 = scmp.eq.s32.totalorder %s20, 0
    %p169 = por %p167, %p168
    %p170 = scmp.ne.s32.totalorder %s158, %s159
    %p171 = scmp.eq.s32.totalorder %s21, 3
    %p172 = por %p170, %p171
    %p174 = scmp.ne.s32.totalorder %s159, %s173
    %p175 = scmp.eq.s32.totalorder %s21, 0
    %p176 = por %p174, %p175
    %s178 = sadd.s32 %s177, 1
    %p181 = scmp.eq.s32.totalorder %s15, 3
    %p182 = scmp.ne.s32.totalorder %s177, %s179
    %p183 = scmp.eq.s32.totalorder %s15, 0
    %p184 = por %p182, %p183
    %p185 = scmp.ne.s32.totalorder %s177, %s179
    %p186 = scmp.eq.s32.totalorder %s20, 3
    %p187 = por %p185, %p186
    %p188 = scmp.ne.s32.totalorder %s179, %s180
    %p189 = scmp.eq.s32.totalorder %s20, 0
    %p190 = por %p188, %p189
    %p191 = scmp.ne.s32.totalorder %s179, %s180
    %p192 = scmp.eq.s32.totalorder %s21, 3
    %p193 = por %p191, %p192
    %p195 = scmp.ne.s32.totalorder %s180, %s194
    %p196 = scmp.eq.s32.totalorder %s21, 0
    %p197 = por %p195, %p196
    %s198 = ssub.s32 %s22, %s34
    %s199 = ssub.s32 %s23, %s30
    %s200 = sor.u32 %s198, %s199
    %p201 = scmp.eq.s32.totalorder %s200, 0
    %s203 = sadd.s32 %s202, 1
    %s204 = scalar_select %p201, %s202, %s203
    %p207 = pneg %p201
    %p208 = scmp.eq.s32.totalorder %s15, 3
    %p209 = por %p207, %p208
    %p210 = scmp.ne.s32.totalorder %s202, %s205
    %p211 = scmp.eq.s32.totalorder %s15, 0
    %p212 = por %p210, %p211
    %p213 = scmp.ne.s32.totalorder %s202, %s205
    %p214 = scmp.eq.s32.totalorder %s20, 3
    %p215 = por %p213, %p214
    %p216 = scmp.ne.s32.totalorder %s205, %s206
    %p217 = scmp.eq.s32.totalorder %s20, 0
    %p218 = por %p216, %p217
    %p219 = scmp.ne.s32.totalorder %s205, %s206
    %p220 = scmp.eq.s32.totalorder %s21, 3
    %p221 = por %p219, %p220
    %p223 = scmp.ne.s32.totalorder %s206, %s222
    %p224 = scmp.eq.s32.totalorder %s21, 0
    %p225 = por %p223, %p224
    %s226 = ssub.s32 %s22, %s34
    %s227 = ssub.s32 %s23, %s30
    %s228 = sor.u32 %s226, %s227
    %p229 = scmp.eq.s32.totalorder %s228, 0
    %s231 = sadd.s32 %s230, 1
    %s232 = scalar_select %p229, %s230, %s231
    %p235 = pneg %p229
    %p236 = scmp.eq.s32.totalorder %s15, 3
    %p237 = por %p235, %p236
    %p238 = scmp.ne.s32.totalorder %s230, %s233
    %p239 = scmp.eq.s32.totalorder %s15, 0
    %p240 = por %p238, %p239
    %p241 = scmp.ne.s32.totalorder %s230, %s233
    %p242 = scmp.eq.s32.totalorder %s20, 3
    %p243 = por %p241, %p242
    %p244 = scmp.ne.s32.totalorder %s233, %s234
    %p245 = scmp.eq.s32.totalorder %s20, 0
    %p246 = por %p244, %p245
    %p247 = scmp.ne.s32.totalorder %s233, %s234
    %p248 = scmp.eq.s32.totalorder %s21, 3
    %p249 = por %p247, %p248
    %p251 = scmp.ne.s32.totalorder %s234, %s250
    %p252 = scmp.eq.s32.totalorder %s21, 0
    %p253 = por %p251, %p252
    %s254 = ssub.s32 %s22, %s34
    %s255 = ssub.s32 %s23, %s30
    %s256 = sor.u32 %s254, %s255
    %p257 = scmp.eq.s32.totalorder %s256, 0
    %s259 = sadd.s32 %s258, 1
    %s260 = scalar_select %p257, %s258, %s259
    %p263 = pneg %p257
    %p264 = scmp.eq.s32.totalorder %s15, 3
    %p265 = por %p263, %p264
    %p266 = scmp.ne.s32.totalorder %s258, %s261
    %p267 = scmp.eq.s32.totalorder %s15, 0
    %p268 = por %p266, %p267
    %p269 = scmp.ne.s32.totalorder %s258, %s261
    %p270 = scmp.eq.s32.totalorder %s20, 3
    %p271 = por %p269, %p270
    %p272 = scmp.ne.s32.totalorder %s261, %s262
    %p273 = scmp.eq.s32.totalorder %s20, 0
    %p274 = por %p272, %p273
    %p275 = scmp.ne.s32.totalorder %s261, %s262
    %p276 = scmp.eq.s32.totalorder %s21, 3
    %p277 = por %p275, %p276
    %p279 = scmp.ne.s32.totalorder %s262, %s278
    %p280 = scmp.eq.s32.totalorder %s21, 0
    %p281 = por %p279, %p280
    %p282 = scmp.le.s32.totalorder 1, %s15
    %p283 = scmp.lt.s32.totalorder %s15, 5
    %p284 = pnand %p282, %p283
    %p285 = pneg %p284
    // Predicated region
    $region9: #{conv3d_block_forward.3} parent=5 // pred_check
      _
    $region10: #{conv3d_block_forward.3} parent=5 // pred_check_branch
      %287 = sbr.rel (%p284) target = $region12
    $region11: #{conv3d_block_forward.3} parent=5 // pred_region
      %s288 = ssub.s32 %s15, 1
      // Predicated region
      $region13: #{conv3d_block_forward.3} parent=11 // pred_check
        %p289 = pneg %p148
      $region14: #{conv3d_block_forward.3} parent=11 // pred_check_branch
        %291 = sbr.rel (%p289) target = $region16
      $region15: #{conv3d_block_forward.3} parent=11 // pred_region
        _
      $region16: #{conv3d_block_forward.3} parent=11 // pred_fallthru
        _
      // Predicated region
      $region17: #{conv3d_block_forward.3} parent=11 // pred_check
        %p292 = pneg %p169
      $region18: #{conv3d_block_forward.3} parent=11 // pred_check_branch
        %294 = sbr.rel (%p292) target = $region20
      $region19: #{conv3d_block_forward.3} parent=11 // pred_region
        _
      $region20: #{conv3d_block_forward.3} parent=11 // pred_fallthru
        _
      // Predicated region
      $region21: #{conv3d_block_forward.3} parent=11 // pred_check
        %p295 = pneg %p190
      $region22: #{conv3d_block_forward.3} parent=11 // pred_check_branch
        %297 = sbr.rel (%p295) target = $region24
      $region23: #{conv3d_block_forward.3} parent=11 // pred_region
        _
      $region24: #{conv3d_block_forward.3} parent=11 // pred_fallthru
        _
    $region12: #{conv3d_block_forward.3} parent=5 // pred_fallthru
      _
    %p298 = scmp.lt.s32.totalorder %s15, 4
    // Predicated region
    $region25: #{conv3d_block_forward.3} parent=5 // pred_check
      %p299 = pneg %p298
    $region26: #{conv3d_block_forward.3} parent=5 // pred_check_branch
      %301 = sbr.rel (%p299) target = $region28
    $region27: #{conv3d_block_forward.3} parent=5 // pred_region
      // Predicated region
      $region29: #{conv3d_block_forward.3} parent=27 // pred_check
        %p302 = pneg %p49
      $region30: #{conv3d_block_forward.3} parent=27 // pred_check_branch
        %304 = sbr.rel (%p302) target = $region32
      $region31: #{conv3d_block_forward.3} parent=27 // pred_region
        %s305 = smul.u32 4, %s23
        %p306 = scmp.lt.s32.totalorder %s22, 1
        %s307 = scalar_select %p306, %s22, 1
        %p308 = scmp.lt.s32.totalorder %s305, 7
        %s309 = scalar_select %p308, %s305, 7
        %s310 = smul.addr %s309, 8
        %s311 = smul.addr %s307, 64
        %s312 = sadd.s32 %s310, %s311
        %s313 = smul.addr %s312, 8
        %s314 = scalar_lea.vmem %s0, %s313
        %s315 = smul.u32 4, %s23
      $region32: #{conv3d_block_forward.3} parent=27 // pred_fallthru
        _
      // Predicated region
      $region33: #{conv3d_block_forward.3} parent=27 // pred_check
        %p316 = pneg %p85
      $region34: #{conv3d_block_forward.3} parent=27 // pred_check_branch
        %318 = sbr.rel (%p316) target = $region36
      $region35: #{conv3d_block_forward.3} parent=27 // pred_region
        %s319 = smul.u32 %s23, 4
        %s320 = ssub.s32 %s319, 1
        %p321 = scmp.gt.s32.totalorder %s320, 0
        %s322 = scalar_select %p321, %s320, 0
        %p323 = scmp.lt.s32.totalorder %s22, 1
        %s324 = scalar_select %p323, %s22, 1
        %p325 = scmp.lt.s32.totalorder %s322, 7
        %s326 = scalar_select %p325, %s322, 7
        %s327 = smul.addr %s326, 8
        %s328 = smul.addr %s324, 64
        %s329 = sadd.s32 %s327, %s328
        %s330 = smul.addr %s329, 8
        %s331 = scalar_lea.vmem %s1, %s330
        %s332 = smul.u32 %s23, 4
        %s333 = ssub.s32 %s332, 1
        %p334 = scmp.gt.s32.totalorder %s333, 0
        %s335 = scalar_select %p334, %s333, 0
      $region36: #{conv3d_block_forward.3} parent=27 // pred_fallthru
        _
      // Predicated region
      $region37: #{conv3d_block_forward.3} parent=27 // pred_check
        %p336 = pneg %p121
      $region38: #{conv3d_block_forward.3} parent=27 // pred_check_branch
        %338 = sbr.rel (%p336) target = $region40
      $region39: #{conv3d_block_forward.3} parent=27 // pred_region
        %s339 = sadd.s32 %s23, 1
        %s340 = smul.u32 %s339, 4
        %p341 = scmp.lt.s32.totalorder %s340, 7
        %s342 = scalar_select %p341, %s340, 7
        %p343 = scmp.lt.s32.totalorder %s22, 1
        %s344 = scalar_select %p343, %s22, 1
        %p345 = scmp.lt.s32.totalorder %s342, 7
        %s346 = scalar_select %p345, %s342, 7
        %s347 = smul.addr %s346, 8
        %s348 = smul.addr %s344, 64
        %s349 = sadd.s32 %s347, %s348
        %s350 = smul.addr %s349, 8
        %s351 = scalar_lea.vmem %s2, %s350
        %s352 = sadd.s32 %s23, 1
        %s353 = smul.u32 %s352, 4
        %p354 = scmp.lt.s32.totalorder %s353, 7
        %s355 = scalar_select %p354, %s353, 7
      $region40: #{conv3d_block_forward.3} parent=27 // pred_fallthru
        _
    $region28: #{conv3d_block_forward.3} parent=5 // pred_fallthru
      _
    %p356 = scmp.le.s32.totalorder 1, %s15
    %p357 = scmp.lt.s32.totalorder %s15, 5
    %p358 = pnand %p356, %p357
    %p359 = pneg %p358
    // Predicated region
    $region41: #{conv3d_block_forward.3} parent=5 // pred_check
      _
    $region42: #{conv3d_block_forward.3} parent=5 // pred_check_branch
      %361 = sbr.rel (%p358) target = $region44
    $region43: #{conv3d_block_forward.3} parent=5 // pred_region
      %s362 = ssub.s32 %s15, 1
      %s363 = smul.u32 4, %s25
      %p364 = scmp.lt.s32.totalorder %s24, 1
      %s365 = scalar_select %p364, %s24, 1
      %p366 = scmp.lt.s32.totalorder %s363, 7
      %s367 = scalar_select %p366, %s363, 7
      %s368 = smul.addr %s367, 8
      %s369 = smul.addr %s365, 64
      %s370 = sadd.s32 %s368, %s369
      %s371 = smul.addr %s370, 8
      %s372 = scalar_lea.vmem %s0, %s371
      %p373 = pneg %p55
      %p374 = pneg %p52
      %s375 = smul.u32 %s25, 4
      %s376 = ssub.s32 %s375, 1
      %p377 = scmp.gt.s32.totalorder %s376, 0
      %s378 = scalar_select %p377, %s376, 0
      %p379 = scmp.lt.s32.totalorder %s24, 1
      %s380 = scalar_select %p379, %s24, 1
      %p381 = scmp.lt.s32.totalorder %s378, 7
      %s382 = scalar_select %p381, %s378, 7
      %s383 = smul.addr %s382, 8
      %s384 = smul.addr %s380, 64
      %s385 = sadd.s32 %s383, %s384
      %s386 = smul.addr %s385, 8
      %s387 = scalar_lea.vmem %s1, %s386
      %p388 = pneg %p91
      %p389 = pneg %p88
      %s390 = sadd.s32 %s25, 1
      %s391 = smul.u32 %s390, 4
      %p392 = scmp.lt.s32.totalorder %s391, 7
      %s393 = scalar_select %p392, %s391, 7
      %p394 = scmp.lt.s32.totalorder %s24, 1
      %s395 = scalar_select %p394, %s24, 1
      %p396 = scmp.lt.s32.totalorder %s393, 7
      %s397 = scalar_select %p396, %s393, 7
      %s398 = smul.addr %s397, 8
      %s399 = smul.addr %s395, 64
      %s400 = sadd.s32 %s398, %s399
      %s401 = smul.addr %s400, 8
      %s402 = scalar_lea.vmem %s2, %s401
      %p403 = pneg %p127
      %p404 = pneg %p124
      %p405 = pneg %p148
      %p406 = pneg %p145
      %p407 = pneg %p169
      %p408 = pneg %p166
      %p409 = pneg %p190
      %p410 = pneg %p187
      %p411 = pneg %p218
      %p412 = pneg %p215
      %s413 = smul.u32 4, %s25
      %p414 = scmp.lt.s32.totalorder %s24, 1
      %s415 = scalar_select %p414, %s24, 1
      %p416 = scmp.lt.s32.totalorder %s413, 7
      %s417 = scalar_select %p416, %s413, 7
      %s418 = smul.addr %s417, 8
      %s419 = smul.addr %s415, 64
      %s420 = sadd.s32 %s418, %s419
      %s421 = smul.addr %s420, 4
      %s422 = scalar_lea.vmem %s6, %s421
      %p423 = pneg %p246
      %p424 = pneg %p243
      %p425 = scmp.lt.s32.totalorder %s24, 1
      %s426 = scalar_select %p425, %s24, 1
      %p427 = scmp.lt.s32.totalorder %s25, 1
      %s428 = scalar_select %p427, %s25, 1
      %s429 = smul.addr %s426, 2
      %s430 = sadd.s32 %s428, %s429
      %s431 = smul.addr %s430, 8
      %s432 = scalar_lea.vmem %s7, %s431
      %p433 = pneg %p274
      %p434 = pneg %p271
      %p435 = scmp.lt.s32.totalorder %s24, 1
      %s436 = scalar_select %p435, %s24, 1
      %p437 = scmp.lt.s32.totalorder %s25, 1
      %s438 = scalar_select %p437, %s25, 1
      %s439 = smul.addr %s436, 2
      %s440 = sadd.s32 %s438, %s439
      %s441 = smul.addr %s440, 8
      %s442 = scalar_lea.vmem %s8, %s441
      %s443 = smul.u32 4, %s25
      %p444 = scmp.lt.s32.totalorder %s24, 1
      %s445 = scalar_select %p444, %s24, 1
      %p446 = scmp.lt.s32.totalorder %s443, 7
      %s447 = scalar_select %p446, %s443, 7
      %s448 = smul.addr %s447, 8
      %s449 = smul.addr %s445, 64
      %s450 = sadd.s32 %s448, %s449
      %s451 = smul.addr %s450, 8
      %s452 = scalar_lea.vmem %s0, %s451
      %s453 = smul.u32 4, %s25
      %s454 = smul.u32 %s25, 4
      %s455 = ssub.s32 %s454, 1
      %p456 = scmp.gt.s32.totalorder %s455, 0
      %s457 = scalar_select %p456, %s455, 0
      %p458 = scmp.lt.s32.totalorder %s24, 1
      %s459 = scalar_select %p458, %s24, 1
      %p460 = scmp.lt.s32.totalorder %s457, 7
      %s461 = scalar_select %p460, %s457, 7
      %s462 = smul.addr %s461, 8
      %s463 = smul.addr %s459, 64
      %s464 = sadd.s32 %s462, %s463
      %s465 = smul.addr %s464, 8
      %s466 = scalar_lea.vmem %s1, %s465
      %s467 = smul.u32 %s25, 4
      %s468 = ssub.s32 %s467, 1
      %p469 = scmp.gt.s32.totalorder %s468, 0
      %s470 = scalar_select %p469, %s468, 0
      %s471 = sadd.s32 %s25, 1
      %s472 = smul.u32 %s471, 4
      %p473 = scmp.lt.s32.totalorder %s472, 7
      %s474 = scalar_select %p473, %s472, 7
      %p475 = scmp.lt.s32.totalorder %s24, 1
      %s476 = scalar_select %p475, %s24, 1
      %p477 = scmp.lt.s32.totalorder %s474, 7
      %s478 = scalar_select %p477, %s474, 7
      %s479 = smul.addr %s478, 8
      %s480 = smul.addr %s476, 64
      %s481 = sadd.s32 %s479, %s480
      %s482 = smul.addr %s481, 8
      %s483 = scalar_lea.vmem %s2, %s482
      %s484 = sadd.s32 %s25, 1
      %s485 = smul.u32 %s484, 4
      %p486 = scmp.lt.s32.totalorder %s485, 7
      %s487 = scalar_select %p486, %s485, 7
      %s488 = smul.u32 4, %s25
      %p489 = scmp.lt.s32.totalorder %s24, 1
      %s490 = scalar_select %p489, %s24, 1
      %p491 = scmp.lt.s32.totalorder %s488, 7
      %s492 = scalar_select %p491, %s488, 7
      %s493 = smul.addr %s492, 8
      %s494 = smul.addr %s490, 64
      %s495 = sadd.s32 %s493, %s494
      %s496 = smul.addr %s495, 4
      %s497 = scalar_lea.vmem %s6, %s496
      %s498 = smul.u32 4, %s25
      %p499 = scmp.lt.s32.totalorder %s24, 1
      %s500 = scalar_select %p499, %s24, 1
      %p501 = scmp.lt.s32.totalorder %s25, 1
      %s502 = scalar_select %p501, %s25, 1
      %s503 = smul.addr %s500, 2
      %s504 = sadd.s32 %s502, %s503
      %s505 = smul.addr %s504, 8
      %s506 = scalar_lea.vmem %s7, %s505
      %p507 = scmp.lt.s32.totalorder %s24, 1
      %s508 = scalar_select %p507, %s24, 1
      %p509 = scmp.lt.s32.totalorder %s25, 1
      %s510 = scalar_select %p509, %s25, 1
      %s511 = smul.addr %s508, 2
      %s512 = sadd.s32 %s510, %s511
      %s513 = smul.addr %s512, 8
      %s514 = scalar_lea.vmem %s8, %s513
      %v516 = vld [vmem:[%s466] sm:$0xff]
      %v517 = vld [vmem:[%s466 + $0x8] sm:$0xff]
      %v518 = vld [vmem:[%s466 + $0x10] sm:$0xff]
      %v519 = vld [vmem:[%s466 + $0x18] sm:$0xff]
      %v520 = vld [vmem:[%s466 + $0x20] sm:$0xff]
      %v521 = vld [vmem:[%s466 + $0x28] sm:$0xff]
      %v522 = vld [vmem:[%s466 + $0x30] sm:$0xff]
      %v523 = vld [vmem:[%s466 + $0x38] sm:$0xff]
      %p524 = scmp.gt.s32.totalorder %s25, 0
      %s525 = scalar_select %p524, 1, 0
      %s526 = scvt.s32.f32 %s525
      %v527 = vstv %s526
      %v528 = vmul.f32 %v516, %v527
      %v529 = vmul.f32 %v517, %v527
      %v530 = vmul.f32 %v518, %v527
      %v531 = vmul.f32 %v519, %v527
      %v532 = vmul.f32 %v520, %v527
      %v533 = vmul.f32 %v521, %v527
      %v534 = vmul.f32 %v522, %v527
      %v535 = vmul.f32 %v523, %v527
      %v536 = vld [vmem:[%s483] sm:$0xff]
      %v537 = vld [vmem:[%s483 + $0x8] sm:$0xff]
      %v538 = vld [vmem:[%s483 + $0x10] sm:$0xff]
      %v539 = vld [vmem:[%s483 + $0x18] sm:$0xff]
      %v540 = vld [vmem:[%s483 + $0x20] sm:$0xff]
      %v541 = vld [vmem:[%s483 + $0x28] sm:$0xff]
      %v542 = vld [vmem:[%s483 + $0x30] sm:$0xff]
      %v543 = vld [vmem:[%s483 + $0x38] sm:$0xff]
      %p544 = scmp.lt.s32.totalorder %s25, 1
      %s545 = scalar_select %p544, 1, 0
      %s546 = scvt.s32.f32 %s545
      %v547 = vstv %s546
      %v548 = vmul.f32 %v536, %v547
      %v549 = vmul.f32 %v537, %v547
      %v550 = vmul.f32 %v538, %v547
      %v551 = vmul.f32 %v539, %v547
      %v552 = vmul.f32 %v540, %v547
      %v553 = vmul.f32 %v541, %v547
      %v554 = vmul.f32 %v542, %v547
      %v555 = vmul.f32 %v543, %v547
      %v556 = vld [vmem:[%s452] sm:$0xff]
      %v557 = vld [vmem:[%s452 + $0x8] sm:$0xff]
      %v558 = vld [vmem:[%s452 + $0x10] sm:$0xff]
      %v559 = vld [vmem:[%s452 + $0x18] sm:$0xff]
      %v560 = vld [vmem:[%s452 + $0x20] sm:$0xff]
      %v561 = vld [vmem:[%s452 + $0x28] sm:$0xff]
      %v562 = vld [vmem:[%s452 + $0x30] sm:$0xff]
      %v563 = vld [vmem:[%s452 + $0x38] sm:$0xff]
      %v564 = vld [vmem:[%s452 + $0x40] sm:$0xff]
      %v565 = vld [vmem:[%s452 + $0x48] sm:$0xff]
      %v566 = vld [vmem:[%s452 + $0x50] sm:$0xff]
      %v567 = vld [vmem:[%s452 + $0x58] sm:$0xff]
      %v568 = vld [vmem:[%s452 + $0x60] sm:$0xff]
      %v569 = vld [vmem:[%s452 + $0x68] sm:$0xff]
      %v570 = vld [vmem:[%s452 + $0x70] sm:$0xff]
      %v571 = vld [vmem:[%s452 + $0x78] sm:$0xff]
      %v572 = vld [vmem:[%s452 + $0x80] sm:$0xff]
      %v573 = vld [vmem:[%s452 + $0x88] sm:$0xff]
      %v574 = vld [vmem:[%s452 + $0x90] sm:$0xff]
      %v575 = vld [vmem:[%s452 + $0x98] sm:$0xff]
      %v576 = vld [vmem:[%s452 + $0xa0] sm:$0xff]
      %v577 = vld [vmem:[%s452 + $0xa8] sm:$0xff]
      %v578 = vld [vmem:[%s452 + $0xb0] sm:$0xff]
      %v579 = vld [vmem:[%s452 + $0xb8] sm:$0xff]
      %v580 = vld [vmem:[%s452 + $0xc0] sm:$0xff]
      %v581 = vld [vmem:[%s452 + $0xc8] sm:$0xff]
      %v582 = vld [vmem:[%s452 + $0xd0] sm:$0xff]
      %v583 = vld [vmem:[%s452 + $0xd8] sm:$0xff]
      %v584 = vld [vmem:[%s452 + $0xe0] sm:$0xff]
      %v585 = vld [vmem:[%s452 + $0xe8] sm:$0xff]
      %v586 = vld [vmem:[%s452 + $0xf0] sm:$0xff]
      %v587 = vld [vmem:[%s452 + $0xf8] sm:$0xff]
      %v637 = vrot.slane 0.0, 7
      %v638 = vrot.slane %v528, 7
      %v639 = vrot.slane %v529, 7
      %v640 = vrot.slane %v530, 7
      %v641 = vrot.slane %v531, 7
      %v642 = vrot.slane %v532, 7
      %v643 = vrot.slane %v533, 7
      %v644 = vrot.slane %v534, 7
      %v645 = vrot.slane %v535, 7
      %v646 = vrot.slane %v556, 7
      %v647 = vrot.slane %v557, 7
      %v648 = vrot.slane %v558, 7
      %v649 = vrot.slane %v559, 7
      %v650 = vrot.slane %v560, 7
      %v651 = vrot.slane %v561, 7
      %v652 = vrot.slane %v562, 7
      %v653 = vrot.slane %v563, 7
      %v654 = vrot.slane %v564, 7
      %v655 = vrot.slane %v565, 7
      %v656 = vrot.slane %v566, 7
      %v657 = vrot.slane %v567, 7
      %v658 = vrot.slane %v568, 7
      %v659 = vrot.slane %v569, 7
      %v660 = vrot.slane %v570, 7
      %v661 = vrot.slane %v571, 7
      %v662 = vrot.slane %v572, 7
      %v663 = vrot.slane %v573, 7
      %v664 = vrot.slane %v574, 7
      %v665 = vrot.slane %v575, 7
      %v666 = vrot.slane %v576, 7
      %v667 = vrot.slane %v577, 7
      %v668 = vrot.slane %v578, 7
      %v669 = vrot.slane %v579, 7
      %v670 = vrot.slane %v580, 7
      %v671 = vrot.slane %v581, 7
      %v672 = vrot.slane %v582, 7
      %v673 = vrot.slane %v583, 7
      %v674 = vrot.slane %v584, 7
      %v675 = vrot.slane %v585, 7
      %v676 = vrot.slane %v586, 7
      %v677 = vrot.slane %v587, 7
      %v678 = vrot.slane %v548, 7
      %v679 = vrot.slane %v549, 7
      %v680 = vrot.slane %v550, 7
      %v681 = vrot.slane %v551, 7
      %v682 = vrot.slane %v552, 7
      %v683 = vrot.slane %v553, 7
      %v684 = vrot.slane %v554, 7
      %v685 = vrot.slane %v555, 7
      %vm735 = vcmask 1040384
      %v736 = vsel %vm735, 0.0, %v637
      %v737 = vsel %vm735, 0.0, %v638
      %v738 = vsel %vm735, 0.0, %v639
      %v739 = vsel %vm735, 0.0, %v640
      %v740 = vsel %vm735, 0.0, %v641
      %v741 = vsel %vm735, 0.0, %v642
      %v742 = vsel %vm735, 0.0, %v643
      %v743 = vsel %vm735, 0.0, %v644
      %v744 = vsel %vm735, 0.0, %v645
      %v745 = vsel %vm735, 0.0, %v646
      %v746 = vsel %vm735, 0.0, %v647
      %v747 = vsel %vm735, 0.0, %v648
      %v748 = vsel %vm735, 0.0, %v649
      %v749 = vsel %vm735, 0.0, %v650
      %v750 = vsel %vm735, 0.0, %v651
      %v751 = vsel %vm735, 0.0, %v652
      %v752 = vsel %vm735, 0.0, %v653
      %v753 = vsel %vm735, 0.0, %v654
      %v754 = vsel %vm735, 0.0, %v655
      %v755 = vsel %vm735, 0.0, %v656
      %v756 = vsel %vm735, 0.0, %v657
      %v757 = vsel %vm735, 0.0, %v658
      %v758 = vsel %vm735, 0.0, %v659
      %v759 = vsel %vm735, 0.0, %v660
      %v760 = vsel %vm735, 0.0, %v661
      %v761 = vsel %vm735, 0.0, %v662
      %v762 = vsel %vm735, 0.0, %v663
      %v763 = vsel %vm735, 0.0, %v664
      %v764 = vsel %vm735, 0.0, %v665
      %v765 = vsel %vm735, 0.0, %v666
      %v766 = vsel %vm735, 0.0, %v667
      %v767 = vsel %vm735, 0.0, %v668
      %v768 = vsel %vm735, 0.0, %v669
      %v769 = vsel %vm735, 0.0, %v670
      %v770 = vsel %vm735, 0.0, %v671
      %v771 = vsel %vm735, 0.0, %v672
      %v772 = vsel %vm735, 0.0, %v673
      %v773 = vsel %vm735, 0.0, %v674
      %v774 = vsel %vm735, 0.0, %v675
      %v775 = vsel %vm735, 0.0, %v676
      %v776 = vsel %vm735, 0.0, %v677
      %v777 = vsel %vm735, 0.0, %v678
      %v778 = vsel %vm735, 0.0, %v679
      %v779 = vsel %vm735, 0.0, %v680
      %v780 = vsel %vm735, 0.0, %v681
      %v781 = vsel %vm735, 0.0, %v682
      %v782 = vsel %vm735, 0.0, %v683
      %v783 = vsel %vm735, 0.0, %v684
      %v784 = vsel %vm735, 0.0, %v685
      %v785 = vsel %vm735, %v637, 0.0
      %v786 = vsel %vm735, %v638, 0.0
      %v787 = vsel %vm735, %v639, 0.0
      %v788 = vsel %vm735, %v640, 0.0
      %v789 = vsel %vm735, %v641, 0.0
      %v790 = vsel %vm735, %v642, 0.0
      %v791 = vsel %vm735, %v643, 0.0
      %v792 = vsel %vm735, %v644, 0.0
      %v793 = vsel %vm735, %v645, 0.0
      %v794 = vsel %vm735, %v646, 0.0
      %v795 = vsel %vm735, %v647, 0.0
      %v796 = vsel %vm735, %v648, 0.0
      %v797 = vsel %vm735, %v649, 0.0
      %v798 = vsel %vm735, %v650, 0.0
      %v799 = vsel %vm735, %v651, 0.0
      %v800 = vsel %vm735, %v652, 0.0
      %v801 = vsel %vm735, %v653, 0.0
      %v802 = vsel %vm735, %v654, 0.0
      %v803 = vsel %vm735, %v655, 0.0
      %v804 = vsel %vm735, %v656, 0.0
      %v805 = vsel %vm735, %v657, 0.0
      %v806 = vsel %vm735, %v658, 0.0
      %v807 = vsel %vm735, %v659, 0.0
      %v808 = vsel %vm735, %v660, 0.0
      %v809 = vsel %vm735, %v661, 0.0
      %v810 = vsel %vm735, %v662, 0.0
      %v811 = vsel %vm735, %v663, 0.0
      %v812 = vsel %vm735, %v664, 0.0
      %v813 = vsel %vm735, %v665, 0.0
      %v814 = vsel %vm735, %v666, 0.0
      %v815 = vsel %vm735, %v667, 0.0
      %v816 = vsel %vm735, %v668, 0.0
      %v817 = vsel %vm735, %v669, 0.0
      %v818 = vsel %vm735, %v670, 0.0
      %v819 = vsel %vm735, %v671, 0.0
      %v820 = vsel %vm735, %v672, 0.0
      %v821 = vsel %vm735, %v673, 0.0
      %v822 = vsel %vm735, %v674, 0.0
      %v823 = vsel %vm735, %v675, 0.0
      %v824 = vsel %vm735, %v676, 0.0
      %v825 = vsel %vm735, %v677, 0.0
      %v826 = vsel %vm735, %v678, 0.0
      %v827 = vsel %vm735, %v679, 0.0
      %v828 = vsel %vm735, %v680, 0.0
      %v829 = vsel %vm735, %v681, 0.0
      %v830 = vsel %vm735, %v682, 0.0
      %v831 = vsel %vm735, %v683, 0.0
      %v832 = vsel %vm735, %v684, 0.0
      %v833 = vsel %vm735, %v685, 0.0
      %vm932 = vcmask 1046528
      %v933 = vrot.slane %v736, 1
      %v934 = vrot.slane %v785, 1
      %v935 = vsel %vm932, %v933, %v934
      %v936 = vrot.slane %v737, 1
      %v937 = vrot.slane %v786, 1
      %v938 = vsel %vm932, %v936, %v937
      %v939 = vrot.slane %v738, 1
      %v940 = vrot.slane %v787, 1
      %v941 = vsel %vm932, %v939, %v940
      %v942 = vrot.slane %v739, 1
      %v943 = vrot.slane %v788, 1
      %v944 = vsel %vm932, %v942, %v943
      %v945 = vrot.slane %v740, 1
      %v946 = vrot.slane %v789, 1
      %v947 = vsel %vm932, %v945, %v946
      %v948 = vrot.slane %v741, 1
      %v949 = vrot.slane %v790, 1
      %v950 = vsel %vm932, %v948, %v949
      %v951 = vrot.slane %v742, 1
      %v952 = vrot.slane %v791, 1
      %v953 = vsel %vm932, %v951, %v952
      %v954 = vrot.slane %v743, 1
      %v955 = vrot.slane %v792, 1
      %v956 = vsel %vm932, %v954, %v955
      %v957 = vrot.slane %v744, 1
      %v958 = vrot.slane %v793, 1
      %v959 = vsel %vm932, %v957, %v958
      %v960 = vrot.slane %v745, 1
      %v961 = vrot.slane %v794, 1
      %v962 = vsel %vm932, %v960, %v961
      %v963 = vrot.slane %v746, 1
      %v964 = vrot.slane %v795, 1
      %v965 = vsel %vm932, %v963, %v964
      %v966 = vrot.slane %v747, 1
      %v967 = vrot.slane %v796, 1
      %v968 = vsel %vm932, %v966, %v967
      %v969 = vrot.slane %v748, 1
      %v970 = vrot.slane %v797, 1
      %v971 = vsel %vm932, %v969, %v970
      %v972 = vrot.slane %v749, 1
      %v973 = vrot.slane %v798, 1
      %v974 = vsel %vm932, %v972, %v973
      %v975 = vrot.slane %v750, 1
      %v976 = vrot.slane %v799, 1
      %v977 = vsel %vm932, %v975, %v976
      %v978 = vrot.slane %v751, 1
      %v979 = vrot.slane %v800, 1
      %v980 = vsel %vm932, %v978, %v979
      %v981 = vrot.slane %v752, 1
      %v982 = vrot.slane %v801, 1
      %v983 = vsel %vm932, %v981, %v982
      %v984 = vrot.slane %v753, 1
      %v985 = vrot.slane %v802, 1
      %v986 = vsel %vm932, %v984, %v985
      %v987 = vrot.slane %v754, 1
      %v988 = vrot.slane %v803, 1
      %v989 = vsel %vm932, %v987, %v988
      %v990 = vrot.slane %v755, 1
      %v991 = vrot.slane %v804, 1
      %v992 = vsel %vm932, %v990, %v991
      %v993 = vrot.slane %v756, 1
      %v994 = vrot.slane %v805, 1
      %v995 = vsel %vm932, %v993, %v994
      %v996 = vrot.slane %v757, 1
      %v997 = vrot.slane %v806, 1
      %v998 = vsel %vm932, %v996, %v997
      %v999 = vrot.slane %v758, 1
      %v1000 = vrot.slane %v807, 1
      %v1001 = vsel %vm932, %v999, %v1000
      %v1002 = vrot.slane %v759, 1
      %v1003 = vrot.slane %v808, 1
      %v1004 = vsel %vm932, %v1002, %v1003
      %v1005 = vrot.slane %v760, 1
      %v1006 = vrot.slane %v809, 1
      %v1007 = vsel %vm932, %v1005, %v1006
      %v1008 = vrot.slane %v761, 1
      %v1009 = vrot.slane %v810, 1
      %v1010 = vsel %vm932, %v1008, %v1009
      %v1011 = vrot.slane %v762, 1
      %v1012 = vrot.slane %v811, 1
      %v1013 = vsel %vm932, %v1011, %v1012
      %v1014 = vrot.slane %v763, 1
      %v1015 = vrot.slane %v812, 1
      %v1016 = vsel %vm932, %v1014, %v1015
      %v1017 = vrot.slane %v764, 1
      %v1018 = vrot.slane %v813, 1
      %v1019 = vsel %vm932, %v1017, %v1018
      %v1020 = vrot.slane %v765, 1
      %v1021 = vrot.slane %v814, 1
      %v1022 = vsel %vm932, %v1020, %v1021
      %v1023 = vrot.slane %v766, 1
      %v1024 = vrot.slane %v815, 1
      %v1025 = vsel %vm932, %v1023, %v1024
      %v1026 = vrot.slane %v767, 1
      %v1027 = vrot.slane %v816, 1
      %v1028 = vsel %vm932, %v1026, %v1027
      %v1029 = vrot.slane %v768, 1
      %v1030 = vrot.slane %v817, 1
      %v1031 = vsel %vm932, %v1029, %v1030
      %v1032 = vrot.slane %v769, 1
      %v1033 = vrot.slane %v818, 1
      %v1034 = vsel %vm932, %v1032, %v1033
      %v1035 = vrot.slane %v770, 1
      %v1036 = vrot.slane %v819, 1
      %v1037 = vsel %vm932, %v1035, %v1036
      %v1038 = vrot.slane %v771, 1
      %v1039 = vrot.slane %v820, 1
      %v1040 = vsel %vm932, %v1038, %v1039
      %v1041 = vrot.slane %v772, 1
      %v1042 = vrot.slane %v821, 1
      %v1043 = vsel %vm932, %v1041, %v1042
      %v1044 = vrot.slane %v773, 1
      %v1045 = vrot.slane %v822, 1
      %v1046 = vsel %vm932, %v1044, %v1045
      %v1047 = vrot.slane %v774, 1
      %v1048 = vrot.slane %v823, 1
      %v1049 = vsel %vm932, %v1047, %v1048
      %v1050 = vrot.slane %v775, 1
      %v1051 = vrot.slane %v824, 1
      %v1052 = vsel %vm932, %v1050, %v1051
      %v1053 = vrot.slane %v776, 1
      %v1054 = vrot.slane %v825, 1
      %v1055 = vsel %vm932, %v1053, %v1054
      %v1056 = vrot.slane %v777, 1
      %v1057 = vrot.slane %v826, 1
      %v1058 = vsel %vm932, %v1056, %v1057
      %v1059 = vrot.slane %v778, 1
      %v1060 = vrot.slane %v827, 1
      %v1061 = vsel %vm932, %v1059, %v1060
      %v1062 = vrot.slane %v779, 1
      %v1063 = vrot.slane %v828, 1
      %v1064 = vsel %vm932, %v1062, %v1063
      %v1065 = vrot.slane %v780, 1
      %v1066 = vrot.slane %v829, 1
      %v1067 = vsel %vm932, %v1065, %v1066
      %v1068 = vrot.slane %v781, 1
      %v1069 = vrot.slane %v830, 1
      %v1070 = vsel %vm932, %v1068, %v1069
      %v1071 = vrot.slane %v782, 1
      %v1072 = vrot.slane %v831, 1
      %v1073 = vsel %vm932, %v1071, %v1072
      %v1074 = vrot.slane %v783, 1
      %v1075 = vrot.slane %v832, 1
      %v1076 = vsel %vm932, %v1074, %v1075
      %v1077 = vrot.slane %v784, 1
      %v1078 = vrot.slane %v833, 1
      %v1079 = vsel %vm932, %v1077, %v1078
      %1080 = vrot.lane.b32.xlu0 %v935, 4
      %v1081 = vpop.permute.xlu0 %1080
      %1082 = vrot.lane.b32.xlu0 %v938, 4
      %v1083 = vpop.permute.xlu0 %1082
      %1084 = vrot.lane.b32.xlu0 %v941, 4
      %v1085 = vpop.permute.xlu0 %1084
      %1086 = vrot.lane.b32.xlu0 %v944, 4
      %v1087 = vpop.permute.xlu0 %1086
      %1088 = vrot.lane.b32.xlu0 %v947, 4
      %v1089 = vpop.permute.xlu0 %1088
      %1090 = vrot.lane.b32.xlu0 %v950, 4
      %v1091 = vpop.permute.xlu0 %1090
      %1092 = vrot.lane.b32.xlu0 %v953, 4
      %v1093 = vpop.permute.xlu0 %1092
      %1094 = vrot.lane.b32.xlu0 %v956, 4
      %v1095 = vpop.permute.xlu0 %1094
      %1096 = vrot.lane.b32.xlu0 %v959, 4
      %v1097 = vpop.permute.xlu0 %1096
      %1098 = vrot.lane.b32.xlu0 %v962, 4
      %v1099 = vpop.permute.xlu0 %1098
      %1100 = vrot.lane.b32.xlu0 %v965, 4
      %v1101 = vpop.permute.xlu0 %1100
      %1102 = vrot.lane.b32.xlu0 %v968, 4
      %v1103 = vpop.permute.xlu0 %1102
      %1104 = vrot.lane.b32.xlu0 %v971, 4
      %v1105 = vpop.permute.xlu0 %1104
      %1106 = vrot.lane.b32.xlu0 %v974, 4
      %v1107 = vpop.permute.xlu0 %1106
      %1108 = vrot.lane.b32.xlu0 %v977, 4
      %v1109 = vpop.permute.xlu0 %1108
      %1110 = vrot.lane.b32.xlu0 %v980, 4
      %v1111 = vpop.permute.xlu0 %1110
      %1112 = vrot.lane.b32.xlu0 %v983, 4
      %v1113 = vpop.permute.xlu0 %1112
      %1114 = vrot.lane.b32.xlu0 %v986, 4
      %v1115 = vpop.permute.xlu0 %1114
      %1116 = vrot.lane.b32.xlu0 %v989, 4
      %v1117 = vpop.permute.xlu0 %1116
      %1118 = vrot.lane.b32.xlu0 %v992, 4
      %v1119 = vpop.permute.xlu0 %1118
      %1120 = vrot.lane.b32.xlu0 %v995, 4
      %v1121 = vpop.permute.xlu0 %1120
      %1122 = vrot.lane.b32.xlu0 %v998, 4
      %v1123 = vpop.permute.xlu0 %1122
      %1124 = vrot.lane.b32.xlu0 %v1001, 4
      %v1125 = vpop.permute.xlu0 %1124
      %1126 = vrot.lane.b32.xlu0 %v1004, 4
      %v1127 = vpop.permute.xlu0 %1126
      %1128 = vrot.lane.b32.xlu0 %v1007, 4
      %v1129 = vpop.permute.xlu0 %1128
      %1130 = vrot.lane.b32.xlu0 %v1010, 4
      %v1131 = vpop.permute.xlu0 %1130
      %1132 = vrot.lane.b32.xlu0 %v1013, 4
      %v1133 = vpop.permute.xlu0 %1132
      %1134 = vrot.lane.b32.xlu0 %v1016, 4
      %v1135 = vpop.permute.xlu0 %1134
      %1136 = vrot.lane.b32.xlu0 %v1019, 4
      %v1137 = vpop.permute.xlu0 %1136
      %1138 = vrot.lane.b32.xlu0 %v1022, 4
      %v1139 = vpop.permute.xlu0 %1138
      %1140 = vrot.lane.b32.xlu0 %v1025, 4
      %v1141 = vpop.permute.xlu0 %1140
      %1142 = vrot.lane.b32.xlu0 %v1028, 4
      %v1143 = vpop.permute.xlu0 %1142
      %1144 = vrot.lane.b32.xlu0 %v1031, 4
      %v1145 = vpop.permute.xlu0 %1144
      %1146 = vrot.lane.b32.xlu0 %v1034, 4
      %v1147 = vpop.permute.xlu0 %1146
      %1148 = vrot.lane.b32.xlu0 %v1037, 4
      %v1149 = vpop.permute.xlu0 %1148
      %1150 = vrot.lane.b32.xlu0 %v1040, 4
      %v1151 = vpop.permute.xlu0 %1150
      %1152 = vrot.lane.b32.xlu0 %v1043, 4
      %v1153 = vpop.permute.xlu0 %1152
      %1154 = vrot.lane.b32.xlu0 %v1046, 4
      %v1155 = vpop.permute.xlu0 %1154
      %1156 = vrot.lane.b32.xlu0 %v1049, 4
      %v1157 = vpop.permute.xlu0 %1156
      %1158 = vrot.lane.b32.xlu0 %v1052, 4
      %v1159 = vpop.permute.xlu0 %1158
      %1160 = vrot.lane.b32.xlu0 %v1055, 4
      %v1161 = vpop.permute.xlu0 %1160
      %1162 = vrot.lane.b32.xlu0 %v1058, 4
      %v1163 = vpop.permute.xlu0 %1162
      %1164 = vrot.lane.b32.xlu0 %v1061, 4
      %v1165 = vpop.permute.xlu0 %1164
      %1166 = vrot.lane.b32.xlu0 %v1064, 4
      %v1167 = vpop.permute.xlu0 %1166
      %1168 = vrot.lane.b32.xlu0 %v1067, 4
      %v1169 = vpop.permute.xlu0 %1168
      %1170 = vrot.lane.b32.xlu0 %v1070, 4
      %v1171 = vpop.permute.xlu0 %1170
      %1172 = vrot.lane.b32.xlu0 %v1073, 4
      %v1173 = vpop.permute.xlu0 %1172
      %1174 = vrot.lane.b32.xlu0 %v1076, 4
      %v1175 = vpop.permute.xlu0 %1174
      %1176 = vrot.lane.b32.xlu0 %v1079, 4
      %v1177 = vpop.permute.xlu0 %1176
      %vm1227 = vcmask 1045504
      %v1228 = vrot.slane %v736, 2
      %v1229 = vrot.slane %v785, 2
      %v1230 = vsel %vm1227, %v1228, %v1229
      %v1231 = vrot.slane %v737, 2
      %v1232 = vrot.slane %v786, 2
      %v1233 = vsel %vm1227, %v1231, %v1232
      %v1234 = vrot.slane %v738, 2
      %v1235 = vrot.slane %v787, 2
      %v1236 = vsel %vm1227, %v1234, %v1235
      %v1237 = vrot.slane %v739, 2
      %v1238 = vrot.slane %v788, 2
      %v1239 = vsel %vm1227, %v1237, %v1238
      %v1240 = vrot.slane %v740, 2
      %v1241 = vrot.slane %v789, 2
      %v1242 = vsel %vm1227, %v1240, %v1241
      %v1243 = vrot.slane %v741, 2
      %v1244 = vrot.slane %v790, 2
      %v1245 = vsel %vm1227, %v1243, %v1244
      %v1246 = vrot.slane %v742, 2
      %v1247 = vrot.slane %v791, 2
      %v1248 = vsel %vm1227, %v1246, %v1247
      %v1249 = vrot.slane %v743, 2
      %v1250 = vrot.slane %v792, 2
      %v1251 = vsel %vm1227, %v1249, %v1250
      %v1252 = vrot.slane %v744, 2
      %v1253 = vrot.slane %v793, 2
      %v1254 = vsel %vm1227, %v1252, %v1253
      %v1255 = vrot.slane %v745, 2
      %v1256 = vrot.slane %v794, 2
      %v1257 = vsel %vm1227, %v1255, %v1256
      %v1258 = vrot.slane %v746, 2
      %v1259 = vrot.slane %v795, 2
      %v1260 = vsel %vm1227, %v1258, %v1259
      %v1261 = vrot.slane %v747, 2
      %v1262 = vrot.slane %v796, 2
      %v1263 = vsel %vm1227, %v1261, %v1262
      %v1264 = vrot.slane %v748, 2
      %v1265 = vrot.slane %v797, 2
      %v1266 = vsel %vm1227, %v1264, %v1265
      %v1267 = vrot.slane %v749, 2
      %v1268 = vrot.slane %v798, 2
      %v1269 = vsel %vm1227, %v1267, %v1268
      %v1270 = vrot.slane %v750, 2
      %v1271 = vrot.slane %v799, 2
      %v1272 = vsel %vm1227, %v1270, %v1271
      %v1273 = vrot.slane %v751, 2
      %v1274 = vrot.slane %v800, 2
      %v1275 = vsel %vm1227, %v1273, %v1274
      %v1276 = vrot.slane %v752, 2
      %v1277 = vrot.slane %v801, 2
      %v1278 = vsel %vm1227, %v1276, %v1277
      %v1279 = vrot.slane %v753, 2
      %v1280 = vrot.slane %v802, 2
      %v1281 = vsel %vm1227, %v1279, %v1280
      %v1282 = vrot.slane %v754, 2
      %v1283 = vrot.slane %v803, 2
      %v1284 = vsel %vm1227, %v1282, %v1283
      %v1285 = vrot.slane %v755, 2
      %v1286 = vrot.slane %v804, 2
      %v1287 = vsel %vm1227, %v1285, %v1286
      %v1288 = vrot.slane %v756, 2
      %v1289 = vrot.slane %v805, 2
      %v1290 = vsel %vm1227, %v1288, %v1289
      %v1291 = vrot.slane %v757, 2
      %v1292 = vrot.slane %v806, 2
      %v1293 = vsel %vm1227, %v1291, %v1292
      %v1294 = vrot.slane %v758, 2
      %v1295 = vrot.slane %v807, 2
      %v1296 = vsel %vm1227, %v1294, %v1295
      %v1297 = vrot.slane %v759, 2
      %v1298 = vrot.slane %v808, 2
      %v1299 = vsel %vm1227, %v1297, %v1298
      %v1300 = vrot.slane %v760, 2
      %v1301 = vrot.slane %v809, 2
      %v1302 = vsel %vm1227, %v1300, %v1301
      %v1303 = vrot.slane %v761, 2
      %v1304 = vrot.slane %v810, 2
      %v1305 = vsel %vm1227, %v1303, %v1304
      %v1306 = vrot.slane %v762, 2
      %v1307 = vrot.slane %v811, 2
      %v1308 = vsel %vm1227, %v1306, %v1307
      %v1309 = vrot.slane %v763, 2
      %v1310 = vrot.slane %v812, 2
      %v1311 = vsel %vm1227, %v1309, %v1310
      %v1312 = vrot.slane %v764, 2
      %v1313 = vrot.slane %v813, 2
      %v1314 = vsel %vm1227, %v1312, %v1313
      %v1315 = vrot.slane %v765, 2
      %v1316 = vrot.slane %v814, 2
      %v1317 = vsel %vm1227, %v1315, %v1316
      %v1318 = vrot.slane %v766, 2
      %v1319 = vrot.slane %v815, 2
      %v1320 = vsel %vm1227, %v1318, %v1319
      %v1321 = vrot.slane %v767, 2
      %v1322 = vrot.slane %v816, 2
      %v1323 = vsel %vm1227, %v1321, %v1322
      %v1324 = vrot.slane %v768, 2
      %v1325 = vrot.slane %v817, 2
      %v1326 = vsel %vm1227, %v1324, %v1325
      %v1327 = vrot.slane %v769, 2
      %v1328 = vrot.slane %v818, 2
      %v1329 = vsel %vm1227, %v1327, %v1328
      %v1330 = vrot.slane %v770, 2
      %v1331 = vrot.slane %v819, 2
      %v1332 = vsel %vm1227, %v1330, %v1331
      %v1333 = vrot.slane %v771, 2
      %v1334 = vrot.slane %v820, 2
      %v1335 = vsel %vm1227, %v1333, %v1334
      %v1336 = vrot.slane %v772, 2
      %v1337 = vrot.slane %v821, 2
      %v1338 = vsel %vm1227, %v1336, %v1337
      %v1339 = vrot.slane %v773, 2
      %v1340 = vrot.slane %v822, 2
      %v1341 = vsel %vm1227, %v1339, %v1340
      %v1342 = vrot.slane %v774, 2
      %v1343 = vrot.slane %v823, 2
      %v1344 = vsel %vm1227, %v1342, %v1343
      %v1345 = vrot.slane %v775, 2
      %v1346 = vrot.slane %v824, 2
      %v1347 = vsel %vm1227, %v1345, %v1346
      %v1348 = vrot.slane %v776, 2
      %v1349 = vrot.slane %v825, 2
      %v1350 = vsel %vm1227, %v1348, %v1349
      %v1351 = vrot.slane %v777, 2
      %v1352 = vrot.slane %v826, 2
      %v1353 = vsel %vm1227, %v1351, %v1352
      %v1354 = vrot.slane %v778, 2
      %v1355 = vrot.slane %v827, 2
      %v1356 = vsel %vm1227, %v1354, %v1355
      %v1357 = vrot.slane %v779, 2
      %v1358 = vrot.slane %v828, 2
      %v1359 = vsel %vm1227, %v1357, %v1358
      %v1360 = vrot.slane %v780, 2
      %v1361 = vrot.slane %v829, 2
      %v1362 = vsel %vm1227, %v1360, %v1361
      %v1363 = vrot.slane %v781, 2
      %v1364 = vrot.slane %v830, 2
      %v1365 = vsel %vm1227, %v1363, %v1364
      %v1366 = vrot.slane %v782, 2
      %v1367 = vrot.slane %v831, 2
      %v1368 = vsel %vm1227, %v1366, %v1367
      %v1369 = vrot.slane %v783, 2
      %v1370 = vrot.slane %v832, 2
      %v1371 = vsel %vm1227, %v1369, %v1370
      %v1372 = vrot.slane %v784, 2
      %v1373 = vrot.slane %v833, 2
      %v1374 = vsel %vm1227, %v1372, %v1373
      %1375 = vrot.lane.b32.xlu0 %v1230, 8
      %v1376 = vpop.permute.xlu0 %1375
      %1377 = vrot.lane.b32.xlu0 %v1233, 8
      %v1378 = vpop.permute.xlu0 %1377
      %1379 = vrot.lane.b32.xlu0 %v1236, 8
      %v1380 = vpop.permute.xlu0 %1379
      %1381 = vrot.lane.b32.xlu0 %v1239, 8
      %v1382 = vpop.permute.xlu0 %1381
      %1383 = vrot.lane.b32.xlu0 %v1242, 8
      %v1384 = vpop.permute.xlu0 %1383
      %1385 = vrot.lane.b32.xlu0 %v1245, 8
      %v1386 = vpop.permute.xlu0 %1385
      %1387 = vrot.lane.b32.xlu0 %v1248, 8
      %v1388 = vpop.permute.xlu0 %1387
      %1389 = vrot.lane.b32.xlu0 %v1251, 8
      %v1390 = vpop.permute.xlu0 %1389
      %1391 = vrot.lane.b32.xlu0 %v1254, 8
      %v1392 = vpop.permute.xlu0 %1391
      %1393 = vrot.lane.b32.xlu0 %v1257, 8
      %v1394 = vpop.permute.xlu0 %1393
      %1395 = vrot.lane.b32.xlu0 %v1260, 8
      %v1396 = vpop.permute.xlu0 %1395
      %1397 = vrot.lane.b32.xlu0 %v1263, 8
      %v1398 = vpop.permute.xlu0 %1397
      %1399 = vrot.lane.b32.xlu0 %v1266, 8
      %v1400 = vpop.permute.xlu0 %1399
      %1401 = vrot.lane.b32.xlu0 %v1269, 8
      %v1402 = vpop.permute.xlu0 %1401
      %1403 = vrot.lane.b32.xlu0 %v1272, 8
      %v1404 = vpop.permute.xlu0 %1403
      %1405 = vrot.lane.b32.xlu0 %v1275, 8
      %v1406 = vpop.permute.xlu0 %1405
      %1407 = vrot.lane.b32.xlu0 %v1278, 8
      %v1408 = vpop.permute.xlu0 %1407
      %1409 = vrot.lane.b32.xlu0 %v1281, 8
      %v1410 = vpop.permute.xlu0 %1409
      %1411 = vrot.lane.b32.xlu0 %v1284, 8
      %v1412 = vpop.permute.xlu0 %1411
      %1413 = vrot.lane.b32.xlu0 %v1287, 8
      %v1414 = vpop.permute.xlu0 %1413
      %1415 = vrot.lane.b32.xlu0 %v1290, 8
      %v1416 = vpop.permute.xlu0 %1415
      %1417 = vrot.lane.b32.xlu0 %v1293, 8
      %v1418 = vpop.permute.xlu0 %1417
      %1419 = vrot.lane.b32.xlu0 %v1296, 8
      %v1420 = vpop.permute.xlu0 %1419
      %1421 = vrot.lane.b32.xlu0 %v1299, 8
      %v1422 = vpop.permute.xlu0 %1421
      %1423 = vrot.lane.b32.xlu0 %v1302, 8
      %v1424 = vpop.permute.xlu0 %1423
      %1425 = vrot.lane.b32.xlu0 %v1305, 8
      %v1426 = vpop.permute.xlu0 %1425
      %1427 = vrot.lane.b32.xlu0 %v1308, 8
      %v1428 = vpop.permute.xlu0 %1427
      %1429 = vrot.lane.b32.xlu0 %v1311, 8
      %v1430 = vpop.permute.xlu0 %1429
      %1431 = vrot.lane.b32.xlu0 %v1314, 8
      %v1432 = vpop.permute.xlu0 %1431
      %1433 = vrot.lane.b32.xlu0 %v1317, 8
      %v1434 = vpop.permute.xlu0 %1433
      %1435 = vrot.lane.b32.xlu0 %v1320, 8
      %v1436 = vpop.permute.xlu0 %1435
      %1437 = vrot.lane.b32.xlu0 %v1323, 8
      %v1438 = vpop.permute.xlu0 %1437
      %1439 = vrot.lane.b32.xlu0 %v1326, 8
      %v1440 = vpop.permute.xlu0 %1439
      %1441 = vrot.lane.b32.xlu0 %v1329, 8
      %v1442 = vpop.permute.xlu0 %1441
      %1443 = vrot.lane.b32.xlu0 %v1332, 8
      %v1444 = vpop.permute.xlu0 %1443
      %1445 = vrot.lane.b32.xlu0 %v1335, 8
      %v1446 = vpop.permute.xlu0 %1445
      %1447 = vrot.lane.b32.xlu0 %v1338, 8
      %v1448 = vpop.permute.xlu0 %1447
      %1449 = vrot.lane.b32.xlu0 %v1341, 8
      %v1450 = vpop.permute.xlu0 %1449
      %1451 = vrot.lane.b32.xlu0 %v1344, 8
      %v1452 = vpop.permute.xlu0 %1451
      %1453 = vrot.lane.b32.xlu0 %v1347, 8
      %v1454 = vpop.permute.xlu0 %1453
      %1455 = vrot.lane.b32.xlu0 %v1350, 8
      %v1456 = vpop.permute.xlu0 %1455
      %1457 = vrot.lane.b32.xlu0 %v1353, 8
      %v1458 = vpop.permute.xlu0 %1457
      %1459 = vrot.lane.b32.xlu0 %v1356, 8
      %v1460 = vpop.permute.xlu0 %1459
      %1461 = vrot.lane.b32.xlu0 %v1359, 8
      %v1462 = vpop.permute.xlu0 %1461
      %1463 = vrot.lane.b32.xlu0 %v1362, 8
      %v1464 = vpop.permute.xlu0 %1463
      %1465 = vrot.lane.b32.xlu0 %v1365, 8
      %v1466 = vpop.permute.xlu0 %1465
      %1467 = vrot.lane.b32.xlu0 %v1368, 8
      %v1468 = vpop.permute.xlu0 %1467
      %1469 = vrot.lane.b32.xlu0 %v1371, 8
      %v1470 = vpop.permute.xlu0 %1469
      %1471 = vrot.lane.b32.xlu0 %v1374, 8
      %v1472 = vpop.permute.xlu0 %1471
      %vm1522 = vcmask 31744
      %v1523 = vsel %vm1522, %v736, %v1081
      %v1524 = vsel %vm1522, %v737, %v1083
      %v1525 = vsel %vm1522, %v738, %v1085
      %v1526 = vsel %vm1522, %v739, %v1087
      %v1527 = vsel %vm1522, %v740, %v1089
      %v1528 = vsel %vm1522, %v741, %v1091
      %v1529 = vsel %vm1522, %v742, %v1093
      %v1530 = vsel %vm1522, %v743, %v1095
      %v1531 = vsel %vm1522, %v744, %v1097
      %v1532 = vsel %vm1522, %v745, %v1099
      %v1533 = vsel %vm1522, %v746, %v1101
      %v1534 = vsel %vm1522, %v747, %v1103
      %v1535 = vsel %vm1522, %v748, %v1105
      %v1536 = vsel %vm1522, %v749, %v1107
      %v1537 = vsel %vm1522, %v750, %v1109
      %v1538 = vsel %vm1522, %v751, %v1111
      %v1539 = vsel %vm1522, %v752, %v1113
      %v1540 = vsel %vm1522, %v753, %v1115
      %v1541 = vsel %vm1522, %v754, %v1117
      %v1542 = vsel %vm1522, %v755, %v1119
      %v1543 = vsel %vm1522, %v756, %v1121
      %v1544 = vsel %vm1522, %v757, %v1123
      %v1545 = vsel %vm1522, %v758, %v1125
      %v1546 = vsel %vm1522, %v759, %v1127
      %v1547 = vsel %vm1522, %v760, %v1129
      %v1548 = vsel %vm1522, %v761, %v1131
      %v1549 = vsel %vm1522, %v762, %v1133
      %v1550 = vsel %vm1522, %v763, %v1135
      %v1551 = vsel %vm1522, %v764, %v1137
      %v1552 = vsel %vm1522, %v765, %v1139
      %v1553 = vsel %vm1522, %v766, %v1141
      %v1554 = vsel %vm1522, %v767, %v1143
      %v1555 = vsel %vm1522, %v768, %v1145
      %v1556 = vsel %vm1522, %v769, %v1147
      %v1557 = vsel %vm1522, %v770, %v1149
      %v1558 = vsel %vm1522, %v771, %v1151
      %v1559 = vsel %vm1522, %v772, %v1153
      %v1560 = vsel %vm1522, %v773, %v1155
      %v1561 = vsel %vm1522, %v774, %v1157
      %v1562 = vsel %vm1522, %v775, %v1159
      %v1563 = vsel %vm1522, %v776, %v1161
      %v1564 = vsel %vm1522, %v777, %v1163
      %v1565 = vsel %vm1522, %v778, %v1165
      %v1566 = vsel %vm1522, %v779, %v1167
      %v1567 = vsel %vm1522, %v780, %v1169
      %v1568 = vsel %vm1522, %v781, %v1171
      %v1569 = vsel %vm1522, %v782, %v1173
      %v1570 = vsel %vm1522, %v783, %v1175
      %v1571 = vsel %vm1522, %v784, %v1177
      %vm1572 = vcmask 64512
      %v1573 = vsel %vm1572, %v1523, %v1376
      %v1574 = vsel %vm1572, %v1524, %v1378
      %v1575 = vsel %vm1572, %v1525, %v1380
      %v1576 = vsel %vm1572, %v1526, %v1382
      %v1577 = vsel %vm1572, %v1527, %v1384
      %v1578 = vsel %vm1572, %v1528, %v1386
      %v1579 = vsel %vm1572, %v1529, %v1388
      %v1580 = vsel %vm1572, %v1530, %v1390
      %v1581 = vsel %vm1572, %v1531, %v1392
      %v1582 = vsel %vm1572, %v1532, %v1394
      %v1583 = vsel %vm1572, %v1533, %v1396
      %v1584 = vsel %vm1572, %v1534, %v1398
      %v1585 = vsel %vm1572, %v1535, %v1400
      %v1586 = vsel %vm1572, %v1536, %v1402
      %v1587 = vsel %vm1572, %v1537, %v1404
      %v1588 = vsel %vm1572, %v1538, %v1406
      %v1589 = vsel %vm1572, %v1539, %v1408
      %v1590 = vsel %vm1572, %v1540, %v1410
      %v1591 = vsel %vm1572, %v1541, %v1412
      %v1592 = vsel %vm1572, %v1542, %v1414
      %v1593 = vsel %vm1572, %v1543, %v1416
      %v1594 = vsel %vm1572, %v1544, %v1418
      %v1595 = vsel %vm1572, %v1545, %v1420
      %v1596 = vsel %vm1572, %v1546, %v1422
      %v1597 = vsel %vm1572, %v1547, %v1424
      %v1598 = vsel %vm1572, %v1548, %v1426
      %v1599 = vsel %vm1572, %v1549, %v1428
      %v1600 = vsel %vm1572, %v1550, %v1430
      %v1601 = vsel %vm1572, %v1551, %v1432
      %v1602 = vsel %vm1572, %v1552, %v1434
      %v1603 = vsel %vm1572, %v1553, %v1436
      %v1604 = vsel %vm1572, %v1554, %v1438
      %v1605 = vsel %vm1572, %v1555, %v1440
      %v1606 = vsel %vm1572, %v1556, %v1442
      %v1607 = vsel %vm1572, %v1557, %v1444
      %v1608 = vsel %vm1572, %v1558, %v1446
      %v1609 = vsel %vm1572, %v1559, %v1448
      %v1610 = vsel %vm1572, %v1560, %v1450
      %v1611 = vsel %vm1572, %v1561, %v1452
      %v1612 = vsel %vm1572, %v1562, %v1454
      %v1613 = vsel %vm1572, %v1563, %v1456
      %v1614 = vsel %vm1572, %v1564, %v1458
      %v1615 = vsel %vm1572, %v1565, %v1460
      %v1616 = vsel %vm1572, %v1566, %v1462
      %v1617 = vsel %vm1572, %v1567, %v1464
      %v1618 = vsel %vm1572, %v1568, %v1466
      %v1619 = vsel %vm1572, %v1569, %v1468
      %v1620 = vsel %vm1572, %v1570, %v1470
      %v1621 = vsel %vm1572, %v1571, %v1472
      %v1622 = vpack.c.bf16 %v1573, %v1573
      %v1623 = vpack.c.bf16 %v1574, %v1574
      %v1624 = vpack.c.bf16 %v1575, %v1575
      %v1625 = vpack.c.bf16 %v1576, %v1576
      %v1626 = vpack.c.bf16 %v1577, %v1577
      %v1627 = vpack.c.bf16 %v1578, %v1578
      %v1628 = vpack.c.bf16 %v1579, %v1579
      %v1629 = vpack.c.bf16 %v1580, %v1580
      %v1630 = vpack.c.bf16 %v1581, %v1581
      %v1631 = vpack.c.bf16 %v1582, %v1582
      %v1632 = vpack.c.bf16 %v1583, %v1583
      %v1633 = vpack.c.bf16 %v1584, %v1584
      %v1634 = vpack.c.bf16 %v1585, %v1585
      %v1635 = vpack.c.bf16 %v1586, %v1586
      %v1636 = vpack.c.bf16 %v1587, %v1587
      %v1637 = vpack.c.bf16 %v1588, %v1588
      %v1638 = vpack.c.bf16 %v1589, %v1589
      %v1639 = vpack.c.bf16 %v1590, %v1590
      %v1640 = vpack.c.bf16 %v1591, %v1591
      %v1641 = vpack.c.bf16 %v1592, %v1592
      %v1642 = vpack.c.bf16 %v1593, %v1593
      %v1643 = vpack.c.bf16 %v1594, %v1594
      %v1644 = vpack.c.bf16 %v1595, %v1595
      %v1645 = vpack.c.bf16 %v1596, %v1596
      %v1646 = vpack.c.bf16 %v1597, %v1597
      %v1647 = vpack.c.bf16 %v1598, %v1598
      %v1648 = vpack.c.bf16 %v1599, %v1599
      %v1649 = vpack.c.bf16 %v1600, %v1600
      %v1650 = vpack.c.bf16 %v1601, %v1601
      %v1651 = vpack.c.bf16 %v1602, %v1602
      %v1652 = vpack.c.bf16 %v1603, %v1603
      %v1653 = vpack.c.bf16 %v1604, %v1604
      %v1654 = vpack.c.bf16 %v1605, %v1605
      %v1655 = vpack.c.bf16 %v1606, %v1606
      %v1656 = vpack.c.bf16 %v1607, %v1607
      %v1657 = vpack.c.bf16 %v1608, %v1608
      %v1658 = vpack.c.bf16 %v1609, %v1609
      %v1659 = vpack.c.bf16 %v1610, %v1610
      %v1660 = vpack.c.bf16 %v1611, %v1611
      %v1661 = vpack.c.bf16 %v1612, %v1612
      %v1662 = vpack.c.bf16 %v1613, %v1613
      %v1663 = vpack.c.bf16 %v1614, %v1614
      %v1664 = vpack.c.bf16 %v1615, %v1615
      %v1665 = vpack.c.bf16 %v1616, %v1616
      %v1666 = vpack.c.bf16 %v1617, %v1617
      %v1667 = vpack.c.bf16 %v1618, %v1618
      %v1668 = vpack.c.bf16 %v1619, %v1619
      %v1669 = vpack.c.bf16 %v1620, %v1620
      %v1670 = vpack.c.bf16 %v1621, %v1621
      %v1671 = vld [vmem:[%s3] sm:$0xf]
      %v1672 = vld [vmem:[%s3 + $0x4] sm:$0x3]
      %s1673 = scalar_lea.vmem %s3, 8
      %v1674 = vld [vmem:[%s1673] sm:$0xf]
      %v1675 = vld [vmem:[%s1673 + $0x4] sm:$0x3]
      %v1708 = vunpack.c.l.b16 %v1623
      %v1709 = vunpack.c.l.b16 %v1624
      %v1710 = vunpack.c.l.b16 %v1625
      %v1711 = vunpack.c.l.b16 %v1626
      %v1712 = vunpack.c.l.b16 %v1627
      %v1713 = vunpack.c.l.b16 %v1628
      %v1714 = vunpack.c.l.b16 %v1629
      %v1715 = vunpack.c.l.b16 %v1630
      %v1716 = vunpack.c.l.b16 %v1631
      %v1717 = vunpack.c.l.b16 %v1632
      %v1718 = vunpack.c.l.b16 %v1633
      %v1719 = vunpack.c.l.b16 %v1634
      %v1720 = vunpack.c.l.b16 %v1635
      %v1721 = vunpack.c.l.b16 %v1636
      %v1722 = vunpack.c.l.b16 %v1637
      %v1723 = vunpack.c.l.b16 %v1638
      %v1724 = vunpack.c.l.b16 %v1639
      %v1725 = vunpack.c.l.b16 %v1640
      %v1726 = vunpack.c.l.b16 %v1641
      %v1727 = vunpack.c.l.b16 %v1642
      %v1728 = vunpack.c.l.b16 %v1643
      %v1729 = vunpack.c.l.b16 %v1644
      %v1730 = vunpack.c.l.b16 %v1645
      %v1731 = vunpack.c.l.b16 %v1646
      %v1732 = vunpack.c.l.b16 %v1647
      %v1733 = vunpack.c.l.b16 %v1648
      %v1734 = vunpack.c.l.b16 %v1649
      %v1735 = vunpack.c.l.b16 %v1650
      %v1736 = vunpack.c.l.b16 %v1651
      %v1737 = vunpack.c.l.b16 %v1652
      %v1738 = vunpack.c.l.b16 %v1653
      %v1739 = vunpack.c.l.b16 %v1654
      %v1740 = vpack.c.b16 %v1709, %v1708
      %v1741 = vpack.c.b16 %v1711, %v1710
      %v1742 = vpack.c.b16 %v1713, %v1712
      %v1743 = vpack.c.b16 %v1715, %v1714
      %v1744 = vpack.c.b16 %v1717, %v1716
      %v1745 = vpack.c.b16 %v1719, %v1718
      %v1746 = vpack.c.b16 %v1721, %v1720
      %v1747 = vpack.c.b16 %v1723, %v1722
      %v1748 = vpack.c.b16 %v1725, %v1724
      %v1749 = vpack.c.b16 %v1727, %v1726
      %v1750 = vpack.c.b16 %v1729, %v1728
      %v1751 = vpack.c.b16 %v1731, %v1730
      %v1752 = vpack.c.b16 %v1733, %v1732
      %v1753 = vpack.c.b16 %v1735, %v1734
      %v1754 = vpack.c.b16 %v1737, %v1736
      %v1755 = vpack.c.b16 %v1739, %v1738
      %v1758 = vunpack.c.l.b16 %v1674
      %v1759 = vunpack.c.l.b16 %v1675
      %v1760 = vpack.c.b16 %v1759, %v1758
      %vm1761 = vcmask 97280
      %v1763 = vsel %vm1761, %v1740, 0
      %v1766 = vsel %vm1761, %v1741, 0
      %v1769 = vsel %vm1761, %v1742, 0
      %v1772 = vsel %vm1761, %v1743, 0
      %v1775 = vsel %vm1761, %v1744, 0
      %v1778 = vsel %vm1761, %v1745, 0
      %v1781 = vsel %vm1761, %v1746, 0
      %v1784 = vsel %vm1761, %v1747, 0
      %v1787 = vsel %vm1761, %v1748, 0
      %v1790 = vsel %vm1761, %v1749, 0
      %v1793 = vsel %vm1761, %v1750, 0
      %v1796 = vsel %vm1761, %v1751, 0
      %v1799 = vsel %vm1761, %v1752, 0
      %v1802 = vsel %vm1761, %v1753, 0
      %v1805 = vsel %vm1761, %v1754, 0
      %v1808 = vsel %vm1761, %v1755, 0
      %v1811 = vsel %vm1227, %v1760, 0
      %1813 = vmatprep.subr.bf16.mxu0 0
      %1814 = vmatpush1.bf16.msra.mxu0 %v1811
      %1815 = vmatprep.subr.bf16.mxu0 0
      %1816 = vmatpush1.bf16.msra.mxu0 0
      %1817 = vmatprep.subr.bf16.mxu0 0
      %1818 = vmatpush1.bf16.msra.mxu0 0
      %1819 = vmatprep.subr.bf16.mxu0 0
      %1820 = vmatpush1.bf16.msra.mxu0 0
      %1821 = vmatprep.subr.bf16.mxu0 0
      %1822 = vmatpush1.bf16.msra.mxu0 0
      %1823 = vmatprep.subr.bf16.mxu0 0
      %1824 = vmatpush1.bf16.msra.mxu0 0
      %1825 = vmatprep.subr.bf16.mxu0 0
      %1826 = vmatpush1.bf16.msra.mxu0 0
      %1827 = vmatprep.subr.bf16.mxu0 0
      %1828 = vmatpush1.bf16.msra.mxu0 0
      %1829 = vmatprep.subr.bf16.mxu0 0
      %1830 = vmatpush1.bf16.msra.mxu0 0
      %1831 = vmatprep.subr.bf16.mxu0 0
      %1832 = vmatpush1.bf16.msra.mxu0 0
      %1833 = vmatprep.subr.bf16.mxu0 0
      %1834 = vmatpush1.bf16.msra.mxu0 0
      %1835 = vmatprep.subr.bf16.mxu0 0
      %1836 = vmatpush1.bf16.msra.mxu0 0
      %1837 = vmatprep.subr.bf16.mxu0 0
      %1838 = vmatpush1.bf16.msra.mxu0 0
      %1839 = vmatprep.subr.bf16.mxu0 0
      %1840 = vmatpush1.bf16.msra.mxu0 0
      %1841 = vmatprep.subr.bf16.mxu0 0
      %1842 = vmatpush1.bf16.msra.mxu0 0
      %1843 = vmatprep.subr.bf16.mxu0 0
      %1844 = vmatpush1.bf16.msra.mxu0 0
      %1845 = vmatprep.mubr.bf16.mxu0 0
      %1846 = vmatmul.mubr.bf16.gmra.mrb[0].mxu0 %v1763
      %v1847 = vpop.f32.mrb[0].mxu0
      %v1848 = vadd.f32 0.0, %v1847
      %v1849 = vpop.f32.mrb[0].mxu0
      %v1850 = vpop.f32.mrb[0].mxu0
      %v1851 = vadd.f32 0.0, %v1850
      %v1852 = vpop.f32.mrb[0].mxu0
      %1853 = vmatprep.mubr.bf16.mxu0 0
      %1854 = vmatmul.mubr.bf16.gmra.mrb[0].mxu0 %v1766
      %v1855 = vpop.f32.mrb[0].mxu0
      %v1856 = vadd.f32 0.0, %v1855
      %v1857 = vpop.f32.mrb[0].mxu0
      %v1858 = vpop.f32.mrb[0].mxu0
      %v1859 = vadd.f32 0.0, %v1858
      %v1860 = vpop.f32.mrb[0].mxu0
      %1861 = vmatprep.mubr.bf16.mxu0 0
      %1862 = vmatmul.mubr.bf16.gmra.mrb[0].mxu0 %v1769
      %v1863 = vpop.f32.mrb[0].mxu0
      %v1864 = vadd.f32 0.0, %v1863
      %v1865 = vpop.f32.mrb[0].mxu0
      %v1866 = vpop.f32.mrb[0].mxu0
      %v1867 = vadd.f32 0.0, %v1866
      %v1868 = vpop.f32.mrb[0].mxu0
      %1869 = vmatprep.mubr.bf16.mxu0 0
      %1870 = vmatmul.mubr.bf16.gmra.mrb[0].mxu0 %v1772
      %v1871 = vpop.f32.mrb[0].mxu0
      %v1872 = vadd.f32 0.0, %v1871
      %v1873 = vpop.f32.mrb[0].mxu0
      %v1874 = vpop.f32.mrb[0].mxu0
      %v1875 = vadd.f32 0.0, %v1874
      %v1876 = vpop.f32.mrb[0].mxu0
      %1877 = vmatprep.mubr.bf16.mxu0 0
      %1878 = vmatmul.mubr.bf16.gmra.mrb[0].mxu0 %v1775
      %v1879 = vpop.f32.mrb[0].mxu0
      %v1880 = vadd.f32 0.0, %v1879
      %v1881 = vpop.f32.mrb[0].mxu0
      %v1882 = vpop.f32.mrb[0].mxu0
      %v1883 = vadd.f32 0.0, %v1882
      %v1884 = vpop.f32.mrb[0].mxu0
      %1885 = vmatprep.mubr.bf16.mxu0 0
      %1886 = vmatmul.mubr.bf16.gmra.mrb[0].mxu0 %v1778
      %v1887 = vpop.f32.mrb[0].mxu0
      %v1888 = vadd.f32 0.0, %v1887
      %v1889 = vpop.f32.mrb[0].mxu0
      %v1890 = vpop.f32.mrb[0].mxu0
      %v1891 = vadd.f32 0.0, %v1890
      %v1892 = vpop.f32.mrb[0].mxu0
      %1893 = vmatprep.mubr.bf16.mxu0 0
      %1894 = vmatmul.mubr.bf16.gmra.mrb[0].mxu0 %v1781
      %v1895 = vpop.f32.mrb[0].mxu0
      %v1896 = vadd.f32 0.0, %v1895
      %v1897 = vpop.f32.mrb[0].mxu0
      %v1898 = vpop.f32.mrb[0].mxu0
      %v1899 = vadd.f32 0.0, %v1898
      %v1900 = vpop.f32.mrb[0].mxu0
      %1901 = vmatprep.mubr.bf16.mxu0 0
      %1902 = vmatmul.mubr.bf16.gmra.mrb[0].mxu0 %v1784
      %v1903 = vpop.f32.mrb[0].mxu0
      %v1904 = vadd.f32 0.0, %v1903
      %v1905 = vpop.f32.mrb[0].mxu0
      %v1906 = vpop.f32.mrb[0].mxu0
      %v1907 = vadd.f32 0.0, %v1906
      %v1908 = vpop.f32.mrb[0].mxu0
      %1909 = vmatprep.mubr.bf16.mxu0 0
      %1910 = vmatmul.mubr.bf16.gmra.mrb[0].mxu0 %v1787
      %v1911 = vpop.f32.mrb[0].mxu0
      %v1912 = vadd.f32 0.0, %v1911
      %v1913 = vpop.f32.mrb[0].mxu0
      %v1914 = vpop.f32.mrb[0].mxu0
      %v1915 = vadd.f32 0.0, %v1914
      %v1916 = vpop.f32.mrb[0].mxu0
      %1917 = vmatprep.mubr.bf16.mxu0 0
      %1918 = vmatmul.mubr.bf16.gmra.mrb[0].mxu0 %v1790
      %v1919 = vpop.f32.mrb[0].mxu0
      %v1920 = vadd.f32 0.0, %v1919
      %v1921 = vpop.f32.mrb[0].mxu0
      %v1922 = vpop.f32.mrb[0].mxu0
      %v1923 = vadd.f32 0.0, %v1922
      %v1924 = vpop.f32.mrb[0].mxu0
      %1925 = vmatprep.mubr.bf16.mxu0 0
      %1926 = vmatmul.mubr.bf16.gmra.mrb[0].mxu0 %v1793
      %v1927 = vpop.f32.mrb[0].mxu0
      %v1928 = vadd.f32 0.0, %v1927
      %v1929 = vpop.f32.mrb[0].mxu0
      %v1930 = vpop.f32.mrb[0].mxu0
      %v1931 = vadd.f32 0.0, %v1930
      %v1932 = vpop.f32.mrb[0].mxu0
      %1933 = vmatprep.mubr.bf16.mxu0 0
      %1934 = vmatmul.mubr.bf16.gmra.mrb[0].mxu0 %v1796
      %v1935 = vpop.f32.mrb[0].mxu0
      %v1936 = vadd.f32 0.0, %v1935
      %v1937 = vpop.f32.mrb[0].mxu0
      %v1938 = vpop.f32.mrb[0].mxu0
      %v1939 = vadd.f32 0.0, %v1938
      %v1940 = vpop.f32.mrb[0].mxu0
      %1941 = vmatprep.mubr.bf16.mxu0 0
      %1942 = vmatmul.mubr.bf16.gmra.mrb[0].mxu0 %v1799
      %v1943 = vpop.f32.mrb[0].mxu0
      %v1944 = vadd.f32 0.0, %v1943
      %v1945 = vpop.f32.mrb[0].mxu0
      %v1946 = vpop.f32.mrb[0].mxu0
      %v1947 = vadd.f32 0.0, %v1946
      %v1948 = vpop.f32.mrb[0].mxu0
      %1949 = vmatprep.mubr.bf16.mxu0 0
      %1950 = vmatmul.mubr.bf16.gmra.mrb[0].mxu0 %v1802
      %v1951 = vpop.f32.mrb[0].mxu0
      %v1952 = vadd.f32 0.0, %v1951
      %v1953 = vpop.f32.mrb[0].mxu0
      %v1954 = vpop.f32.mrb[0].mxu0
      %v1955 = vadd.f32 0.0, %v1954
      %v1956 = vpop.f32.mrb[0].mxu0
      %1957 = vmatprep.mubr.bf16.mxu0 0
      %1958 = vmatmul.mubr.bf16.gmra.mrb[0].mxu0 %v1805
      %v1959 = vpop.f32.mrb[0].mxu0
      %v1960 = vadd.f32 0.0, %v1959
      %v1961 = vpop.f32.mrb[0].mxu0
      %v1962 = vpop.f32.mrb[0].mxu0
      %v1963 = vadd.f32 0.0, %v1962
      %v1964 = vpop.f32.mrb[0].mxu0
      %1965 = vmatprep.mubr.bf16.mxu0 0
      %1966 = vmatmul.mubr.bf16.gmra.mrb[0].mxu0 %v1808
      %v1967 = vpop.f32.mrb[0].mxu0
      %v1968 = vadd.f32 0.0, %v1967
      %v1969 = vpop.f32.mrb[0].mxu0
      %v1970 = vpop.f32.mrb[0].mxu0
      %v1971 = vadd.f32 0.0, %v1970
      %v1972 = vpop.f32.mrb[0].mxu0
      %1973 = vdwg.mxu0
      %v1975 = vunpack.c.l.b16 %v1622
      %v1976 = vpack.c.b16 %v1708, %v1975
      %v1977 = vpack.c.b16 %v1710, %v1709
      %v1978 = vpack.c.b16 %v1712, %v1711
      %v1979 = vpack.c.b16 %v1714, %v1713
      %v1980 = vpack.c.b16 %v1716, %v1975
      %v1981 = vpack.c.b16 %v1718, %v1717
      %v1982 = vpack.c.b16 %v1720, %v1719
      %v1983 = vpack.c.b16 %v1722, %v1721
      %v1984 = vpack.c.b16 %v1724, %v1975
      %v1985 = vpack.c.b16 %v1726, %v1725
      %v1986 = vpack.c.b16 %v1728, %v1727
      %v1987 = vpack.c.b16 %v1730, %v1729
      %v1988 = vpack.c.b16 %v1732, %v1975
      %v1989 = vpack.c.b16 %v1734, %v1733
      %v1990 = vpack.c.b16 %v1736, %v1735
      %v1991 = vpack.c.b16 %v1738, %v1737
      %v1994 = vunpack.c.l.b16 %v1671
      %v1995 = vunpack.c.l.b16 %v1672
      %v1996 = vpack.c.b16 %v1995, %v1994
      %v1998 = vsel %vm1761, %v1976, 0
      %v2001 = vsel %vm1761, %v1977, 0
      %v2004 = vsel %vm1761, %v1978, 0
      %v2007 = vsel %vm1761, %v1979, 0
      %v2010 = vsel %vm1761, %v1980, 0
      %v2013 = vsel %vm1761, %v1981, 0
      %v2016 = vsel %vm1761, %v1982, 0
      %v2019 = vsel %vm1761, %v1983, 0
      %v2022 = vsel %vm1761, %v1984, 0
      %v2025 = vsel %vm1761, %v1985, 0
      %v2028 = vsel %vm1761, %v1986, 0
      %v2031 = vsel %vm1761, %v1987, 0
      %v2034 = vsel %vm1761, %v1988, 0
      %v2037 = vsel %vm1761, %v1989, 0
      %v2040 = vsel %vm1761, %v1990, 0
      %v2043 = vsel %vm1761, %v1991, 0
      %v2046 = vsel %vm1227, %v1996, 0
      %2048 = vmatprep.subr.bf16.mxu0 0
      %2049 = vmatpush1.bf16.msra.mxu0 %v2046
      %2050 = vmatprep.subr.bf16.mxu0 0
      %2051 = vmatpush1.bf16.msra.mxu0 0
      %2052 = vmatprep.subr.bf16.mxu0 0
      %2053 = vmatpush1.bf16.msra.mxu0 0
      %2054 = vmatprep.subr.bf16.mxu0 0
      %2055 = vmatpush1.bf16.msra.mxu0 0
      %2056 = vmatprep.subr.bf16.mxu0 0
      %2057 = vmatpush1.bf16.msra.mxu0 0
      %2058 = vmatprep.subr.bf16.mxu0 0
      %2059 = vmatpush1.bf16.msra.mxu0 0
      %2060 = vmatprep.subr.bf16.mxu0 0
      %2061 = vmatpush1.bf16.msra.mxu0 0
      %2062 = vmatprep.subr.bf16.mxu0 0
      %2063 = vmatpush1.bf16.msra.mxu0 0
      %2064 = vmatprep.subr.bf16.mxu0 0
      %2065 = vmatpush1.bf16.msra.mxu0 0
      %2066 = vmatprep.subr.bf16.mxu0 0
      %2067 = vmatpush1.bf16.msra.mxu0 0
      %2068 = vmatprep.subr.bf16.mxu0 0
      %2069 = vmatpush1.bf16.msra.mxu0 0
      %2070 = vmatprep.subr.bf16.mxu0 0
      %2071 = vmatpush1.bf16.msra.mxu0 0
      %2072 = vmatprep.subr.bf16.mxu0 0
      %2073 = vmatpush1.bf16.msra.mxu0 0
      %2074 = vmatprep.subr.bf16.mxu0 0
      %2075 = vmatpush1.bf16.msra.mxu0 0
      %2076 = vmatprep.subr.bf16.mxu0 0
      %2077 = vmatpush1.bf16.msra.mxu0 0
      %2078 = vmatprep.subr.bf16.mxu0 0
      %2079 = vmatpush1.bf16.msra.mxu0 0
      %2080 = vmatprep.mubr.bf16.mxu0 0
      %2081 = vmatmul.mubr.bf16.gmra.mrb[0].mxu0 %v1998
      %v2082 = vpop.f32.mrb[0].mxu0
      %v2083 = vadd.f32 %v1848, %v2082
      %v2084 = vpop.f32.mrb[0].mxu0
      %v2085 = vpop.f32.mrb[0].mxu0
      %v2086 = vadd.f32 %v1851, %v2085
      %v2087 = vpop.f32.mrb[0].mxu0
      %2088 = vmatprep.mubr.bf16.mxu0 0
      %2089 = vmatmul.mubr.bf16.gmra.mrb[0].mxu0 %v2001
      %v2090 = vpop.f32.mrb[0].mxu0
      %v2091 = vadd.f32 %v1856, %v2090
      %v2092 = vpop.f32.mrb[0].mxu0
      %v2093 = vpop.f32.mrb[0].mxu0
      %v2094 = vadd.f32 %v1859, %v2093
      %v2095 = vpop.f32.mrb[0].mxu0
      %2096 = vmatprep.mubr.bf16.mxu0 0
      %2097 = vmatmul.mubr.bf16.gmra.mrb[0].mxu0 %v2004
      %v2098 = vpop.f32.mrb[0].mxu0
      %v2099 = vadd.f32 %v1864, %v2098
      %v2100 = vpop.f32.mrb[0].mxu0
      %v2101 = vpop.f32.mrb[0].mxu0
      %v2102 = vadd.f32 %v1867, %v2101
      %v2103 = vpop.f32.mrb[0].mxu0
      %2104 = vmatprep.mubr.bf16.mxu0 0
      %2105 = vmatmul.mubr.bf16.gmra.mrb[0].mxu0 %v2007
      %v2106 = vpop.f32.mrb[0].mxu0
      %v2107 = vadd.f32 %v1872, %v2106
      %v2108 = vpop.f32.mrb[0].mxu0
      %v2109 = vpop.f32.mrb[0].mxu0
      %v2110 = vadd.f32 %v1875, %v2109
      %v2111 = vpop.f32.mrb[0].mxu0
      %2112 = vmatprep.mubr.bf16.mxu0 0
      %2113 = vmatmul.mubr.bf16.gmra.mrb[0].mxu0 %v2010
      %v2114 = vpop.f32.mrb[0].mxu0
      %v2115 = vadd.f32 %v1880, %v2114
      %v2116 = vpop.f32.mrb[0].mxu0
      %v2117 = vpop.f32.mrb[0].mxu0
      %v2118 = vadd.f32 %v1883, %v2117
      %v2119 = vpop.f32.mrb[0].mxu0
      %2120 = vmatprep.mubr.bf16.mxu0 0
      %2121 = vmatmul.mubr.bf16.gmra.mrb[0].mxu0 %v2013
      %v2122 = vpop.f32.mrb[0].mxu0
      %v2123 = vadd.f32 %v1888, %v2122
      %v2124 = vpop.f32.mrb[0].mxu0
      %v2125 = vpop.f32.mrb[0].mxu0
      %v2126 = vadd.f32 %v1891, %v2125
      %v2127 = vpop.f32.mrb[0].mxu0
      %2128 = vmatprep.mubr.bf16.mxu0 0
      %2129 = vmatmul.mubr.bf16.gmra.mrb[0].mxu0 %v2016
      %v2130 = vpop.f32.mrb[0].mxu0
      %v2131 = vadd.f32 %v1896, %v2130
      %v2132 = vpop.f32.mrb[0].mxu0
      %v2133 = vpop.f32.mrb[0].mxu0
      %v2134 = vadd.f32 %v1899, %v2133
      %v2135 = vpop.f32.mrb[0].mxu0
      %2136 = vmatprep.mubr.bf16.mxu0 0
      %2137 = vmatmul.mubr.bf16.gmra.mrb[0].mxu0 %v2019
      %v2138 = vpop.f32.mrb[0].mxu0
      %v2139 = vadd.f32 %v1904, %v2138
      %v2140 = vpop.f32.mrb[0].mxu0
      %v2141 = vpop.f32.mrb[0].mxu0
      %v2142 = vadd.f32 %v1907, %v2141
      %v2143 = vpop.f32.mrb[0].mxu0
      %2144 = vmatprep.mubr.bf16.mxu0 0
      %2145 = vmatmul.mubr.bf16.gmra.mrb[0].mxu0 %v2022
      %v2146 = vpop.f32.mrb[0].mxu0
      %v2147 = vadd.f32 %v1912, %v2146
      %v2148 = vpop.f32.mrb[0].mxu0
      %v2149 = vpop.f32.mrb[0].mxu0
      %v2150 = vadd.f32 %v1915, %v2149
      %v2151 = vpop.f32.mrb[0].mxu0
      %2152 = vmatprep.mubr.bf16.mxu0 0
      %2153 = vmatmul.mubr.bf16.gmra.mrb[0].mxu0 %v2025
      %v2154 = vpop.f32.mrb[0].mxu0
      %v2155 = vadd.f32 %v1920, %v2154
      %v2156 = vpop.f32.mrb[0].mxu0
      %v2157 = vpop.f32.mrb[0].mxu0
      %v2158 = vadd.f32 %v1923, %v2157
      %v2159 = vpop.f32.mrb[0].mxu0
      %2160 = vmatprep.mubr.bf16.mxu0 0
      %2161 = vmatmul.mubr.bf16.gmra.mrb[0].mxu0 %v2028
      %v2162 = vpop.f32.mrb[0].mxu0
      %v2163 = vadd.f32 %v1928, %v2162
      %v2164 = vpop.f32.mrb[0].mxu0
      %v2165 = vpop.f32.mrb[0].mxu0
      %v2166 = vadd.f32 %v1931, %v2165
      %v2167 = vpop.f32.mrb[0].mxu0
      %2168 = vmatprep.mubr.bf16.mxu0 0
      %2169 = vmatmul.mubr.bf16.gmra.mrb[0].mxu0 %v2031
      %v2170 = vpop.f32.mrb[0].mxu0
      %v2171 = vadd.f32 %v1936, %v2170
      %v2172 = vpop.f32.mrb[0].mxu0
      %v2173 = vpop.f32.mrb[0].mxu0
      %v2174 = vadd.f32 %v1939, %v2173
      %v2175 = vpop.f32.mrb[0].mxu0
      %2176 = vmatprep.mubr.bf16.mxu0 0
      %2177 = vmatmul.mubr.bf16.gmra.mrb[0].mxu0 %v2034
      %v2178 = vpop.f32.mrb[0].mxu0
      %v2179 = vadd.f32 %v1944, %v2178
      %v2180 = vpop.f32.mrb[0].mxu0
      %v2181 = vpop.f32.mrb[0].mxu0
      %v2182 = vadd.f32 %v1947, %v2181
      %v2183 = vpop.f32.mrb[0].mxu0
      %2184 = vmatprep.mubr.bf16.mxu0 0
      %2185 = vmatmul.mubr.bf16.gmra.mrb[0].mxu0 %v2037
      %v2186 = vpop.f32.mrb[0].mxu0
      %v2187 = vadd.f32 %v1952, %v2186
      %v2188 = vpop.f32.mrb[0].mxu0
      %v2189 = vpop.f32.mrb[0].mxu0
      %v2190 = vadd.f32 %v1955, %v2189
      %v2191 = vpop.f32.mrb[0].mxu0
      %2192 = vmatprep.mubr.bf16.mxu0 0
      %2193 = vmatmul.mubr.bf16.gmra.mrb[0].mxu0 %v2040
      %v2194 = vpop.f32.mrb[0].mxu0
      %v2195 = vadd.f32 %v1960, %v2194
      %v2196 = vpop.f32.mrb[0].mxu0
      %v2197 = vpop.f32.mrb[0].mxu0
      %v2198 = vadd.f32 %v1963, %v2197
      %v2199 = vpop.f32.mrb[0].mxu0
      %2200 = vmatprep.mubr.bf16.mxu0 0
      %2201 = vmatmul.mubr.bf16.gmra.mrb[0].mxu0 %v2043
      %v2202 = vpop.f32.mrb[0].mxu0
      %v2203 = vadd.f32 %v1968, %v2202
      %v2204 = vpop.f32.mrb[0].mxu0
      %v2205 = vpop.f32.mrb[0].mxu0
      %v2206 = vadd.f32 %v1971, %v2205
      %v2207 = vpop.f32.mrb[0].mxu0
      %2208 = vdwg.mxu0
      %s2209 = scalar_lea.vmem %s3, 16
      %v2210 = vld [vmem:[%s2209] sm:$0xf]
      %v2211 = vld [vmem:[%s2209 + $0x4] sm:$0x3]
      %v2212 = vpack.c.b16 %v1975, %v1715
      %v2213 = vpack.c.b16 %v1975, %v1723
      %v2214 = vpack.c.b16 %v1975, %v1731
      %v2215 = vpack.c.b16 %v1975, %v1739
      %v2218 = vunpack.c.l.b16 %v2210
      %v2219 = vunpack.c.l.b16 %v2211
      %v2220 = vpack.c.b16 %v2219, %v2218
      %v2222 = vsel %vm1761, %v2212, 0
      %v2225 = vsel %vm1761, %v2213, 0
      %v2228 = vsel %vm1761, %v2214, 0
      %v2231 = vsel %vm1761, %v2215, 0
      %v2234 = vsel %vm1227, %v2220, 0
      %2236 = vmatprep.subr.bf16.mxu0 0
      %2237 = vmatpush1.bf16.msra.mxu0 %v2234
      %2238 = vmatprep.subr.bf16.mxu0 0
      %2239 = vmatpush1.bf16.msra.mxu0 0
      %2240 = vmatprep.subr.bf16.mxu0 0
      %2241 = vmatpush1.bf16.msra.mxu0 0
      %2242 = vmatprep.subr.bf16.mxu0 0
      %2243 = vmatpush1.bf16.msra.mxu0 0
      %2244 = vmatprep.subr.bf16.mxu0 0
      %2245 = vmatpush1.bf16.msra.mxu0 0
      %2246 = vmatprep.subr.bf16.mxu0 0
      %2247 = vmatpush1.bf16.msra.mxu0 0
      %2248 = vmatprep.subr.bf16.mxu0 0
      %2249 = vmatpush1.bf16.msra.mxu0 0
      %2250 = vmatprep.subr.bf16.mxu0 0
      %2251 = vmatpush1.bf16.msra.mxu0 0
      %2252 = vmatprep.subr.bf16.mxu0 0
      %2253 = vmatpush1.bf16.msra.mxu0 0
      %2254 = vmatprep.subr.bf16.mxu0 0
      %2255 = vmatpush1.bf16.msra.mxu0 0
      %2256 = vmatprep.subr.bf16.mxu0 0
      %2257 = vmatpush1.bf16.msra.mxu0 0
      %2258 = vmatprep.subr.bf16.mxu0 0
      %2259 = vmatpush1.bf16.msra.mxu0 0
      %2260 = vmatprep.subr.bf16.mxu0 0
      %2261 = vmatpush1.bf16.msra.mxu0 0
      %2262 = vmatprep.subr.bf16.mxu0 0
      %2263 = vmatpush1.bf16.msra.mxu0 0
      %2264 = vmatprep.subr.bf16.mxu0 0
      %2265 = vmatpush1.bf16.msra.mxu0 0
      %2266 = vmatprep.subr.bf16.mxu0 0
      %2267 = vmatpush1.bf16.msra.mxu0 0
      %2268 = vmatprep.mubr.bf16.mxu0 0
      %2269 = vmatmul.mubr.bf16.gmra.mrb[0].mxu0 %v2001
      %v2270 = vpop.f32.mrb[0].mxu0
      %v2271 = vadd.f32 0.0, %v2270
      %v2272 = vpop.f32.mrb[0].mxu0
      %v2273 = vpop.f32.mrb[0].mxu0
      %v2274 = vadd.f32 0.0, %v2273
      %v2275 = vpop.f32.mrb[0].mxu0
      %2276 = vmatprep.mubr.bf16.mxu0 0
      %2277 = vmatmul.mubr.bf16.gmra.mrb[0].mxu0 %v2004
      %v2278 = vpop.f32.mrb[0].mxu0
      %v2279 = vadd.f32 0.0, %v2278
      %v2280 = vpop.f32.mrb[0].mxu0
      %v2281 = vpop.f32.mrb[0].mxu0
      %v2282 = vadd.f32 0.0, %v2281
      %v2283 = vpop.f32.mrb[0].mxu0
      %2284 = vmatprep.mubr.bf16.mxu0 0
      %2285 = vmatmul.mubr.bf16.gmra.mrb[0].mxu0 %v2007
      %v2286 = vpop.f32.mrb[0].mxu0
      %v2287 = vadd.f32 0.0, %v2286
      %v2288 = vpop.f32.mrb[0].mxu0
      %v2289 = vpop.f32.mrb[0].mxu0
      %v2290 = vadd.f32 0.0, %v2289
      %v2291 = vpop.f32.mrb[0].mxu0
      %2292 = vmatprep.mubr.bf16.mxu0 0
      %2293 = vmatmul.mubr.bf16.gmra.mrb[0].mxu0 %v2222
      %v2294 = vpop.f32.mrb[0].mxu0
      %v2295 = vadd.f32 0.0, %v2294
      %v2296 = vpop.f32.mrb[0].mxu0
      %v2297 = vpop.f32.mrb[0].mxu0
      %v2298 = vadd.f32 0.0, %v2297
      %v2299 = vpop.f32.mrb[0].mxu0
      %2300 = vmatprep.mubr.bf16.mxu0 0
      %2301 = vmatmul.mubr.bf16.gmra.mrb[0].mxu0 %v2013
      %v2302 = vpop.f32.mrb[0].mxu0
      %v2303 = vadd.f32 0.0, %v2302
      %v2304 = vpop.f32.mrb[0].mxu0
      %v2305 = vpop.f32.mrb[0].mxu0
      %v2306 = vadd.f32 0.0, %v2305
      %v2307 = vpop.f32.mrb[0].mxu0
      %2308 = vmatprep.mubr.bf16.mxu0 0
      %2309 = vmatmul.mubr.bf16.gmra.mrb[0].mxu0 %v2016
      %v2310 = vpop.f32.mrb[0].mxu0
      %v2311 = vadd.f32 0.0, %v2310
      %v2312 = vpop.f32.mrb[0].mxu0
      %v2313 = vpop.f32.mrb[0].mxu0
      %v2314 = vadd.f32 0.0, %v2313
      %v2315 = vpop.f32.mrb[0].mxu0
      %2316 = vmatprep.mubr.bf16.mxu0 0
      %2317 = vmatmul.mubr.bf16.gmra.mrb[0].mxu0 %v2019
      %v2318 = vpop.f32.mrb[0].mxu0
      %v2319 = vadd.f32 0.0, %v2318
      %v2320 = vpop.f32.mrb[0].mxu0
      %v2321 = vpop.f32.mrb[0].mxu0
      %v2322 = vadd.f32 0.0, %v2321
      %v2323 = vpop.f32.mrb[0].mxu0
      %2324 = vmatprep.mubr.bf16.mxu0 0
      %2325 = vmatmul.mubr.bf16.gmra.mrb[0].mxu0 %v2225
      %v2326 = vpop.f32.mrb[0].mxu0
      %v2327 = vadd.f32 0.0, %v2326
      %v2328 = vpop.f32.mrb[0].mxu0
      %v2329 = vpop.f32.mrb[0].mxu0
      %v2330 = vadd.f32 0.0, %v2329
      %v2331 = vpop.f32.mrb[0].mxu0
      %2332 = vmatprep.mubr.bf16.mxu0 0
      %2333 = vmatmul.mubr.bf16.gmra.mrb[0].mxu0 %v2025
      %v2334 = vpop.f32.mrb[0].mxu0
      %v2335 = vadd.f32 0.0, %v2334
      %v2336 = vpop.f32.mrb[0].mxu0
      %v2337 = vpop.f32.mrb[0].mxu0
      %v2338 = vadd.f32 0.0, %v2337
      %v2339 = vpop.f32.mrb[0].mxu0
      %2340 = vmatprep.mubr.bf16.mxu0 0
      %2341 = vmatmul.mubr.bf16.gmra.mrb[0].mxu0 %v2028
      %v2342 = vpop.f32.mrb[0].mxu0
      %v2343 = vadd.f32 0.0, %v2342
      %v2344 = vpop.f32.mrb[0].mxu0
      %v2345 = vpop.f32.mrb[0].mxu0
      %v2346 = vadd.f32 0.0, %v2345
      %v2347 = vpop.f32.mrb[0].mxu0
      %2348 = vmatprep.mubr.bf16.mxu0 0
      %2349 = vmatmul.mubr.bf16.gmra.mrb[0].mxu0 %v2031
      %v2350 = vpop.f32.mrb[0].mxu0
      %v2351 = vadd.f32 0.0, %v2350
      %v2352 = vpop.f32.mrb[0].mxu0
      %v2353 = vpop.f32.mrb[0].mxu0
      %v2354 = vadd.f32 0.0, %v2353
      %v2355 = vpop.f32.mrb[0].mxu0
      %2356 = vmatprep.mubr.bf16.mxu0 0
      %2357 = vmatmul.mubr.bf16.gmra.mrb[0].mxu0 %v2228
      %v2358 = vpop.f32.mrb[0].mxu0
      %v2359 = vadd.f32 0.0, %v2358
      %v2360 = vpop.f32.mrb[0].mxu0
      %v2361 = vpop.f32.mrb[0].mxu0
      %v2362 = vadd.f32 0.0, %v2361
      %v2363 = vpop.f32.mrb[0].mxu0
      %2364 = vmatprep.mubr.bf16.mxu0 0
      %2365 = vmatmul.mubr.bf16.gmra.mrb[0].mxu0 %v2037
      %v2366 = vpop.f32.mrb[0].mxu0
      %v2367 = vadd.f32 0.0, %v2366
      %v2368 = vpop.f32.mrb[0].mxu0
      %v2369 = vpop.f32.mrb[0].mxu0
      %v2370 = vadd.f32 0.0, %v2369
      %v2371 = vpop.f32.mrb[0].mxu0
      %2372 = vmatprep.mubr.bf16.mxu0 0
      %2373 = vmatmul.mubr.bf16.gmra.mrb[0].mxu0 %v2040
      %v2374 = vpop.f32.mrb[0].mxu0
      %v2375 = vadd.f32 0.0, %v2374
      %v2376 = vpop.f32.mrb[0].mxu0
      %v2377 = vpop.f32.mrb[0].mxu0
      %v2378 = vadd.f32 0.0, %v2377
      %v2379 = vpop.f32.mrb[0].mxu0
      %2380 = vmatprep.mubr.bf16.mxu0 0
      %2381 = vmatmul.mubr.bf16.gmra.mrb[0].mxu0 %v2043
      %v2382 = vpop.f32.mrb[0].mxu0
      %v2383 = vadd.f32 0.0, %v2382
      %v2384 = vpop.f32.mrb[0].mxu0
      %v2385 = vpop.f32.mrb[0].mxu0
      %v2386 = vadd.f32 0.0, %v2385
      %v2387 = vpop.f32.mrb[0].mxu0
      %2388 = vmatprep.mubr.bf16.mxu0 0
      %2389 = vmatmul.mubr.bf16.gmra.mrb[0].mxu0 %v2231
      %v2390 = vpop.f32.mrb[0].mxu0
      %v2391 = vadd.f32 0.0, %v2390
      %v2392 = vpop.f32.mrb[0].mxu0
      %v2393 = vpop.f32.mrb[0].mxu0
      %v2394 = vadd.f32 0.0, %v2393
      %v2395 = vpop.f32.mrb[0].mxu0
      %2396 = vdwg.mxu0
      %v2397 = vadd.f32 %v2083, %v2271
      %v2398 = vadd.f32 %v2086, %v2274
      %v2399 = vadd.f32 %v2091, %v2279
      %v2400 = vadd.f32 %v2094, %v2282
      %v2401 = vadd.f32 %v2099, %v2287
      %v2402 = vadd.f32 %v2102, %v2290
      %v2403 = vadd.f32 %v2107, %v2295
      %v2404 = vadd.f32 %v2110, %v2298
      %v2405 = vadd.f32 %v2115, %v2303
      %v2406 = vadd.f32 %v2118, %v2306
      %v2407 = vadd.f32 %v2123, %v2311
      %v2408 = vadd.f32 %v2126, %v2314
      %v2409 = vadd.f32 %v2131, %v2319
      %v2410 = vadd.f32 %v2134, %v2322
      %v2411 = vadd.f32 %v2139, %v2327
      %v2412 = vadd.f32 %v2142, %v2330
      %v2413 = vadd.f32 %v2147, %v2335
      %v2414 = vadd.f32 %v2150, %v2338
      %v2415 = vadd.f32 %v2155, %v2343
      %v2416 = vadd.f32 %v2158, %v2346
      %v2417 = vadd.f32 %v2163, %v2351
      %v2418 = vadd.f32 %v2166, %v2354
      %v2419 = vadd.f32 %v2171, %v2359
      %v2420 = vadd.f32 %v2174, %v2362
      %v2421 = vadd.f32 %v2179, %v2367
      %v2422 = vadd.f32 %v2182, %v2370
      %v2423 = vadd.f32 %v2187, %v2375
      %v2424 = vadd.f32 %v2190, %v2378
      %v2425 = vadd.f32 %v2195, %v2383
      %v2426 = vadd.f32 %v2198, %v2386
      %v2427 = vadd.f32 %v2203, %v2391
      %v2428 = vadd.f32 %v2206, %v2394
      %s2429 = scalar_lea.vmem %s3, 24
      %v2430 = vld [vmem:[%s2429] sm:$0xf]
      %v2431 = vld [vmem:[%s2429 + $0x4] sm:$0x3]
      %v2439 = vunpack.c.l.b16 %v1655
      %v2440 = vunpack.c.l.b16 %v1656
      %v2441 = vunpack.c.l.b16 %v1657
      %v2442 = vunpack.c.l.b16 %v1658
      %v2443 = vunpack.c.l.b16 %v1659
      %v2444 = vunpack.c.l.b16 %v1660
      %v2445 = vunpack.c.l.b16 %v1661
      %v2446 = vpack.c.b16 %v2439, %v1975
      %v2447 = vpack.c.b16 %v2441, %v2440
      %v2448 = vpack.c.b16 %v2443, %v2442
      %v2449 = vpack.c.b16 %v2445, %v2444
      %v2452 = vunpack.c.l.b16 %v2430
      %v2453 = vunpack.c.l.b16 %v2431
      %v2454 = vpack.c.b16 %v2453, %v2452
      %v2456 = vsel %vm1761, %v2446, 0
      %v2459 = vsel %vm1761, %v2447, 0
      %v2462 = vsel %vm1761, %v2448, 0
      %v2465 = vsel %vm1761, %v2449, 0
      %v2468 = vsel %vm1227, %v2454, 0
      %2470 = vmatprep.subr.bf16.mxu0 0
      %2471 = vmatpush1.bf16.msra.mxu0 %v2468
      %2472 = vmatprep.subr.bf16.mxu0 0
      %2473 = vmatpush1.bf16.msra.mxu0 0
      %2474 = vmatprep.subr.bf16.mxu0 0
      %2475 = vmatpush1.bf16.msra.mxu0 0
      %2476 = vmatprep.subr.bf16.mxu0 0
      %2477 = vmatpush1.bf16.msra.mxu0 0
      %2478 = vmatprep.subr.bf16.mxu0 0
      %2479 = vmatpush1.bf16.msra.mxu0 0
      %2480 = vmatprep.subr.bf16.mxu0 0
      %2481 = vmatpush1.bf16.msra.mxu0 0
      %2482 = vmatprep.subr.bf16.mxu0 0
      %2483 = vmatpush1.bf16.msra.mxu0 0
      %2484 = vmatprep.subr.bf16.mxu0 0
      %2485 = vmatpush1.bf16.msra.mxu0 0
      %2486 = vmatprep.subr.bf16.mxu0 0
      %2487 = vmatpush1.bf16.msra.mxu0 0
      %2488 = vmatprep.subr.bf16.mxu0 0
      %2489 = vmatpush1.bf16.msra.mxu0 0
      %2490 = vmatprep.subr.bf16.mxu0 0
      %2491 = vmatpush1.bf16.msra.mxu0 0
      %2492 = vmatprep.subr.bf16.mxu0 0
      %2493 = vmatpush1.bf16.msra.mxu0 0
      %2494 = vmatprep.subr.bf16.mxu0 0
      %2495 = vmatpush1.bf16.msra.mxu0 0
      %2496 = vmatprep.subr.bf16.mxu0 0
      %2497 = vmatpush1.bf16.msra.mxu0 0
      %2498 = vmatprep.subr.bf16.mxu0 0
      %2499 = vmatpush1.bf16.msra.mxu0 0
      %2500 = vmatprep.subr.bf16.mxu0 0
      %2501 = vmatpush1.bf16.msra.mxu0 0
      %2502 = vmatprep.mubr.bf16.mxu0 0
      %2503 = vmatmul.mubr.bf16.gmra.mrb[0].mxu0 %v2010
      %v2504 = vpop.f32.mrb[0].mxu0
      %v2505 = vadd.f32 0.0, %v2504
      %v2506 = vpop.f32.mrb[0].mxu0
      %v2507 = vpop.f32.mrb[0].mxu0
      %v2508 = vadd.f32 0.0, %v2507
      %v2509 = vpop.f32.mrb[0].mxu0
      %2510 = vmatprep.mubr.bf16.mxu0 0
      %2511 = vmatmul.mubr.bf16.gmra.mrb[0].mxu0 %v2013
      %v2512 = vpop.f32.mrb[0].mxu0
      %v2513 = vadd.f32 0.0, %v2512
      %v2514 = vpop.f32.mrb[0].mxu0
      %v2515 = vpop.f32.mrb[0].mxu0
      %v2516 = vadd.f32 0.0, %v2515
      %v2517 = vpop.f32.mrb[0].mxu0
      %2518 = vmatprep.mubr.bf16.mxu0 0
      %2519 = vmatmul.mubr.bf16.gmra.mrb[0].mxu0 %v2016
      %v2520 = vpop.f32.mrb[0].mxu0
      %v2521 = vadd.f32 0.0, %v2520
      %v2522 = vpop.f32.mrb[0].mxu0
      %v2523 = vpop.f32.mrb[0].mxu0
      %v2524 = vadd.f32 0.0, %v2523
      %v2525 = vpop.f32.mrb[0].mxu0
      %2526 = vmatprep.mubr.bf16.mxu0 0
      %2527 = vmatmul.mubr.bf16.gmra.mrb[0].mxu0 %v2019
      %v2528 = vpop.f32.mrb[0].mxu0
      %v2529 = vadd.f32 0.0, %v2528
      %v2530 = vpop.f32.mrb[0].mxu0
      %v2531 = vpop.f32.mrb[0].mxu0
      %v2532 = vadd.f32 0.0, %v2531
      %v2533 = vpop.f32.mrb[0].mxu0
      %2534 = vmatprep.mubr.bf16.mxu0 0
      %2535 = vmatmul.mubr.bf16.gmra.mrb[0].mxu0 %v2022
      %v2536 = vpop.f32.mrb[0].mxu0
      %v2537 = vadd.f32 0.0, %v2536
      %v2538 = vpop.f32.mrb[0].mxu0
      %v2539 = vpop.f32.mrb[0].mxu0
      %v2540 = vadd.f32 0.0, %v2539
      %v2541 = vpop.f32.mrb[0].mxu0
      %2542 = vmatprep.mubr.bf16.mxu0 0
      %2543 = vmatmul.mubr.bf16.gmra.mrb[0].mxu0 %v2025
      %v2544 = vpop.f32.mrb[0].mxu0
      %v2545 = vadd.f32 0.0, %v2544
      %v2546 = vpop.f32.mrb[0].mxu0
      %v2547 = vpop.f32.mrb[0].mxu0
      %v2548 = vadd.f32 0.0, %v2547
      %v2549 = vpop.f32.mrb[0].mxu0
      %2550 = vmatprep.mubr.bf16.mxu0 0
      %2551 = vmatmul.mubr.bf16.gmra.mrb[0].mxu0 %v2028
      %v2552 = vpop.f32.mrb[0].mxu0
      %v2553 = vadd.f32 0.0, %v2552
      %v2554 = vpop.f32.mrb[0].mxu0
      %v2555 = vpop.f32.mrb[0].mxu0
      %v2556 = vadd.f32 0.0, %v2555
      %v2557 = vpop.f32.mrb[0].mxu0
      %2558 = vmatprep.mubr.bf16.mxu0 0
      %2559 = vmatmul.mubr.bf16.gmra.mrb[0].mxu0 %v2031
      %v2560 = vpop.f32.mrb[0].mxu0
      %v2561 = vadd.f32 0.0, %v2560
      %v2562 = vpop.f32.mrb[0].mxu0
      %v2563 = vpop.f32.mrb[0].mxu0
      %v2564 = vadd.f32 0.0, %v2563
      %v2565 = vpop.f32.mrb[0].mxu0
      %2566 = vmatprep.mubr.bf16.mxu0 0
      %2567 = vmatmul.mubr.bf16.gmra.mrb[0].mxu0 %v2034
      %v2568 = vpop.f32.mrb[0].mxu0
      %v2569 = vadd.f32 0.0, %v2568
      %v2570 = vpop.f32.mrb[0].mxu0
      %v2571 = vpop.f32.mrb[0].mxu0
      %v2572 = vadd.f32 0.0, %v2571
      %v2573 = vpop.f32.mrb[0].mxu0
      %2574 = vmatprep.mubr.bf16.mxu0 0
      %2575 = vmatmul.mubr.bf16.gmra.mrb[0].mxu0 %v2037
      %v2576 = vpop.f32.mrb[0].mxu0
      %v2577 = vadd.f32 0.0, %v2576
      %v2578 = vpop.f32.mrb[0].mxu0
      %v2579 = vpop.f32.mrb[0].mxu0
      %v2580 = vadd.f32 0.0, %v2579
      %v2581 = vpop.f32.mrb[0].mxu0
      %2582 = vmatprep.mubr.bf16.mxu0 0
      %2583 = vmatmul.mubr.bf16.gmra.mrb[0].mxu0 %v2040
      %v2584 = vpop.f32.mrb[0].mxu0
      %v2585 = vadd.f32 0.0, %v2584
      %v2586 = vpop.f32.mrb[0].mxu0
      %v2587 = vpop.f32.mrb[0].mxu0
      %v2588 = vadd.f32 0.0, %v2587
      %v2589 = vpop.f32.mrb[0].mxu0
      %2590 = vmatprep.mubr.bf16.mxu0 0
      %2591 = vmatmul.mubr.bf16.gmra.mrb[0].mxu0 %v2043
      %v2592 = vpop.f32.mrb[0].mxu0
      %v2593 = vadd.f32 0.0, %v2592
      %v2594 = vpop.f32.mrb[0].mxu0
      %v2595 = vpop.f32.mrb[0].mxu0
      %v2596 = vadd.f32 0.0, %v2595
      %v2597 = vpop.f32.mrb[0].mxu0
      %2598 = vmatprep.mubr.bf16.mxu0 0
      %2599 = vmatmul.mubr.bf16.gmra.mrb[0].mxu0 %v2456
      %v2600 = vpop.f32.mrb[0].mxu0
      %v2601 = vadd.f32 0.0, %v2600
      %v2602 = vpop.f32.mrb[0].mxu0
      %v2603 = vpop.f32.mrb[0].mxu0
      %v2604 = vadd.f32 0.0, %v2603
      %v2605 = vpop.f32.mrb[0].mxu0
      %2606 = vmatprep.mubr.bf16.mxu0 0
      %2607 = vmatmul.mubr.bf16.gmra.mrb[0].mxu0 %v2459
      %v2608 = vpop.f32.mrb[0].mxu0
      %v2609 = vadd.f32 0.0, %v2608
      %v2610 = vpop.f32.mrb[0].mxu0
      %v2611 = vpop.f32.mrb[0].mxu0
      %v2612 = vadd.f32 0.0, %v2611
      %v2613 = vpop.f32.mrb[0].mxu0
      %2614 = vmatprep.mubr.bf16.mxu0 0
      %2615 = vmatmul.mubr.bf16.gmra.mrb[0].mxu0 %v2462
      %v2616 = vpop.f32.mrb[0].mxu0
      %v2617 = vadd.f32 0.0, %v2616
      %v2618 = vpop.f32.mrb[0].mxu0
      %v2619 = vpop.f32.mrb[0].mxu0
      %v2620 = vadd.f32 0.0, %v2619
      %v2621 = vpop.f32.mrb[0].mxu0
      %2622 = vmatprep.mubr.bf16.mxu0 0
      %2623 = vmatmul.mubr.bf16.gmra.mrb[0].mxu0 %v2465
      %v2624 = vpop.f32.mrb[0].mxu0
      %v2625 = vadd.f32 0.0, %v2624
      %v2626 = vpop.f32.mrb[0].mxu0
      %v2627 = vpop.f32.mrb[0].mxu0
      %v2628 = vadd.f32 0.0, %v2627
      %v2629 = vpop.f32.mrb[0].mxu0
      %2630 = vdwg.mxu0
      %v2631 = vadd.f32 %v2397, %v2505
      %v2632 = vadd.f32 %v2398, %v2508
      %v2633 = vadd.f32 %v2399, %v2513
      %v2634 = vadd.f32 %v2400, %v2516
      %v2635 = vadd.f32 %v2401, %v2521
      %v2636 = vadd.f32 %v2402, %v2524
      %v2637 = vadd.f32 %v2403, %v2529
      %v2638 = vadd.f32 %v2404, %v2532
      %v2639 = vadd.f32 %v2405, %v2537
      %v2640 = vadd.f32 %v2406, %v2540
      %v2641 = vadd.f32 %v2407, %v2545
      %v2642 = vadd.f32 %v2408, %v2548
      %v2643 = vadd.f32 %v2409, %v2553
      %v2644 = vadd.f32 %v2410, %v2556
      %v2645 = vadd.f32 %v2411, %v2561
      %v2646 = vadd.f32 %v2412, %v2564
      %v2647 = vadd.f32 %v2413, %v2569
      %v2648 = vadd.f32 %v2414, %v2572
      %v2649 = vadd.f32 %v2415, %v2577
      %v2650 = vadd.f32 %v2416, %v2580
      %v2651 = vadd.f32 %v2417, %v2585
      %v2652 = vadd.f32 %v2418, %v2588
      %v2653 = vadd.f32 %v2419, %v2593
      %v2654 = vadd.f32 %v2420, %v2596
      %v2655 = vadd.f32 %v2421, %v2601
      %v2656 = vadd.f32 %v2422, %v2604
      %v2657 = vadd.f32 %v2423, %v2609
      %v2658 = vadd.f32 %v2424, %v2612
      %v2659 = vadd.f32 %v2425, %v2617
      %v2660 = vadd.f32 %v2426, %v2620
      %v2661 = vadd.f32 %v2427, %v2625
      %v2662 = vadd.f32 %v2428, %v2628
      %s2663 = scalar_lea.vmem %s3, 32
      %v2664 = vld [vmem:[%s2663] sm:$0xf]
      %v2665 = vld [vmem:[%s2663 + $0x4] sm:$0x3]
      %v2667 = vunpack.c.l.b16 %v1662
      %v2668 = vpack.c.b16 %v2440, %v2439
      %v2669 = vpack.c.b16 %v2442, %v2441
      %v2670 = vpack.c.b16 %v2444, %v2443
      %v2671 = vpack.c.b16 %v2667, %v2445
      %v2674 = vunpack.c.l.b16 %v2664
      %v2675 = vunpack.c.l.b16 %v2665
      %v2676 = vpack.c.b16 %v2675, %v2674
      %v2678 = vsel %vm1761, %v2668, 0
      %v2681 = vsel %vm1761, %v2669, 0
      %v2684 = vsel %vm1761, %v2670, 0
      %v2687 = vsel %vm1761, %v2671, 0
      %v2690 = vsel %vm1227, %v2676, 0
      %2692 = vmatprep.subr.bf16.mxu0 0
      %2693 = vmatpush1.bf16.msra.mxu0 %v2690
      %2694 = vmatprep.subr.bf16.mxu0 0
      %2695 = vmatpush1.bf16.msra.mxu0 0
      %2696 = vmatprep.subr.bf16.mxu0 0
      %2697 = vmatpush1.bf16.msra.mxu0 0
      %2698 = vmatprep.subr.bf16.mxu0 0
      %2699 = vmatpush1.bf16.msra.mxu0 0
      %2700 = vmatprep.subr.bf16.mxu0 0
      %2701 = vmatpush1.bf16.msra.mxu0 0
      %2702 = vmatprep.subr.bf16.mxu0 0
      %2703 = vmatpush1.bf16.msra.mxu0 0
      %2704 = vmatprep.subr.bf16.mxu0 0
      %2705 = vmatpush1.bf16.msra.mxu0 0
      %2706 = vmatprep.subr.bf16.mxu0 0
      %2707 = vmatpush1.bf16.msra.mxu0 0
      %2708 = vmatprep.subr.bf16.mxu0 0
      %2709 = vmatpush1.bf16.msra.mxu0 0
      %2710 = vmatprep.subr.bf16.mxu0 0
      %2711 = vmatpush1.bf16.msra.mxu0 0
      %2712 = vmatprep.subr.bf16.mxu0 0
      %2713 = vmatpush1.bf16.msra.mxu0 0
      %2714 = vmatprep.subr.bf16.mxu0 0
      %2715 = vmatpush1.bf16.msra.mxu0 0
      %2716 = vmatprep.subr.bf16.mxu0 0
      %2717 = vmatpush1.bf16.msra.mxu0 0
      %2718 = vmatprep.subr.bf16.mxu0 0
      %2719 = vmatpush1.bf16.msra.mxu0 0
      %2720 = vmatprep.subr.bf16.mxu0 0
      %2721 = vmatpush1.bf16.msra.mxu0 0
      %2722 = vmatprep.subr.bf16.mxu0 0
      %2723 = vmatpush1.bf16.msra.mxu0 0
      %2724 = vmatprep.mubr.bf16.mxu0 0
      %2725 = vmatmul.mubr.bf16.gmra.mrb[0].mxu0 %v1775
      %v2726 = vpop.f32.mrb[0].mxu0
      %v2727 = vadd.f32 0.0, %v2726
      %v2728 = vpop.f32.mrb[0].mxu0
      %v2729 = vpop.f32.mrb[0].mxu0
      %v2730 = vadd.f32 0.0, %v2729
      %v2731 = vpop.f32.mrb[0].mxu0
      %2732 = vmatprep.mubr.bf16.mxu0 0
      %2733 = vmatmul.mubr.bf16.gmra.mrb[0].mxu0 %v1778
      %v2734 = vpop.f32.mrb[0].mxu0
      %v2735 = vadd.f32 0.0, %v2734
      %v2736 = vpop.f32.mrb[0].mxu0
      %v2737 = vpop.f32.mrb[0].mxu0
      %v2738 = vadd.f32 0.0, %v2737
      %v2739 = vpop.f32.mrb[0].mxu0
      %2740 = vmatprep.mubr.bf16.mxu0 0
      %2741 = vmatmul.mubr.bf16.gmra.mrb[0].mxu0 %v1781
      %v2742 = vpop.f32.mrb[0].mxu0
      %v2743 = vadd.f32 0.0, %v2742
      %v2744 = vpop.f32.mrb[0].mxu0
      %v2745 = vpop.f32.mrb[0].mxu0
      %v2746 = vadd.f32 0.0, %v2745
      %v2747 = vpop.f32.mrb[0].mxu0
      %2748 = vmatprep.mubr.bf16.mxu0 0
      %2749 = vmatmul.mubr.bf16.gmra.mrb[0].mxu0 %v1784
      %v2750 = vpop.f32.mrb[0].mxu0
      %v2751 = vadd.f32 0.0, %v2750
      %v2752 = vpop.f32.mrb[0].mxu0
      %v2753 = vpop.f32.mrb[0].mxu0
      %v2754 = vadd.f32 0.0, %v2753
      %v2755 = vpop.f32.mrb[0].mxu0
      %2756 = vmatprep.mubr.bf16.mxu0 0
      %2757 = vmatmul.mubr.bf16.gmra.mrb[0].mxu0 %v1787
      %v2758 = vpop.f32.mrb[0].mxu0
      %v2759 = vadd.f32 0.0, %v2758
      %v2760 = vpop.f32.mrb[0].mxu0
      %v2761 = vpop.f32.mrb[0].mxu0
      %v2762 = vadd.f32 0.0, %v2761
      %v2763 = vpop.f32.mrb[0].mxu0
      %2764 = vmatprep.mubr.bf16.mxu0 0
      %2765 = vmatmul.mubr.bf16.gmra.mrb[0].mxu0 %v1790
      %v2766 = vpop.f32.mrb[0].mxu0
      %v2767 = vadd.f32 0.0, %v2766
      %v2768 = vpop.f32.mrb[0].mxu0
      %v2769 = vpop.f32.mrb[0].mxu0
      %v2770 = vadd.f32 0.0, %v2769
      %v2771 = vpop.f32.mrb[0].mxu0
      %2772 = vmatprep.mubr.bf16.mxu0 0
      %2773 = vmatmul.mubr.bf16.gmra.mrb[0].mxu0 %v1793
      %v2774 = vpop.f32.mrb[0].mxu0
      %v2775 = vadd.f32 0.0, %v2774
      %v2776 = vpop.f32.mrb[0].mxu0
      %v2777 = vpop.f32.mrb[0].mxu0
      %v2778 = vadd.f32 0.0, %v2777
      %v2779 = vpop.f32.mrb[0].mxu0
      %2780 = vmatprep.mubr.bf16.mxu0 0
      %2781 = vmatmul.mubr.bf16.gmra.mrb[0].mxu0 %v1796
      %v2782 = vpop.f32.mrb[0].mxu0
      %v2783 = vadd.f32 0.0, %v2782
      %v2784 = vpop.f32.mrb[0].mxu0
      %v2785 = vpop.f32.mrb[0].mxu0
      %v2786 = vadd.f32 0.0, %v2785
      %v2787 = vpop.f32.mrb[0].mxu0
      %2788 = vmatprep.mubr.bf16.mxu0 0
      %2789 = vmatmul.mubr.bf16.gmra.mrb[0].mxu0 %v1799
      %v2790 = vpop.f32.mrb[0].mxu0
      %v2791 = vadd.f32 0.0, %v2790
      %v2792 = vpop.f32.mrb[0].mxu0
      %v2793 = vpop.f32.mrb[0].mxu0
      %v2794 = vadd.f32 0.0, %v2793
      %v2795 = vpop.f32.mrb[0].mxu0
      %2796 = vmatprep.mubr.bf16.mxu0 0
      %2797 = vmatmul.mubr.bf16.gmra.mrb[0].mxu0 %v1802
      %v2798 = vpop.f32.mrb[0].mxu0
      %v2799 = vadd.f32 0.0, %v2798
      %v2800 = vpop.f32.mrb[0].mxu0
      %v2801 = vpop.f32.mrb[0].mxu0
      %v2802 = vadd.f32 0.0, %v2801
      %v2803 = vpop.f32.mrb[0].mxu0
      %2804 = vmatprep.mubr.bf16.mxu0 0
      %2805 = vmatmul.mubr.bf16.gmra.mrb[0].mxu0 %v1805
      %v2806 = vpop.f32.mrb[0].mxu0
      %v2807 = vadd.f32 0.0, %v2806
      %v2808 = vpop.f32.mrb[0].mxu0
      %v2809 = vpop.f32.mrb[0].mxu0
      %v2810 = vadd.f32 0.0, %v2809
      %v2811 = vpop.f32.mrb[0].mxu0
      %2812 = vmatprep.mubr.bf16.mxu0 0
      %2813 = vmatmul.mubr.bf16.gmra.mrb[0].mxu0 %v1808
      %v2814 = vpop.f32.mrb[0].mxu0
      %v2815 = vadd.f32 0.0, %v2814
      %v2816 = vpop.f32.mrb[0].mxu0
      %v2817 = vpop.f32.mrb[0].mxu0
      %v2818 = vadd.f32 0.0, %v2817
      %v2819 = vpop.f32.mrb[0].mxu0
      %2820 = vmatprep.mubr.bf16.mxu0 0
      %2821 = vmatmul.mubr.bf16.gmra.mrb[0].mxu0 %v2678
      %v2822 = vpop.f32.mrb[0].mxu0
      %v2823 = vadd.f32 0.0, %v2822
      %v2824 = vpop.f32.mrb[0].mxu0
      %v2825 = vpop.f32.mrb[0].mxu0
      %v2826 = vadd.f32 0.0, %v2825
      %v2827 = vpop.f32.mrb[0].mxu0
      %2828 = vmatprep.mubr.bf16.mxu0 0
      %2829 = vmatmul.mubr.bf16.gmra.mrb[0].mxu0 %v2681
      %v2830 = vpop.f32.mrb[0].mxu0
      %v2831 = vadd.f32 0.0, %v2830
      %v2832 = vpop.f32.mrb[0].mxu0
      %v2833 = vpop.f32.mrb[0].mxu0
      %v2834 = vadd.f32 0.0, %v2833
      %v2835 = vpop.f32.mrb[0].mxu0
      %2836 = vmatprep.mubr.bf16.mxu0 0
      %2837 = vmatmul.mubr.bf16.gmra.mrb[0].mxu0 %v2684
      %v2838 = vpop.f32.mrb[0].mxu0
      %v2839 = vadd.f32 0.0, %v2838
      %v2840 = vpop.f32.mrb[0].mxu0
      %v2841 = vpop.f32.mrb[0].mxu0
      %v2842 = vadd.f32 0.0, %v2841
      %v2843 = vpop.f32.mrb[0].mxu0
      %2844 = vmatprep.mubr.bf16.mxu0 0
      %2845 = vmatmul.mubr.bf16.gmra.mrb[0].mxu0 %v2687
      %v2846 = vpop.f32.mrb[0].mxu0
      %v2847 = vadd.f32 0.0, %v2846
      %v2848 = vpop.f32.mrb[0].mxu0
      %v2849 = vpop.f32.mrb[0].mxu0
      %v2850 = vadd.f32 0.0, %v2849
      %v2851 = vpop.f32.mrb[0].mxu0
      %2852 = vdwg.mxu0
      %v2853 = vadd.f32 %v2631, %v2727
      %v2854 = vadd.f32 %v2632, %v2730
      %v2855 = vadd.f32 %v2633, %v2735
      %v2856 = vadd.f32 %v2634, %v2738
      %v2857 = vadd.f32 %v2635, %v2743
      %v2858 = vadd.f32 %v2636, %v2746
      %v2859 = vadd.f32 %v2637, %v2751
      %v2860 = vadd.f32 %v2638, %v2754
      %v2861 = vadd.f32 %v2639, %v2759
      %v2862 = vadd.f32 %v2640, %v2762
      %v2863 = vadd.f32 %v2641, %v2767
      %v2864 = vadd.f32 %v2642, %v2770
      %v2865 = vadd.f32 %v2643, %v2775
      %v2866 = vadd.f32 %v2644, %v2778
      %v2867 = vadd.f32 %v2645, %v2783
      %v2868 = vadd.f32 %v2646, %v2786
      %v2869 = vadd.f32 %v2647, %v2791
      %v2870 = vadd.f32 %v2648, %v2794
      %v2871 = vadd.f32 %v2649, %v2799
      %v2872 = vadd.f32 %v2650, %v2802
      %v2873 = vadd.f32 %v2651, %v2807
      %v2874 = vadd.f32 %v2652, %v2810
      %v2875 = vadd.f32 %v2653, %v2815
      %v2876 = vadd.f32 %v2654, %v2818
      %v2877 = vadd.f32 %v2655, %v2823
      %v2878 = vadd.f32 %v2656, %v2826
      %v2879 = vadd.f32 %v2657, %v2831
      %v2880 = vadd.f32 %v2658, %v2834
      %v2881 = vadd.f32 %v2659, %v2839
      %v2882 = vadd.f32 %v2660, %v2842
      %v2883 = vadd.f32 %v2661, %v2847
      %v2884 = vadd.f32 %v2662, %v2850
      %s2885 = scalar_lea.vmem %s3, 40
      %v2886 = vld [vmem:[%s2885] sm:$0xf]
      %v2887 = vld [vmem:[%s2885 + $0x4] sm:$0x3]
      %v2888 = vpack.c.b16 %v1975, %v2667
      %v2891 = vunpack.c.l.b16 %v2886
      %v2892 = vunpack.c.l.b16 %v2887
      %v2893 = vpack.c.b16 %v2892, %v2891
      %v2895 = vsel %vm1761, %v2888, 0
      %v2898 = vsel %vm1227, %v2893, 0
      %2900 = vmatprep.subr.bf16.mxu0 0
      %2901 = vmatpush1.bf16.msra.mxu0 %v2898
      %2902 = vmatprep.subr.bf16.mxu0 0
      %2903 = vmatpush1.bf16.msra.mxu0 0
      %2904 = vmatprep.subr.bf16.mxu0 0
      %2905 = vmatpush1.bf16.msra.mxu0 0
      %2906 = vmatprep.subr.bf16.mxu0 0
      %2907 = vmatpush1.bf16.msra.mxu0 0
      %2908 = vmatprep.subr.bf16.mxu0 0
      %2909 = vmatpush1.bf16.msra.mxu0 0
      %2910 = vmatprep.subr.bf16.mxu0 0
      %2911 = vmatpush1.bf16.msra.mxu0 0
      %2912 = vmatprep.subr.bf16.mxu0 0
      %2913 = vmatpush1.bf16.msra.mxu0 0
      %2914 = vmatprep.subr.bf16.mxu0 0
      %2915 = vmatpush1.bf16.msra.mxu0 0
      %2916 = vmatprep.subr.bf16.mxu0 0
      %2917 = vmatpush1.bf16.msra.mxu0 0
      %2918 = vmatprep.subr.bf16.mxu0 0
      %2919 = vmatpush1.bf16.msra.mxu0 0
      %2920 = vmatprep.subr.bf16.mxu0 0
      %2921 = vmatpush1.bf16.msra.mxu0 0
      %2922 = vmatprep.subr.bf16.mxu0 0
      %2923 = vmatpush1.bf16.msra.mxu0 0
      %2924 = vmatprep.subr.bf16.mxu0 0
      %2925 = vmatpush1.bf16.msra.mxu0 0
      %2926 = vmatprep.subr.bf16.mxu0 0
      %2927 = vmatpush1.bf16.msra.mxu0 0
      %2928 = vmatprep.subr.bf16.mxu0 0
      %2929 = vmatpush1.bf16.msra.mxu0 0
      %2930 = vmatprep.subr.bf16.mxu0 0
      %2931 = vmatpush1.bf16.msra.mxu0 0
      %2932 = vmatprep.mubr.bf16.mxu0 0
      %2933 = vmatmul.mubr.bf16.gmra.mrb[0].mxu0 %v2013
      %v2934 = vpop.f32.mrb[0].mxu0
      %v2935 = vadd.f32 0.0, %v2934
      %v2936 = vpop.f32.mrb[0].mxu0
      %v2937 = vpop.f32.mrb[0].mxu0
      %v2938 = vadd.f32 0.0, %v2937
      %v2939 = vpop.f32.mrb[0].mxu0
      %2940 = vmatprep.mubr.bf16.mxu0 0
      %2941 = vmatmul.mubr.bf16.gmra.mrb[0].mxu0 %v2016
      %v2942 = vpop.f32.mrb[0].mxu0
      %v2943 = vadd.f32 0.0, %v2942
      %v2944 = vpop.f32.mrb[0].mxu0
      %v2945 = vpop.f32.mrb[0].mxu0
      %v2946 = vadd.f32 0.0, %v2945
      %v2947 = vpop.f32.mrb[0].mxu0
      %2948 = vmatprep.mubr.bf16.mxu0 0
      %2949 = vmatmul.mubr.bf16.gmra.mrb[0].mxu0 %v2019
      %v2950 = vpop.f32.mrb[0].mxu0
      %v2951 = vadd.f32 0.0, %v2950
      %v2952 = vpop.f32.mrb[0].mxu0
      %v2953 = vpop.f32.mrb[0].mxu0
      %v2954 = vadd.f32 0.0, %v2953
      %v2955 = vpop.f32.mrb[0].mxu0
      %2956 = vmatprep.mubr.bf16.mxu0 0
      %2957 = vmatmul.mubr.bf16.gmra.mrb[0].mxu0 %v2225
      %v2958 = vpop.f32.mrb[0].mxu0
      %v2959 = vadd.f32 0.0, %v2958
      %v2960 = vpop.f32.mrb[0].mxu0
      %v2961 = vpop.f32.mrb[0].mxu0
      %v2962 = vadd.f32 0.0, %v2961
      %v2963 = vpop.f32.mrb[0].mxu0
      %2964 = vmatprep.mubr.bf16.mxu0 0
      %2965 = vmatmul.mubr.bf16.gmra.mrb[0].mxu0 %v2025
      %v2966 = vpop.f32.mrb[0].mxu0
      %v2967 = vadd.f32 0.0, %v2966
      %v2968 = vpop.f32.mrb[0].mxu0
      %v2969 = vpop.f32.mrb[0].mxu0
      %v2970 = vadd.f32 0.0, %v2969
      %v2971 = vpop.f32.mrb[0].mxu0
      %2972 = vmatprep.mubr.bf16.mxu0 0
      %2973 = vmatmul.mubr.bf16.gmra.mrb[0].mxu0 %v2028
      %v2974 = vpop.f32.mrb[0].mxu0
      %v2975 = vadd.f32 0.0, %v2974
      %v2976 = vpop.f32.mrb[0].mxu0
      %v2977 = vpop.f32.mrb[0].mxu0
      %v2978 = vadd.f32 0.0, %v2977
      %v2979 = vpop.f32.mrb[0].mxu0
      %2980 = vmatprep.mubr.bf16.mxu0 0
      %2981 = vmatmul.mubr.bf16.gmra.mrb[0].mxu0 %v2031
      %v2982 = vpop.f32.mrb[0].mxu0
      %v2983 = vadd.f32 0.0, %v2982
      %v2984 = vpop.f32.mrb[0].mxu0
      %v2985 = vpop.f32.mrb[0].mxu0
      %v2986 = vadd.f32 0.0, %v2985
      %v2987 = vpop.f32.mrb[0].mxu0
      %2988 = vmatprep.mubr.bf16.mxu0 0
      %2989 = vmatmul.mubr.bf16.gmra.mrb[0].mxu0 %v2228
      %v2990 = vpop.f32.mrb[0].mxu0
      %v2991 = vadd.f32 0.0, %v2990
      %v2992 = vpop.f32.mrb[0].mxu0
      %v2993 = vpop.f32.mrb[0].mxu0
      %v2994 = vadd.f32 0.0, %v2993
      %v2995 = vpop.f32.mrb[0].mxu0
      %2996 = vmatprep.mubr.bf16.mxu0 0
      %2997 = vmatmul.mubr.bf16.gmra.mrb[0].mxu0 %v2037
      %v2998 = vpop.f32.mrb[0].mxu0
      %v2999 = vadd.f32 0.0, %v2998
      %v3000 = vpop.f32.mrb[0].mxu0
      %v3001 = vpop.f32.mrb[0].mxu0
      %v3002 = vadd.f32 0.0, %v3001
      %v3003 = vpop.f32.mrb[0].mxu0
      %3004 = vmatprep.mubr.bf16.mxu0 0
      %3005 = vmatmul.mubr.bf16.gmra.mrb[0].mxu0 %v2040
      %v3006 = vpop.f32.mrb[0].mxu0
      %v3007 = vadd.f32 0.0, %v3006
      %v3008 = vpop.f32.mrb[0].mxu0
      %v3009 = vpop.f32.mrb[0].mxu0
      %v3010 = vadd.f32 0.0, %v3009
      %v3011 = vpop.f32.mrb[0].mxu0
      %3012 = vmatprep.mubr.bf16.mxu0 0
      %3013 = vmatmul.mubr.bf16.gmra.mrb[0].mxu0 %v2043
      %v3014 = vpop.f32.mrb[0].mxu0
      %v3015 = vadd.f32 0.0, %v3014
      %v3016 = vpop.f32.mrb[0].mxu0
      %v3017 = vpop.f32.mrb[0].mxu0
      %v3018 = vadd.f32 0.0, %v3017
      %v3019 = vpop.f32.mrb[0].mxu0
      %3020 = vmatprep.mubr.bf16.mxu0 0
      %3021 = vmatmul.mubr.bf16.gmra.mrb[0].mxu0 %v2231
      %v3022 = vpop.f32.mrb[0].mxu0
      %v3023 = vadd.f32 0.0, %v3022
      %v3024 = vpop.f32.mrb[0].mxu0
      %v3025 = vpop.f32.mrb[0].mxu0
      %v3026 = vadd.f32 0.0, %v3025
      %v3027 = vpop.f32.mrb[0].mxu0
      %3028 = vmatprep.mubr.bf16.mxu0 0
      %3029 = vmatmul.mubr.bf16.gmra.mrb[0].mxu0 %v2459
      %v3030 = vpop.f32.mrb[0].mxu0
      %v3031 = vadd.f32 0.0, %v3030
      %v3032 = vpop.f32.mrb[0].mxu0
      %v3033 = vpop.f32.mrb[0].mxu0
      %v3034 = vadd.f32 0.0, %v3033
      %v3035 = vpop.f32.mrb[0].mxu0
      %3036 = vmatprep.mubr.bf16.mxu0 0
      %3037 = vmatmul.mubr.bf16.gmra.mrb[0].mxu0 %v2462
      %v3038 = vpop.f32.mrb[0].mxu0
      %v3039 = vadd.f32 0.0, %v3038
      %v3040 = vpop.f32.mrb[0].mxu0
      %v3041 = vpop.f32.mrb[0].mxu0
      %v3042 = vadd.f32 0.0, %v3041
      %v3043 = vpop.f32.mrb[0].mxu0
      %3044 = vmatprep.mubr.bf16.mxu0 0
      %3045 = vmatmul.mubr.bf16.gmra.mrb[0].mxu0 %v2465
      %v3046 = vpop.f32.mrb[0].mxu0
      %v3047 = vadd.f32 0.0, %v3046
      %v3048 = vpop.f32.mrb[0].mxu0
      %v3049 = vpop.f32.mrb[0].mxu0
      %v3050 = vadd.f32 0.0, %v3049
      %v3051 = vpop.f32.mrb[0].mxu0
      %3052 = vmatprep.mubr.bf16.mxu0 0
      %3053 = vmatmul.mubr.bf16.gmra.mrb[0].mxu0 %v2895
      %v3054 = vpop.f32.mrb[0].mxu0
      %v3055 = vadd.f32 0.0, %v3054
      %v3056 = vpop.f32.mrb[0].mxu0
      %v3057 = vpop.f32.mrb[0].mxu0
      %v3058 = vadd.f32 0.0, %v3057
      %v3059 = vpop.f32.mrb[0].mxu0
      %3060 = vdwg.mxu0
      %v3061 = vadd.f32 %v2853, %v2935
      %v3062 = vadd.f32 %v2854, %v2938
      %v3063 = vadd.f32 %v2855, %v2943
      %v3064 = vadd.f32 %v2856, %v2946
      %v3065 = vadd.f32 %v2857, %v2951
      %v3066 = vadd.f32 %v2858, %v2954
      %v3067 = vadd.f32 %v2859, %v2959
      %v3068 = vadd.f32 %v2860, %v2962
      %v3069 = vadd.f32 %v2861, %v2967
      %v3070 = vadd.f32 %v2862, %v2970
      %v3071 = vadd.f32 %v2863, %v2975
      %v3072 = vadd.f32 %v2864, %v2978
      %v3073 = vadd.f32 %v2865, %v2983
      %v3074 = vadd.f32 %v2866, %v2986
      %v3075 = vadd.f32 %v2867, %v2991
      %v3076 = vadd.f32 %v2868, %v2994
      %v3077 = vadd.f32 %v2869, %v2999
      %v3078 = vadd.f32 %v2870, %v3002
      %v3079 = vadd.f32 %v2871, %v3007
      %v3080 = vadd.f32 %v2872, %v3010
      %v3081 = vadd.f32 %v2873, %v3015
      %v3082 = vadd.f32 %v2874, %v3018
      %v3083 = vadd.f32 %v2875, %v3023
      %v3084 = vadd.f32 %v2876, %v3026
      %v3085 = vadd.f32 %v2877, %v3031
      %v3086 = vadd.f32 %v2878, %v3034
      %v3087 = vadd.f32 %v2879, %v3039
      %v3088 = vadd.f32 %v2880, %v3042
      %v3089 = vadd.f32 %v2881, %v3047
      %v3090 = vadd.f32 %v2882, %v3050
      %v3091 = vadd.f32 %v2883, %v3055
      %v3092 = vadd.f32 %v2884, %v3058
      %s3093 = scalar_lea.vmem %s3, 48
      %v3094 = vld [vmem:[%s3093] sm:$0xf]
      %v3095 = vld [vmem:[%s3093 + $0x4] sm:$0x3]
      %v3103 = vunpack.c.l.b16 %v1663
      %v3104 = vunpack.c.l.b16 %v1664
      %v3105 = vunpack.c.l.b16 %v1665
      %v3106 = vunpack.c.l.b16 %v1666
      %v3107 = vunpack.c.l.b16 %v1667
      %v3108 = vunpack.c.l.b16 %v1668
      %v3109 = vunpack.c.l.b16 %v1669
      %v3110 = vpack.c.b16 %v3103, %v1975
      %v3111 = vpack.c.b16 %v3105, %v3104
      %v3112 = vpack.c.b16 %v3107, %v3106
      %v3113 = vpack.c.b16 %v3109, %v3108
      %v3116 = vunpack.c.l.b16 %v3094
      %v3117 = vunpack.c.l.b16 %v3095
      %v3118 = vpack.c.b16 %v3117, %v3116
      %v3120 = vsel %vm1761, %v3110, 0
      %v3123 = vsel %vm1761, %v3111, 0
      %v3126 = vsel %vm1761, %v3112, 0
      %v3129 = vsel %vm1761, %v3113, 0
      %v3132 = vsel %vm1227, %v3118, 0
      %3134 = vmatprep.subr.bf16.mxu0 0
      %3135 = vmatpush1.bf16.msra.mxu0 %v3132
      %3136 = vmatprep.subr.bf16.mxu0 0
      %3137 = vmatpush1.bf16.msra.mxu0 0
      %3138 = vmatprep.subr.bf16.mxu0 0
      %3139 = vmatpush1.bf16.msra.mxu0 0
      %3140 = vmatprep.subr.bf16.mxu0 0
      %3141 = vmatpush1.bf16.msra.mxu0 0
      %3142 = vmatprep.subr.bf16.mxu0 0
      %3143 = vmatpush1.bf16.msra.mxu0 0
      %3144 = vmatprep.subr.bf16.mxu0 0
      %3145 = vmatpush1.bf16.msra.mxu0 0
      %3146 = vmatprep.subr.bf16.mxu0 0
      %3147 = vmatpush1.bf16.msra.mxu0 0
      %3148 = vmatprep.subr.bf16.mxu0 0
      %3149 = vmatpush1.bf16.msra.mxu0 0
      %3150 = vmatprep.subr.bf16.mxu0 0
      %3151 = vmatpush1.bf16.msra.mxu0 0
      %3152 = vmatprep.subr.bf16.mxu0 0
      %3153 = vmatpush1.bf16.msra.mxu0 0
      %3154 = vmatprep.subr.bf16.mxu0 0
      %3155 = vmatpush1.bf16.msra.mxu0 0
      %3156 = vmatprep.subr.bf16.mxu0 0
      %3157 = vmatpush1.bf16.msra.mxu0 0
      %3158 = vmatprep.subr.bf16.mxu0 0
      %3159 = vmatpush1.bf16.msra.mxu0 0
      %3160 = vmatprep.subr.bf16.mxu0 0
      %3161 = vmatpush1.bf16.msra.mxu0 0
      %3162 = vmatprep.subr.bf16.mxu0 0
      %3163 = vmatpush1.bf16.msra.mxu0 0
      %3164 = vmatprep.subr.bf16.mxu0 0
      %3165 = vmatpush1.bf16.msra.mxu0 0
      %3166 = vmatprep.mubr.bf16.mxu0 0
      %3167 = vmatmul.mubr.bf16.gmra.mrb[0].mxu0 %v2022
      %v3168 = vpop.f32.mrb[0].mxu0
      %v3169 = vadd.f32 0.0, %v3168
      %v3170 = vpop.f32.mrb[0].mxu0
      %v3171 = vpop.f32.mrb[0].mxu0
      %v3172 = vadd.f32 0.0, %v3171
      %v3173 = vpop.f32.mrb[0].mxu0
      %3174 = vmatprep.mubr.bf16.mxu0 0
      %3175 = vmatmul.mubr.bf16.gmra.mrb[0].mxu0 %v2025
      %v3176 = vpop.f32.mrb[0].mxu0
      %v3177 = vadd.f32 0.0, %v3176
      %v3178 = vpop.f32.mrb[0].mxu0
      %v3179 = vpop.f32.mrb[0].mxu0
      %v3180 = vadd.f32 0.0, %v3179
      %v3181 = vpop.f32.mrb[0].mxu0
      %3182 = vmatprep.mubr.bf16.mxu0 0
      %3183 = vmatmul.mubr.bf16.gmra.mrb[0].mxu0 %v2028
      %v3184 = vpop.f32.mrb[0].mxu0
      %v3185 = vadd.f32 0.0, %v3184
      %v3186 = vpop.f32.mrb[0].mxu0
      %v3187 = vpop.f32.mrb[0].mxu0
      %v3188 = vadd.f32 0.0, %v3187
      %v3189 = vpop.f32.mrb[0].mxu0
      %3190 = vmatprep.mubr.bf16.mxu0 0
      %3191 = vmatmul.mubr.bf16.gmra.mrb[0].mxu0 %v2031
      %v3192 = vpop.f32.mrb[0].mxu0
      %v3193 = vadd.f32 0.0, %v3192
      %v3194 = vpop.f32.mrb[0].mxu0
      %v3195 = vpop.f32.mrb[0].mxu0
      %v3196 = vadd.f32 0.0, %v3195
      %v3197 = vpop.f32.mrb[0].mxu0
      %3198 = vmatprep.mubr.bf16.mxu0 0
      %3199 = vmatmul.mubr.bf16.gmra.mrb[0].mxu0 %v2034
      %v3200 = vpop.f32.mrb[0].mxu0
      %v3201 = vadd.f32 0.0, %v3200
      %v3202 = vpop.f32.mrb[0].mxu0
      %v3203 = vpop.f32.mrb[0].mxu0
      %v3204 = vadd.f32 0.0, %v3203
      %v3205 = vpop.f32.mrb[0].mxu0
      %3206 = vmatprep.mubr.bf16.mxu0 0
      %3207 = vmatmul.mubr.bf16.gmra.mrb[0].mxu0 %v2037
      %v3208 = vpop.f32.mrb[0].mxu0
      %v3209 = vadd.f32 0.0, %v3208
      %v3210 = vpop.f32.mrb[0].mxu0
      %v3211 = vpop.f32.mrb[0].mxu0
      %v3212 = vadd.f32 0.0, %v3211
      %v3213 = vpop.f32.mrb[0].mxu0
      %3214 = vmatprep.mubr.bf16.mxu0 0
      %3215 = vmatmul.mubr.bf16.gmra.mrb[0].mxu0 %v2040
      %v3216 = vpop.f32.mrb[0].mxu0
      %v3217 = vadd.f32 0.0, %v3216
      %v3218 = vpop.f32.mrb[0].mxu0
      %v3219 = vpop.f32.mrb[0].mxu0
      %v3220 = vadd.f32 0.0, %v3219
      %v3221 = vpop.f32.mrb[0].mxu0
      %3222 = vmatprep.mubr.bf16.mxu0 0
      %3223 = vmatmul.mubr.bf16.gmra.mrb[0].mxu0 %v2043
      %v3224 = vpop.f32.mrb[0].mxu0
      %v3225 = vadd.f32 0.0, %v3224
      %v3226 = vpop.f32.mrb[0].mxu0
      %v3227 = vpop.f32.mrb[0].mxu0
      %v3228 = vadd.f32 0.0, %v3227
      %v3229 = vpop.f32.mrb[0].mxu0
      %3230 = vmatprep.mubr.bf16.mxu0 0
      %3231 = vmatmul.mubr.bf16.gmra.mrb[0].mxu0 %v2456
      %v3232 = vpop.f32.mrb[0].mxu0
      %v3233 = vadd.f32 0.0, %v3232
      %v3234 = vpop.f32.mrb[0].mxu0
      %v3235 = vpop.f32.mrb[0].mxu0
      %v3236 = vadd.f32 0.0, %v3235
      %v3237 = vpop.f32.mrb[0].mxu0
      %3238 = vmatprep.mubr.bf16.mxu0 0
      %3239 = vmatmul.mubr.bf16.gmra.mrb[0].mxu0 %v2459
      %v3240 = vpop.f32.mrb[0].mxu0
      %v3241 = vadd.f32 0.0, %v3240
      %v3242 = vpop.f32.mrb[0].mxu0
      %v3243 = vpop.f32.mrb[0].mxu0
      %v3244 = vadd.f32 0.0, %v3243
      %v3245 = vpop.f32.mrb[0].mxu0
      %3246 = vmatprep.mubr.bf16.mxu0 0
      %3247 = vmatmul.mubr.bf16.gmra.mrb[0].mxu0 %v2462
      %v3248 = vpop.f32.mrb[0].mxu0
      %v3249 = vadd.f32 0.0, %v3248
      %v3250 = vpop.f32.mrb[0].mxu0
      %v3251 = vpop.f32.mrb[0].mxu0
      %v3252 = vadd.f32 0.0, %v3251
      %v3253 = vpop.f32.mrb[0].mxu0
      %3254 = vmatprep.mubr.bf16.mxu0 0
      %3255 = vmatmul.mubr.bf16.gmra.mrb[0].mxu0 %v2465
      %v3256 = vpop.f32.mrb[0].mxu0
      %v3257 = vadd.f32 0.0, %v3256
      %v3258 = vpop.f32.mrb[0].mxu0
      %v3259 = vpop.f32.mrb[0].mxu0
      %v3260 = vadd.f32 0.0, %v3259
      %v3261 = vpop.f32.mrb[0].mxu0
      %3262 = vmatprep.mubr.bf16.mxu0 0
      %3263 = vmatmul.mubr.bf16.gmra.mrb[0].mxu0 %v3120
      %v3264 = vpop.f32.mrb[0].mxu0
      %v3265 = vadd.f32 0.0, %v3264
      %v3266 = vpop.f32.mrb[0].mxu0
      %v3267 = vpop.f32.mrb[0].mxu0
      %v3268 = vadd.f32 0.0, %v3267
      %v3269 = vpop.f32.mrb[0].mxu0
      %3270 = vmatprep.mubr.bf16.mxu0 0
      %3271 = vmatmul.mubr.bf16.gmra.mrb[0].mxu0 %v3123
      %v3272 = vpop.f32.mrb[0].mxu0
      %v3273 = vadd.f32 0.0, %v3272
      %v3274 = vpop.f32.mrb[0].mxu0
      %v3275 = vpop.f32.mrb[0].mxu0
      %v3276 = vadd.f32 0.0, %v3275
      %v3277 = vpop.f32.mrb[0].mxu0
      %3278 = vmatprep.mubr.bf16.mxu0 0
      %3279 = vmatmul.mubr.bf16.gmra.mrb[0].mxu0 %v3126
      %v3280 = vpop.f32.mrb[0].mxu0
      %v3281 = vadd.f32 0.0, %v3280
      %v3282 = vpop.f32.mrb[0].mxu0
      %v3283 = vpop.f32.mrb[0].mxu0
      %v3284 = vadd.f32 0.0, %v3283
      %v3285 = vpop.f32.mrb[0].mxu0
      %3286 = vmatprep.mubr.bf16.mxu0 0
      %3287 = vmatmul.mubr.bf16.gmra.mrb[0].mxu0 %v3129
      %v3288 = vpop.f32.mrb[0].mxu0
      %v3289 = vadd.f32 0.0, %v3288
      %v3290 = vpop.f32.mrb[0].mxu0
      %v3291 = vpop.f32.mrb[0].mxu0
      %v3292 = vadd.f32 0.0, %v3291
      %v3293 = vpop.f32.mrb[0].mxu0
      %3294 = vdwg.mxu0
      %v3295 = vadd.f32 %v3061, %v3169
      %v3296 = vadd.f32 %v3062, %v3172
      %v3297 = vadd.f32 %v3063, %v3177
      %v3298 = vadd.f32 %v3064, %v3180
      %v3299 = vadd.f32 %v3065, %v3185
      %v3300 = vadd.f32 %v3066, %v3188
      %v3301 = vadd.f32 %v3067, %v3193
      %v3302 = vadd.f32 %v3068, %v3196
      %v3303 = vadd.f32 %v3069, %v3201
      %v3304 = vadd.f32 %v3070, %v3204
      %v3305 = vadd.f32 %v3071, %v3209
      %v3306 = vadd.f32 %v3072, %v3212
      %v3307 = vadd.f32 %v3073, %v3217
      %v3308 = vadd.f32 %v3074, %v3220
      %v3309 = vadd.f32 %v3075, %v3225
      %v3310 = vadd.f32 %v3076, %v3228
      %v3311 = vadd.f32 %v3077, %v3233
      %v3312 = vadd.f32 %v3078, %v3236
      %v3313 = vadd.f32 %v3079, %v3241
      %v3314 = vadd.f32 %v3080, %v3244
      %v3315 = vadd.f32 %v3081, %v3249
      %v3316 = vadd.f32 %v3082, %v3252
      %v3317 = vadd.f32 %v3083, %v3257
      %v3318 = vadd.f32 %v3084, %v3260
      %v3319 = vadd.f32 %v3085, %v3265
      %v3320 = vadd.f32 %v3086, %v3268
      %v3321 = vadd.f32 %v3087, %v3273
      %v3322 = vadd.f32 %v3088, %v3276
      %v3323 = vadd.f32 %v3089, %v3281
      %v3324 = vadd.f32 %v3090, %v3284
      %v3325 = vadd.f32 %v3091, %v3289
      %v3326 = vadd.f32 %v3092, %v3292
      %s3327 = scalar_lea.vmem %s3, 56
      %v3328 = vld [vmem:[%s3327] sm:$0xf]
      %v3329 = vld [vmem:[%s3327 + $0x4] sm:$0x3]
      %v3331 = vunpack.c.l.b16 %v1670
      %v3332 = vpack.c.b16 %v3104, %v3103
      %v3333 = vpack.c.b16 %v3106, %v3105
      %v3334 = vpack.c.b16 %v3108, %v3107
      %v3335 = vpack.c.b16 %v3331, %v3109
      %v3338 = vunpack.c.l.b16 %v3328
      %v3339 = vunpack.c.l.b16 %v3329
      %v3340 = vpack.c.b16 %v3339, %v3338
      %v3342 = vsel %vm1761, %v3332, 0
      %v3345 = vsel %vm1761, %v3333, 0
      %v3348 = vsel %vm1761, %v3334, 0
      %v3351 = vsel %vm1761, %v3335, 0
      %v3354 = vsel %vm1227, %v3340, 0
      %3356 = vmatprep.subr.bf16.mxu0 0
      %3357 = vmatpush1.bf16.msra.mxu0 %v3354
      %3358 = vmatprep.subr.bf16.mxu0 0
      %3359 = vmatpush1.bf16.msra.mxu0 0
      %3360 = vmatprep.subr.bf16.mxu0 0
      %3361 = vmatpush1.bf16.msra.mxu0 0
      %3362 = vmatprep.subr.bf16.mxu0 0
      %3363 = vmatpush1.bf16.msra.mxu0 0
      %3364 = vmatprep.subr.bf16.mxu0 0
      %3365 = vmatpush1.bf16.msra.mxu0 0
      %3366 = vmatprep.subr.bf16.mxu0 0
      %3367 = vmatpush1.bf16.msra.mxu0 0
      %3368 = vmatprep.subr.bf16.mxu0 0
      %3369 = vmatpush1.bf16.msra.mxu0 0
      %3370 = vmatprep.subr.bf16.mxu0 0
      %3371 = vmatpush1.bf16.msra.mxu0 0
      %3372 = vmatprep.subr.bf16.mxu0 0
      %3373 = vmatpush1.bf16.msra.mxu0 0
      %3374 = vmatprep.subr.bf16.mxu0 0
      %3375 = vmatpush1.bf16.msra.mxu0 0
      %3376 = vmatprep.subr.bf16.mxu0 0
      %3377 = vmatpush1.bf16.msra.mxu0 0
      %3378 = vmatprep.subr.bf16.mxu0 0
      %3379 = vmatpush1.bf16.msra.mxu0 0
      %3380 = vmatprep.subr.bf16.mxu0 0
      %3381 = vmatpush1.bf16.msra.mxu0 0
      %3382 = vmatprep.subr.bf16.mxu0 0
      %3383 = vmatpush1.bf16.msra.mxu0 0
      %3384 = vmatprep.subr.bf16.mxu0 0
      %3385 = vmatpush1.bf16.msra.mxu0 0
      %3386 = vmatprep.subr.bf16.mxu0 0
      %3387 = vmatpush1.bf16.msra.mxu0 0
      %3388 = vmatprep.mubr.bf16.mxu0 0
      %3389 = vmatmul.mubr.bf16.gmra.mrb[0].mxu0 %v1787
      %v3390 = vpop.f32.mrb[0].mxu0
      %v3391 = vadd.f32 0.0, %v3390
      %v3392 = vpop.f32.mrb[0].mxu0
      %v3393 = vpop.f32.mrb[0].mxu0
      %v3394 = vadd.f32 0.0, %v3393
      %v3395 = vpop.f32.mrb[0].mxu0
      %3396 = vmatprep.mubr.bf16.mxu0 0
      %3397 = vmatmul.mubr.bf16.gmra.mrb[0].mxu0 %v1790
      %v3398 = vpop.f32.mrb[0].mxu0
      %v3399 = vadd.f32 0.0, %v3398
      %v3400 = vpop.f32.mrb[0].mxu0
      %v3401 = vpop.f32.mrb[0].mxu0
      %v3402 = vadd.f32 0.0, %v3401
      %v3403 = vpop.f32.mrb[0].mxu0
      %3404 = vmatprep.mubr.bf16.mxu0 0
      %3405 = vmatmul.mubr.bf16.gmra.mrb[0].mxu0 %v1793
      %v3406 = vpop.f32.mrb[0].mxu0
      %v3407 = vadd.f32 0.0, %v3406
      %v3408 = vpop.f32.mrb[0].mxu0
      %v3409 = vpop.f32.mrb[0].mxu0
      %v3410 = vadd.f32 0.0, %v3409
      %v3411 = vpop.f32.mrb[0].mxu0
      %3412 = vmatprep.mubr.bf16.mxu0 0
      %3413 = vmatmul.mubr.bf16.gmra.mrb[0].mxu0 %v1796
      %v3414 = vpop.f32.mrb[0].mxu0
      %v3415 = vadd.f32 0.0, %v3414
      %v3416 = vpop.f32.mrb[0].mxu0
      %v3417 = vpop.f32.mrb[0].mxu0
      %v3418 = vadd.f32 0.0, %v3417
      %v3419 = vpop.f32.mrb[0].mxu0
      %3420 = vmatprep.mubr.bf16.mxu0 0
      %3421 = vmatmul.mubr.bf16.gmra.mrb[0].mxu0 %v1799
      %v3422 = vpop.f32.mrb[0].mxu0
      %v3423 = vadd.f32 0.0, %v3422
      %v3424 = vpop.f32.mrb[0].mxu0
      %v3425 = vpop.f32.mrb[0].mxu0
      %v3426 = vadd.f32 0.0, %v3425
      %v3427 = vpop.f32.mrb[0].mxu0
      %3428 = vmatprep.mubr.bf16.mxu0 0
      %3429 = vmatmul.mubr.bf16.gmra.mrb[0].mxu0 %v1802
      %v3430 = vpop.f32.mrb[0].mxu0
      %v3431 = vadd.f32 0.0, %v3430
      %v3432 = vpop.f32.mrb[0].mxu0
      %v3433 = vpop.f32.mrb[0].mxu0
      %v3434 = vadd.f32 0.0, %v3433
      %v3435 = vpop.f32.mrb[0].mxu0
      %3436 = vmatprep.mubr.bf16.mxu0 0
      %3437 = vmatmul.mubr.bf16.gmra.mrb[0].mxu0 %v1805
      %v3438 = vpop.f32.mrb[0].mxu0
      %v3439 = vadd.f32 0.0, %v3438
      %v3440 = vpop.f32.mrb[0].mxu0
      %v3441 = vpop.f32.mrb[0].mxu0
      %v3442 = vadd.f32 0.0, %v3441
      %v3443 = vpop.f32.mrb[0].mxu0
      %3444 = vmatprep.mubr.bf16.mxu0 0
      %3445 = vmatmul.mubr.bf16.gmra.mrb[0].mxu0 %v1808
      %v3446 = vpop.f32.mrb[0].mxu0
      %v3447 = vadd.f32 0.0, %v3446
      %v3448 = vpop.f32.mrb[0].mxu0
      %v3449 = vpop.f32.mrb[0].mxu0
      %v3450 = vadd.f32 0.0, %v3449
      %v3451 = vpop.f32.mrb[0].mxu0
      %3452 = vmatprep.mubr.bf16.mxu0 0
      %3453 = vmatmul.mubr.bf16.gmra.mrb[0].mxu0 %v2678
      %v3454 = vpop.f32.mrb[0].mxu0
      %v3455 = vadd.f32 0.0, %v3454
      %v3456 = vpop.f32.mrb[0].mxu0
      %v3457 = vpop.f32.mrb[0].mxu0
      %v3458 = vadd.f32 0.0, %v3457
      %v3459 = vpop.f32.mrb[0].mxu0
      %3460 = vmatprep.mubr.bf16.mxu0 0
      %3461 = vmatmul.mubr.bf16.gmra.mrb[0].mxu0 %v2681
      %v3462 = vpop.f32.mrb[0].mxu0
      %v3463 = vadd.f32 0.0, %v3462
      %v3464 = vpop.f32.mrb[0].mxu0
      %v3465 = vpop.f32.mrb[0].mxu0
      %v3466 = vadd.f32 0.0, %v3465
      %v3467 = vpop.f32.mrb[0].mxu0
      %3468 = vmatprep.mubr.bf16.mxu0 0
      %3469 = vmatmul.mubr.bf16.gmra.mrb[0].mxu0 %v2684
      %v3470 = vpop.f32.mrb[0].mxu0
      %v3471 = vadd.f32 0.0, %v3470
      %v3472 = vpop.f32.mrb[0].mxu0
      %v3473 = vpop.f32.mrb[0].mxu0
      %v3474 = vadd.f32 0.0, %v3473
      %v3475 = vpop.f32.mrb[0].mxu0
      %3476 = vmatprep.mubr.bf16.mxu0 0
      %3477 = vmatmul.mubr.bf16.gmra.mrb[0].mxu0 %v2687
      %v3478 = vpop.f32.mrb[0].mxu0
      %v3479 = vadd.f32 0.0, %v3478
      %v3480 = vpop.f32.mrb[0].mxu0
      %v3481 = vpop.f32.mrb[0].mxu0
      %v3482 = vadd.f32 0.0, %v3481
      %v3483 = vpop.f32.mrb[0].mxu0
      %3484 = vmatprep.mubr.bf16.mxu0 0
      %3485 = vmatmul.mubr.bf16.gmra.mrb[0].mxu0 %v3342
      %v3486 = vpop.f32.mrb[0].mxu0
      %v3487 = vadd.f32 0.0, %v3486
      %v3488 = vpop.f32.mrb[0].mxu0
      %v3489 = vpop.f32.mrb[0].mxu0
      %v3490 = vadd.f32 0.0, %v3489
      %v3491 = vpop.f32.mrb[0].mxu0
      %3492 = vmatprep.mubr.bf16.mxu0 0
      %3493 = vmatmul.mubr.bf16.gmra.mrb[0].mxu0 %v3345
      %v3494 = vpop.f32.mrb[0].mxu0
      %v3495 = vadd.f32 0.0, %v3494
      %v3496 = vpop.f32.mrb[0].mxu0
      %v3497 = vpop.f32.mrb[0].mxu0
      %v3498 = vadd.f32 0.0, %v3497
      %v3499 = vpop.f32.mrb[0].mxu0
      %3500 = vmatprep.mubr.bf16.mxu0 0
      %3501 = vmatmul.mubr.bf16.gmra.mrb[0].mxu0 %v3348
      %v3502 = vpop.f32.mrb[0].mxu0
      %v3503 = vadd.f32 0.0, %v3502
      %v3504 = vpop.f32.mrb[0].mxu0
      %v3505 = vpop.f32.mrb[0].mxu0
      %v3506 = vadd.f32 0.0, %v3505
      %v3507 = vpop.f32.mrb[0].mxu0
      %3508 = vmatprep.mubr.bf16.mxu0 0
      %3509 = vmatmul.mubr.bf16.gmra.mrb[0].mxu0 %v3351
      %v3510 = vpop.f32.mrb[0].mxu0
      %v3511 = vadd.f32 0.0, %v3510
      %v3512 = vpop.f32.mrb[0].mxu0
      %v3513 = vpop.f32.mrb[0].mxu0
      %v3514 = vadd.f32 0.0, %v3513
      %v3515 = vpop.f32.mrb[0].mxu0
      %3516 = vdwg.mxu0
      %v3517 = vadd.f32 %v3295, %v3391
      %v3518 = vadd.f32 %v3296, %v3394
      %v3519 = vadd.f32 %v3297, %v3399
      %v3520 = vadd.f32 %v3298, %v3402
      %v3521 = vadd.f32 %v3299, %v3407
      %v3522 = vadd.f32 %v3300, %v3410
      %v3523 = vadd.f32 %v3301, %v3415
      %v3524 = vadd.f32 %v3302, %v3418
      %v3525 = vadd.f32 %v3303, %v3423
      %v3526 = vadd.f32 %v3304, %v3426
      %v3527 = vadd.f32 %v3305, %v3431
      %v3528 = vadd.f32 %v3306, %v3434
      %v3529 = vadd.f32 %v3307, %v3439
      %v3530 = vadd.f32 %v3308, %v3442
      %v3531 = vadd.f32 %v3309, %v3447
      %v3532 = vadd.f32 %v3310, %v3450
      %v3533 = vadd.f32 %v3311, %v3455
      %v3534 = vadd.f32 %v3312, %v3458
      %v3535 = vadd.f32 %v3313, %v3463
      %v3536 = vadd.f32 %v3314, %v3466
      %v3537 = vadd.f32 %v3315, %v3471
      %v3538 = vadd.f32 %v3316, %v3474
      %v3539 = vadd.f32 %v3317, %v3479
      %v3540 = vadd.f32 %v3318, %v3482
      %v3541 = vadd.f32 %v3319, %v3487
      %v3542 = vadd.f32 %v3320, %v3490
      %v3543 = vadd.f32 %v3321, %v3495
      %v3544 = vadd.f32 %v3322, %v3498
      %v3545 = vadd.f32 %v3323, %v3503
      %v3546 = vadd.f32 %v3324, %v3506
      %v3547 = vadd.f32 %v3325, %v3511
      %v3548 = vadd.f32 %v3326, %v3514
      %s3549 = scalar_lea.vmem %s3, 64
      %v3550 = vld [vmem:[%s3549] sm:$0xf]
      %v3551 = vld [vmem:[%s3549 + $0x4] sm:$0x3]
      %v3552 = vpack.c.b16 %v1975, %v3331
      %v3555 = vunpack.c.l.b16 %v3550
      %v3556 = vunpack.c.l.b16 %v3551
      %v3557 = vpack.c.b16 %v3556, %v3555
      %v3559 = vsel %vm1761, %v3552, 0
      %v3562 = vsel %vm1227, %v3557, 0
      %3564 = vmatprep.subr.bf16.mxu0 0
      %3565 = vmatpush1.bf16.msra.mxu0 %v3562
      %3566 = vmatprep.subr.bf16.mxu0 0
      %3567 = vmatpush1.bf16.msra.mxu0 0
      %3568 = vmatprep.subr.bf16.mxu0 0
      %3569 = vmatpush1.bf16.msra.mxu0 0
      %3570 = vmatprep.subr.bf16.mxu0 0
      %3571 = vmatpush1.bf16.msra.mxu0 0
      %3572 = vmatprep.subr.bf16.mxu0 0
      %3573 = vmatpush1.bf16.msra.mxu0 0
      %3574 = vmatprep.subr.bf16.mxu0 0
      %3575 = vmatpush1.bf16.msra.mxu0 0
      %3576 = vmatprep.subr.bf16.mxu0 0
      %3577 = vmatpush1.bf16.msra.mxu0 0
      %3578 = vmatprep.subr.bf16.mxu0 0
      %3579 = vmatpush1.bf16.msra.mxu0 0
      %3580 = vmatprep.subr.bf16.mxu0 0
      %3581 = vmatpush1.bf16.msra.mxu0 0
      %3582 = vmatprep.subr.bf16.mxu0 0
      %3583 = vmatpush1.bf16.msra.mxu0 0
      %3584 = vmatprep.subr.bf16.mxu0 0
      %3585 = vmatpush1.bf16.msra.mxu0 0
      %3586 = vmatprep.subr.bf16.mxu0 0
      %3587 = vmatpush1.bf16.msra.mxu0 0
      %3588 = vmatprep.subr.bf16.mxu0 0
      %3589 = vmatpush1.bf16.msra.mxu0 0
      %3590 = vmatprep.subr.bf16.mxu0 0
      %3591 = vmatpush1.bf16.msra.mxu0 0
      %3592 = vmatprep.subr.bf16.mxu0 0
      %3593 = vmatpush1.bf16.msra.mxu0 0
      %3594 = vmatprep.subr.bf16.mxu0 0
      %3595 = vmatpush1.bf16.msra.mxu0 0
      %3596 = vmatprep.mubr.bf16.mxu0 0
      %3597 = vmatmul.mubr.bf16.gmra.mrb[0].mxu0 %v2025
      %v3598 = vpop.f32.mrb[0].mxu0
      %v3599 = vadd.f32 0.0, %v3598
      %v3600 = vpop.f32.mrb[0].mxu0
      %v3601 = vpop.f32.mrb[0].mxu0
      %v3602 = vadd.f32 0.0, %v3601
      %v3603 = vpop.f32.mrb[0].mxu0
      %3604 = vmatprep.mubr.bf16.mxu0 0
      %3605 = vmatmul.mubr.bf16.gmra.mrb[0].mxu0 %v2028
      %v3606 = vpop.f32.mrb[0].mxu0
      %v3607 = vadd.f32 0.0, %v3606
      %v3608 = vpop.f32.mrb[0].mxu0
      %v3609 = vpop.f32.mrb[0].mxu0
      %v3610 = vadd.f32 0.0, %v3609
      %v3611 = vpop.f32.mrb[0].mxu0
      %3612 = vmatprep.mubr.bf16.mxu0 0
      %3613 = vmatmul.mubr.bf16.gmra.mrb[0].mxu0 %v2031
      %v3614 = vpop.f32.mrb[0].mxu0
      %v3615 = vadd.f32 0.0, %v3614
      %v3616 = vpop.f32.mrb[0].mxu0
      %v3617 = vpop.f32.mrb[0].mxu0
      %v3618 = vadd.f32 0.0, %v3617
      %v3619 = vpop.f32.mrb[0].mxu0
      %3620 = vmatprep.mubr.bf16.mxu0 0
      %3621 = vmatmul.mubr.bf16.gmra.mrb[0].mxu0 %v2228
      %v3622 = vpop.f32.mrb[0].mxu0
      %v3623 = vadd.f32 0.0, %v3622
      %v3624 = vpop.f32.mrb[0].mxu0
      %v3625 = vpop.f32.mrb[0].mxu0
      %v3626 = vadd.f32 0.0, %v3625
      %v3627 = vpop.f32.mrb[0].mxu0
      %3628 = vmatprep.mubr.bf16.mxu0 0
      %3629 = vmatmul.mubr.bf16.gmra.mrb[0].mxu0 %v2037
      %v3630 = vpop.f32.mrb[0].mxu0
      %v3631 = vadd.f32 0.0, %v3630
      %v3632 = vpop.f32.mrb[0].mxu0
      %v3633 = vpop.f32.mrb[0].mxu0
      %v3634 = vadd.f32 0.0, %v3633
      %v3635 = vpop.f32.mrb[0].mxu0
      %3636 = vmatprep.mubr.bf16.mxu0 0
      %3637 = vmatmul.mubr.bf16.gmra.mrb[0].mxu0 %v2040
      %v3638 = vpop.f32.mrb[0].mxu0
      %v3639 = vadd.f32 0.0, %v3638
      %v3640 = vpop.f32.mrb[0].mxu0
      %v3641 = vpop.f32.mrb[0].mxu0
      %v3642 = vadd.f32 0.0, %v3641
      %v3643 = vpop.f32.mrb[0].mxu0
      %3644 = vmatprep.mubr.bf16.mxu0 0
      %3645 = vmatmul.mubr.bf16.gmra.mrb[0].mxu0 %v2043
      %v3646 = vpop.f32.mrb[0].mxu0
      %v3647 = vadd.f32 0.0, %v3646
      %v3648 = vpop.f32.mrb[0].mxu0
      %v3649 = vpop.f32.mrb[0].mxu0
      %v3650 = vadd.f32 0.0, %v3649
      %v3651 = vpop.f32.mrb[0].mxu0
      %3652 = vmatprep.mubr.bf16.mxu0 0
      %3653 = vmatmul.mubr.bf16.gmra.mrb[0].mxu0 %v2231
      %v3654 = vpop.f32.mrb[0].mxu0
      %v3655 = vadd.f32 0.0, %v3654
      %v3656 = vpop.f32.mrb[0].mxu0
      %v3657 = vpop.f32.mrb[0].mxu0
      %v3658 = vadd.f32 0.0, %v3657
      %v3659 = vpop.f32.mrb[0].mxu0
      %3660 = vmatprep.mubr.bf16.mxu0 0
      %3661 = vmatmul.mubr.bf16.gmra.mrb[0].mxu0 %v2459
      %v3662 = vpop.f32.mrb[0].mxu0
      %v3663 = vadd.f32 0.0, %v3662
      %v3664 = vpop.f32.mrb[0].mxu0
      %v3665 = vpop.f32.mrb[0].mxu0
      %v3666 = vadd.f32 0.0, %v3665
      %v3667 = vpop.f32.mrb[0].mxu0
      %3668 = vmatprep.mubr.bf16.mxu0 0
      %3669 = vmatmul.mubr.bf16.gmra.mrb[0].mxu0 %v2462
      %v3670 = vpop.f32.mrb[0].mxu0
      %v3671 = vadd.f32 0.0, %v3670
      %v3672 = vpop.f32.mrb[0].mxu0
      %v3673 = vpop.f32.mrb[0].mxu0
      %v3674 = vadd.f32 0.0, %v3673
      %v3675 = vpop.f32.mrb[0].mxu0
      %3676 = vmatprep.mubr.bf16.mxu0 0
      %3677 = vmatmul.mubr.bf16.gmra.mrb[0].mxu0 %v2465
      %v3678 = vpop.f32.mrb[0].mxu0
      %v3679 = vadd.f32 0.0, %v3678
      %v3680 = vpop.f32.mrb[0].mxu0
      %v3681 = vpop.f32.mrb[0].mxu0
      %v3682 = vadd.f32 0.0, %v3681
      %v3683 = vpop.f32.mrb[0].mxu0
      %3684 = vmatprep.mubr.bf16.mxu0 0
      %3685 = vmatmul.mubr.bf16.gmra.mrb[0].mxu0 %v2895
      %v3686 = vpop.f32.mrb[0].mxu0
      %v3687 = vadd.f32 0.0, %v3686
      %v3688 = vpop.f32.mrb[0].mxu0
      %v3689 = vpop.f32.mrb[0].mxu0
      %v3690 = vadd.f32 0.0, %v3689
      %v3691 = vpop.f32.mrb[0].mxu0
      %3692 = vmatprep.mubr.bf16.mxu0 0
      %3693 = vmatmul.mubr.bf16.gmra.mrb[0].mxu0 %v3123
      %v3694 = vpop.f32.mrb[0].mxu0
      %v3695 = vadd.f32 0.0, %v3694
      %v3696 = vpop.f32.mrb[0].mxu0
      %v3697 = vpop.f32.mrb[0].mxu0
      %v3698 = vadd.f32 0.0, %v3697
      %v3699 = vpop.f32.mrb[0].mxu0
      %3700 = vmatprep.mubr.bf16.mxu0 0
      %3701 = vmatmul.mubr.bf16.gmra.mrb[0].mxu0 %v3126
      %v3702 = vpop.f32.mrb[0].mxu0
      %v3703 = vadd.f32 0.0, %v3702
      %v3704 = vpop.f32.mrb[0].mxu0
      %v3705 = vpop.f32.mrb[0].mxu0
      %v3706 = vadd.f32 0.0, %v3705
      %v3707 = vpop.f32.mrb[0].mxu0
      %3708 = vmatprep.mubr.bf16.mxu0 0
      %3709 = vmatmul.mubr.bf16.gmra.mrb[0].mxu0 %v3129
      %v3710 = vpop.f32.mrb[0].mxu0
      %v3711 = vadd.f32 0.0, %v3710
      %v3712 = vpop.f32.mrb[0].mxu0
      %v3713 = vpop.f32.mrb[0].mxu0
      %v3714 = vadd.f32 0.0, %v3713
      %v3715 = vpop.f32.mrb[0].mxu0
      %3716 = vmatprep.mubr.bf16.mxu0 0
      %3717 = vmatmul.mubr.bf16.gmra.mrb[0].mxu0 %v3559
      %v3718 = vpop.f32.mrb[0].mxu0
      %v3719 = vadd.f32 0.0, %v3718
      %v3720 = vpop.f32.mrb[0].mxu0
      %v3721 = vpop.f32.mrb[0].mxu0
      %v3722 = vadd.f32 0.0, %v3721
      %v3723 = vpop.f32.mrb[0].mxu0
      %3724 = vdwg.mxu0
      %v3725 = vadd.f32 %v3517, %v3599
      %v3726 = vadd.f32 %v3518, %v3602
      %v3727 = vadd.f32 %v3519, %v3607
      %v3728 = vadd.f32 %v3520, %v3610
      %v3729 = vadd.f32 %v3521, %v3615
      %v3730 = vadd.f32 %v3522, %v3618
      %v3731 = vadd.f32 %v3523, %v3623
      %v3732 = vadd.f32 %v3524, %v3626
      %v3733 = vadd.f32 %v3525, %v3631
      %v3734 = vadd.f32 %v3526, %v3634
      %v3735 = vadd.f32 %v3527, %v3639
      %v3736 = vadd.f32 %v3528, %v3642
      %v3737 = vadd.f32 %v3529, %v3647
      %v3738 = vadd.f32 %v3530, %v3650
      %v3739 = vadd.f32 %v3531, %v3655
      %v3740 = vadd.f32 %v3532, %v3658
      %v3741 = vadd.f32 %v3533, %v3663
      %v3742 = vadd.f32 %v3534, %v3666
      %v3743 = vadd.f32 %v3535, %v3671
      %v3744 = vadd.f32 %v3536, %v3674
      %v3745 = vadd.f32 %v3537, %v3679
      %v3746 = vadd.f32 %v3538, %v3682
      %v3747 = vadd.f32 %v3539, %v3687
      %v3748 = vadd.f32 %v3540, %v3690
      %v3749 = vadd.f32 %v3541, %v3695
      %v3750 = vadd.f32 %v3542, %v3698
      %v3751 = vadd.f32 %v3543, %v3703
      %v3752 = vadd.f32 %v3544, %v3706
      %v3753 = vadd.f32 %v3545, %v3711
      %v3754 = vadd.f32 %v3546, %v3714
      %v3755 = vadd.f32 %v3547, %v3719
      %v3756 = vadd.f32 %v3548, %v3722
      %v3757 = vsel %vm1572, %v3725, 0.0
      %v3758 = vsel %vm1572, %v3726, 0.0
      %v3759 = vadd.f32 %v3757, %v3758
      %v3760 = vsel %vm1572, %v3727, 0.0
      %v3761 = vadd.f32 %v3759, %v3760
      %v3762 = vsel %vm1572, %v3728, 0.0
      %v3763 = vadd.f32 %v3761, %v3762
      %v3764 = vsel %vm1572, %v3729, 0.0
      %v3765 = vadd.f32 %v3763, %v3764
      %v3766 = vsel %vm1572, %v3730, 0.0
      %v3767 = vadd.f32 %v3765, %v3766
      %v3768 = vsel %vm1572, %v3731, 0.0
      %v3769 = vadd.f32 %v3767, %v3768
      %v3770 = vsel %vm1572, %v3732, 0.0
      %v3771 = vadd.f32 %v3769, %v3770
      %v3772 = vsel %vm1572, %v3733, 0.0
      %v3773 = vadd.f32 %v3771, %v3772
      %v3774 = vsel %vm1572, %v3734, 0.0
      %v3775 = vadd.f32 %v3773, %v3774
      %v3776 = vsel %vm1572, %v3735, 0.0
      %v3777 = vadd.f32 %v3775, %v3776
      %v3778 = vsel %vm1572, %v3736, 0.0
      %v3779 = vadd.f32 %v3777, %v3778
      %v3780 = vsel %vm1572, %v3737, 0.0
      %v3781 = vadd.f32 %v3779, %v3780
      %v3782 = vsel %vm1572, %v3738, 0.0
      %v3783 = vadd.f32 %v3781, %v3782
      %v3784 = vsel %vm1572, %v3739, 0.0
      %v3785 = vadd.f32 %v3783, %v3784
      %v3786 = vsel %vm1572, %v3740, 0.0
      %v3787 = vadd.f32 %v3785, %v3786
      %v3788 = vsel %vm1572, %v3741, 0.0
      %v3789 = vadd.f32 %v3787, %v3788
      %v3790 = vsel %vm1572, %v3742, 0.0
      %v3791 = vadd.f32 %v3789, %v3790
      %v3792 = vsel %vm1572, %v3743, 0.0
      %v3793 = vadd.f32 %v3791, %v3792
      %v3794 = vsel %vm1572, %v3744, 0.0
      %v3795 = vadd.f32 %v3793, %v3794
      %v3796 = vsel %vm1572, %v3745, 0.0
      %v3797 = vadd.f32 %v3795, %v3796
      %v3798 = vsel %vm1572, %v3746, 0.0
      %v3799 = vadd.f32 %v3797, %v3798
      %v3800 = vsel %vm1572, %v3747, 0.0
      %v3801 = vadd.f32 %v3799, %v3800
      %v3802 = vsel %vm1572, %v3748, 0.0
      %v3803 = vadd.f32 %v3801, %v3802
      %v3804 = vsel %vm1572, %v3749, 0.0
      %v3805 = vadd.f32 %v3803, %v3804
      %v3806 = vsel %vm1572, %v3750, 0.0
      %v3807 = vadd.f32 %v3805, %v3806
      %v3808 = vsel %vm1572, %v3751, 0.0
      %v3809 = vadd.f32 %v3807, %v3808
      %v3810 = vsel %vm1572, %v3752, 0.0
      %v3811 = vadd.f32 %v3809, %v3810
      %v3812 = vsel %vm1572, %v3753, 0.0
      %v3813 = vadd.f32 %v3811, %v3812
      %v3814 = vsel %vm1572, %v3754, 0.0
      %v3815 = vadd.f32 %v3813, %v3814
      %v3816 = vsel %vm1572, %v3755, 0.0
      %v3817 = vadd.f32 %v3815, %v3816
      %v3818 = vsel %vm1572, %v3756, 0.0
      %v3819 = vadd.f32 %v3817, %v3818
      %3820 = vst.msk [vmem:[%s506] sm:$0xff] %vm1572, %v3819
      %v3821 = vmul.f32 %v3725, %v3725
      %v3822 = vmul.f32 %v3726, %v3726
      %v3823 = vmul.f32 %v3727, %v3727
      %v3824 = vmul.f32 %v3728, %v3728
      %v3825 = vmul.f32 %v3729, %v3729
      %v3826 = vmul.f32 %v3730, %v3730
      %v3827 = vmul.f32 %v3731, %v3731
      %v3828 = vmul.f32 %v3732, %v3732
      %v3829 = vmul.f32 %v3733, %v3733
      %v3830 = vmul.f32 %v3734, %v3734
      %v3831 = vmul.f32 %v3735, %v3735
      %v3832 = vmul.f32 %v3736, %v3736
      %v3833 = vmul.f32 %v3737, %v3737
      %v3834 = vmul.f32 %v3738, %v3738
      %v3835 = vmul.f32 %v3739, %v3739
      %v3836 = vmul.f32 %v3740, %v3740
      %v3837 = vmul.f32 %v3741, %v3741
      %v3838 = vmul.f32 %v3742, %v3742
      %v3839 = vmul.f32 %v3743, %v3743
      %v3840 = vmul.f32 %v3744, %v3744
      %v3841 = vmul.f32 %v3745, %v3745
      %v3842 = vmul.f32 %v3746, %v3746
      %v3843 = vmul.f32 %v3747, %v3747
      %v3844 = vmul.f32 %v3748, %v3748
      %v3845 = vmul.f32 %v3749, %v3749
      %v3846 = vmul.f32 %v3750, %v3750
      %v3847 = vmul.f32 %v3751, %v3751
      %v3848 = vmul.f32 %v3752, %v3752
      %v3849 = vmul.f32 %v3753, %v3753
      %v3850 = vmul.f32 %v3754, %v3754
      %v3851 = vmul.f32 %v3755, %v3755
      %v3852 = vmul.f32 %v3756, %v3756
      %v3853 = vsel %vm1572, %v3821, 0.0
      %v3854 = vsel %vm1572, %v3822, 0.0
      %v3855 = vadd.f32 %v3853, %v3854
      %v3856 = vsel %vm1572, %v3823, 0.0
      %v3857 = vadd.f32 %v3855, %v3856
      %v3858 = vsel %vm1572, %v3824, 0.0
      %v3859 = vadd.f32 %v3857, %v3858
      %v3860 = vsel %vm1572, %v3825, 0.0
      %v3861 = vadd.f32 %v3859, %v3860
      %v3862 = vsel %vm1572, %v3826, 0.0
      %v3863 = vadd.f32 %v3861, %v3862
      %v3864 = vsel %vm1572, %v3827, 0.0
      %v3865 = vadd.f32 %v3863, %v3864
      %v3866 = vsel %vm1572, %v3828, 0.0
      %v3867 = vadd.f32 %v3865, %v3866
      %v3868 = vsel %vm1572, %v3829, 0.0
      %v3869 = vadd.f32 %v3867, %v3868
      %v3870 = vsel %vm1572, %v3830, 0.0
      %v3871 = vadd.f32 %v3869, %v3870
      %v3872 = vsel %vm1572, %v3831, 0.0
      %v3873 = vadd.f32 %v3871, %v3872
      %v3874 = vsel %vm1572, %v3832, 0.0
      %v3875 = vadd.f32 %v3873, %v3874
      %v3876 = vsel %vm1572, %v3833, 0.0
      %v3877 = vadd.f32 %v3875, %v3876
      %v3878 = vsel %vm1572, %v3834, 0.0
      %v3879 = vadd.f32 %v3877, %v3878
      %v3880 = vsel %vm1572, %v3835, 0.0
      %v3881 = vadd.f32 %v3879, %v3880
      %v3882 = vsel %vm1572, %v3836, 0.0
      %v3883 = vadd.f32 %v3881, %v3882
      %v3884 = vsel %vm1572, %v3837, 0.0
      %v3885 = vadd.f32 %v3883, %v3884
      %v3886 = vsel %vm1572, %v3838, 0.0
      %v3887 = vadd.f32 %v3885, %v3886
      %v3888 = vsel %vm1572, %v3839, 0.0
      %v3889 = vadd.f32 %v3887, %v3888
      %v3890 = vsel %vm1572, %v3840, 0.0
      %v3891 = vadd.f32 %v3889, %v3890
      %v3892 = vsel %vm1572, %v3841, 0.0
      %v3893 = vadd.f32 %v3891, %v3892
      %v3894 = vsel %vm1572, %v3842, 0.0
      %v3895 = vadd.f32 %v3893, %v3894
      %v3896 = vsel %vm1572, %v3843, 0.0
      %v3897 = vadd.f32 %v3895, %v3896
      %v3898 = vsel %vm1572, %v3844, 0.0
      %v3899 = vadd.f32 %v3897, %v3898
      %v3900 = vsel %vm1572, %v3845, 0.0
      %v3901 = vadd.f32 %v3899, %v3900
      %v3902 = vsel %vm1572, %v3846, 0.0
      %v3903 = vadd.f32 %v3901, %v3902
      %v3904 = vsel %vm1572, %v3847, 0.0
      %v3905 = vadd.f32 %v3903, %v3904
      %v3906 = vsel %vm1572, %v3848, 0.0
      %v3907 = vadd.f32 %v3905, %v3906
      %v3908 = vsel %vm1572, %v3849, 0.0
      %v3909 = vadd.f32 %v3907, %v3908
      %v3910 = vsel %vm1572, %v3850, 0.0
      %v3911 = vadd.f32 %v3909, %v3910
      %v3912 = vsel %vm1572, %v3851, 0.0
      %v3913 = vadd.f32 %v3911, %v3912
      %v3914 = vsel %vm1572, %v3852, 0.0
      %v3915 = vadd.f32 %v3913, %v3914
      %3916 = vst.msk [vmem:[%s514] sm:$0xff] %vm1572, %v3915
      %v3917 = vpack.c.bf16 %v3725, %v3725
      %v3918 = vpack.c.bf16 %v3726, %v3726
      %v3919 = vpack.c.bf16 %v3727, %v3727
      %v3920 = vpack.c.bf16 %v3728, %v3728
      %v3921 = vpack.c.bf16 %v3729, %v3729
      %v3922 = vpack.c.bf16 %v3730, %v3730
      %v3923 = vpack.c.bf16 %v3731, %v3731
      %v3924 = vpack.c.bf16 %v3732, %v3732
      %v3925 = vpack.c.bf16 %v3733, %v3733
      %v3926 = vpack.c.bf16 %v3734, %v3734
      %v3927 = vpack.c.bf16 %v3735, %v3735
      %v3928 = vpack.c.bf16 %v3736, %v3736
      %v3929 = vpack.c.bf16 %v3737, %v3737
      %v3930 = vpack.c.bf16 %v3738, %v3738
      %v3931 = vpack.c.bf16 %v3739, %v3739
      %v3932 = vpack.c.bf16 %v3740, %v3740
      %v3933 = vpack.c.bf16 %v3741, %v3741
      %v3934 = vpack.c.bf16 %v3742, %v3742
      %v3935 = vpack.c.bf16 %v3743, %v3743
      %v3936 = vpack.c.bf16 %v3744, %v3744
      %v3937 = vpack.c.bf16 %v3745, %v3745
      %v3938 = vpack.c.bf16 %v3746, %v3746
      %v3939 = vpack.c.bf16 %v3747, %v3747
      %v3940 = vpack.c.bf16 %v3748, %v3748
      %v3941 = vpack.c.bf16 %v3749, %v3749
      %v3942 = vpack.c.bf16 %v3750, %v3750
      %v3943 = vpack.c.bf16 %v3751, %v3751
      %v3944 = vpack.c.bf16 %v3752, %v3752
      %v3945 = vpack.c.bf16 %v3753, %v3753
      %v3946 = vpack.c.bf16 %v3754, %v3754
      %v3947 = vpack.c.bf16 %v3755, %v3755
      %v3948 = vpack.c.bf16 %v3756, %v3756
      %vm3949 = vcmask 60416
      %3950 = vst.msk [vmem:[%s497] sm:$0xf] %vm3949, %v3917
      %3951 = vst.msk [vmem:[%s497 + $0x4] sm:$0xf] %vm3949, %v3918
      %3952 = vst.msk [vmem:[%s497 + $0x8] sm:$0xf] %vm3949, %v3919
      %3953 = vst.msk [vmem:[%s497 + $0xc] sm:$0xf] %vm3949, %v3920
      %3954 = vst.msk [vmem:[%s497 + $0x10] sm:$0xf] %vm3949, %v3921
      %3955 = vst.msk [vmem:[%s497 + $0x14] sm:$0xf] %vm3949, %v3922
      %3956 = vst.msk [vmem:[%s497 + $0x18] sm:$0xf] %vm3949, %v3923
      %3957 = vst.msk [vmem:[%s497 + $0x1c] sm:$0xf] %vm3949, %v3924
      %3958 = vst.msk [vmem:[%s497 + $0x20] sm:$0xf] %vm3949, %v3925
      %3959 = vst.msk [vmem:[%s497 + $0x24] sm:$0xf] %vm3949, %v3926
      %3960 = vst.msk [vmem:[%s497 + $0x28] sm:$0xf] %vm3949, %v3927
      %3961 = vst.msk [vmem:[%s497 + $0x2c] sm:$0xf] %vm3949, %v3928
      %3962 = vst.msk [vmem:[%s497 + $0x30] sm:$0xf] %vm3949, %v3929
      %3963 = vst.msk [vmem:[%s497 + $0x34] sm:$0xf] %vm3949, %v3930
      %3964 = vst.msk [vmem:[%s497 + $0x38] sm:$0xf] %vm3949, %v3931
      %3965 = vst.msk [vmem:[%s497 + $0x3c] sm:$0xf] %vm3949, %v3932
      %3966 = vst.msk [vmem:[%s497 + $0x40] sm:$0xf] %vm3949, %v3933
      %3967 = vst.msk [vmem:[%s497 + $0x44] sm:$0xf] %vm3949, %v3934
      %3968 = vst.msk [vmem:[%s497 + $0x48] sm:$0xf] %vm3949, %v3935
      %3969 = vst.msk [vmem:[%s497 + $0x4c] sm:$0xf] %vm3949, %v3936
      %3970 = vst.msk [vmem:[%s497 + $0x50] sm:$0xf] %vm3949, %v3937
      %3971 = vst.msk [vmem:[%s497 + $0x54] sm:$0xf] %vm3949, %v3938
      %3972 = vst.msk [vmem:[%s497 + $0x58] sm:$0xf] %vm3949, %v3939
      %3973 = vst.msk [vmem:[%s497 + $0x5c] sm:$0xf] %vm3949, %v3940
      %3974 = vst.msk [vmem:[%s497 + $0x60] sm:$0xf] %vm3949, %v3941
      %3975 = vst.msk [vmem:[%s497 + $0x64] sm:$0xf] %vm3949, %v3942
      %3976 = vst.msk [vmem:[%s497 + $0x68] sm:$0xf] %vm3949, %v3943
      %3977 = vst.msk [vmem:[%s497 + $0x6c] sm:$0xf] %vm3949, %v3944
      %3978 = vst.msk [vmem:[%s497 + $0x70] sm:$0xf] %vm3949, %v3945
      %3979 = vst.msk [vmem:[%s497 + $0x74] sm:$0xf] %vm3949, %v3946
      %3980 = vst.msk [vmem:[%s497 + $0x78] sm:$0xf] %vm3949, %v3947
      %3981 = vst.msk [vmem:[%s497 + $0x7c] sm:$0xf] %vm3949, %v3948
      %s3982 = smul.u32 4, %s25
      %p3983 = scmp.lt.s32.totalorder %s24, 1
      %s3984 = scalar_select %p3983, %s24, 1
      %p3985 = scmp.lt.s32.totalorder %s3982, 7
      %s3986 = scalar_select %p3985, %s3982, 7
      %s3987 = smul.addr %s3986, 8
      %s3988 = smul.addr %s3984, 64
      %s3989 = sadd.s32 %s3987, %s3988
      %s3990 = smul.addr %s3989, 4
      %s3991 = scalar_lea.vmem %s6, %s3990
      %p3992 = scmp.lt.s32.totalorder %s24, 1
      %s3993 = scalar_select %p3992, %s24, 1
      %p3994 = scmp.lt.s32.totalorder %s25, 1
      %s3995 = scalar_select %p3994, %s25, 1
      %s3996 = smul.addr %s3993, 2
      %s3997 = sadd.s32 %s3995, %s3996
      %s3998 = smul.addr %s3997, 8
      %s3999 = scalar_lea.vmem %s7, %s3998
      %p4000 = scmp.lt.s32.totalorder %s24, 1
      %s4001 = scalar_select %p4000, %s24, 1
      %p4002 = scmp.lt.s32.totalorder %s25, 1
      %s4003 = scalar_select %p4002, %s25, 1
      %s4004 = smul.addr %s4001, 2
      %s4005 = sadd.s32 %s4003, %s4004
      %s4006 = smul.addr %s4005, 8
      %s4007 = scalar_lea.vmem %s8, %s4006
      // Predicated region
      $region45: #{conv3d_block_forward.3} parent=43 // pred_check
        %p4008 = pneg %p215
      $region46: #{conv3d_block_forward.3} parent=43 // pred_check_branch
        %4010 = sbr.rel (%p4008) target = $region48
      $region47: #{conv3d_block_forward.3} parent=43 // pred_region
        %s4011 = smul.u32 4, %s25
      $region48: #{conv3d_block_forward.3} parent=43 // pred_fallthru
        _
      // Predicated region
      $region49: #{conv3d_block_forward.3} parent=43 // pred_check
        %p4012 = pneg %p243
      $region50: #{conv3d_block_forward.3} parent=43 // pred_check_branch
        %4014 = sbr.rel (%p4012) target = $region52
      $region51: #{conv3d_block_forward.3} parent=43 // pred_region
        _
      $region52: #{conv3d_block_forward.3} parent=43 // pred_fallthru
        _
      // Predicated region
      $region53: #{conv3d_block_forward.3} parent=43 // pred_check
        %p4015 = pneg %p271
      $region54: #{conv3d_block_forward.3} parent=43 // pred_check_branch
        %4017 = sbr.rel (%p4015) target = $region56
      $region55: #{conv3d_block_forward.3} parent=43 // pred_region
        _
      $region56: #{conv3d_block_forward.3} parent=43 // pred_fallthru
        _
    $region44: #{conv3d_block_forward.3} parent=5 // pred_fallthru
      _
    %p4018 = scmp.le.s32.totalorder 2, %s15
    // Predicated region
    $region57: #{conv3d_block_forward.3} parent=5 // pred_check
      %p4019 = pneg %p4018
    $region58: #{conv3d_block_forward.3} parent=5 // pred_check_branch
      %4021 = sbr.rel (%p4019) target = $region60
    $region59: #{conv3d_block_forward.3} parent=5 // pred_region
      %s4022 = ssub.s32 %s15, 2
      // Predicated region
      $region61: #{conv3d_block_forward.3} parent=59 // pred_check
        %p4023 = pneg %p221
      $region62: #{conv3d_block_forward.3} parent=59 // pred_check_branch
        %4025 = sbr.rel (%p4023) target = $region64
      $region63: #{conv3d_block_forward.3} parent=59 // pred_region
        %s4026 = smul.u32 4, %s27
        %p4027 = scmp.lt.s32.totalorder %s26, 1
        %s4028 = scalar_select %p4027, %s26, 1
        %p4029 = scmp.lt.s32.totalorder %s4026, 7
        %s4030 = scalar_select %p4029, %s4026, 7
        %s4031 = smul.addr %s4030, 8
        %s4032 = smul.addr %s4028, 64
        %s4033 = sadd.s32 %s4031, %s4032
        %s4034 = smul.addr %s4033, 4
        %s4035 = scalar_lea.vmem %s6, %s4034
      $region64: #{conv3d_block_forward.3} parent=59 // pred_fallthru
        _
      // Predicated region
      $region65: #{conv3d_block_forward.3} parent=59 // pred_check
        %p4036 = pneg %p249
      $region66: #{conv3d_block_forward.3} parent=59 // pred_check_branch
        %4038 = sbr.rel (%p4036) target = $region68
      $region67: #{conv3d_block_forward.3} parent=59 // pred_region
        %p4039 = scmp.lt.s32.totalorder %s26, 1
        %s4040 = scalar_select %p4039, %s26, 1
        %p4041 = scmp.lt.s32.totalorder %s27, 1
        %s4042 = scalar_select %p4041, %s27, 1
        %s4043 = smul.addr %s4040, 2
        %s4044 = sadd.s32 %s4042, %s4043
        %s4045 = smul.addr %s4044, 8
        %s4046 = scalar_lea.vmem %s7, %s4045
      $region68: #{conv3d_block_forward.3} parent=59 // pred_fallthru
        _
      // Predicated region
      $region69: #{conv3d_block_forward.3} parent=59 // pred_check
        %p4047 = pneg %p277
      $region70: #{conv3d_block_forward.3} parent=59 // pred_check_branch
        %4049 = sbr.rel (%p4047) target = $region72
      $region71: #{conv3d_block_forward.3} parent=59 // pred_region
        %p4050 = scmp.lt.s32.totalorder %s26, 1
        %s4051 = scalar_select %p4050, %s26, 1
        %p4052 = scmp.lt.s32.totalorder %s27, 1
        %s4053 = scalar_select %p4052, %s27, 1
        %s4054 = smul.addr %s4051, 2
        %s4055 = sadd.s32 %s4053, %s4054
        %s4056 = smul.addr %s4055, 8
        %s4057 = scalar_lea.vmem %s8, %s4056
      $region72: #{conv3d_block_forward.3} parent=59 // pred_fallthru
        _
    $region60: #{conv3d_block_forward.3} parent=5 // pred_fallthru
      _
  $region6: #{conv3d_block_forward.3} parent=0 // loop_footer
    %s19 = sadd.s32 1, %s15
  $region7: #{conv3d_block_forward.3} parent=0 // loop_footer_branch
    %14 = sbr.rel target = $region3
  $region8: #{conv3d_block_forward.3} parent=0 // loop_exit
    _

</llo_original>
